<compile_context>
chip_gen: v5e
topology: v5e:2x2
jax: 0.10.0
libtpu: 0.0.40
codegen_flags: <defaults>
</compile_context>

<pallas_src>
import functools
import math

import jax
import jax.numpy as jnp
from jax import lax
from jax.experimental import pallas as pl
from jax.experimental.pallas import tpu as pltpu


# ----------------------------------------------------------------------------
# Fused decoder kernel (one batch image per grid step)
# ----------------------------------------------------------------------------
def _make_fused_kernel(*, h, w, cin, c, n_res, stride, c1, cout):
    """Builds the fused decoder kernel.

    Ref layout (positional):
      inputs : x(1,h,w,cin), w0(9*cin,c), b0(1,c),
               [w3(9*c,cmid), w1(cmid,c)] * n_res,
               wt1(9*c,4*cd), bt1(1,4*cd), [wt2(9*c1,4*cout), bt2(1,4*cout)]
      output : stride 4 -> (1,2,2,h,w,4*cout)   stride 2 -> (1,h,w,4*cout)
      scratch: xpad(h+2,w+2,cin), trunk(h+2,w+2,c),
               [planes(2,2,h+2,w+2,c1)] if stride == 4
    """
    m = h * w
    bf16 = jnp.bfloat16
    f32 = jnp.float32

    def kernel(*refs):
        it = iter(refs)
        x_ref = next(it)
        w0_ref = next(it)
        b0_ref = next(it)
        res_refs = [(next(it), next(it)) for _ in range(n_res)]
        wt1_ref = next(it)
        bt1_ref = next(it)
        if stride == 4:
            wt2_ref = next(it)
            bt2_ref = next(it)
        o_ref = next(it)
        xpad = next(it)
        trunk = next(it)
        planes = next(it) if stride == 4 else None

        def patch9(tap):
            """(m, 9*C) patch: 9 taps K-concatenated (channels innermost)."""
            return jnp.concatenate(
                [tap(dy, dx) for dy in range(3) for dx in range(3)], axis=-1)

        # ---- zero-pad the input inside VMEM (no HBM pad / window tensors) --
        xpad[...] = jnp.zeros_like(xpad)
        xpad[1:h + 1, 1:w + 1, :] = x_ref[0]
        trunk[...] = jnp.zeros_like(trunk)
        if stride == 4:
            planes[...] = jnp.zeros_like(planes)

        # ---- conv0: 3x3, pad 1 (single K=9*cin matmul) ---------------------
        p = patch9(lambda dy, dx: xpad[dy:dy + h, dx:dx + w, :].reshape(m, cin))
        acc = jnp.dot(p, w0_ref[...], preferred_element_type=f32) + b0_ref[...]
        if n_res == 0:
            acc = jnp.maximum(acc, 0.0)          # Sequential's ReLU (no res blocks)
        trunk[1:h + 1, 1:w + 1, :] = acc.reshape(h, w, c).astype(bf16)

        # ---- residual stack (3x3 -> ReLU -> 1x1 -> add), all in VMEM -------
        for i, (w3_ref, w1_ref) in enumerate(res_refs):
            p = patch9(lambda dy, dx: trunk[dy:dy + h, dx:dx + w, :].reshape(m, c))
            mid = jnp.maximum(
                jnp.dot(p, w3_ref[...], preferred_element_type=f32), 0.0)
            r = jnp.dot(mid.astype(bf16), w1_ref[...], preferred_element_type=f32)
            out = trunk[1:h + 1, 1:w + 1, :].reshape(m, c).astype(f32) + r
            if i == n_res - 1:
                out = jnp.maximum(out, 0.0)      # post-stack ReLU fused here
            trunk[1:h + 1, 1:w + 1, :] = out.reshape(h, w, c).astype(bf16)

        # ---- deconv 1: phase-fused ConvTranspose2d(4, s=2, p=1) ------------
        # one matmul: (m, 9*c) @ (9*c, 4*Cd) -> all 4 sub-pixel phases at once
        p = patch9(lambda dy, dx: trunk[dy:dy + h, dx:dx + w, :].reshape(m, c))
        d1 = jnp.dot(p, wt1_ref[...], preferred_element_type=f32) + bt1_ref[...]

        if stride == 2:
            # final layer: columns are (py, px, co); store factorized block.
            o_ref[0] = d1.reshape(h, w, 4 * cout).astype(o_ref.dtype)
            return

        # stride == 4: ReLU, scatter phases into padded VMEM planes.
        d1 = jnp.maximum(d1, 0.0)
        for py in range(2):
            for px in range(2):
                blk = d1[:, (py * 2 + px) * c1:(py * 2 + px + 1) * c1]
                planes[py, px, 1:h + 1, 1:w + 1, :] = (
                    blk.reshape(h, w, c1).astype(bf16))

        # ---- deconv 2: parity-split over its input grid --------------------
        # For input parity class (ay, ax), the 3x3 tap support maps to static
        # slices of the padded phase planes; one matmul yields all 4 output
        # phases (qy, qx) of that class.
        for ay in range(2):
            for ax in range(2):
                taps = []
                for iy in range(3):
                    for ix in range(3):
                        ry = ay - 1 + iy            # row offset on deconv1 grid
                        rx = ax - 1 + ix
                        pr, dr = ry % 2, ry // 2    # phase plane / plane-row shift
                        pc, dc = rx % 2, rx // 2
                        taps.append(
                            planes[pr, pc,
                                   1 + dr:1 + dr + h,
                                   1 + dc:1 + dc + w, :].reshape(m, c1))
                p2 = jnp.concatenate(taps, axis=-1)          # (m, 9*c1)
                d2 = (jnp.dot(p2, wt2_ref[...], preferred_element_type=f32)
                      + bt2_ref[...])                        # (m, 4*cout)
                o_ref[0, ay, ax, :, :, :] = (
                    d2.reshape(h, w, 4 * cout).astype(o_ref.dtype))

    return kernel


# ----------------------------------------------------------------------------
# pallas_call wrapper
# ----------------------------------------------------------------------------
def _full_spec(arr):
    nd = arr.ndim
    return pl.BlockSpec(arr.shape, lambda i: (0,) * nd)


def _vmem_limit_bytes(blocks):
    """blocks: iterable of (shape, dtype, buffer_count). Derived, with headroom."""
    total = 0
    for shape, dtype, bufs in blocks:
        total += bufs * math.prod(shape) * jnp.dtype(dtype).itemsize
    total += 8 << 20                       # headroom for compiler temporaries
    return int(min(max(total, 16 << 20), 96 << 20))


def decoder_forward(x_nchw, params, *, stride, n_res_block):
    n, cin, h, w = x_nchw.shape
    c = params["w0"].shape[1]
    # NCHW (PyTorch) -> NHWC (kernel layout); bf16 activations feed the MXU.
    x = jnp.transpose(x_nchw, (0, 2, 3, 1)).astype(jnp.bfloat16)

    if stride == 4:
        c1 = params["wt1"].shape[1] // 4
        cout = params["wt2"].shape[1] // 4
        out_shape = jax.ShapeDtypeStruct((n, 2, 2, h, w, 4 * cout), jnp.float32)
        out_spec = pl.BlockSpec((1, 2, 2, h, w, 4 * cout),
                                lambda i: (i, 0, 0, 0, 0, 0))
        out_blk = (1, 2, 2, h, w, 4 * cout)
    elif stride == 2:
        c1 = 0
        cout = params["wt1"].shape[1] // 4
        out_shape = jax.ShapeDtypeStruct((n, h, w, 4 * cout), jnp.float32)
        out_spec = pl.BlockSpec((1, h, w, 4 * cout), lambda i: (i, 0, 0, 0))
        out_blk = (1, h, w, 4 * cout)
    else:
        raise ValueError("stride must be 2 or 4")

    inputs = [x, params["w0"], params["b0"]]
    in_specs = [pl.BlockSpec((1, h, w, cin), lambda i: (i, 0, 0, 0)),
                _full_spec(params["w0"]), _full_spec(params["b0"])]
    for (w3, w1) in params["res"]:
        inputs += [w3, w1]
        in_specs += [_full_spec(w3), _full_spec(w1)]
    inputs += [params["wt1"], params["bt1"]]
    in_specs += [_full_spec(params["wt1"]), _full_spec(params["bt1"])]
    if stride == 4:
        inputs += [params["wt2"], params["bt2"]]
        in_specs += [_full_spec(params["wt2"]), _full_spec(params["bt2"])]

    scratch_defs = [((h + 2, w + 2, cin), jnp.bfloat16),   # padded input
                    ((h + 2, w + 2, c), jnp.bfloat16)]     # padded trunk act
    if stride == 4:
        scratch_defs.append(((2, 2, h + 2, w + 2, c1), jnp.bfloat16))
    scratch_shapes = [pltpu.VMEM(s, d) for s, d in scratch_defs]

    vmem_limit = _vmem_limit_bytes(
        [((1, h, w, cin), x.dtype, 2)]
        + [(a.shape, a.dtype, 2) for a in inputs[1:]]
        + [(out_blk, jnp.float32, 2)]
        + [(s, d, 1) for s, d in scratch_defs])

    kernel = _make_fused_kernel(h=h, w=w, cin=cin, c=c, n_res=n_res_block,
                                stride=stride, c1=c1, cout=cout)

    y = pl.pallas_call(
        kernel,
        out_shape=out_shape,
        grid=(n,),
        in_specs=in_specs,
        out_specs=out_spec,
        scratch_shapes=scratch_shapes,
        compiler_params=pltpu.CompilerParams(
            dimension_semantics=("parallel",),
            vmem_limit_bytes=vmem_limit),
    )(*inputs)

    # Layout epilogue: free reshapes + ONE small permute to NCHW.
    if stride == 4:
        # y[n, ay, ax, r, c, (qy,qx,co)] -> out[n, co, 4r+2ay+qy, 4c+2ax+qx]
        y = y.reshape(n, 2, 2, h, w, 2, 2, cout)
        y = jnp.transpose(y, (0, 7, 3, 1, 5, 4, 2, 6))
        y = y.reshape(n, cout, 4 * h, 4 * w)
    else:
        # y[n, r, c, (py,px,co)] -> out[n, co, 2r+py, 2c+px]
        y = y.reshape(n, h, w, 2, 2, cout)
        y = jnp.transpose(y, (0, 5, 1, 3, 2, 4))
        y = y.reshape(n, cout, 2 * h, 2 * w)
    return y


# ----------------------------------------------------------------------------
# Parameters: raw PyTorch-layout init + one-time fused-layout preparation
# ----------------------------------------------------------------------------
def init_decoder_params(key, in_channel, out_channel, channel,
                        n_res_block, n_res_channel, stride):
    """Raw params in PyTorch layouts (Conv2d: (Cout,Cin,kH,kW);
    ConvTranspose2d: (Cin,Cout,kH,kW)); biases 1-D."""
    ks = iter(jax.random.split(key, 4 + 2 * n_res_block + 4))
    s = 0.05
    p = {"w0": s * jax.random.normal(next(ks), (channel, in_channel, 3, 3), jnp.float32),
         "b0": s * jax.random.normal(next(ks), (channel,), jnp.float32),
         "res": []}
    for _ in range(n_res_block):
        w3 = s * jax.random.normal(next(ks), (n_res_channel, channel, 3, 3), jnp.float32)
        w1 = s * jax.random.normal(next(ks), (channel, n_res_channel, 1, 1), jnp.float32)
        p["res"].append((w3, w1))
    if stride == 4:
        p["wt1"] = s * jax.random.normal(next(ks), (channel, channel // 2, 4, 4), jnp.float32)
        p["bt1"] = s * jax.random.normal(next(ks), (channel // 2,), jnp.float32)
        p["wt2"] = s * jax.random.normal(next(ks), (channel // 2, out_channel, 4, 4), jnp.float32)
        p["bt2"] = s * jax.random.normal(next(ks), (out_channel,), jnp.float32)
    elif stride == 2:
        p["wt1"] = s * jax.random.normal(next(ks), (channel, out_channel, 4, 4), jnp.float32)
        p["bt1"] = s * jax.random.normal(next(ks), (out_channel,), jnp.float32)
    else:
        raise ValueError("stride must be 2 or 4")
    return p


def prepare_decoder_params(raw, *, compute_dtype=jnp.bfloat16):
    """One-time weight re-layout + bf16 cast (outside the jitted forward):
       Conv2d (Cout,Cin,3,3)          -> (9*Cin, Cout)   tap K-concatenated
       1x1 Conv (Cout,Cin,1,1)        -> (Cin, Cout)
       ConvTranspose2d (Cin,Cout,4,4) -> (9*Cin, 4*Cout)  tap-K x phase-N fused
       biases                         -> (1, Cout) / (1, 4*Cout) tiled, f32
    """
    def conv3x3_w(wt):
        cout_, cin_ = wt.shape[0], wt.shape[1]
        return (jnp.transpose(wt, (2, 3, 1, 0))
                .reshape(9 * cin_, cout_).astype(compute_dtype))

    def conv1x1_w(wt):
        return jnp.transpose(wt[:, :, 0, 0]).astype(compute_dtype)

    def deconv_w(wt):
        # Phase decomposition of ConvTranspose2d(4, s=2, p=1):
        #   out[2r+py, 2c+px] = b + sum_{dy,dx} xpad[r+py+dy, c+px+dx]
        #                                 * wt[:, :, 3-(2*dy+py), 3-(2*dx+px)]
        # Fused over the shared 3x3 tap support (oy = py+dy, ox = px+dx):
        #   rows  = (oy*3+ox)*Cin + ci ; cols = (py*2+px)*Cout + co
        cin_, cout_ = wt.shape[0], wt.shape[1]
        w_hwio = jnp.transpose(wt, (2, 3, 0, 1))          # (ky, kx, Cin, Cout)
        taps = []
        for oy in range(3):
            for ox in range(3):
                cols = []
                for py in range(2):
                    for px in range(2):
                        dy, dx = oy - py, ox - px
                        if 0 <= dy <= 1 and 0 <= dx <= 1:
                            cols.append(w_hwio[3 - (2 * dy + py), 3 - (2 * dx + px)])
                        else:
                            cols.append(jnp.zeros((cin_, cout_), wt.dtype))
                taps.append(jnp.concatenate(cols, axis=1))   # (Cin, 4*Cout)
        return jnp.concatenate(taps, axis=0).astype(compute_dtype)

    def bias(b):
        return b.astype(jnp.float32).reshape(1, -1)

    def bias4(b):
        return jnp.tile(b.astype(jnp.float32).reshape(1, -1), (1, 4))

    p = {"w0": conv3x3_w(raw["w0"]), "b0": bias(raw["b0"]),
         "res": [(conv3x3_w(w3), conv1x1_w(w1)) for (w3, w1) in raw["res"]],
         "wt1": deconv_w(raw["wt1"]), "bt1": bias4(raw["bt1"])}
    if "wt2" in raw:
        p["wt2"] = deconv_w(raw["wt2"])
        p["bt2"] = bias4(raw["bt2"])
    return p


# ----------------------------------------------------------------------------
# Pure-JAX f32 reference (runtime numerical validation only)
# ----------------------------------------------------------------------------
def decoder_reference(x_nchw, raw, *, stride, n_res_block):
    x = jnp.transpose(x_nchw, (0, 2, 3, 1))

    def conv3(inp, w, b=None):
        w_hwio = jnp.transpose(w, (2, 3, 1, 0))
        y = lax.conv_general_dilated(inp, w_hwio, (1, 1), ((1, 1), (1, 1)),
                                     dimension_numbers=("NHWC", "HWIO", "NHWC"))
        return y if b is None else y + b

    def deconv(inp, wt, b):
        g = jnp.transpose(wt[:, :, ::-1, ::-1], (2, 3, 0, 1))
        y = lax.conv_general_dilated(inp, g, (1, 1), ((2, 2), (2, 2)),
                                     lhs_dilation=(2, 2),
                                     dimension_numbers=("NHWC", "HWIO", "NHWC"))
        return y + b

    h = conv3(x, raw["w0"], raw["b0"])
    if n_res_block == 0:
        h = jnp.maximum(h, 0.0)
    for i, (w3, w1) in enumerate(raw["res"]):
        r = jnp.maximum(conv3(h, w3), 0.0)
        r = jnp.einsum("nhwm,om->nhwo", r, w1[:, :, 0, 0])
        h = h + r
        if i == n_res_block - 1:
            h = jnp.maximum(h, 0.0)
    if stride == 4:
        h = jnp.maximum(deconv(h, raw["wt1"], raw["bt1"]), 0.0)
        h = deconv(h, raw["wt2"], raw["bt2"])
    else:
        h = deconv(h, raw["wt1"], raw["bt1"])
    return jnp.transpose(h, (0, 3, 1, 2))


# ----------------------------------------------------------------------------
if __name__ == "__main__":
    configs = [
        # Decoder(4, 3, 32, n_res_block=2, n_res_channel=8, stride=4), 8x8 input.
        dict(in_channel=4, out_channel=3, channel=32, n_res_block=2,
             n_res_channel=8, stride=4, n=2, h=8, w=8),
        # stride-2 head, single image (exercises the other kernel path).
        dict(in_channel=8, out_channel=3, channel=32, n_res_block=1,
             n_res_channel=8, stride=2, n=1, h=16, w=16),
    ]
    key = jax.random.PRNGKey(0)
    for cfg in configs:
        key, kx, kp = jax.random.split(key, 3)
        x = jax.random.normal(
            kx, (cfg["n"], cfg["in_channel"], cfg["h"], cfg["w"]), jnp.float32)
        raw = init_decoder_params(kp, cfg["in_channel"], cfg["out_channel"],
                                  cfg["channel"], cfg["n_res_block"],
                                  cfg["n_res_channel"], cfg["stride"])
        params = prepare_decoder_params(raw)
        fwd = jax.jit(functools.partial(decoder_forward, stride=cfg["stride"],
                                        n_res_block=cfg["n_res_block"]))
        y = fwd(x, params)
        jax.block_until_ready(y)

        assert y.shape == (cfg["n"], cfg["out_channel"],
                           cfg["h"] * cfg["stride"], cfg["w"] * cfg["stride"]), y.shape
        assert y.dtype == jnp.float32

        # Numerical check against a pure-JAX f32 reference.  bf16 matmul inputs
        # give ~<1% relative error; structural / indexing bugs give O(1).
        ref = decoder_reference(x, raw, stride=cfg["stride"],
                                n_res_block=cfg["n_res_block"])
        rel = float(jnp.linalg.norm(y - ref) / (jnp.linalg.norm(ref) + 1e-8))
        assert rel < 5e-2, rel

    print("KERNEL_OK")
</pallas_src>

<mosaic_0001>
module attributes {stable_mosaic.version = 11 : i64} {
  func.func @kernel(%arg0: i32, %arg1: memref<1x8x8x4xbf16, #tpu.memory_space<vmem>>, %arg2: memref<36x32xbf16, #tpu.memory_space<vmem>>, %arg3: memref<1x32xf32, #tpu.memory_space<vmem>>, %arg4: memref<288x8xbf16, #tpu.memory_space<vmem>>, %arg5: memref<8x32xbf16, #tpu.memory_space<vmem>>, %arg6: memref<288x8xbf16, #tpu.memory_space<vmem>>, %arg7: memref<8x32xbf16, #tpu.memory_space<vmem>>, %arg8: memref<288x64xbf16, #tpu.memory_space<vmem>>, %arg9: memref<1x64xf32, #tpu.memory_space<vmem>>, %arg10: memref<144x12xbf16, #tpu.memory_space<vmem>>, %arg11: memref<1x12xf32, #tpu.memory_space<vmem>>, %arg12: memref<1x2x2x8x8x12xf32, #tpu.memory_space<vmem>>, %arg13: memref<10x10x4xbf16, #tpu.memory_space<vmem>>, %arg14: memref<10x10x32xbf16, #tpu.memory_space<vmem>>, %arg15: memref<2x2x10x10x16xbf16, #tpu.memory_space<vmem>>) attributes {dimension_semantics = [#tpu.dimension_semantics<parallel>], iteration_bounds = array<i64: 2>, scalar_prefetch = 0 : i64, scratch_operands = 3 : i64, tpu.core_type = #tpu.core_type<tc>, window_params = [{transform_indices = @transform_0, window_bounds = array<i64: 1, 8, 8, 4>}, {pipeline_mode = #tpu.pipeline_mode<synchronous>, transform_indices = @transform_1, window_bounds = array<i64: 36, 32>}, {pipeline_mode = #tpu.pipeline_mode<synchronous>, transform_indices = @transform_2, window_bounds = array<i64: 1, 32>}, {pipeline_mode = #tpu.pipeline_mode<synchronous>, transform_indices = @transform_3, window_bounds = array<i64: 288, 8>}, {pipeline_mode = #tpu.pipeline_mode<synchronous>, transform_indices = @transform_4, window_bounds = array<i64: 8, 32>}, {pipeline_mode = #tpu.pipeline_mode<synchronous>, transform_indices = @transform_5, window_bounds = array<i64: 288, 8>}, {pipeline_mode = #tpu.pipeline_mode<synchronous>, transform_indices = @transform_6, window_bounds = array<i64: 8, 32>}, {pipeline_mode = #tpu.pipeline_mode<synchronous>, transform_indices = @transform_7, window_bounds = array<i64: 288, 64>}, {pipeline_mode = #tpu.pipeline_mode<synchronous>, transform_indices = @transform_8, window_bounds = array<i64: 1, 64>}, {pipeline_mode = #tpu.pipeline_mode<synchronous>, transform_indices = @transform_9, window_bounds = array<i64: 144, 12>}, {pipeline_mode = #tpu.pipeline_mode<synchronous>, transform_indices = @transform_10, window_bounds = array<i64: 1, 12>}, {transform_indices = @transform_11, window_bounds = array<i64: 1, 2, 2, 8, 8, 12>}]} {
    %cst = arith.constant 0.000000e+00 : bf16
    %0 = vector.broadcast %cst : bf16 to vector<10x10x4xbf16>
    %c0 = arith.constant 0 : index
    %c0_0 = arith.constant 0 : index
    %c0_1 = arith.constant 0 : index
    %1 = vector.load %arg13[%c0, %c0_0, %c0_1] : memref<10x10x4xbf16, #tpu.memory_space<vmem>>, vector<10x10x4xbf16>
    tpu.vector_store %arg13[%c0, %c0_0, %c0_1], %0 {strides = array<i32>} : memref<10x10x4xbf16, #tpu.memory_space<vmem>>, vector<10x10x4xbf16>,
    %c0_2 = arith.constant 0 : index
    %c0_3 = arith.constant 0 : index
    %c0_4 = arith.constant 0 : index
    %c0_5 = arith.constant 0 : index
    %2 = vector.load %arg1[%c0_2, %c0_3, %c0_4, %c0_5] : memref<1x8x8x4xbf16, #tpu.memory_space<vmem>>, vector<1x8x8x4xbf16>
    %3 = vector.shape_cast %2 : vector<1x8x8x4xbf16> to vector<8x8x4xbf16>
    %c1 = arith.constant 1 : index
    %c1_6 = arith.constant 1 : index
    %c0_7 = arith.constant 0 : index
    %4 = vector.load %arg13[%c1, %c1_6, %c0_7] : memref<10x10x4xbf16, #tpu.memory_space<vmem>>, vector<8x8x4xbf16>
    tpu.vector_store %arg13[%c1, %c1_6, %c0_7], %3 {strides = array<i32>} : memref<10x10x4xbf16, #tpu.memory_space<vmem>>, vector<8x8x4xbf16>,
    %cst_8 = arith.constant 0.000000e+00 : bf16
    %5 = vector.broadcast %cst_8 : bf16 to vector<10x10x32xbf16>
    %c0_9 = arith.constant 0 : index
    %c0_10 = arith.constant 0 : index
    %c0_11 = arith.constant 0 : index
    %6 = vector.load %arg14[%c0_9, %c0_10, %c0_11] : memref<10x10x32xbf16, #tpu.memory_space<vmem>>, vector<10x10x32xbf16>
    tpu.vector_store %arg14[%c0_9, %c0_10, %c0_11], %5 {strides = array<i32>} : memref<10x10x32xbf16, #tpu.memory_space<vmem>>, vector<10x10x32xbf16>,
    %cst_12 = arith.constant 0.000000e+00 : bf16
    %7 = vector.broadcast %cst_12 : bf16 to vector<2x2x10x10x16xbf16>
    %c0_13 = arith.constant 0 : index
    %c0_14 = arith.constant 0 : index
    %c0_15 = arith.constant 0 : index
    %c0_16 = arith.constant 0 : index
    %c0_17 = arith.constant 0 : index
    %8 = vector.load %arg15[%c0_13, %c0_14, %c0_15, %c0_16, %c0_17] : memref<2x2x10x10x16xbf16, #tpu.memory_space<vmem>>, vector<2x2x10x10x16xbf16>
    tpu.vector_store %arg15[%c0_13, %c0_14, %c0_15, %c0_16, %c0_17], %7 {strides = array<i32>} : memref<2x2x10x10x16xbf16, #tpu.memory_space<vmem>>, vector<2x2x10x10x16xbf16>,
    %c0_18 = arith.constant 0 : index
    %c0_19 = arith.constant 0 : index
    %c0_20 = arith.constant 0 : index
    %9 = vector.load %arg13[%c0_18, %c0_19, %c0_20] : memref<10x10x4xbf16, #tpu.memory_space<vmem>>, vector<8x8x4xbf16>
    %10 = vector.shape_cast %9 : vector<8x8x4xbf16> to vector<64x4xbf16>
    %c0_21 = arith.constant 0 : index
    %c1_22 = arith.constant 1 : index
    %c0_23 = arith.constant 0 : index
    %11 = vector.load %arg13[%c0_21, %c1_22, %c0_23] : memref<10x10x4xbf16, #tpu.memory_space<vmem>>, vector<8x8x4xbf16>
    %12 = vector.shape_cast %11 : vector<8x8x4xbf16> to vector<64x4xbf16>
    %c0_24 = arith.constant 0 : index
    %c2 = arith.constant 2 : index
    %c0_25 = arith.constant 0 : index
    %13 = vector.load %arg13[%c0_24, %c2, %c0_25] : memref<10x10x4xbf16, #tpu.memory_space<vmem>>, vector<8x8x4xbf16>
    %14 = vector.shape_cast %13 : vector<8x8x4xbf16> to vector<64x4xbf16>
    %c1_26 = arith.constant 1 : index
    %c0_27 = arith.constant 0 : index
    %c0_28 = arith.constant 0 : index
    %15 = vector.load %arg13[%c1_26, %c0_27, %c0_28] : memref<10x10x4xbf16, #tpu.memory_space<vmem>>, vector<8x8x4xbf16>
    %16 = vector.shape_cast %15 : vector<8x8x4xbf16> to vector<64x4xbf16>
    %c1_29 = arith.constant 1 : index
    %c1_30 = arith.constant 1 : index
    %c0_31 = arith.constant 0 : index
    %17 = vector.load %arg13[%c1_29, %c1_30, %c0_31] : memref<10x10x4xbf16, #tpu.memory_space<vmem>>, vector<8x8x4xbf16>
    %18 = vector.shape_cast %17 : vector<8x8x4xbf16> to vector<64x4xbf16>
    %c1_32 = arith.constant 1 : index
    %c2_33 = arith.constant 2 : index
    %c0_34 = arith.constant 0 : index
    %19 = vector.load %arg13[%c1_32, %c2_33, %c0_34] : memref<10x10x4xbf16, #tpu.memory_space<vmem>>, vector<8x8x4xbf16>
    %20 = vector.shape_cast %19 : vector<8x8x4xbf16> to vector<64x4xbf16>
    %c2_35 = arith.constant 2 : index
    %c0_36 = arith.constant 0 : index
    %c0_37 = arith.constant 0 : index
    %21 = vector.load %arg13[%c2_35, %c0_36, %c0_37] : memref<10x10x4xbf16, #tpu.memory_space<vmem>>, vector<8x8x4xbf16>
    %22 = vector.shape_cast %21 : vector<8x8x4xbf16> to vector<64x4xbf16>
    %c2_38 = arith.constant 2 : index
    %c1_39 = arith.constant 1 : index
    %c0_40 = arith.constant 0 : index
    %23 = vector.load %arg13[%c2_38, %c1_39, %c0_40] : memref<10x10x4xbf16, #tpu.memory_space<vmem>>, vector<8x8x4xbf16>
    %24 = vector.shape_cast %23 : vector<8x8x4xbf16> to vector<64x4xbf16>
    %c2_41 = arith.constant 2 : index
    %c2_42 = arith.constant 2 : index
    %c0_43 = arith.constant 0 : index
    %25 = vector.load %arg13[%c2_41, %c2_42, %c0_43] : memref<10x10x4xbf16, #tpu.memory_space<vmem>>, vector<8x8x4xbf16>
    %26 = vector.shape_cast %25 : vector<8x8x4xbf16> to vector<64x4xbf16>
    %27 = tpu.concatenate %10, %12, %14, %16, %18, %20, %22, %24, %26 in 1 : vector<64x4xbf16>, vector<64x4xbf16>, vector<64x4xbf16>, vector<64x4xbf16>, vector<64x4xbf16>, vector<64x4xbf16>, vector<64x4xbf16>, vector<64x4xbf16>, vector<64x4xbf16> -> vector<64x36xbf16>
    %c0_44 = arith.constant 0 : index
    %c0_45 = arith.constant 0 : index
    %28 = vector.load %arg2[%c0_44, %c0_45] : memref<36x32xbf16, #tpu.memory_space<vmem>>, vector<36x32xbf16>
    %cst_46 = arith.constant dense<0.000000e+00> : vector<64x32xf32>
    %29 = tpu.matmul %27, %28, %cst_46 {dimension_numbers = #tpu.dot_dimension_numbers<[1], [0], [0], [1], [0, 0, 1, 1], [], []>} : vector<64x36xbf16>, vector<36x32xbf16>, vector<64x32xf32> -> vector<64x32xf32>
    %c0_47 = arith.constant 0 : index
    %c0_48 = arith.constant 0 : index
    %30 = vector.load %arg3[%c0_47, %c0_48] : memref<1x32xf32, #tpu.memory_space<vmem>>, vector<1x32xf32>
    %31 = vector.broadcast %30 : vector<1x32xf32> to vector<64x32xf32>
    %32 = arith.addf %29, %31 : vector<64x32xf32>
    %33 = vector.shape_cast %32 : vector<64x32xf32> to vector<8x8x32xf32>
    %34 = arith.truncf %33 : vector<8x8x32xf32> to vector<8x8x32xbf16>
    %c1_49 = arith.constant 1 : index
    %c1_50 = arith.constant 1 : index
    %c0_51 = arith.constant 0 : index
    %35 = vector.load %arg14[%c1_49, %c1_50, %c0_51] : memref<10x10x32xbf16, #tpu.memory_space<vmem>>, vector<8x8x32xbf16>
    tpu.vector_store %arg14[%c1_49, %c1_50, %c0_51], %34 {strides = array<i32>} : memref<10x10x32xbf16, #tpu.memory_space<vmem>>, vector<8x8x32xbf16>,
    %c0_52 = arith.constant 0 : index
    %c0_53 = arith.constant 0 : index
    %c0_54 = arith.constant 0 : index
    %36 = vector.load %arg14[%c0_52, %c0_53, %c0_54] : memref<10x10x32xbf16, #tpu.memory_space<vmem>>, vector<8x8x32xbf16>
    %37 = vector.shape_cast %36 : vector<8x8x32xbf16> to vector<64x32xbf16>
    %c0_55 = arith.constant 0 : index
    %c1_56 = arith.constant 1 : index
    %c0_57 = arith.constant 0 : index
    %38 = vector.load %arg14[%c0_55, %c1_56, %c0_57] : memref<10x10x32xbf16, #tpu.memory_space<vmem>>, vector<8x8x32xbf16>
    %39 = vector.shape_cast %38 : vector<8x8x32xbf16> to vector<64x32xbf16>
    %c0_58 = arith.constant 0 : index
    %c2_59 = arith.constant 2 : index
    %c0_60 = arith.constant 0 : index
    %40 = vector.load %arg14[%c0_58, %c2_59, %c0_60] : memref<10x10x32xbf16, #tpu.memory_space<vmem>>, vector<8x8x32xbf16>
    %41 = vector.shape_cast %40 : vector<8x8x32xbf16> to vector<64x32xbf16>
    %c1_61 = arith.constant 1 : index
    %c0_62 = arith.constant 0 : index
    %c0_63 = arith.constant 0 : index
    %42 = vector.load %arg14[%c1_61, %c0_62, %c0_63] : memref<10x10x32xbf16, #tpu.memory_space<vmem>>, vector<8x8x32xbf16>
    %43 = vector.shape_cast %42 : vector<8x8x32xbf16> to vector<64x32xbf16>
    %c1_64 = arith.constant 1 : index
    %c1_65 = arith.constant 1 : index
    %c0_66 = arith.constant 0 : index
    %44 = vector.load %arg14[%c1_64, %c1_65, %c0_66] : memref<10x10x32xbf16, #tpu.memory_space<vmem>>, vector<8x8x32xbf16>
    %45 = vector.shape_cast %44 : vector<8x8x32xbf16> to vector<64x32xbf16>
    %c1_67 = arith.constant 1 : index
    %c2_68 = arith.constant 2 : index
    %c0_69 = arith.constant 0 : index
    %46 = vector.load %arg14[%c1_67, %c2_68, %c0_69] : memref<10x10x32xbf16, #tpu.memory_space<vmem>>, vector<8x8x32xbf16>
    %47 = vector.shape_cast %46 : vector<8x8x32xbf16> to vector<64x32xbf16>
    %c2_70 = arith.constant 2 : index
    %c0_71 = arith.constant 0 : index
    %c0_72 = arith.constant 0 : index
    %48 = vector.load %arg14[%c2_70, %c0_71, %c0_72] : memref<10x10x32xbf16, #tpu.memory_space<vmem>>, vector<8x8x32xbf16>
    %49 = vector.shape_cast %48 : vector<8x8x32xbf16> to vector<64x32xbf16>
    %c2_73 = arith.constant 2 : index
    %c1_74 = arith.constant 1 : index
    %c0_75 = arith.constant 0 : index
    %50 = vector.load %arg14[%c2_73, %c1_74, %c0_75] : memref<10x10x32xbf16, #tpu.memory_space<vmem>>, vector<8x8x32xbf16>
    %51 = vector.shape_cast %50 : vector<8x8x32xbf16> to vector<64x32xbf16>
    %c2_76 = arith.constant 2 : index
    %c2_77 = arith.constant 2 : index
    %c0_78 = arith.constant 0 : index
    %52 = vector.load %arg14[%c2_76, %c2_77, %c0_78] : memref<10x10x32xbf16, #tpu.memory_space<vmem>>, vector<8x8x32xbf16>
    %53 = vector.shape_cast %52 : vector<8x8x32xbf16> to vector<64x32xbf16>
    %54 = tpu.concatenate %37, %39, %41, %43, %45, %47, %49, %51, %53 in 1 : vector<64x32xbf16>, vector<64x32xbf16>, vector<64x32xbf16>, vector<64x32xbf16>, vector<64x32xbf16>, vector<64x32xbf16>, vector<64x32xbf16>, vector<64x32xbf16>, vector<64x32xbf16> -> vector<64x288xbf16>
    %c0_79 = arith.constant 0 : index
    %c0_80 = arith.constant 0 : index
    %55 = vector.load %arg4[%c0_79, %c0_80] : memref<288x8xbf16, #tpu.memory_space<vmem>>, vector<288x8xbf16>
    %cst_81 = arith.constant dense<0.000000e+00> : vector<64x8xf32>
    %56 = tpu.matmul %54, %55, %cst_81 {dimension_numbers = #tpu.dot_dimension_numbers<[1], [0], [0], [1], [0, 0, 1, 1], [], []>} : vector<64x288xbf16>, vector<288x8xbf16>, vector<64x8xf32> -> vector<64x8xf32>
    %cst_82 = arith.constant 0.000000e+00 : f32
    %57 = vector.broadcast %cst_82 : f32 to vector<64x8xf32>
    %58 = arith.maximumf %56, %57 : vector<64x8xf32>
    %59 = arith.truncf %58 : vector<64x8xf32> to vector<64x8xbf16>
    %c0_83 = arith.constant 0 : index
    %c0_84 = arith.constant 0 : index
    %60 = vector.load %arg5[%c0_83, %c0_84] : memref<8x32xbf16, #tpu.memory_space<vmem>>, vector<8x32xbf16>
    %cst_85 = arith.constant dense<0.000000e+00> : vector<64x32xf32>
    %61 = tpu.matmul %59, %60, %cst_85 {dimension_numbers = #tpu.dot_dimension_numbers<[1], [0], [0], [1], [0, 0, 1, 1], [], []>} : vector<64x8xbf16>, vector<8x32xbf16>, vector<64x32xf32> -> vector<64x32xf32>
    %c1_86 = arith.constant 1 : index
    %c1_87 = arith.constant 1 : index
    %c0_88 = arith.constant 0 : index
    %62 = vector.load %arg14[%c1_86, %c1_87, %c0_88] : memref<10x10x32xbf16, #tpu.memory_space<vmem>>, vector<8x8x32xbf16>
    %63 = vector.shape_cast %62 : vector<8x8x32xbf16> to vector<64x32xbf16>
    %64 = arith.extf %63 : vector<64x32xbf16> to vector<64x32xf32>
    %65 = arith.addf %64, %61 : vector<64x32xf32>
    %66 = vector.shape_cast %65 : vector<64x32xf32> to vector<8x8x32xf32>
    %67 = arith.truncf %66 : vector<8x8x32xf32> to vector<8x8x32xbf16>
    %c1_89 = arith.constant 1 : index
    %c1_90 = arith.constant 1 : index
    %c0_91 = arith.constant 0 : index
    %68 = vector.load %arg14[%c1_89, %c1_90, %c0_91] : memref<10x10x32xbf16, #tpu.memory_space<vmem>>, vector<8x8x32xbf16>
    tpu.vector_store %arg14[%c1_89, %c1_90, %c0_91], %67 {strides = array<i32>} : memref<10x10x32xbf16, #tpu.memory_space<vmem>>, vector<8x8x32xbf16>,
    %c0_92 = arith.constant 0 : index
    %c0_93 = arith.constant 0 : index
    %c0_94 = arith.constant 0 : index
    %69 = vector.load %arg14[%c0_92, %c0_93, %c0_94] : memref<10x10x32xbf16, #tpu.memory_space<vmem>>, vector<8x8x32xbf16>
    %70 = vector.shape_cast %69 : vector<8x8x32xbf16> to vector<64x32xbf16>
    %c0_95 = arith.constant 0 : index
    %c1_96 = arith.constant 1 : index
    %c0_97 = arith.constant 0 : index
    %71 = vector.load %arg14[%c0_95, %c1_96, %c0_97] : memref<10x10x32xbf16, #tpu.memory_space<vmem>>, vector<8x8x32xbf16>
    %72 = vector.shape_cast %71 : vector<8x8x32xbf16> to vector<64x32xbf16>
    %c0_98 = arith.constant 0 : index
    %c2_99 = arith.constant 2 : index
    %c0_100 = arith.constant 0 : index
    %73 = vector.load %arg14[%c0_98, %c2_99, %c0_100] : memref<10x10x32xbf16, #tpu.memory_space<vmem>>, vector<8x8x32xbf16>
    %74 = vector.shape_cast %73 : vector<8x8x32xbf16> to vector<64x32xbf16>
    %c1_101 = arith.constant 1 : index
    %c0_102 = arith.constant 0 : index
    %c0_103 = arith.constant 0 : index
    %75 = vector.load %arg14[%c1_101, %c0_102, %c0_103] : memref<10x10x32xbf16, #tpu.memory_space<vmem>>, vector<8x8x32xbf16>
    %76 = vector.shape_cast %75 : vector<8x8x32xbf16> to vector<64x32xbf16>
    %c1_104 = arith.constant 1 : index
    %c1_105 = arith.constant 1 : index
    %c0_106 = arith.constant 0 : index
    %77 = vector.load %arg14[%c1_104, %c1_105, %c0_106] : memref<10x10x32xbf16, #tpu.memory_space<vmem>>, vector<8x8x32xbf16>
    %78 = vector.shape_cast %77 : vector<8x8x32xbf16> to vector<64x32xbf16>
    %c1_107 = arith.constant 1 : index
    %c2_108 = arith.constant 2 : index
    %c0_109 = arith.constant 0 : index
    %79 = vector.load %arg14[%c1_107, %c2_108, %c0_109] : memref<10x10x32xbf16, #tpu.memory_space<vmem>>, vector<8x8x32xbf16>
    %80 = vector.shape_cast %79 : vector<8x8x32xbf16> to vector<64x32xbf16>
    %c2_110 = arith.constant 2 : index
    %c0_111 = arith.constant 0 : index
    %c0_112 = arith.constant 0 : index
    %81 = vector.load %arg14[%c2_110, %c0_111, %c0_112] : memref<10x10x32xbf16, #tpu.memory_space<vmem>>, vector<8x8x32xbf16>
    %82 = vector.shape_cast %81 : vector<8x8x32xbf16> to vector<64x32xbf16>
    %c2_113 = arith.constant 2 : index
    %c1_114 = arith.constant 1 : index
    %c0_115 = arith.constant 0 : index
    %83 = vector.load %arg14[%c2_113, %c1_114, %c0_115] : memref<10x10x32xbf16, #tpu.memory_space<vmem>>, vector<8x8x32xbf16>
    %84 = vector.shape_cast %83 : vector<8x8x32xbf16> to vector<64x32xbf16>
    %c2_116 = arith.constant 2 : index
    %c2_117 = arith.constant 2 : index
    %c0_118 = arith.constant 0 : index
    %85 = vector.load %arg14[%c2_116, %c2_117, %c0_118] : memref<10x10x32xbf16, #tpu.memory_space<vmem>>, vector<8x8x32xbf16>
    %86 = vector.shape_cast %85 : vector<8x8x32xbf16> to vector<64x32xbf16>
    %87 = tpu.concatenate %70, %72, %74, %76, %78, %80, %82, %84, %86 in 1 : vector<64x32xbf16>, vector<64x32xbf16>, vector<64x32xbf16>, vector<64x32xbf16>, vector<64x32xbf16>, vector<64x32xbf16>, vector<64x32xbf16>, vector<64x32xbf16>, vector<64x32xbf16> -> vector<64x288xbf16>
    %c0_119 = arith.constant 0 : index
    %c0_120 = arith.constant 0 : index
    %88 = vector.load %arg6[%c0_119, %c0_120] : memref<288x8xbf16, #tpu.memory_space<vmem>>, vector<288x8xbf16>
    %cst_121 = arith.constant dense<0.000000e+00> : vector<64x8xf32>
    %89 = tpu.matmul %87, %88, %cst_121 {dimension_numbers = #tpu.dot_dimension_numbers<[1], [0], [0], [1], [0, 0, 1, 1], [], []>} : vector<64x288xbf16>, vector<288x8xbf16>, vector<64x8xf32> -> vector<64x8xf32>
    %cst_122 = arith.constant 0.000000e+00 : f32
    %90 = vector.broadcast %cst_122 : f32 to vector<64x8xf32>
    %91 = arith.maximumf %89, %90 : vector<64x8xf32>
    %92 = arith.truncf %91 : vector<64x8xf32> to vector<64x8xbf16>
    %c0_123 = arith.constant 0 : index
    %c0_124 = arith.constant 0 : index
    %93 = vector.load %arg7[%c0_123, %c0_124] : memref<8x32xbf16, #tpu.memory_space<vmem>>, vector<8x32xbf16>
    %cst_125 = arith.constant dense<0.000000e+00> : vector<64x32xf32>
    %94 = tpu.matmul %92, %93, %cst_125 {dimension_numbers = #tpu.dot_dimension_numbers<[1], [0], [0], [1], [0, 0, 1, 1], [], []>} : vector<64x8xbf16>, vector<8x32xbf16>, vector<64x32xf32> -> vector<64x32xf32>
    %c1_126 = arith.constant 1 : index
    %c1_127 = arith.constant 1 : index
    %c0_128 = arith.constant 0 : index
    %95 = vector.load %arg14[%c1_126, %c1_127, %c0_128] : memref<10x10x32xbf16, #tpu.memory_space<vmem>>, vector<8x8x32xbf16>
    %96 = vector.shape_cast %95 : vector<8x8x32xbf16> to vector<64x32xbf16>
    %97 = arith.extf %96 : vector<64x32xbf16> to vector<64x32xf32>
    %98 = arith.addf %97, %94 : vector<64x32xf32>
    %cst_129 = arith.constant 0.000000e+00 : f32
    %99 = vector.broadcast %cst_129 : f32 to vector<64x32xf32>
    %100 = arith.maximumf %98, %99 : vector<64x32xf32>
    %101 = vector.shape_cast %100 : vector<64x32xf32> to vector<8x8x32xf32>
    %102 = arith.truncf %101 : vector<8x8x32xf32> to vector<8x8x32xbf16>
    %c1_130 = arith.constant 1 : index
    %c1_131 = arith.constant 1 : index
    %c0_132 = arith.constant 0 : index
    %103 = vector.load %arg14[%c1_130, %c1_131, %c0_132] : memref<10x10x32xbf16, #tpu.memory_space<vmem>>, vector<8x8x32xbf16>
    tpu.vector_store %arg14[%c1_130, %c1_131, %c0_132], %102 {strides = array<i32>} : memref<10x10x32xbf16, #tpu.memory_space<vmem>>, vector<8x8x32xbf16>,
    %c0_133 = arith.constant 0 : index
    %c0_134 = arith.constant 0 : index
    %c0_135 = arith.constant 0 : index
    %104 = vector.load %arg14[%c0_133, %c0_134, %c0_135] : memref<10x10x32xbf16, #tpu.memory_space<vmem>>, vector<8x8x32xbf16>
    %105 = vector.shape_cast %104 : vector<8x8x32xbf16> to vector<64x32xbf16>
    %c0_136 = arith.constant 0 : index
    %c1_137 = arith.constant 1 : index
    %c0_138 = arith.constant 0 : index
    %106 = vector.load %arg14[%c0_136, %c1_137, %c0_138] : memref<10x10x32xbf16, #tpu.memory_space<vmem>>, vector<8x8x32xbf16>
    %107 = vector.shape_cast %106 : vector<8x8x32xbf16> to vector<64x32xbf16>
    %c0_139 = arith.constant 0 : index
    %c2_140 = arith.constant 2 : index
    %c0_141 = arith.constant 0 : index
    %108 = vector.load %arg14[%c0_139, %c2_140, %c0_141] : memref<10x10x32xbf16, #tpu.memory_space<vmem>>, vector<8x8x32xbf16>
    %109 = vector.shape_cast %108 : vector<8x8x32xbf16> to vector<64x32xbf16>
    %c1_142 = arith.constant 1 : index
    %c0_143 = arith.constant 0 : index
    %c0_144 = arith.constant 0 : index
    %110 = vector.load %arg14[%c1_142, %c0_143, %c0_144] : memref<10x10x32xbf16, #tpu.memory_space<vmem>>, vector<8x8x32xbf16>
    %111 = vector.shape_cast %110 : vector<8x8x32xbf16> to vector<64x32xbf16>
    %c1_145 = arith.constant 1 : index
    %c1_146 = arith.constant 1 : index
    %c0_147 = arith.constant 0 : index
    %112 = vector.load %arg14[%c1_145, %c1_146, %c0_147] : memref<10x10x32xbf16, #tpu.memory_space<vmem>>, vector<8x8x32xbf16>
    %113 = vector.shape_cast %112 : vector<8x8x32xbf16> to vector<64x32xbf16>
    %c1_148 = arith.constant 1 : index
    %c2_149 = arith.constant 2 : index
    %c0_150 = arith.constant 0 : index
    %114 = vector.load %arg14[%c1_148, %c2_149, %c0_150] : memref<10x10x32xbf16, #tpu.memory_space<vmem>>, vector<8x8x32xbf16>
    %115 = vector.shape_cast %114 : vector<8x8x32xbf16> to vector<64x32xbf16>
    %c2_151 = arith.constant 2 : index
    %c0_152 = arith.constant 0 : index
    %c0_153 = arith.constant 0 : index
    %116 = vector.load %arg14[%c2_151, %c0_152, %c0_153] : memref<10x10x32xbf16, #tpu.memory_space<vmem>>, vector<8x8x32xbf16>
    %117 = vector.shape_cast %116 : vector<8x8x32xbf16> to vector<64x32xbf16>
    %c2_154 = arith.constant 2 : index
    %c1_155 = arith.constant 1 : index
    %c0_156 = arith.constant 0 : index
    %118 = vector.load %arg14[%c2_154, %c1_155, %c0_156] : memref<10x10x32xbf16, #tpu.memory_space<vmem>>, vector<8x8x32xbf16>
    %119 = vector.shape_cast %118 : vector<8x8x32xbf16> to vector<64x32xbf16>
    %c2_157 = arith.constant 2 : index
    %c2_158 = arith.constant 2 : index
    %c0_159 = arith.constant 0 : index
    %120 = vector.load %arg14[%c2_157, %c2_158, %c0_159] : memref<10x10x32xbf16, #tpu.memory_space<vmem>>, vector<8x8x32xbf16>
    %121 = vector.shape_cast %120 : vector<8x8x32xbf16> to vector<64x32xbf16>
    %122 = tpu.concatenate %105, %107, %109, %111, %113, %115, %117, %119, %121 in 1 : vector<64x32xbf16>, vector<64x32xbf16>, vector<64x32xbf16>, vector<64x32xbf16>, vector<64x32xbf16>, vector<64x32xbf16>, vector<64x32xbf16>, vector<64x32xbf16>, vector<64x32xbf16> -> vector<64x288xbf16>
    %c0_160 = arith.constant 0 : index
    %c0_161 = arith.constant 0 : index
    %123 = vector.load %arg8[%c0_160, %c0_161] : memref<288x64xbf16, #tpu.memory_space<vmem>>, vector<288x64xbf16>
    %cst_162 = arith.constant dense<0.000000e+00> : vector<64x64xf32>
    %124 = tpu.matmul %122, %123, %cst_162 {dimension_numbers = #tpu.dot_dimension_numbers<[1], [0], [0], [1], [0, 0, 1, 1], [], []>} : vector<64x288xbf16>, vector<288x64xbf16>, vector<64x64xf32> -> vector<64x64xf32>
    %c0_163 = arith.constant 0 : index
    %c0_164 = arith.constant 0 : index
    %125 = vector.load %arg9[%c0_163, %c0_164] : memref<1x64xf32, #tpu.memory_space<vmem>>, vector<1x64xf32>
    %126 = vector.broadcast %125 : vector<1x64xf32> to vector<64x64xf32>
    %127 = arith.addf %124, %126 : vector<64x64xf32>
    %cst_165 = arith.constant 0.000000e+00 : f32
    %128 = vector.broadcast %cst_165 : f32 to vector<64x64xf32>
    %129 = arith.maximumf %127, %128 : vector<64x64xf32>
    %130 = vector.extract_strided_slice %129 {offsets = [0, 0], sizes = [64, 16], strides = [1, 1]} : vector<64x64xf32> to vector<64x16xf32>
    %131 = vector.shape_cast %130 : vector<64x16xf32> to vector<8x8x16xf32>
    %132 = arith.truncf %131 : vector<8x8x16xf32> to vector<8x8x16xbf16>
    %c0_166 = arith.constant 0 : index
    %c0_167 = arith.constant 0 : index
    %c1_168 = arith.constant 1 : index
    %c1_169 = arith.constant 1 : index
    %c0_170 = arith.constant 0 : index
    %133 = vector.load %arg15[%c0_166, %c0_167, %c1_168, %c1_169, %c0_170] : memref<2x2x10x10x16xbf16, #tpu.memory_space<vmem>>, vector<1x1x8x8x16xbf16>
    %134 = vector.shape_cast %133 : vector<1x1x8x8x16xbf16> to vector<8x8x16xbf16>
    %135 = vector.shape_cast %132 : vector<8x8x16xbf16> to vector<1x1x8x8x16xbf16>
    tpu.vector_store %arg15[%c0_166, %c0_167, %c1_168, %c1_169, %c0_170], %135 {strides = array<i32>} : memref<2x2x10x10x16xbf16, #tpu.memory_space<vmem>>, vector<1x1x8x8x16xbf16>,
    %136 = vector.extract_strided_slice %129 {offsets = [0, 16], sizes = [64, 16], strides = [1, 1]} : vector<64x64xf32> to vector<64x16xf32>
    %137 = vector.shape_cast %136 : vector<64x16xf32> to vector<8x8x16xf32>
    %138 = arith.truncf %137 : vector<8x8x16xf32> to vector<8x8x16xbf16>
    %c0_171 = arith.constant 0 : index
    %c1_172 = arith.constant 1 : index
    %c1_173 = arith.constant 1 : index
    %c1_174 = arith.constant 1 : index
    %c0_175 = arith.constant 0 : index
    %139 = vector.load %arg15[%c0_171, %c1_172, %c1_173, %c1_174, %c0_175] : memref<2x2x10x10x16xbf16, #tpu.memory_space<vmem>>, vector<1x1x8x8x16xbf16>
    %140 = vector.shape_cast %139 : vector<1x1x8x8x16xbf16> to vector<8x8x16xbf16>
    %141 = vector.shape_cast %138 : vector<8x8x16xbf16> to vector<1x1x8x8x16xbf16>
    tpu.vector_store %arg15[%c0_171, %c1_172, %c1_173, %c1_174, %c0_175], %141 {strides = array<i32>} : memref<2x2x10x10x16xbf16, #tpu.memory_space<vmem>>, vector<1x1x8x8x16xbf16>,
    %142 = vector.extract_strided_slice %129 {offsets = [0, 32], sizes = [64, 16], strides = [1, 1]} : vector<64x64xf32> to vector<64x16xf32>
    %143 = vector.shape_cast %142 : vector<64x16xf32> to vector<8x8x16xf32>
    %144 = arith.truncf %143 : vector<8x8x16xf32> to vector<8x8x16xbf16>
    %c1_176 = arith.constant 1 : index
    %c0_177 = arith.constant 0 : index
    %c1_178 = arith.constant 1 : index
    %c1_179 = arith.constant 1 : index
    %c0_180 = arith.constant 0 : index
    %145 = vector.load %arg15[%c1_176, %c0_177, %c1_178, %c1_179, %c0_180] : memref<2x2x10x10x16xbf16, #tpu.memory_space<vmem>>, vector<1x1x8x8x16xbf16>
    %146 = vector.shape_cast %145 : vector<1x1x8x8x16xbf16> to vector<8x8x16xbf16>
    %147 = vector.shape_cast %144 : vector<8x8x16xbf16> to vector<1x1x8x8x16xbf16>
    tpu.vector_store %arg15[%c1_176, %c0_177, %c1_178, %c1_179, %c0_180], %147 {strides = array<i32>} : memref<2x2x10x10x16xbf16, #tpu.memory_space<vmem>>, vector<1x1x8x8x16xbf16>,
    %148 = vector.extract_strided_slice %129 {offsets = [0, 48], sizes = [64, 16], strides = [1, 1]} : vector<64x64xf32> to vector<64x16xf32>
    %149 = vector.shape_cast %148 : vector<64x16xf32> to vector<8x8x16xf32>
    %150 = arith.truncf %149 : vector<8x8x16xf32> to vector<8x8x16xbf16>
    %c1_181 = arith.constant 1 : index
    %c1_182 = arith.constant 1 : index
    %c1_183 = arith.constant 1 : index
    %c1_184 = arith.constant 1 : index
    %c0_185 = arith.constant 0 : index
    %151 = vector.load %arg15[%c1_181, %c1_182, %c1_183, %c1_184, %c0_185] : memref<2x2x10x10x16xbf16, #tpu.memory_space<vmem>>, vector<1x1x8x8x16xbf16>
    %152 = vector.shape_cast %151 : vector<1x1x8x8x16xbf16> to vector<8x8x16xbf16>
    %153 = vector.shape_cast %150 : vector<8x8x16xbf16> to vector<1x1x8x8x16xbf16>
    tpu.vector_store %arg15[%c1_181, %c1_182, %c1_183, %c1_184, %c0_185], %153 {strides = array<i32>} : memref<2x2x10x10x16xbf16, #tpu.memory_space<vmem>>, vector<1x1x8x8x16xbf16>,
    %c1_186 = arith.constant 1 : index
    %c1_187 = arith.constant 1 : index
    %c0_188 = arith.constant 0 : index
    %c0_189 = arith.constant 0 : index
    %c0_190 = arith.constant 0 : index
    %154 = vector.load %arg15[%c1_186, %c1_187, %c0_188, %c0_189, %c0_190] : memref<2x2x10x10x16xbf16, #tpu.memory_space<vmem>>, vector<1x1x8x8x16xbf16>
    %155 = vector.shape_cast %154 : vector<1x1x8x8x16xbf16> to vector<8x8x16xbf16>
    %156 = vector.shape_cast %155 : vector<8x8x16xbf16> to vector<64x16xbf16>
    %c1_191 = arith.constant 1 : index
    %c0_192 = arith.constant 0 : index
    %c0_193 = arith.constant 0 : index
    %c1_194 = arith.constant 1 : index
    %c0_195 = arith.constant 0 : index
    %157 = vector.load %arg15[%c1_191, %c0_192, %c0_193, %c1_194, %c0_195] : memref<2x2x10x10x16xbf16, #tpu.memory_space<vmem>>, vector<1x1x8x8x16xbf16>
    %158 = vector.shape_cast %157 : vector<1x1x8x8x16xbf16> to vector<8x8x16xbf16>
    %159 = vector.shape_cast %158 : vector<8x8x16xbf16> to vector<64x16xbf16>
    %c1_196 = arith.constant 1 : index
    %c1_197 = arith.constant 1 : index
    %c0_198 = arith.constant 0 : index
    %c1_199 = arith.constant 1 : index
    %c0_200 = arith.constant 0 : index
    %160 = vector.load %arg15[%c1_196, %c1_197, %c0_198, %c1_199, %c0_200] : memref<2x2x10x10x16xbf16, #tpu.memory_space<vmem>>, vector<1x1x8x8x16xbf16>
    %161 = vector.shape_cast %160 : vector<1x1x8x8x16xbf16> to vector<8x8x16xbf16>
    %162 = vector.shape_cast %161 : vector<8x8x16xbf16> to vector<64x16xbf16>
    %c0_201 = arith.constant 0 : index
    %c1_202 = arith.constant 1 : index
    %c1_203 = arith.constant 1 : index
    %c0_204 = arith.constant 0 : index
    %c0_205 = arith.constant 0 : index
    %163 = vector.load %arg15[%c0_201, %c1_202, %c1_203, %c0_204, %c0_205] : memref<2x2x10x10x16xbf16, #tpu.memory_space<vmem>>, vector<1x1x8x8x16xbf16>
    %164 = vector.shape_cast %163 : vector<1x1x8x8x16xbf16> to vector<8x8x16xbf16>
    %165 = vector.shape_cast %164 : vector<8x8x16xbf16> to vector<64x16xbf16>
    %c0_206 = arith.constant 0 : index
    %c0_207 = arith.constant 0 : index
    %c1_208 = arith.constant 1 : index
    %c1_209 = arith.constant 1 : index
    %c0_210 = arith.constant 0 : index
    %166 = vector.load %arg15[%c0_206, %c0_207, %c1_208, %c1_209, %c0_210] : memref<2x2x10x10x16xbf16, #tpu.memory_space<vmem>>, vector<1x1x8x8x16xbf16>
    %167 = vector.shape_cast %166 : vector<1x1x8x8x16xbf16> to vector<8x8x16xbf16>
    %168 = vector.shape_cast %167 : vector<8x8x16xbf16> to vector<64x16xbf16>
    %c0_211 = arith.constant 0 : index
    %c1_212 = arith.constant 1 : index
    %c1_213 = arith.constant 1 : index
    %c1_214 = arith.constant 1 : index
    %c0_215 = arith.constant 0 : index
    %169 = vector.load %arg15[%c0_211, %c1_212, %c1_213, %c1_214, %c0_215] : memref<2x2x10x10x16xbf16, #tpu.memory_space<vmem>>, vector<1x1x8x8x16xbf16>
    %170 = vector.shape_cast %169 : vector<1x1x8x8x16xbf16> to vector<8x8x16xbf16>
    %171 = vector.shape_cast %170 : vector<8x8x16xbf16> to vector<64x16xbf16>
    %c1_216 = arith.constant 1 : index
    %c1_217 = arith.constant 1 : index
    %c1_218 = arith.constant 1 : index
    %c0_219 = arith.constant 0 : index
    %c0_220 = arith.constant 0 : index
    %172 = vector.load %arg15[%c1_216, %c1_217, %c1_218, %c0_219, %c0_220] : memref<2x2x10x10x16xbf16, #tpu.memory_space<vmem>>, vector<1x1x8x8x16xbf16>
    %173 = vector.shape_cast %172 : vector<1x1x8x8x16xbf16> to vector<8x8x16xbf16>
    %174 = vector.shape_cast %173 : vector<8x8x16xbf16> to vector<64x16xbf16>
    %c1_221 = arith.constant 1 : index
    %c0_222 = arith.constant 0 : index
    %c1_223 = arith.constant 1 : index
    %c1_224 = arith.constant 1 : index
    %c0_225 = arith.constant 0 : index
    %175 = vector.load %arg15[%c1_221, %c0_222, %c1_223, %c1_224, %c0_225] : memref<2x2x10x10x16xbf16, #tpu.memory_space<vmem>>, vector<1x1x8x8x16xbf16>
    %176 = vector.shape_cast %175 : vector<1x1x8x8x16xbf16> to vector<8x8x16xbf16>
    %177 = vector.shape_cast %176 : vector<8x8x16xbf16> to vector<64x16xbf16>
    %c1_226 = arith.constant 1 : index
    %c1_227 = arith.constant 1 : index
    %c1_228 = arith.constant 1 : index
    %c1_229 = arith.constant 1 : index
    %c0_230 = arith.constant 0 : index
    %178 = vector.load %arg15[%c1_226, %c1_227, %c1_228, %c1_229, %c0_230] : memref<2x2x10x10x16xbf16, #tpu.memory_space<vmem>>, vector<1x1x8x8x16xbf16>
    %179 = vector.shape_cast %178 : vector<1x1x8x8x16xbf16> to vector<8x8x16xbf16>
    %180 = vector.shape_cast %179 : vector<8x8x16xbf16> to vector<64x16xbf16>
    %181 = tpu.concatenate %156, %159, %162, %165, %168, %171, %174, %177, %180 in 1 : vector<64x16xbf16>, vector<64x16xbf16>, vector<64x16xbf16>, vector<64x16xbf16>, vector<64x16xbf16>, vector<64x16xbf16>, vector<64x16xbf16>, vector<64x16xbf16>, vector<64x16xbf16> -> vector<64x144xbf16>
    %c0_231 = arith.constant 0 : index
    %c0_232 = arith.constant 0 : index
    %182 = vector.load %arg10[%c0_231, %c0_232] : memref<144x12xbf16, #tpu.memory_space<vmem>>, vector<144x12xbf16>
    %cst_233 = arith.constant dense<0.000000e+00> : vector<64x12xf32>
    %183 = tpu.matmul %181, %182, %cst_233 {dimension_numbers = #tpu.dot_dimension_numbers<[1], [0], [0], [1], [0, 0, 1, 1], [], []>} : vector<64x144xbf16>, vector<144x12xbf16>, vector<64x12xf32> -> vector<64x12xf32>
    %c0_234 = arith.constant 0 : index
    %c0_235 = arith.constant 0 : index
    %184 = vector.load %arg11[%c0_234, %c0_235] : memref<1x12xf32, #tpu.memory_space<vmem>>, vector<1x12xf32>
    %185 = vector.broadcast %184 : vector<1x12xf32> to vector<64x12xf32>
    %186 = arith.addf %183, %185 : vector<64x12xf32>
    %187 = vector.shape_cast %186 : vector<64x12xf32> to vector<8x8x12xf32>
    %c0_236 = arith.constant 0 : index
    %c0_237 = arith.constant 0 : index
    %c0_238 = arith.constant 0 : index
    %c0_239 = arith.constant 0 : index
    %c0_240 = arith.constant 0 : index
    %c0_241 = arith.constant 0 : index
    %188 = vector.load %arg12[%c0_236, %c0_237, %c0_238, %c0_239, %c0_240, %c0_241] : memref<1x2x2x8x8x12xf32, #tpu.memory_space<vmem>>, vector<1x1x1x8x8x12xf32>
    %189 = vector.shape_cast %188 : vector<1x1x1x8x8x12xf32> to vector<8x8x12xf32>
    %190 = vector.shape_cast %187 : vector<8x8x12xf32> to vector<1x1x1x8x8x12xf32>
    tpu.vector_store %arg12[%c0_236, %c0_237, %c0_238, %c0_239, %c0_240, %c0_241], %190 {strides = array<i32>} : memref<1x2x2x8x8x12xf32, #tpu.memory_space<vmem>>, vector<1x1x1x8x8x12xf32>,
    %c1_242 = arith.constant 1 : index
    %c0_243 = arith.constant 0 : index
    %c0_244 = arith.constant 0 : index
    %c1_245 = arith.constant 1 : index
    %c0_246 = arith.constant 0 : index
    %191 = vector.load %arg15[%c1_242, %c0_243, %c0_244, %c1_245, %c0_246] : memref<2x2x10x10x16xbf16, #tpu.memory_space<vmem>>, vector<1x1x8x8x16xbf16>
    %192 = vector.shape_cast %191 : vector<1x1x8x8x16xbf16> to vector<8x8x16xbf16>
    %193 = vector.shape_cast %192 : vector<8x8x16xbf16> to vector<64x16xbf16>
    %c1_247 = arith.constant 1 : index
    %c1_248 = arith.constant 1 : index
    %c0_249 = arith.constant 0 : index
    %c1_250 = arith.constant 1 : index
    %c0_251 = arith.constant 0 : index
    %194 = vector.load %arg15[%c1_247, %c1_248, %c0_249, %c1_250, %c0_251] : memref<2x2x10x10x16xbf16, #tpu.memory_space<vmem>>, vector<1x1x8x8x16xbf16>
    %195 = vector.shape_cast %194 : vector<1x1x8x8x16xbf16> to vector<8x8x16xbf16>
    %196 = vector.shape_cast %195 : vector<8x8x16xbf16> to vector<64x16xbf16>
    %c1_252 = arith.constant 1 : index
    %c0_253 = arith.constant 0 : index
    %c0_254 = arith.constant 0 : index
    %c2_255 = arith.constant 2 : index
    %c0_256 = arith.constant 0 : index
    %197 = vector.load %arg15[%c1_252, %c0_253, %c0_254, %c2_255, %c0_256] : memref<2x2x10x10x16xbf16, #tpu.memory_space<vmem>>, vector<1x1x8x8x16xbf16>
    %198 = vector.shape_cast %197 : vector<1x1x8x8x16xbf16> to vector<8x8x16xbf16>
    %199 = vector.shape_cast %198 : vector<8x8x16xbf16> to vector<64x16xbf16>
    %c0_257 = arith.constant 0 : index
    %c0_258 = arith.constant 0 : index
    %c1_259 = arith.constant 1 : index
    %c1_260 = arith.constant 1 : index
    %c0_261 = arith.constant 0 : index
    %200 = vector.load %arg15[%c0_257, %c0_258, %c1_259, %c1_260, %c0_261] : memref<2x2x10x10x16xbf16, #tpu.memory_space<vmem>>, vector<1x1x8x8x16xbf16>
    %201 = vector.shape_cast %200 : vector<1x1x8x8x16xbf16> to vector<8x8x16xbf16>
    %202 = vector.shape_cast %201 : vector<8x8x16xbf16> to vector<64x16xbf16>
    %c0_262 = arith.constant 0 : index
    %c1_263 = arith.constant 1 : index
    %c1_264 = arith.constant 1 : index
    %c1_265 = arith.constant 1 : index
    %c0_266 = arith.constant 0 : index
    %203 = vector.load %arg15[%c0_262, %c1_263, %c1_264, %c1_265, %c0_266] : memref<2x2x10x10x16xbf16, #tpu.memory_space<vmem>>, vector<1x1x8x8x16xbf16>
    %204 = vector.shape_cast %203 : vector<1x1x8x8x16xbf16> to vector<8x8x16xbf16>
    %205 = vector.shape_cast %204 : vector<8x8x16xbf16> to vector<64x16xbf16>
    %c0_267 = arith.constant 0 : index
    %c0_268 = arith.constant 0 : index
    %c1_269 = arith.constant 1 : index
    %c2_270 = arith.constant 2 : index
    %c0_271 = arith.constant 0 : index
    %206 = vector.load %arg15[%c0_267, %c0_268, %c1_269, %c2_270, %c0_271] : memref<2x2x10x10x16xbf16, #tpu.memory_space<vmem>>, vector<1x1x8x8x16xbf16>
    %207 = vector.shape_cast %206 : vector<1x1x8x8x16xbf16> to vector<8x8x16xbf16>
    %208 = vector.shape_cast %207 : vector<8x8x16xbf16> to vector<64x16xbf16>
    %c1_272 = arith.constant 1 : index
    %c0_273 = arith.constant 0 : index
    %c1_274 = arith.constant 1 : index
    %c1_275 = arith.constant 1 : index
    %c0_276 = arith.constant 0 : index
    %209 = vector.load %arg15[%c1_272, %c0_273, %c1_274, %c1_275, %c0_276] : memref<2x2x10x10x16xbf16, #tpu.memory_space<vmem>>, vector<1x1x8x8x16xbf16>
    %210 = vector.shape_cast %209 : vector<1x1x8x8x16xbf16> to vector<8x8x16xbf16>
    %211 = vector.shape_cast %210 : vector<8x8x16xbf16> to vector<64x16xbf16>
    %c1_277 = arith.constant 1 : index
    %c1_278 = arith.constant 1 : index
    %c1_279 = arith.constant 1 : index
    %c1_280 = arith.constant 1 : index
    %c0_281 = arith.constant 0 : index
    %212 = vector.load %arg15[%c1_277, %c1_278, %c1_279, %c1_280, %c0_281] : memref<2x2x10x10x16xbf16, #tpu.memory_space<vmem>>, vector<1x1x8x8x16xbf16>
    %213 = vector.shape_cast %212 : vector<1x1x8x8x16xbf16> to vector<8x8x16xbf16>
    %214 = vector.shape_cast %213 : vector<8x8x16xbf16> to vector<64x16xbf16>
    %c1_282 = arith.constant 1 : index
    %c0_283 = arith.constant 0 : index
    %c1_284 = arith.constant 1 : index
    %c2_285 = arith.constant 2 : index
    %c0_286 = arith.constant 0 : index
    %215 = vector.load %arg15[%c1_282, %c0_283, %c1_284, %c2_285, %c0_286] : memref<2x2x10x10x16xbf16, #tpu.memory_space<vmem>>, vector<1x1x8x8x16xbf16>
    %216 = vector.shape_cast %215 : vector<1x1x8x8x16xbf16> to vector<8x8x16xbf16>
    %217 = vector.shape_cast %216 : vector<8x8x16xbf16> to vector<64x16xbf16>
    %218 = tpu.concatenate %193, %196, %199, %202, %205, %208, %211, %214, %217 in 1 : vector<64x16xbf16>, vector<64x16xbf16>, vector<64x16xbf16>, vector<64x16xbf16>, vector<64x16xbf16>, vector<64x16xbf16>, vector<64x16xbf16>, vector<64x16xbf16>, vector<64x16xbf16> -> vector<64x144xbf16>
    %c0_287 = arith.constant 0 : index
    %c0_288 = arith.constant 0 : index
    %219 = vector.load %arg10[%c0_287, %c0_288] : memref<144x12xbf16, #tpu.memory_space<vmem>>, vector<144x12xbf16>
    %cst_289 = arith.constant dense<0.000000e+00> : vector<64x12xf32>
    %220 = tpu.matmul %218, %219, %cst_289 {dimension_numbers = #tpu.dot_dimension_numbers<[1], [0], [0], [1], [0, 0, 1, 1], [], []>} : vector<64x144xbf16>, vector<144x12xbf16>, vector<64x12xf32> -> vector<64x12xf32>
    %c0_290 = arith.constant 0 : index
    %c0_291 = arith.constant 0 : index
    %221 = vector.load %arg11[%c0_290, %c0_291] : memref<1x12xf32, #tpu.memory_space<vmem>>, vector<1x12xf32>
    %222 = vector.broadcast %221 : vector<1x12xf32> to vector<64x12xf32>
    %223 = arith.addf %220, %222 : vector<64x12xf32>
    %224 = vector.shape_cast %223 : vector<64x12xf32> to vector<8x8x12xf32>
    %c0_292 = arith.constant 0 : index
    %c0_293 = arith.constant 0 : index
    %c1_294 = arith.constant 1 : index
    %c0_295 = arith.constant 0 : index
    %c0_296 = arith.constant 0 : index
    %c0_297 = arith.constant 0 : index
    %225 = vector.load %arg12[%c0_292, %c0_293, %c1_294, %c0_295, %c0_296, %c0_297] : memref<1x2x2x8x8x12xf32, #tpu.memory_space<vmem>>, vector<1x1x1x8x8x12xf32>
    %226 = vector.shape_cast %225 : vector<1x1x1x8x8x12xf32> to vector<8x8x12xf32>
    %227 = vector.shape_cast %224 : vector<8x8x12xf32> to vector<1x1x1x8x8x12xf32>
    tpu.vector_store %arg12[%c0_292, %c0_293, %c1_294, %c0_295, %c0_296, %c0_297], %227 {strides = array<i32>} : memref<1x2x2x8x8x12xf32, #tpu.memory_space<vmem>>, vector<1x1x1x8x8x12xf32>,
    %c0_298 = arith.constant 0 : index
    %c1_299 = arith.constant 1 : index
    %c1_300 = arith.constant 1 : index
    %c0_301 = arith.constant 0 : index
    %c0_302 = arith.constant 0 : index
    %228 = vector.load %arg15[%c0_298, %c1_299, %c1_300, %c0_301, %c0_302] : memref<2x2x10x10x16xbf16, #tpu.memory_space<vmem>>, vector<1x1x8x8x16xbf16>
    %229 = vector.shape_cast %228 : vector<1x1x8x8x16xbf16> to vector<8x8x16xbf16>
    %230 = vector.shape_cast %229 : vector<8x8x16xbf16> to vector<64x16xbf16>
    %c0_303 = arith.constant 0 : index
    %c0_304 = arith.constant 0 : index
    %c1_305 = arith.constant 1 : index
    %c1_306 = arith.constant 1 : index
    %c0_307 = arith.constant 0 : index
    %231 = vector.load %arg15[%c0_303, %c0_304, %c1_305, %c1_306, %c0_307] : memref<2x2x10x10x16xbf16, #tpu.memory_space<vmem>>, vector<1x1x8x8x16xbf16>
    %232 = vector.shape_cast %231 : vector<1x1x8x8x16xbf16> to vector<8x8x16xbf16>
    %233 = vector.shape_cast %232 : vector<8x8x16xbf16> to vector<64x16xbf16>
    %c0_308 = arith.constant 0 : index
    %c1_309 = arith.constant 1 : index
    %c1_310 = arith.constant 1 : index
    %c1_311 = arith.constant 1 : index
    %c0_312 = arith.constant 0 : index
    %234 = vector.load %arg15[%c0_308, %c1_309, %c1_310, %c1_311, %c0_312] : memref<2x2x10x10x16xbf16, #tpu.memory_space<vmem>>, vector<1x1x8x8x16xbf16>
    %235 = vector.shape_cast %234 : vector<1x1x8x8x16xbf16> to vector<8x8x16xbf16>
    %236 = vector.shape_cast %235 : vector<8x8x16xbf16> to vector<64x16xbf16>
    %c1_313 = arith.constant 1 : index
    %c1_314 = arith.constant 1 : index
    %c1_315 = arith.constant 1 : index
    %c0_316 = arith.constant 0 : index
    %c0_317 = arith.constant 0 : index
    %237 = vector.load %arg15[%c1_313, %c1_314, %c1_315, %c0_316, %c0_317] : memref<2x2x10x10x16xbf16, #tpu.memory_space<vmem>>, vector<1x1x8x8x16xbf16>
    %238 = vector.shape_cast %237 : vector<1x1x8x8x16xbf16> to vector<8x8x16xbf16>
    %239 = vector.shape_cast %238 : vector<8x8x16xbf16> to vector<64x16xbf16>
    %c1_318 = arith.constant 1 : index
    %c0_319 = arith.constant 0 : index
    %c1_320 = arith.constant 1 : index
    %c1_321 = arith.constant 1 : index
    %c0_322 = arith.constant 0 : index
    %240 = vector.load %arg15[%c1_318, %c0_319, %c1_320, %c1_321, %c0_322] : memref<2x2x10x10x16xbf16, #tpu.memory_space<vmem>>, vector<1x1x8x8x16xbf16>
    %241 = vector.shape_cast %240 : vector<1x1x8x8x16xbf16> to vector<8x8x16xbf16>
    %242 = vector.shape_cast %241 : vector<8x8x16xbf16> to vector<64x16xbf16>
    %c1_323 = arith.constant 1 : index
    %c1_324 = arith.constant 1 : index
    %c1_325 = arith.constant 1 : index
    %c1_326 = arith.constant 1 : index
    %c0_327 = arith.constant 0 : index
    %243 = vector.load %arg15[%c1_323, %c1_324, %c1_325, %c1_326, %c0_327] : memref<2x2x10x10x16xbf16, #tpu.memory_space<vmem>>, vector<1x1x8x8x16xbf16>
    %244 = vector.shape_cast %243 : vector<1x1x8x8x16xbf16> to vector<8x8x16xbf16>
    %245 = vector.shape_cast %244 : vector<8x8x16xbf16> to vector<64x16xbf16>
    %c0_328 = arith.constant 0 : index
    %c1_329 = arith.constant 1 : index
    %c2_330 = arith.constant 2 : index
    %c0_331 = arith.constant 0 : index
    %c0_332 = arith.constant 0 : index
    %246 = vector.load %arg15[%c0_328, %c1_329, %c2_330, %c0_331, %c0_332] : memref<2x2x10x10x16xbf16, #tpu.memory_space<vmem>>, vector<1x1x8x8x16xbf16>
    %247 = vector.shape_cast %246 : vector<1x1x8x8x16xbf16> to vector<8x8x16xbf16>
    %248 = vector.shape_cast %247 : vector<8x8x16xbf16> to vector<64x16xbf16>
    %c0_333 = arith.constant 0 : index
    %c0_334 = arith.constant 0 : index
    %c2_335 = arith.constant 2 : index
    %c1_336 = arith.constant 1 : index
    %c0_337 = arith.constant 0 : index
    %249 = vector.load %arg15[%c0_333, %c0_334, %c2_335, %c1_336, %c0_337] : memref<2x2x10x10x16xbf16, #tpu.memory_space<vmem>>, vector<1x1x8x8x16xbf16>
    %250 = vector.shape_cast %249 : vector<1x1x8x8x16xbf16> to vector<8x8x16xbf16>
    %251 = vector.shape_cast %250 : vector<8x8x16xbf16> to vector<64x16xbf16>
    %c0_338 = arith.constant 0 : index
    %c1_339 = arith.constant 1 : index
    %c2_340 = arith.constant 2 : index
    %c1_341 = arith.constant 1 : index
    %c0_342 = arith.constant 0 : index
    %252 = vector.load %arg15[%c0_338, %c1_339, %c2_340, %c1_341, %c0_342] : memref<2x2x10x10x16xbf16, #tpu.memory_space<vmem>>, vector<1x1x8x8x16xbf16>
    %253 = vector.shape_cast %252 : vector<1x1x8x8x16xbf16> to vector<8x8x16xbf16>
    %254 = vector.shape_cast %253 : vector<8x8x16xbf16> to vector<64x16xbf16>
    %255 = tpu.concatenate %230, %233, %236, %239, %242, %245, %248, %251, %254 in 1 : vector<64x16xbf16>, vector<64x16xbf16>, vector<64x16xbf16>, vector<64x16xbf16>, vector<64x16xbf16>, vector<64x16xbf16>, vector<64x16xbf16>, vector<64x16xbf16>, vector<64x16xbf16> -> vector<64x144xbf16>
    %c0_343 = arith.constant 0 : index
    %c0_344 = arith.constant 0 : index
    %256 = vector.load %arg10[%c0_343, %c0_344] : memref<144x12xbf16, #tpu.memory_space<vmem>>, vector<144x12xbf16>
    %cst_345 = arith.constant dense<0.000000e+00> : vector<64x12xf32>
    %257 = tpu.matmul %255, %256, %cst_345 {dimension_numbers = #tpu.dot_dimension_numbers<[1], [0], [0], [1], [0, 0, 1, 1], [], []>} : vector<64x144xbf16>, vector<144x12xbf16>, vector<64x12xf32> -> vector<64x12xf32>
    %c0_346 = arith.constant 0 : index
    %c0_347 = arith.constant 0 : index
    %258 = vector.load %arg11[%c0_346, %c0_347] : memref<1x12xf32, #tpu.memory_space<vmem>>, vector<1x12xf32>
    %259 = vector.broadcast %258 : vector<1x12xf32> to vector<64x12xf32>
    %260 = arith.addf %257, %259 : vector<64x12xf32>
    %261 = vector.shape_cast %260 : vector<64x12xf32> to vector<8x8x12xf32>
    %c0_348 = arith.constant 0 : index
    %c1_349 = arith.constant 1 : index
    %c0_350 = arith.constant 0 : index
    %c0_351 = arith.constant 0 : index
    %c0_352 = arith.constant 0 : index
    %c0_353 = arith.constant 0 : index
    %262 = vector.load %arg12[%c0_348, %c1_349, %c0_350, %c0_351, %c0_352, %c0_353] : memref<1x2x2x8x8x12xf32, #tpu.memory_space<vmem>>, vector<1x1x1x8x8x12xf32>
    %263 = vector.shape_cast %262 : vector<1x1x1x8x8x12xf32> to vector<8x8x12xf32>
    %264 = vector.shape_cast %261 : vector<8x8x12xf32> to vector<1x1x1x8x8x12xf32>
    tpu.vector_store %arg12[%c0_348, %c1_349, %c0_350, %c0_351, %c0_352, %c0_353], %264 {strides = array<i32>} : memref<1x2x2x8x8x12xf32, #tpu.memory_space<vmem>>, vector<1x1x1x8x8x12xf32>,
    %c0_354 = arith.constant 0 : index
    %c0_355 = arith.constant 0 : index
    %c1_356 = arith.constant 1 : index
    %c1_357 = arith.constant 1 : index
    %c0_358 = arith.constant 0 : index
    %265 = vector.load %arg15[%c0_354, %c0_355, %c1_356, %c1_357, %c0_358] : memref<2x2x10x10x16xbf16, #tpu.memory_space<vmem>>, vector<1x1x8x8x16xbf16>
    %266 = vector.shape_cast %265 : vector<1x1x8x8x16xbf16> to vector<8x8x16xbf16>
    %267 = vector.shape_cast %266 : vector<8x8x16xbf16> to vector<64x16xbf16>
    %c0_359 = arith.constant 0 : index
    %c1_360 = arith.constant 1 : index
    %c1_361 = arith.constant 1 : index
    %c1_362 = arith.constant 1 : index
    %c0_363 = arith.constant 0 : index
    %268 = vector.load %arg15[%c0_359, %c1_360, %c1_361, %c1_362, %c0_363] : memref<2x2x10x10x16xbf16, #tpu.memory_space<vmem>>, vector<1x1x8x8x16xbf16>
    %269 = vector.shape_cast %268 : vector<1x1x8x8x16xbf16> to vector<8x8x16xbf16>
    %270 = vector.shape_cast %269 : vector<8x8x16xbf16> to vector<64x16xbf16>
    %c0_364 = arith.constant 0 : index
    %c0_365 = arith.constant 0 : index
    %c1_366 = arith.constant 1 : index
    %c2_367 = arith.constant 2 : index
    %c0_368 = arith.constant 0 : index
    %271 = vector.load %arg15[%c0_364, %c0_365, %c1_366, %c2_367, %c0_368] : memref<2x2x10x10x16xbf16, #tpu.memory_space<vmem>>, vector<1x1x8x8x16xbf16>
    %272 = vector.shape_cast %271 : vector<1x1x8x8x16xbf16> to vector<8x8x16xbf16>
    %273 = vector.shape_cast %272 : vector<8x8x16xbf16> to vector<64x16xbf16>
    %c1_369 = arith.constant 1 : index
    %c0_370 = arith.constant 0 : index
    %c1_371 = arith.constant 1 : index
    %c1_372 = arith.constant 1 : index
    %c0_373 = arith.constant 0 : index
    %274 = vector.load %arg15[%c1_369, %c0_370, %c1_371, %c1_372, %c0_373] : memref<2x2x10x10x16xbf16, #tpu.memory_space<vmem>>, vector<1x1x8x8x16xbf16>
    %275 = vector.shape_cast %274 : vector<1x1x8x8x16xbf16> to vector<8x8x16xbf16>
    %276 = vector.shape_cast %275 : vector<8x8x16xbf16> to vector<64x16xbf16>
    %c1_374 = arith.constant 1 : index
    %c1_375 = arith.constant 1 : index
    %c1_376 = arith.constant 1 : index
    %c1_377 = arith.constant 1 : index
    %c0_378 = arith.constant 0 : index
    %277 = vector.load %arg15[%c1_374, %c1_375, %c1_376, %c1_377, %c0_378] : memref<2x2x10x10x16xbf16, #tpu.memory_space<vmem>>, vector<1x1x8x8x16xbf16>
    %278 = vector.shape_cast %277 : vector<1x1x8x8x16xbf16> to vector<8x8x16xbf16>
    %279 = vector.shape_cast %278 : vector<8x8x16xbf16> to vector<64x16xbf16>
    %c1_379 = arith.constant 1 : index
    %c0_380 = arith.constant 0 : index
    %c1_381 = arith.constant 1 : index
    %c2_382 = arith.constant 2 : index
    %c0_383 = arith.constant 0 : index
    %280 = vector.load %arg15[%c1_379, %c0_380, %c1_381, %c2_382, %c0_383] : memref<2x2x10x10x16xbf16, #tpu.memory_space<vmem>>, vector<1x1x8x8x16xbf16>
    %281 = vector.shape_cast %280 : vector<1x1x8x8x16xbf16> to vector<8x8x16xbf16>
    %282 = vector.shape_cast %281 : vector<8x8x16xbf16> to vector<64x16xbf16>
    %c0_384 = arith.constant 0 : index
    %c0_385 = arith.constant 0 : index
    %c2_386 = arith.constant 2 : index
    %c1_387 = arith.constant 1 : index
    %c0_388 = arith.constant 0 : index
    %283 = vector.load %arg15[%c0_384, %c0_385, %c2_386, %c1_387, %c0_388] : memref<2x2x10x10x16xbf16, #tpu.memory_space<vmem>>, vector<1x1x8x8x16xbf16>
    %284 = vector.shape_cast %283 : vector<1x1x8x8x16xbf16> to vector<8x8x16xbf16>
    %285 = vector.shape_cast %284 : vector<8x8x16xbf16> to vector<64x16xbf16>
    %c0_389 = arith.constant 0 : index
    %c1_390 = arith.constant 1 : index
    %c2_391 = arith.constant 2 : index
    %c1_392 = arith.constant 1 : index
    %c0_393 = arith.constant 0 : index
    %286 = vector.load %arg15[%c0_389, %c1_390, %c2_391, %c1_392, %c0_393] : memref<2x2x10x10x16xbf16, #tpu.memory_space<vmem>>, vector<1x1x8x8x16xbf16>
    %287 = vector.shape_cast %286 : vector<1x1x8x8x16xbf16> to vector<8x8x16xbf16>
    %288 = vector.shape_cast %287 : vector<8x8x16xbf16> to vector<64x16xbf16>
    %c0_394 = arith.constant 0 : index
    %c0_395 = arith.constant 0 : index
    %c2_396 = arith.constant 2 : index
    %c2_397 = arith.constant 2 : index
    %c0_398 = arith.constant 0 : index
    %289 = vector.load %arg15[%c0_394, %c0_395, %c2_396, %c2_397, %c0_398] : memref<2x2x10x10x16xbf16, #tpu.memory_space<vmem>>, vector<1x1x8x8x16xbf16>
    %290 = vector.shape_cast %289 : vector<1x1x8x8x16xbf16> to vector<8x8x16xbf16>
    %291 = vector.shape_cast %290 : vector<8x8x16xbf16> to vector<64x16xbf16>
    %292 = tpu.concatenate %267, %270, %273, %276, %279, %282, %285, %288, %291 in 1 : vector<64x16xbf16>, vector<64x16xbf16>, vector<64x16xbf16>, vector<64x16xbf16>, vector<64x16xbf16>, vector<64x16xbf16>, vector<64x16xbf16>, vector<64x16xbf16>, vector<64x16xbf16> -> vector<64x144xbf16>
    %c0_399 = arith.constant 0 : index
    %c0_400 = arith.constant 0 : index
    %293 = vector.load %arg10[%c0_399, %c0_400] : memref<144x12xbf16, #tpu.memory_space<vmem>>, vector<144x12xbf16>
    %cst_401 = arith.constant dense<0.000000e+00> : vector<64x12xf32>
    %294 = tpu.matmul %292, %293, %cst_401 {dimension_numbers = #tpu.dot_dimension_numbers<[1], [0], [0], [1], [0, 0, 1, 1], [], []>} : vector<64x144xbf16>, vector<144x12xbf16>, vector<64x12xf32> -> vector<64x12xf32>
    %c0_402 = arith.constant 0 : index
    %c0_403 = arith.constant 0 : index
    %295 = vector.load %arg11[%c0_402, %c0_403] : memref<1x12xf32, #tpu.memory_space<vmem>>, vector<1x12xf32>
    %296 = vector.broadcast %295 : vector<1x12xf32> to vector<64x12xf32>
    %297 = arith.addf %294, %296 : vector<64x12xf32>
    %298 = vector.shape_cast %297 : vector<64x12xf32> to vector<8x8x12xf32>
    %c0_404 = arith.constant 0 : index
    %c1_405 = arith.constant 1 : index
    %c1_406 = arith.constant 1 : index
    %c0_407 = arith.constant 0 : index
    %c0_408 = arith.constant 0 : index
    %c0_409 = arith.constant 0 : index
    %299 = vector.load %arg12[%c0_404, %c1_405, %c1_406, %c0_407, %c0_408, %c0_409] : memref<1x2x2x8x8x12xf32, #tpu.memory_space<vmem>>, vector<1x1x1x8x8x12xf32>
    %300 = vector.shape_cast %299 : vector<1x1x1x8x8x12xf32> to vector<8x8x12xf32>
    %301 = vector.shape_cast %298 : vector<8x8x12xf32> to vector<1x1x1x8x8x12xf32>
    tpu.vector_store %arg12[%c0_404, %c1_405, %c1_406, %c0_407, %c0_408, %c0_409], %301 {strides = array<i32>} : memref<1x2x2x8x8x12xf32, #tpu.memory_space<vmem>>, vector<1x1x1x8x8x12xf32>,
    return
  }
  func.func @transform_0(%arg0: i32) -> (i32, i32, i32, i32) {
    %c0_i32 = arith.constant 0 : i32
    %c0_i32_0 = arith.constant 0 : i32
    %c0_i32_1 = arith.constant 0 : i32
    %c0_i32_2 = arith.constant 0 : i32
    return %arg0, %c0_i32, %c0_i32_0, %c0_i32_1 : i32, i32, i32, i32
  }
  func.func @transform_1(%arg0: i32) -> (i32, i32) {
    %c0_i32 = arith.constant 0 : i32
    %c0_i32_0 = arith.constant 0 : i32
    %c0_i32_1 = arith.constant 0 : i32
    return %c0_i32, %c0_i32_0 : i32, i32
  }
  func.func @transform_2(%arg0: i32) -> (i32, i32) {
    %c0_i32 = arith.constant 0 : i32
    %c0_i32_0 = arith.constant 0 : i32
    %c0_i32_1 = arith.constant 0 : i32
    return %c0_i32, %c0_i32_0 : i32, i32
  }
  func.func @transform_3(%arg0: i32) -> (i32, i32) {
    %c0_i32 = arith.constant 0 : i32
    %c0_i32_0 = arith.constant 0 : i32
    %c0_i32_1 = arith.constant 0 : i32
    return %c0_i32, %c0_i32_0 : i32, i32
  }
  func.func @transform_4(%arg0: i32) -> (i32, i32) {
    %c0_i32 = arith.constant 0 : i32
    %c0_i32_0 = arith.constant 0 : i32
    %c0_i32_1 = arith.constant 0 : i32
    return %c0_i32, %c0_i32_0 : i32, i32
  }
  func.func @transform_5(%arg0: i32) -> (i32, i32) {
    %c0_i32 = arith.constant 0 : i32
    %c0_i32_0 = arith.constant 0 : i32
    %c0_i32_1 = arith.constant 0 : i32
    return %c0_i32, %c0_i32_0 : i32, i32
  }
  func.func @transform_6(%arg0: i32) -> (i32, i32) {
    %c0_i32 = arith.constant 0 : i32
    %c0_i32_0 = arith.constant 0 : i32
    %c0_i32_1 = arith.constant 0 : i32
    return %c0_i32, %c0_i32_0 : i32, i32
  }
  func.func @transform_7(%arg0: i32) -> (i32, i32) {
    %c0_i32 = arith.constant 0 : i32
    %c0_i32_0 = arith.constant 0 : i32
    %c0_i32_1 = arith.constant 0 : i32
    return %c0_i32, %c0_i32_0 : i32, i32
  }
  func.func @transform_8(%arg0: i32) -> (i32, i32) {
    %c0_i32 = arith.constant 0 : i32
    %c0_i32_0 = arith.constant 0 : i32
    %c0_i32_1 = arith.constant 0 : i32
    return %c0_i32, %c0_i32_0 : i32, i32
  }
  func.func @transform_9(%arg0: i32) -> (i32, i32) {
    %c0_i32 = arith.constant 0 : i32
    %c0_i32_0 = arith.constant 0 : i32
    %c0_i32_1 = arith.constant 0 : i32
    return %c0_i32, %c0_i32_0 : i32, i32
  }
  func.func @transform_10(%arg0: i32) -> (i32, i32) {
    %c0_i32 = arith.constant 0 : i32
    %c0_i32_0 = arith.constant 0 : i32
    %c0_i32_1 = arith.constant 0 : i32
    return %c0_i32, %c0_i32_0 : i32, i32
  }
  func.func @transform_11(%arg0: i32) -> (i32, i32, i32, i32, i32, i32) {
    %c0_i32 = arith.constant 0 : i32
    %c0_i32_0 = arith.constant 0 : i32
    %c0_i32_1 = arith.constant 0 : i32
    %c0_i32_2 = arith.constant 0 : i32
    %c0_i32_3 = arith.constant 0 : i32
    %c0_i32_4 = arith.constant 0 : i32
    return %arg0, %c0_i32, %c0_i32_0, %c0_i32_1, %c0_i32_2, %c0_i32_3 : i32, i32, i32, i32, i32, i32
  }
}

</mosaic_0001>

<llo_original>
// kernel: decoder_forward.1
$region0: #{decoder_forward.1}
  #allocation0 [shape = 'u32[]', space=smem, size = 0x4, offset = 0x4, fixed_abs, tag = 'smem constant byte address 0x4 - core index']
  #allocation1 [shape = 'u32[72,128]{1,0:T(1,128)}', space=vmem, size = 0x9000, scoped, tag = 'internal scratch']
  #allocation2 [shape = 'bf16[10,10,4]{2,1,0:T(8,128)(2,1)}', space=vmem, size = 0xa000, scoped, tag = 'scratch operand']
  #allocation3 [shape = 'bf16[10,10,32]{2,1,0:T(8,128)(2,1)}', space=vmem, size = 0xa000, scoped, tag = 'scratch operand']
  #allocation4 [shape = 'bf16[2,2,10,10,16]{4,3,2,1,0:T(8,128)(2,1)}', space=vmem, size = 0x28000, scoped, tag = 'scratch operand']
  %s0 = inlined_call_operand.vmem [shape: bf16[2,8,8,4], index: 0, kind: input, shape index: {}]
  %s1 = inlined_call_operand.vmem [shape: bf16[36,32], index: 1, kind: input, shape index: {}]
  %s2 = inlined_call_operand.hbm [shape: f32[1,32], index: 2, kind: input, shape index: {}]
  %s3 = inlined_call_operand.vmem [shape: bf16[288,8], index: 3, kind: input, shape index: {}]
  %s4 = inlined_call_operand.hbm [shape: bf16[8,32], index: 4, kind: input, shape index: {}]
  %s5 = inlined_call_operand.vmem [shape: bf16[288,8], index: 5, kind: input, shape index: {}]
  %s6 = inlined_call_operand.hbm [shape: bf16[8,32], index: 6, kind: input, shape index: {}]
  %s7 = inlined_call_operand.vmem [shape: bf16[288,64], index: 7, kind: input, shape index: {}]
  %s8 = inlined_call_operand.hbm [shape: f32[1,64], index: 8, kind: input, shape index: {}]
  %s9 = inlined_call_operand.vmem [shape: bf16[144,12], index: 9, kind: input, shape index: {}]
  %s10 = inlined_call_operand.hbm [shape: f32[1,12], index: 10, kind: input, shape index: {}]
  %s11 = inlined_call_operand.vmem [shape: f32[2,2,2,8,8,12], index: 11, kind: output, shape index: {}]
  %s12 = sld [smem:[#allocation0]]
  $region97: #{decoder_forward.1} parent=0
    _
  %s14 = ssub.s32 1, %s12
  %s15 = scalar_select 0, %s14, %s12
  $region1: #{decoder_forward.1} parent=0
    #allocation5 [shape = 'u8[512]{0}', space=vmem, size = 0x400, scoped, tag = 'input window, operand 2, single buffered']
    #allocation6 [shape = 's32[2]{0}', space=sflag, size = 0x8, scoped, tag = 'scoped memory for decoder_forward.1']
    #allocation7 [shape = 'u8[2048]{0}', space=vmem, size = 0x800, scoped, tag = 'input window, operand 4, single buffered']
    #allocation8 [shape = 's32[1]{0}', space=sflag, size = 0x4, scoped, tag = 'scoped memory for decoder_forward.1']
    #allocation9 [shape = 'u8[2048]{0}', space=vmem, size = 0x800, scoped, tag = 'input window, operand 6, single buffered']
    #allocation10 [shape = 'u8[512]{0}', space=vmem, size = 0x400, scoped, tag = 'input window, operand 8, single buffered']
    #allocation11 [shape = 's32[1]{0}', space=sflag, size = 0x4, scoped, tag = 'scoped memory for decoder_forward.1']
    #allocation12 [shape = 'u8[512]{0}', space=vmem, size = 0x400, scoped, tag = 'input window, operand 10, single buffered']
    %16 = vsyncpa [#allocation6], 0
    %17 = vsyncpa [#allocation8], 0
    %18 = vsyncpa [#allocation11], 0
    loop: start=0, step=1, limit=4
    $region2: #{decoder_forward.1} parent=1 // loop_pre_header
      _
    $region3: #{decoder_forward.1} parent=1 // loop_header
      %s20 = sphi 0, %s24
      %p21 = scmp.ge.s32.totalorder %s20, 4
      %s30 = sphi 0, %s32
      %s33 = sphi 0, %s30
      %s34 = sphi 0, %s33
      %s50 = sphi 0, %s34
      %s54 = sphi 0, %s54
      %s56 = sphi 0, %s54
      %s57 = sphi 0, %s56
      %s71 = sphi 0, %s57
      %s75 = sphi 0, %s75
      %s77 = sphi 0, %s75
      %s78 = sphi 0, %s77
      %s92 = sphi 0, %s78
      %s96 = sphi 0, %s96
      %s98 = sphi 0, %s96
      %s99 = sphi 0, %s98
      %s113 = sphi 0, %s99
      %s117 = sphi 0, %s117
      %s119 = sphi 0, %s117
      %s120 = sphi 0, %s119
      %s134 = sphi 0, %s120
      %s138 = sphi 0, %s138
      %s140 = sphi 0, %s138
      %s141 = sphi 0, %s140
      %s155 = sphi 0, %s141
      %s159 = sphi 0, %s159
      %s161 = sphi 0, %s159
      %s162 = sphi 0, %s161
      %s176 = sphi 0, %s162
      %s180 = sphi 0, %s180
      %s182 = sphi 0, %s180
      %s183 = sphi 0, %s182
      %s197 = sphi 0, %s183
      %s201 = sphi 0, %s201
      %s203 = sphi 0, %s201
      %s204 = sphi 0, %s203
      %s218 = sphi 0, %s204
      %s222 = sphi 0, %s222
      %s224 = sphi 0, %s222
      %s225 = sphi 0, %s224
      %s239 = sphi 0, %s225
      %s243 = sphi 0, %s243
      %s245 = sphi 0, %s243
      %s246 = sphi 0, %s245
      %s260 = sphi 0, %s246
      %s266 = sphi 0, %s268
      %s269 = sphi 0, %s266
      %s270 = sphi 0, %s269
      %s286 = sphi 0, %s270
    $region4: #{decoder_forward.1} parent=1 // loop_header_branch
      %23 = sbr.rel (%p21) target = $region8
    $region5: #{decoder_forward.1} parent=1 // loop_body
      %s25 = ssub.s32 %s20, 1
      %s26 = ssub.s32 %s20, 2
      %s27 = sadd.s32 %s20, 1
      %s28 = ssub.s32 %s20, %s27
      %p29 = scmp.eq.s32.totalorder %s28, 0
      %s31 = sadd.s32 %s30, 1
      %s32 = scalar_select %p29, %s30, %s31
      %p35 = pneg %p29
      %p36 = scmp.eq.s32.totalorder %s20, 1
      %p37 = por %p35, %p36
      %p38 = scmp.ne.s32.totalorder %s30, %s33
      %p39 = scmp.eq.s32.totalorder %s20, 0
      %p40 = por %p38, %p39
      %p41 = scmp.ne.s32.totalorder %s30, %s33
      %p42 = scmp.eq.s32.totalorder %s25, 1
      %p43 = por %p41, %p42
      %p44 = scmp.ne.s32.totalorder %s33, %s34
      %p45 = scmp.eq.s32.totalorder %s25, 0
      %p46 = por %p44, %p45
      %p47 = scmp.ne.s32.totalorder %s33, %s34
      %p48 = scmp.eq.s32.totalorder %s26, 1
      %p49 = por %p47, %p48
      %p51 = scmp.ne.s32.totalorder %s34, %s50
      %p52 = scmp.eq.s32.totalorder %s26, 0
      %p53 = por %p51, %p52
      %s55 = sadd.s32 %s54, 1
      %p58 = scmp.eq.s32.totalorder %s20, 1
      %p59 = scmp.ne.s32.totalorder %s54, %s56
      %p60 = scmp.eq.s32.totalorder %s20, 0
      %p61 = por %p59, %p60
      %p62 = scmp.ne.s32.totalorder %s54, %s56
      %p63 = scmp.eq.s32.totalorder %s25, 1
      %p64 = por %p62, %p63
      %p65 = scmp.ne.s32.totalorder %s56, %s57
      %p66 = scmp.eq.s32.totalorder %s25, 0
      %p67 = por %p65, %p66
      %p68 = scmp.ne.s32.totalorder %s56, %s57
      %p69 = scmp.eq.s32.totalorder %s26, 1
      %p70 = por %p68, %p69
      %p72 = scmp.ne.s32.totalorder %s57, %s71
      %p73 = scmp.eq.s32.totalorder %s26, 0
      %p74 = por %p72, %p73
      %s76 = sadd.s32 %s75, 1
      %p79 = scmp.eq.s32.totalorder %s20, 1
      %p80 = scmp.ne.s32.totalorder %s75, %s77
      %p81 = scmp.eq.s32.totalorder %s20, 0
      %p82 = por %p80, %p81
      %p83 = scmp.ne.s32.totalorder %s75, %s77
      %p84 = scmp.eq.s32.totalorder %s25, 1
      %p85 = por %p83, %p84
      %p86 = scmp.ne.s32.totalorder %s77, %s78
      %p87 = scmp.eq.s32.totalorder %s25, 0
      %p88 = por %p86, %p87
      %p89 = scmp.ne.s32.totalorder %s77, %s78
      %p90 = scmp.eq.s32.totalorder %s26, 1
      %p91 = por %p89, %p90
      %p93 = scmp.ne.s32.totalorder %s78, %s92
      %p94 = scmp.eq.s32.totalorder %s26, 0
      %p95 = por %p93, %p94
      %s97 = sadd.s32 %s96, 1
      %p100 = scmp.eq.s32.totalorder %s20, 1
      %p101 = scmp.ne.s32.totalorder %s96, %s98
      %p102 = scmp.eq.s32.totalorder %s20, 0
      %p103 = por %p101, %p102
      %p104 = scmp.ne.s32.totalorder %s96, %s98
      %p105 = scmp.eq.s32.totalorder %s25, 1
      %p106 = por %p104, %p105
      %p107 = scmp.ne.s32.totalorder %s98, %s99
      %p108 = scmp.eq.s32.totalorder %s25, 0
      %p109 = por %p107, %p108
      %p110 = scmp.ne.s32.totalorder %s98, %s99
      %p111 = scmp.eq.s32.totalorder %s26, 1
      %p112 = por %p110, %p111
      %p114 = scmp.ne.s32.totalorder %s99, %s113
      %p115 = scmp.eq.s32.totalorder %s26, 0
      %p116 = por %p114, %p115
      %s118 = sadd.s32 %s117, 1
      %p121 = scmp.eq.s32.totalorder %s20, 1
      %p122 = scmp.ne.s32.totalorder %s117, %s119
      %p123 = scmp.eq.s32.totalorder %s20, 0
      %p124 = por %p122, %p123
      %p125 = scmp.ne.s32.totalorder %s117, %s119
      %p126 = scmp.eq.s32.totalorder %s25, 1
      %p127 = por %p125, %p126
      %p128 = scmp.ne.s32.totalorder %s119, %s120
      %p129 = scmp.eq.s32.totalorder %s25, 0
      %p130 = por %p128, %p129
      %p131 = scmp.ne.s32.totalorder %s119, %s120
      %p132 = scmp.eq.s32.totalorder %s26, 1
      %p133 = por %p131, %p132
      %p135 = scmp.ne.s32.totalorder %s120, %s134
      %p136 = scmp.eq.s32.totalorder %s26, 0
      %p137 = por %p135, %p136
      %s139 = sadd.s32 %s138, 1
      %p142 = scmp.eq.s32.totalorder %s20, 1
      %p143 = scmp.ne.s32.totalorder %s138, %s140
      %p144 = scmp.eq.s32.totalorder %s20, 0
      %p145 = por %p143, %p144
      %p146 = scmp.ne.s32.totalorder %s138, %s140
      %p147 = scmp.eq.s32.totalorder %s25, 1
      %p148 = por %p146, %p147
      %p149 = scmp.ne.s32.totalorder %s140, %s141
      %p150 = scmp.eq.s32.totalorder %s25, 0
      %p151 = por %p149, %p150
      %p152 = scmp.ne.s32.totalorder %s140, %s141
      %p153 = scmp.eq.s32.totalorder %s26, 1
      %p154 = por %p152, %p153
      %p156 = scmp.ne.s32.totalorder %s141, %s155
      %p157 = scmp.eq.s32.totalorder %s26, 0
      %p158 = por %p156, %p157
      %s160 = sadd.s32 %s159, 1
      %p163 = scmp.eq.s32.totalorder %s20, 1
      %p164 = scmp.ne.s32.totalorder %s159, %s161
      %p165 = scmp.eq.s32.totalorder %s20, 0
      %p166 = por %p164, %p165
      %p167 = scmp.ne.s32.totalorder %s159, %s161
      %p168 = scmp.eq.s32.totalorder %s25, 1
      %p169 = por %p167, %p168
      %p170 = scmp.ne.s32.totalorder %s161, %s162
      %p171 = scmp.eq.s32.totalorder %s25, 0
      %p172 = por %p170, %p171
      %p173 = scmp.ne.s32.totalorder %s161, %s162
      %p174 = scmp.eq.s32.totalorder %s26, 1
      %p175 = por %p173, %p174
      %p177 = scmp.ne.s32.totalorder %s162, %s176
      %p178 = scmp.eq.s32.totalorder %s26, 0
      %p179 = por %p177, %p178
      %s181 = sadd.s32 %s180, 1
      %p184 = scmp.eq.s32.totalorder %s20, 1
      %p185 = scmp.ne.s32.totalorder %s180, %s182
      %p186 = scmp.eq.s32.totalorder %s20, 0
      %p187 = por %p185, %p186
      %p188 = scmp.ne.s32.totalorder %s180, %s182
      %p189 = scmp.eq.s32.totalorder %s25, 1
      %p190 = por %p188, %p189
      %p191 = scmp.ne.s32.totalorder %s182, %s183
      %p192 = scmp.eq.s32.totalorder %s25, 0
      %p193 = por %p191, %p192
      %p194 = scmp.ne.s32.totalorder %s182, %s183
      %p195 = scmp.eq.s32.totalorder %s26, 1
      %p196 = por %p194, %p195
      %p198 = scmp.ne.s32.totalorder %s183, %s197
      %p199 = scmp.eq.s32.totalorder %s26, 0
      %p200 = por %p198, %p199
      %s202 = sadd.s32 %s201, 1
      %p205 = scmp.eq.s32.totalorder %s20, 1
      %p206 = scmp.ne.s32.totalorder %s201, %s203
      %p207 = scmp.eq.s32.totalorder %s20, 0
      %p208 = por %p206, %p207
      %p209 = scmp.ne.s32.totalorder %s201, %s203
      %p210 = scmp.eq.s32.totalorder %s25, 1
      %p211 = por %p209, %p210
      %p212 = scmp.ne.s32.totalorder %s203, %s204
      %p213 = scmp.eq.s32.totalorder %s25, 0
      %p214 = por %p212, %p213
      %p215 = scmp.ne.s32.totalorder %s203, %s204
      %p216 = scmp.eq.s32.totalorder %s26, 1
      %p217 = por %p215, %p216
      %p219 = scmp.ne.s32.totalorder %s204, %s218
      %p220 = scmp.eq.s32.totalorder %s26, 0
      %p221 = por %p219, %p220
      %s223 = sadd.s32 %s222, 1
      %p226 = scmp.eq.s32.totalorder %s20, 1
      %p227 = scmp.ne.s32.totalorder %s222, %s224
      %p228 = scmp.eq.s32.totalorder %s20, 0
      %p229 = por %p227, %p228
      %p230 = scmp.ne.s32.totalorder %s222, %s224
      %p231 = scmp.eq.s32.totalorder %s25, 1
      %p232 = por %p230, %p231
      %p233 = scmp.ne.s32.totalorder %s224, %s225
      %p234 = scmp.eq.s32.totalorder %s25, 0
      %p235 = por %p233, %p234
      %p236 = scmp.ne.s32.totalorder %s224, %s225
      %p237 = scmp.eq.s32.totalorder %s26, 1
      %p238 = por %p236, %p237
      %p240 = scmp.ne.s32.totalorder %s225, %s239
      %p241 = scmp.eq.s32.totalorder %s26, 0
      %p242 = por %p240, %p241
      %s244 = sadd.s32 %s243, 1
      %p247 = scmp.eq.s32.totalorder %s20, 1
      %p248 = scmp.ne.s32.totalorder %s243, %s245
      %p249 = scmp.eq.s32.totalorder %s20, 0
      %p250 = por %p248, %p249
      %p251 = scmp.ne.s32.totalorder %s243, %s245
      %p252 = scmp.eq.s32.totalorder %s25, 1
      %p253 = por %p251, %p252
      %p254 = scmp.ne.s32.totalorder %s245, %s246
      %p255 = scmp.eq.s32.totalorder %s25, 0
      %p256 = por %p254, %p255
      %p257 = scmp.ne.s32.totalorder %s245, %s246
      %p258 = scmp.eq.s32.totalorder %s26, 1
      %p259 = por %p257, %p258
      %p261 = scmp.ne.s32.totalorder %s246, %s260
      %p262 = scmp.eq.s32.totalorder %s26, 0
      %p263 = por %p261, %p262
      %s264 = ssub.s32 %s20, %s27
      %p265 = scmp.eq.s32.totalorder %s264, 0
      %s267 = sadd.s32 %s266, 1
      %s268 = scalar_select %p265, %s266, %s267
      %p271 = pneg %p265
      %p272 = scmp.eq.s32.totalorder %s20, 1
      %p273 = por %p271, %p272
      %p274 = scmp.ne.s32.totalorder %s266, %s269
      %p275 = scmp.eq.s32.totalorder %s20, 0
      %p276 = por %p274, %p275
      %p277 = scmp.ne.s32.totalorder %s266, %s269
      %p278 = scmp.eq.s32.totalorder %s25, 1
      %p279 = por %p277, %p278
      %p280 = scmp.ne.s32.totalorder %s269, %s270
      %p281 = scmp.eq.s32.totalorder %s25, 0
      %p282 = por %p280, %p281
      %p283 = scmp.ne.s32.totalorder %s269, %s270
      %p284 = scmp.eq.s32.totalorder %s26, 1
      %p285 = por %p283, %p284
      %p287 = scmp.ne.s32.totalorder %s270, %s286
      %p288 = scmp.eq.s32.totalorder %s26, 0
      %p289 = por %p287, %p288
      %p290 = scmp.le.s32.totalorder 1, %s20
      %p291 = scmp.lt.s32.totalorder %s20, 3
      %p292 = pnand %p290, %p291
      %p293 = pneg %p292
      // Predicated region
      $region9: #{decoder_forward.1} parent=5 // pred_check
        _
      $region10: #{decoder_forward.1} parent=5 // pred_check_branch
        %295 = sbr.rel (%p292) target = $region12
      $region11: #{decoder_forward.1} parent=5 // pred_region
        %s296 = ssub.s32 %s20, 1
        // Predicated region
        $region13: #{decoder_forward.1} parent=11 // pred_check
          %p297 = pneg %p67
        $region14: #{decoder_forward.1} parent=11 // pred_check_branch
          %299 = sbr.rel (%p297) target = $region16
        $region15: #{decoder_forward.1} parent=11 // pred_region
          _
        $region16: #{decoder_forward.1} parent=11 // pred_fallthru
          _
        // Predicated region
        $region17: #{decoder_forward.1} parent=11 // pred_check
          %p300 = pneg %p88
        $region18: #{decoder_forward.1} parent=11 // pred_check_branch
          %302 = sbr.rel (%p300) target = $region20
        $region19: #{decoder_forward.1} parent=11 // pred_region
          %304 = vsyncadd [#allocation6], 0
          %s306 = sshll.u32 %s2, 4
          %s307 = int_to_ptr.hbm [resolvable:$true] %s306
          %s308 = sshll.u32 [#allocation5], 4
          %s309 = int_to_ptr.vmem [resolvable:$true] %s308
          %311 = dma.hbm_to_vmem [thread:$0]  %s307, 16, %s309, [#allocation6]
        $region20: #{decoder_forward.1} parent=11 // pred_fallthru
          _
        // Predicated region
        $region21: #{decoder_forward.1} parent=11 // pred_check
          %p312 = pneg %p109
        $region22: #{decoder_forward.1} parent=11 // pred_check_branch
          %314 = sbr.rel (%p312) target = $region24
        $region23: #{decoder_forward.1} parent=11 // pred_region
          _
        $region24: #{decoder_forward.1} parent=11 // pred_fallthru
          _
        // Predicated region
        $region25: #{decoder_forward.1} parent=11 // pred_check
          %p315 = pneg %p130
        $region26: #{decoder_forward.1} parent=11 // pred_check_branch
          %317 = sbr.rel (%p315) target = $region28
        $region27: #{decoder_forward.1} parent=11 // pred_region
          %319 = vsyncadd [#allocation8], 0
          %s321 = sshll.u32 %s4, 4
          %s322 = int_to_ptr.hbm [resolvable:$true] %s321
          %s323 = sshll.u32 [#allocation7], 4
          %s324 = int_to_ptr.vmem [resolvable:$true] %s323
          %326 = dma.hbm_to_vmem [thread:$0]  %s322, 64, %s324, [#allocation8]
        $region28: #{decoder_forward.1} parent=11 // pred_fallthru
          _
        // Predicated region
        $region29: #{decoder_forward.1} parent=11 // pred_check
          %p327 = pneg %p151
        $region30: #{decoder_forward.1} parent=11 // pred_check_branch
          %329 = sbr.rel (%p327) target = $region32
        $region31: #{decoder_forward.1} parent=11 // pred_region
          _
        $region32: #{decoder_forward.1} parent=11 // pred_fallthru
          _
        // Predicated region
        $region33: #{decoder_forward.1} parent=11 // pred_check
          %p330 = pneg %p172
        $region34: #{decoder_forward.1} parent=11 // pred_check_branch
          %332 = sbr.rel (%p330) target = $region36
        $region35: #{decoder_forward.1} parent=11 // pred_region
          %334 = vsyncadd [#allocation8], 0
          %s336 = sshll.u32 %s6, 4
          %s337 = int_to_ptr.hbm [resolvable:$true] %s336
          %s338 = sshll.u32 [#allocation9], 4
          %s339 = int_to_ptr.vmem [resolvable:$true] %s338
          %341 = dma.hbm_to_vmem [thread:$0]  %s337, 64, %s339, [#allocation8]
        $region36: #{decoder_forward.1} parent=11 // pred_fallthru
          _
        // Predicated region
        $region37: #{decoder_forward.1} parent=11 // pred_check
          %p342 = pneg %p193
        $region38: #{decoder_forward.1} parent=11 // pred_check_branch
          %344 = sbr.rel (%p342) target = $region40
        $region39: #{decoder_forward.1} parent=11 // pred_region
          _
        $region40: #{decoder_forward.1} parent=11 // pred_fallthru
          _
        // Predicated region
        $region41: #{decoder_forward.1} parent=11 // pred_check
          %p345 = pneg %p214
        $region42: #{decoder_forward.1} parent=11 // pred_check_branch
          %347 = sbr.rel (%p345) target = $region44
        $region43: #{decoder_forward.1} parent=11 // pred_region
          %349 = vsyncadd [#allocation11], 0
          %s351 = sshll.u32 %s8, 4
          %s352 = int_to_ptr.hbm [resolvable:$true] %s351
          %s353 = sshll.u32 [#allocation10], 4
          %s354 = int_to_ptr.vmem [resolvable:$true] %s353
          %356 = dma.hbm_to_vmem [thread:$0]  %s352, 16, %s354, [#allocation11]
        $region44: #{decoder_forward.1} parent=11 // pred_fallthru
          _
        // Predicated region
        $region45: #{decoder_forward.1} parent=11 // pred_check
          %p357 = pneg %p235
        $region46: #{decoder_forward.1} parent=11 // pred_check_branch
          %359 = sbr.rel (%p357) target = $region48
        $region47: #{decoder_forward.1} parent=11 // pred_region
          _
        $region48: #{decoder_forward.1} parent=11 // pred_fallthru
          _
        // Predicated region
        $region49: #{decoder_forward.1} parent=11 // pred_check
          %p360 = pneg %p256
        $region50: #{decoder_forward.1} parent=11 // pred_check_branch
          %362 = sbr.rel (%p360) target = $region52
        $region51: #{decoder_forward.1} parent=11 // pred_region
          %364 = vsyncadd [#allocation11], 0
          %s366 = sshll.u32 %s10, 4
          %s367 = int_to_ptr.hbm [resolvable:$true] %s366
          %s368 = sshll.u32 [#allocation12], 4
          %s369 = int_to_ptr.vmem [resolvable:$true] %s368
          %371 = dma.hbm_to_vmem [thread:$0]  %s367, 16, %s369, [#allocation11]
        $region52: #{decoder_forward.1} parent=11 // pred_fallthru
          _
      $region12: #{decoder_forward.1} parent=5 // pred_fallthru
        _
      %p372 = scmp.lt.s32.totalorder %s20, 2
      // Predicated region
      $region53: #{decoder_forward.1} parent=5 // pred_check
        %p373 = pneg %p372
      $region54: #{decoder_forward.1} parent=5 // pred_check_branch
        %375 = sbr.rel (%p373) target = $region56
      $region55: #{decoder_forward.1} parent=5 // pred_region
        // Predicated region
        $region57: #{decoder_forward.1} parent=55 // pred_check
          %p376 = pneg %p40
        $region58: #{decoder_forward.1} parent=55 // pred_check_branch
          %378 = sbr.rel (%p376) target = $region60
        $region59: #{decoder_forward.1} parent=55 // pred_region
          %p379 = scmp.lt.s32.totalorder %s20, 1
          %s380 = scalar_select %p379, %s20, 1
          %s381 = smul.addr %s380, 8
          %s382 = smul.addr %s381, 4
          %s383 = scalar_lea.vmem %s0, %s382
        $region60: #{decoder_forward.1} parent=55 // pred_fallthru
          _
      $region56: #{decoder_forward.1} parent=5 // pred_fallthru
        _
      %p384 = scmp.le.s32.totalorder 1, %s20
      %p385 = scmp.lt.s32.totalorder %s20, 3
      %p386 = pnand %p384, %p385
      %p387 = pneg %p386
      // Predicated region
      $region61: #{decoder_forward.1} parent=5 // pred_check
        _
      $region62: #{decoder_forward.1} parent=5 // pred_check_branch
        %389 = sbr.rel (%p386) target = $region64
      $region63: #{decoder_forward.1} parent=5 // pred_region
        %s390 = ssub.s32 %s20, 1
        // Predicated region
        $region65: #{decoder_forward.1} parent=63 // pred_check
          %p391 = pneg %p88
        $region66: #{decoder_forward.1} parent=63 // pred_check_branch
          %393 = sbr.rel (%p391) target = $region68
        $region67: #{decoder_forward.1} parent=63 // pred_region
          %395 = dma.done [#allocation6], 16
        $region68: #{decoder_forward.1} parent=63 // pred_fallthru
          _
        // Predicated region
        $region69: #{decoder_forward.1} parent=63 // pred_check
          %p396 = pneg %p130
        $region70: #{decoder_forward.1} parent=63 // pred_check_branch
          %398 = sbr.rel (%p396) target = $region72
        $region71: #{decoder_forward.1} parent=63 // pred_region
          %400 = dma.done [#allocation8], 64
        $region72: #{decoder_forward.1} parent=63 // pred_fallthru
          _
        // Predicated region
        $region73: #{decoder_forward.1} parent=63 // pred_check
          %p401 = pneg %p172
        $region74: #{decoder_forward.1} parent=63 // pred_check_branch
          %403 = sbr.rel (%p401) target = $region76
        $region75: #{decoder_forward.1} parent=63 // pred_region
          %405 = dma.done [#allocation8], 64
        $region76: #{decoder_forward.1} parent=63 // pred_fallthru
          _
        // Predicated region
        $region77: #{decoder_forward.1} parent=63 // pred_check
          %p406 = pneg %p214
        $region78: #{decoder_forward.1} parent=63 // pred_check_branch
          %408 = sbr.rel (%p406) target = $region80
        $region79: #{decoder_forward.1} parent=63 // pred_region
          %410 = dma.done [#allocation11], 16
        $region80: #{decoder_forward.1} parent=63 // pred_fallthru
          _
        // Predicated region
        $region81: #{decoder_forward.1} parent=63 // pred_check
          %p411 = pneg %p256
        $region82: #{decoder_forward.1} parent=63 // pred_check_branch
          %413 = sbr.rel (%p411) target = $region84
        $region83: #{decoder_forward.1} parent=63 // pred_region
          %415 = dma.done [#allocation11], 16
        $region84: #{decoder_forward.1} parent=63 // pred_fallthru
          _
        %p416 = scmp.lt.s32.totalorder %s25, 1
        %s417 = scalar_select %p416, %s25, 1
        %s418 = smul.addr %s417, 8
        %s419 = smul.addr %s418, 4
        %s420 = scalar_lea.vmem %s0, %s419
        %p421 = pneg %p46
        %p422 = pneg %p43
        %p423 = pneg %p67
        %p424 = pneg %p64
        %p425 = pneg %p88
        %p426 = pneg %p85
        %p427 = pneg %p109
        %p428 = pneg %p106
        %p429 = pneg %p130
        %p430 = pneg %p127
        %p431 = pneg %p151
        %p432 = pneg %p148
        %p433 = pneg %p172
        %p434 = pneg %p169
        %p435 = pneg %p193
        %p436 = pneg %p190
        %p437 = pneg %p214
        %p438 = pneg %p211
        %p439 = pneg %p235
        %p440 = pneg %p232
        %p441 = pneg %p256
        %p442 = pneg %p253
        %p443 = pneg %p282
        %p444 = pneg %p279
        %p445 = scmp.lt.s32.totalorder %s25, 1
        %s446 = scalar_select %p445, %s25, 1
        %s447 = smul.addr %s446, 32
        %s448 = smul.addr %s447, 8
        %s449 = scalar_lea.vmem %s11, %s448
        %p450 = scmp.lt.s32.totalorder %s25, 1
        %s451 = scalar_select %p450, %s25, 1
        %s452 = smul.addr %s451, 8
        %s453 = smul.addr %s452, 4
        %s454 = scalar_lea.vmem %s0, %s453
        %p455 = scmp.lt.s32.totalorder %s25, 1
        %s456 = scalar_select %p455, %s25, 1
        %s457 = smul.addr %s456, 32
        %s458 = smul.addr %s457, 8
        %s459 = scalar_lea.vmem %s11, %s458
        %vm461 = vcmask 27648
        %462 = vst.msk [vmem:[#allocation2] sm:$0xf] %vm461, 0
        %vm463 = vcmask 24576
        %464 = vst.msk [vmem:[#allocation2 + $0x4] sm:$0x1] %vm463, 0
        %465 = vst.msk [vmem:[#allocation2 + $0x8] sm:$0xf] %vm461, 0
        %466 = vst.msk [vmem:[#allocation2 + $0xc] sm:$0x1] %vm463, 0
        %467 = vst.msk [vmem:[#allocation2 + $0x10] sm:$0xf] %vm461, 0
        %468 = vst.msk [vmem:[#allocation2 + $0x14] sm:$0x1] %vm463, 0
        %469 = vst.msk [vmem:[#allocation2 + $0x18] sm:$0xf] %vm461, 0
        %470 = vst.msk [vmem:[#allocation2 + $0x1c] sm:$0x1] %vm463, 0
        %471 = vst.msk [vmem:[#allocation2 + $0x20] sm:$0xf] %vm461, 0
        %472 = vst.msk [vmem:[#allocation2 + $0x24] sm:$0x1] %vm463, 0
        %473 = vst.msk [vmem:[#allocation2 + $0x28] sm:$0xf] %vm461, 0
        %474 = vst.msk [vmem:[#allocation2 + $0x2c] sm:$0x1] %vm463, 0
        %475 = vst.msk [vmem:[#allocation2 + $0x30] sm:$0xf] %vm461, 0
        %476 = vst.msk [vmem:[#allocation2 + $0x34] sm:$0x1] %vm463, 0
        %477 = vst.msk [vmem:[#allocation2 + $0x38] sm:$0xf] %vm461, 0
        %478 = vst.msk [vmem:[#allocation2 + $0x3c] sm:$0x1] %vm463, 0
        %479 = vst.msk [vmem:[#allocation2 + $0x40] sm:$0xf] %vm461, 0
        %480 = vst.msk [vmem:[#allocation2 + $0x44] sm:$0x1] %vm463, 0
        %481 = vst.msk [vmem:[#allocation2 + $0x48] sm:$0xf] %vm461, 0
        %482 = vst.msk [vmem:[#allocation2 + $0x4c] sm:$0x1] %vm463, 0
        %v483 = vld [vmem:[%s454] sm:$0xf]
        %v484 = vld [vmem:[%s454 + $0x4] sm:$0xf]
        %v485 = vld [vmem:[%s454 + $0x8] sm:$0xf]
        %v486 = vld [vmem:[%s454 + $0xc] sm:$0xf]
        %v487 = vld [vmem:[%s454 + $0x10] sm:$0xf]
        %v488 = vld [vmem:[%s454 + $0x14] sm:$0xf]
        %v489 = vld [vmem:[%s454 + $0x18] sm:$0xf]
        %v490 = vld [vmem:[%s454 + $0x1c] sm:$0xf]
        %v492 = vshrl.u32 %v483, 16
        %v494 = vrot.slane %v492, 7
        %v495 = vshll.u32 %v483, 16
        %v497 = vor.u32 %v494, %v495
        %v498 = vrot.slane %v494, 4
        %v500 = vshrl.u32 %v484, 16
        %v502 = vrot.slane %v500, 7
        %v503 = vshll.u32 %v484, 16
        %v505 = vor.u32 %v502, %v503
        %v506 = vrot.slane %v502, 4
        %v508 = vshrl.u32 %v485, 16
        %v510 = vrot.slane %v508, 7
        %v511 = vshll.u32 %v485, 16
        %v513 = vor.u32 %v510, %v511
        %v514 = vrot.slane %v510, 4
        %v516 = vshrl.u32 %v486, 16
        %v518 = vrot.slane %v516, 7
        %v519 = vshll.u32 %v486, 16
        %v521 = vor.u32 %v518, %v519
        %v522 = vrot.slane %v518, 4
        %v524 = vshrl.u32 %v487, 16
        %v526 = vrot.slane %v524, 7
        %v527 = vshll.u32 %v487, 16
        %v529 = vor.u32 %v526, %v527
        %v530 = vrot.slane %v526, 4
        %v532 = vshrl.u32 %v488, 16
        %v534 = vrot.slane %v532, 7
        %v535 = vshll.u32 %v488, 16
        %v537 = vor.u32 %v534, %v535
        %v538 = vrot.slane %v534, 4
        %v540 = vshrl.u32 %v489, 16
        %v542 = vrot.slane %v540, 7
        %v543 = vshll.u32 %v489, 16
        %v545 = vor.u32 %v542, %v543
        %v546 = vrot.slane %v542, 4
        %v548 = vshrl.u32 %v490, 16
        %v550 = vrot.slane %v548, 7
        %v551 = vshll.u32 %v490, 16
        %v553 = vor.u32 %v550, %v551
        %v554 = vrot.slane %v550, 4
        %s571 = scalar_lea.vmem [#allocation2], 8
        %vm572 = vcmask 27648
        %vm573 = vsmask.f32 7938
        %vm574 = vmand %vm572, %vm573
        %v575 = vld [vmem:[%s571] sm:$0xf]
        %v576 = vsel %vm574, %v497, %v575
        %577 = vst [vmem:[%s571] sm:$0xf] %v576
        %vm578 = vcmask 24576
        %vm579 = vsmask.f32 256
        %vm580 = vmand %vm578, %vm579
        %v581 = vld [vmem:[%s571 + $0x4] sm:$0x1]
        %v582 = vsel %vm580, %v498, %v581
        %583 = vst [vmem:[%s571 + $0x4] sm:$0x1] %v582
        %v584 = vld [vmem:[%s571 + $0x8] sm:$0xf]
        %v585 = vsel %vm574, %v505, %v584
        %586 = vst [vmem:[%s571 + $0x8] sm:$0xf] %v585
        %v587 = vld [vmem:[%s571 + $0xc] sm:$0x1]
        %v588 = vsel %vm580, %v506, %v587
        %589 = vst [vmem:[%s571 + $0xc] sm:$0x1] %v588
        %v590 = vld [vmem:[%s571 + $0x10] sm:$0xf]
        %v591 = vsel %vm574, %v513, %v590
        %592 = vst [vmem:[%s571 + $0x10] sm:$0xf] %v591
        %v593 = vld [vmem:[%s571 + $0x14] sm:$0x1]
        %v594 = vsel %vm580, %v514, %v593
        %595 = vst [vmem:[%s571 + $0x14] sm:$0x1] %v594
        %v596 = vld [vmem:[%s571 + $0x18] sm:$0xf]
        %v597 = vsel %vm574, %v521, %v596
        %598 = vst [vmem:[%s571 + $0x18] sm:$0xf] %v597
        %v599 = vld [vmem:[%s571 + $0x1c] sm:$0x1]
        %v600 = vsel %vm580, %v522, %v599
        %601 = vst [vmem:[%s571 + $0x1c] sm:$0x1] %v600
        %v602 = vld [vmem:[%s571 + $0x20] sm:$0xf]
        %v603 = vsel %vm574, %v529, %v602
        %604 = vst [vmem:[%s571 + $0x20] sm:$0xf] %v603
        %v605 = vld [vmem:[%s571 + $0x24] sm:$0x1]
        %v606 = vsel %vm580, %v530, %v605
        %607 = vst [vmem:[%s571 + $0x24] sm:$0x1] %v606
        %v608 = vld [vmem:[%s571 + $0x28] sm:$0xf]
        %v609 = vsel %vm574, %v537, %v608
        %610 = vst [vmem:[%s571 + $0x28] sm:$0xf] %v609
        %v611 = vld [vmem:[%s571 + $0x2c] sm:$0x1]
        %v612 = vsel %vm580, %v538, %v611
        %613 = vst [vmem:[%s571 + $0x2c] sm:$0x1] %v612
        %v614 = vld [vmem:[%s571 + $0x30] sm:$0xf]
        %v615 = vsel %vm574, %v545, %v614
        %616 = vst [vmem:[%s571 + $0x30] sm:$0xf] %v615
        %v617 = vld [vmem:[%s571 + $0x34] sm:$0x1]
        %v618 = vsel %vm580, %v546, %v617
        %619 = vst [vmem:[%s571 + $0x34] sm:$0x1] %v618
        %v620 = vld [vmem:[%s571 + $0x38] sm:$0xf]
        %v621 = vsel %vm574, %v553, %v620
        %622 = vst [vmem:[%s571 + $0x38] sm:$0xf] %v621
        %v623 = vld [vmem:[%s571 + $0x3c] sm:$0x1]
        %v624 = vsel %vm580, %v554, %v623
        %625 = vst [vmem:[%s571 + $0x3c] sm:$0x1] %v624
        %vm626 = vcmask 257024
        %627 = vst.msk [vmem:[#allocation3] sm:$0xf] %vm626, 0
        %vm628 = vcmask 253952
        %629 = vst.msk [vmem:[#allocation3 + $0x4] sm:$0x1] %vm628, 0
        %630 = vst.msk [vmem:[#allocation3 + $0x8] sm:$0xf] %vm626, 0
        %631 = vst.msk [vmem:[#allocation3 + $0xc] sm:$0x1] %vm628, 0
        %632 = vst.msk [vmem:[#allocation3 + $0x10] sm:$0xf] %vm626, 0
        %633 = vst.msk [vmem:[#allocation3 + $0x14] sm:$0x1] %vm628, 0
        %634 = vst.msk [vmem:[#allocation3 + $0x18] sm:$0xf] %vm626, 0
        %635 = vst.msk [vmem:[#allocation3 + $0x1c] sm:$0x1] %vm628, 0
        %636 = vst.msk [vmem:[#allocation3 + $0x20] sm:$0xf] %vm626, 0
        %637 = vst.msk [vmem:[#allocation3 + $0x24] sm:$0x1] %vm628, 0
        %638 = vst.msk [vmem:[#allocation3 + $0x28] sm:$0xf] %vm626, 0
        %639 = vst.msk [vmem:[#allocation3 + $0x2c] sm:$0x1] %vm628, 0
        %640 = vst.msk [vmem:[#allocation3 + $0x30] sm:$0xf] %vm626, 0
        %641 = vst.msk [vmem:[#allocation3 + $0x34] sm:$0x1] %vm628, 0
        %642 = vst.msk [vmem:[#allocation3 + $0x38] sm:$0xf] %vm626, 0
        %643 = vst.msk [vmem:[#allocation3 + $0x3c] sm:$0x1] %vm628, 0
        %644 = vst.msk [vmem:[#allocation3 + $0x40] sm:$0xf] %vm626, 0
        %645 = vst.msk [vmem:[#allocation3 + $0x44] sm:$0x1] %vm628, 0
        %646 = vst.msk [vmem:[#allocation3 + $0x48] sm:$0xf] %vm626, 0
        %647 = vst.msk [vmem:[#allocation3 + $0x4c] sm:$0x1] %vm628, 0
        %vm648 = vcmask 125952
        %649 = vst.msk [vmem:[#allocation4] sm:$0xf] %vm648, 0
        %vm650 = vcmask 122880
        %651 = vst.msk [vmem:[#allocation4 + $0x4] sm:$0x1] %vm650, 0
        %652 = vst.msk [vmem:[#allocation4 + $0x8] sm:$0xf] %vm648, 0
        %653 = vst.msk [vmem:[#allocation4 + $0xc] sm:$0x1] %vm650, 0
        %654 = vst.msk [vmem:[#allocation4 + $0x10] sm:$0xf] %vm648, 0
        %655 = vst.msk [vmem:[#allocation4 + $0x14] sm:$0x1] %vm650, 0
        %656 = vst.msk [vmem:[#allocation4 + $0x18] sm:$0xf] %vm648, 0
        %657 = vst.msk [vmem:[#allocation4 + $0x1c] sm:$0x1] %vm650, 0
        %658 = vst.msk [vmem:[#allocation4 + $0x20] sm:$0xf] %vm648, 0
        %659 = vst.msk [vmem:[#allocation4 + $0x24] sm:$0x1] %vm650, 0
        %660 = vst.msk [vmem:[#allocation4 + $0x28] sm:$0xf] %vm648, 0
        %661 = vst.msk [vmem:[#allocation4 + $0x2c] sm:$0x1] %vm650, 0
        %662 = vst.msk [vmem:[#allocation4 + $0x30] sm:$0xf] %vm648, 0
        %663 = vst.msk [vmem:[#allocation4 + $0x34] sm:$0x1] %vm650, 0
        %664 = vst.msk [vmem:[#allocation4 + $0x38] sm:$0xf] %vm648, 0
        %665 = vst.msk [vmem:[#allocation4 + $0x3c] sm:$0x1] %vm650, 0
        %666 = vst.msk [vmem:[#allocation4 + $0x40] sm:$0xf] %vm648, 0
        %667 = vst.msk [vmem:[#allocation4 + $0x44] sm:$0x1] %vm650, 0
        %668 = vst.msk [vmem:[#allocation4 + $0x48] sm:$0xf] %vm648, 0
        %669 = vst.msk [vmem:[#allocation4 + $0x4c] sm:$0x1] %vm650, 0
        %670 = vst.msk [vmem:[#allocation4 + $0x50] sm:$0xf] %vm648, 0
        %671 = vst.msk [vmem:[#allocation4 + $0x54] sm:$0x1] %vm650, 0
        %672 = vst.msk [vmem:[#allocation4 + $0x58] sm:$0xf] %vm648, 0
        %673 = vst.msk [vmem:[#allocation4 + $0x5c] sm:$0x1] %vm650, 0
        %674 = vst.msk [vmem:[#allocation4 + $0x60] sm:$0xf] %vm648, 0
        %675 = vst.msk [vmem:[#allocation4 + $0x64] sm:$0x1] %vm650, 0
        %676 = vst.msk [vmem:[#allocation4 + $0x68] sm:$0xf] %vm648, 0
        %677 = vst.msk [vmem:[#allocation4 + $0x6c] sm:$0x1] %vm650, 0
        %678 = vst.msk [vmem:[#allocation4 + $0x70] sm:$0xf] %vm648, 0
        %679 = vst.msk [vmem:[#allocation4 + $0x74] sm:$0x1] %vm650, 0
        %680 = vst.msk [vmem:[#allocation4 + $0x78] sm:$0xf] %vm648, 0
        %681 = vst.msk [vmem:[#allocation4 + $0x7c] sm:$0x1] %vm650, 0
        %682 = vst.msk [vmem:[#allocation4 + $0x80] sm:$0xf] %vm648, 0
        %683 = vst.msk [vmem:[#allocation4 + $0x84] sm:$0x1] %vm650, 0
        %684 = vst.msk [vmem:[#allocation4 + $0x88] sm:$0xf] %vm648, 0
        %685 = vst.msk [vmem:[#allocation4 + $0x8c] sm:$0x1] %vm650, 0
        %686 = vst.msk [vmem:[#allocation4 + $0x90] sm:$0xf] %vm648, 0
        %687 = vst.msk [vmem:[#allocation4 + $0x94] sm:$0x1] %vm650, 0
        %688 = vst.msk [vmem:[#allocation4 + $0x98] sm:$0xf] %vm648, 0
        %689 = vst.msk [vmem:[#allocation4 + $0x9c] sm:$0x1] %vm650, 0
        %690 = vst.msk [vmem:[#allocation4 + $0xa0] sm:$0xf] %vm648, 0
        %691 = vst.msk [vmem:[#allocation4 + $0xa4] sm:$0x1] %vm650, 0
        %692 = vst.msk [vmem:[#allocation4 + $0xa8] sm:$0xf] %vm648, 0
        %693 = vst.msk [vmem:[#allocation4 + $0xac] sm:$0x1] %vm650, 0
        %694 = vst.msk [vmem:[#allocation4 + $0xb0] sm:$0xf] %vm648, 0
        %695 = vst.msk [vmem:[#allocation4 + $0xb4] sm:$0x1] %vm650, 0
        %696 = vst.msk [vmem:[#allocation4 + $0xb8] sm:$0xf] %vm648, 0
        %697 = vst.msk [vmem:[#allocation4 + $0xbc] sm:$0x1] %vm650, 0
        %698 = vst.msk [vmem:[#allocation4 + $0xc0] sm:$0xf] %vm648, 0
        %699 = vst.msk [vmem:[#allocation4 + $0xc4] sm:$0x1] %vm650, 0
        %700 = vst.msk [vmem:[#allocation4 + $0xc8] sm:$0xf] %vm648, 0
        %701 = vst.msk [vmem:[#allocation4 + $0xcc] sm:$0x1] %vm650, 0
        %702 = vst.msk [vmem:[#allocation4 + $0xd0] sm:$0xf] %vm648, 0
        %703 = vst.msk [vmem:[#allocation4 + $0xd4] sm:$0x1] %vm650, 0
        %704 = vst.msk [vmem:[#allocation4 + $0xd8] sm:$0xf] %vm648, 0
        %705 = vst.msk [vmem:[#allocation4 + $0xdc] sm:$0x1] %vm650, 0
        %706 = vst.msk [vmem:[#allocation4 + $0xe0] sm:$0xf] %vm648, 0
        %707 = vst.msk [vmem:[#allocation4 + $0xe4] sm:$0x1] %vm650, 0
        %708 = vst.msk [vmem:[#allocation4 + $0xe8] sm:$0xf] %vm648, 0
        %709 = vst.msk [vmem:[#allocation4 + $0xec] sm:$0x1] %vm650, 0
        %710 = vst.msk [vmem:[#allocation4 + $0xf0] sm:$0xf] %vm648, 0
        %711 = vst.msk [vmem:[#allocation4 + $0xf4] sm:$0x1] %vm650, 0
        %712 = vst.msk [vmem:[#allocation4 + $0xf8] sm:$0xf] %vm648, 0
        %713 = vst.msk [vmem:[#allocation4 + $0xfc] sm:$0x1] %vm650, 0
        %714 = vst.msk [vmem:[#allocation4 + $0x100] sm:$0xf] %vm648, 0
        %715 = vst.msk [vmem:[#allocation4 + $0x104] sm:$0x1] %vm650, 0
        %716 = vst.msk [vmem:[#allocation4 + $0x108] sm:$0xf] %vm648, 0
        %717 = vst.msk [vmem:[#allocation4 + $0x10c] sm:$0x1] %vm650, 0
        %718 = vst.msk [vmem:[#allocation4 + $0x110] sm:$0xf] %vm648, 0
        %719 = vst.msk [vmem:[#allocation4 + $0x114] sm:$0x1] %vm650, 0
        %720 = vst.msk [vmem:[#allocation4 + $0x118] sm:$0xf] %vm648, 0
        %721 = vst.msk [vmem:[#allocation4 + $0x11c] sm:$0x1] %vm650, 0
        %722 = vst.msk [vmem:[#allocation4 + $0x120] sm:$0xf] %vm648, 0
        %723 = vst.msk [vmem:[#allocation4 + $0x124] sm:$0x1] %vm650, 0
        %724 = vst.msk [vmem:[#allocation4 + $0x128] sm:$0xf] %vm648, 0
        %725 = vst.msk [vmem:[#allocation4 + $0x12c] sm:$0x1] %vm650, 0
        %726 = vst.msk [vmem:[#allocation4 + $0x130] sm:$0xf] %vm648, 0
        %727 = vst.msk [vmem:[#allocation4 + $0x134] sm:$0x1] %vm650, 0
        %728 = vst.msk [vmem:[#allocation4 + $0x138] sm:$0xf] %vm648, 0
        %729 = vst.msk [vmem:[#allocation4 + $0x13c] sm:$0x1] %vm650, 0
        %v730 = vld [vmem:[#allocation2] sm:$0xf]
        %v731 = vld [vmem:[#allocation2 + $0x8] sm:$0xf]
        %v732 = vld [vmem:[#allocation2 + $0x10] sm:$0xf]
        %v733 = vld [vmem:[#allocation2 + $0x18] sm:$0xf]
        %v734 = vld [vmem:[#allocation2 + $0x20] sm:$0xf]
        %v735 = vld [vmem:[#allocation2 + $0x28] sm:$0xf]
        %v736 = vld [vmem:[#allocation2 + $0x30] sm:$0xf]
        %v737 = vld [vmem:[#allocation2 + $0x38] sm:$0xf]
        %v738 = vld [vmem:[#allocation2 + $0x4] sm:$0x1]
        %v739 = vld [vmem:[#allocation2 + $0xc] sm:$0x1]
        %v740 = vld [vmem:[#allocation2 + $0x14] sm:$0x1]
        %v741 = vld [vmem:[#allocation2 + $0x1c] sm:$0x1]
        %v742 = vld [vmem:[#allocation2 + $0x24] sm:$0x1]
        %v743 = vld [vmem:[#allocation2 + $0x2c] sm:$0x1]
        %v744 = vld [vmem:[#allocation2 + $0x34] sm:$0x1]
        %v745 = vld [vmem:[#allocation2 + $0x3c] sm:$0x1]
        %vm746 = vsmask.f32 3328
        %vm747 = vsmask.f32 7440
        %vm748 = vmor %vm746, %vm747
        %v750 = vshrl.u32 %v730, 16
        %v752 = vrot.slane %v750, 4
        %v753 = vshll.u32 %v730, 16
        %v755 = vrot.slane %v753, 5
        %v756 = vor.u32 %v752, %v755
        %v757 = vrot.slane %v756, 4
        %v759 = vshll.u32 %v738, 16
        %v761 = vrot.slane %v759, 5
        %v762 = vsel %vm748, %v757, %v761
        %v764 = vshrl.u32 %v731, 16
        %v766 = vrot.slane %v764, 4
        %v767 = vshll.u32 %v731, 16
        %v769 = vrot.slane %v767, 5
        %v770 = vor.u32 %v766, %v769
        %v771 = vrot.slane %v770, 4
        %v773 = vshll.u32 %v739, 16
        %v775 = vrot.slane %v773, 5
        %v776 = vsel %vm748, %v771, %v775
        %v778 = vshrl.u32 %v732, 16
        %v780 = vrot.slane %v778, 4
        %v781 = vshll.u32 %v732, 16
        %v783 = vrot.slane %v781, 5
        %v784 = vor.u32 %v780, %v783
        %v785 = vrot.slane %v784, 4
        %v787 = vshll.u32 %v740, 16
        %v789 = vrot.slane %v787, 5
        %v790 = vsel %vm748, %v785, %v789
        %v792 = vshrl.u32 %v733, 16
        %v794 = vrot.slane %v792, 4
        %v795 = vshll.u32 %v733, 16
        %v797 = vrot.slane %v795, 5
        %v798 = vor.u32 %v794, %v797
        %v799 = vrot.slane %v798, 4
        %v801 = vshll.u32 %v741, 16
        %v803 = vrot.slane %v801, 5
        %v804 = vsel %vm748, %v799, %v803
        %v806 = vshrl.u32 %v734, 16
        %v808 = vrot.slane %v806, 4
        %v809 = vshll.u32 %v734, 16
        %v811 = vrot.slane %v809, 5
        %v812 = vor.u32 %v808, %v811
        %v813 = vrot.slane %v812, 4
        %v815 = vshll.u32 %v742, 16
        %v817 = vrot.slane %v815, 5
        %v818 = vsel %vm748, %v813, %v817
        %v820 = vshrl.u32 %v735, 16
        %v822 = vrot.slane %v820, 4
        %v823 = vshll.u32 %v735, 16
        %v825 = vrot.slane %v823, 5
        %v826 = vor.u32 %v822, %v825
        %v827 = vrot.slane %v826, 4
        %v829 = vshll.u32 %v743, 16
        %v831 = vrot.slane %v829, 5
        %v832 = vsel %vm748, %v827, %v831
        %v834 = vshrl.u32 %v736, 16
        %v836 = vrot.slane %v834, 4
        %v837 = vshll.u32 %v736, 16
        %v839 = vrot.slane %v837, 5
        %v840 = vor.u32 %v836, %v839
        %v841 = vrot.slane %v840, 4
        %v843 = vshll.u32 %v744, 16
        %v845 = vrot.slane %v843, 5
        %v846 = vsel %vm748, %v841, %v845
        %v848 = vshrl.u32 %v737, 16
        %v850 = vrot.slane %v848, 4
        %v851 = vshll.u32 %v737, 16
        %v853 = vrot.slane %v851, 5
        %v854 = vor.u32 %v850, %v853
        %v855 = vrot.slane %v854, 4
        %v857 = vshll.u32 %v745, 16
        %v859 = vrot.slane %v857, 5
        %v860 = vsel %vm748, %v855, %v859
        %v861 = vld [vmem:[#allocation2] sm:$0xe]
        %v862 = vld [vmem:[#allocation2 + $0x8] sm:$0xe]
        %v863 = vld [vmem:[#allocation2 + $0x10] sm:$0xe]
        %v864 = vld [vmem:[#allocation2 + $0x18] sm:$0xe]
        %v865 = vld [vmem:[#allocation2 + $0x20] sm:$0xe]
        %v866 = vld [vmem:[#allocation2 + $0x28] sm:$0xe]
        %v867 = vld [vmem:[#allocation2 + $0x30] sm:$0xe]
        %v868 = vld [vmem:[#allocation2 + $0x38] sm:$0xe]
        %vm885 = vcmask 1042432
        %vm886 = vcmask 1046532
        %vm887 = vmor %vm885, %vm886
        %v888 = vrot.slane %v861, 5
        %v889 = vrot.slane %v888, 4
        %v890 = vrot.slane %v738, 5
        %v891 = vsel %vm887, %v889, %v890
        %v892 = vrot.slane %v862, 5
        %v893 = vrot.slane %v892, 4
        %v894 = vrot.slane %v739, 5
        %v895 = vsel %vm887, %v893, %v894
        %v896 = vrot.slane %v863, 5
        %v897 = vrot.slane %v896, 4
        %v898 = vrot.slane %v740, 5
        %v899 = vsel %vm887, %v897, %v898
        %v900 = vrot.slane %v864, 5
        %v901 = vrot.slane %v900, 4
        %v902 = vrot.slane %v741, 5
        %v903 = vsel %vm887, %v901, %v902
        %v904 = vrot.slane %v865, 5
        %v905 = vrot.slane %v904, 4
        %v906 = vrot.slane %v742, 5
        %v907 = vsel %vm887, %v905, %v906
        %v908 = vrot.slane %v866, 5
        %v909 = vrot.slane %v908, 4
        %v910 = vrot.slane %v743, 5
        %v911 = vsel %vm887, %v909, %v910
        %v912 = vrot.slane %v867, 5
        %v913 = vrot.slane %v912, 4
        %v914 = vrot.slane %v744, 5
        %v915 = vsel %vm887, %v913, %v914
        %v916 = vrot.slane %v868, 5
        %v917 = vrot.slane %v916, 4
        %v918 = vrot.slane %v745, 5
        %v919 = vsel %vm887, %v917, %v918
        %v920 = vld [vmem:[%s571] sm:$0xf]
        %v921 = vld [vmem:[%s571 + $0x8] sm:$0xf]
        %v922 = vld [vmem:[%s571 + $0x10] sm:$0xf]
        %v923 = vld [vmem:[%s571 + $0x18] sm:$0xf]
        %v924 = vld [vmem:[%s571 + $0x20] sm:$0xf]
        %v925 = vld [vmem:[%s571 + $0x28] sm:$0xf]
        %v926 = vld [vmem:[%s571 + $0x30] sm:$0xf]
        %v927 = vld [vmem:[%s571 + $0x38] sm:$0xf]
        %v928 = vld [vmem:[%s571 + $0x4] sm:$0x1]
        %v929 = vld [vmem:[%s571 + $0xc] sm:$0x1]
        %v930 = vld [vmem:[%s571 + $0x14] sm:$0x1]
        %v931 = vld [vmem:[%s571 + $0x1c] sm:$0x1]
        %v932 = vld [vmem:[%s571 + $0x24] sm:$0x1]
        %v933 = vld [vmem:[%s571 + $0x2c] sm:$0x1]
        %v934 = vld [vmem:[%s571 + $0x34] sm:$0x1]
        %v935 = vld [vmem:[%s571 + $0x3c] sm:$0x1]
        %v937 = vshrl.u32 %v920, 16
        %v939 = vrot.slane %v937, 4
        %v940 = vshll.u32 %v920, 16
        %v942 = vrot.slane %v940, 5
        %v943 = vor.u32 %v939, %v942
        %v944 = vrot.slane %v943, 4
        %v946 = vshll.u32 %v928, 16
        %v948 = vrot.slane %v946, 5
        %v949 = vsel %vm748, %v944, %v948
        %v951 = vshrl.u32 %v921, 16
        %v953 = vrot.slane %v951, 4
        %v954 = vshll.u32 %v921, 16
        %v956 = vrot.slane %v954, 5
        %v957 = vor.u32 %v953, %v956
        %v958 = vrot.slane %v957, 4
        %v960 = vshll.u32 %v929, 16
        %v962 = vrot.slane %v960, 5
        %v963 = vsel %vm748, %v958, %v962
        %v965 = vshrl.u32 %v922, 16
        %v967 = vrot.slane %v965, 4
        %v968 = vshll.u32 %v922, 16
        %v970 = vrot.slane %v968, 5
        %v971 = vor.u32 %v967, %v970
        %v972 = vrot.slane %v971, 4
        %v974 = vshll.u32 %v930, 16
        %v976 = vrot.slane %v974, 5
        %v977 = vsel %vm748, %v972, %v976
        %v979 = vshrl.u32 %v923, 16
        %v981 = vrot.slane %v979, 4
        %v982 = vshll.u32 %v923, 16
        %v984 = vrot.slane %v982, 5
        %v985 = vor.u32 %v981, %v984
        %v986 = vrot.slane %v985, 4
        %v988 = vshll.u32 %v931, 16
        %v990 = vrot.slane %v988, 5
        %v991 = vsel %vm748, %v986, %v990
        %v993 = vshrl.u32 %v924, 16
        %v995 = vrot.slane %v993, 4
        %v996 = vshll.u32 %v924, 16
        %v998 = vrot.slane %v996, 5
        %v999 = vor.u32 %v995, %v998
        %v1000 = vrot.slane %v999, 4
        %v1002 = vshll.u32 %v932, 16
        %v1004 = vrot.slane %v1002, 5
        %v1005 = vsel %vm748, %v1000, %v1004
        %v1007 = vshrl.u32 %v925, 16
        %v1009 = vrot.slane %v1007, 4
        %v1010 = vshll.u32 %v925, 16
        %v1012 = vrot.slane %v1010, 5
        %v1013 = vor.u32 %v1009, %v1012
        %v1014 = vrot.slane %v1013, 4
        %v1016 = vshll.u32 %v933, 16
        %v1018 = vrot.slane %v1016, 5
        %v1019 = vsel %vm748, %v1014, %v1018
        %v1021 = vshrl.u32 %v926, 16
        %v1023 = vrot.slane %v1021, 4
        %v1024 = vshll.u32 %v926, 16
        %v1026 = vrot.slane %v1024, 5
        %v1027 = vor.u32 %v1023, %v1026
        %v1028 = vrot.slane %v1027, 4
        %v1030 = vshll.u32 %v934, 16
        %v1032 = vrot.slane %v1030, 5
        %v1033 = vsel %vm748, %v1028, %v1032
        %v1035 = vshrl.u32 %v927, 16
        %v1037 = vrot.slane %v1035, 4
        %v1038 = vshll.u32 %v927, 16
        %v1040 = vrot.slane %v1038, 5
        %v1041 = vor.u32 %v1037, %v1040
        %v1042 = vrot.slane %v1041, 4
        %v1044 = vshll.u32 %v935, 16
        %v1046 = vrot.slane %v1044, 5
        %v1047 = vsel %vm748, %v1042, %v1046
        %v1048 = vld [vmem:[%s571] sm:$0xe]
        %v1049 = vld [vmem:[%s571 + $0x8] sm:$0xe]
        %v1050 = vld [vmem:[%s571 + $0x10] sm:$0xe]
        %v1051 = vld [vmem:[%s571 + $0x18] sm:$0xe]
        %v1052 = vld [vmem:[%s571 + $0x20] sm:$0xe]
        %v1053 = vld [vmem:[%s571 + $0x28] sm:$0xe]
        %v1054 = vld [vmem:[%s571 + $0x30] sm:$0xe]
        %v1055 = vld [vmem:[%s571 + $0x38] sm:$0xe]
        %v1072 = vrot.slane %v1048, 5
        %v1073 = vrot.slane %v1072, 4
        %v1074 = vrot.slane %v928, 5
        %v1075 = vsel %vm887, %v1073, %v1074
        %v1076 = vrot.slane %v1049, 5
        %v1077 = vrot.slane %v1076, 4
        %v1078 = vrot.slane %v929, 5
        %v1079 = vsel %vm887, %v1077, %v1078
        %v1080 = vrot.slane %v1050, 5
        %v1081 = vrot.slane %v1080, 4
        %v1082 = vrot.slane %v930, 5
        %v1083 = vsel %vm887, %v1081, %v1082
        %v1084 = vrot.slane %v1051, 5
        %v1085 = vrot.slane %v1084, 4
        %v1086 = vrot.slane %v931, 5
        %v1087 = vsel %vm887, %v1085, %v1086
        %v1088 = vrot.slane %v1052, 5
        %v1089 = vrot.slane %v1088, 4
        %v1090 = vrot.slane %v932, 5
        %v1091 = vsel %vm887, %v1089, %v1090
        %v1092 = vrot.slane %v1053, 5
        %v1093 = vrot.slane %v1092, 4
        %v1094 = vrot.slane %v933, 5
        %v1095 = vsel %vm887, %v1093, %v1094
        %v1096 = vrot.slane %v1054, 5
        %v1097 = vrot.slane %v1096, 4
        %v1098 = vrot.slane %v934, 5
        %v1099 = vsel %vm887, %v1097, %v1098
        %v1100 = vrot.slane %v1055, 5
        %v1101 = vrot.slane %v1100, 4
        %v1102 = vrot.slane %v935, 5
        %v1103 = vsel %vm887, %v1101, %v1102
        %s1104 = scalar_lea.vmem [#allocation2], 16
        %v1105 = vld [vmem:[%s1104] sm:$0xf]
        %v1106 = vld [vmem:[%s1104 + $0x8] sm:$0xf]
        %v1107 = vld [vmem:[%s1104 + $0x10] sm:$0xf]
        %v1108 = vld [vmem:[%s1104 + $0x18] sm:$0xf]
        %v1109 = vld [vmem:[%s1104 + $0x20] sm:$0xf]
        %v1110 = vld [vmem:[%s1104 + $0x28] sm:$0xf]
        %v1111 = vld [vmem:[%s1104 + $0x30] sm:$0xf]
        %v1112 = vld [vmem:[%s1104 + $0x38] sm:$0xf]
        %v1113 = vld [vmem:[%s1104 + $0x4] sm:$0x1]
        %v1114 = vld [vmem:[%s1104 + $0xc] sm:$0x1]
        %v1115 = vld [vmem:[%s1104 + $0x14] sm:$0x1]
        %v1116 = vld [vmem:[%s1104 + $0x1c] sm:$0x1]
        %v1117 = vld [vmem:[%s1104 + $0x24] sm:$0x1]
        %v1118 = vld [vmem:[%s1104 + $0x2c] sm:$0x1]
        %v1119 = vld [vmem:[%s1104 + $0x34] sm:$0x1]
        %v1120 = vld [vmem:[%s1104 + $0x3c] sm:$0x1]
        %v1122 = vshrl.u32 %v1105, 16
        %v1124 = vrot.slane %v1122, 4
        %v1125 = vshll.u32 %v1105, 16
        %v1127 = vrot.slane %v1125, 5
        %v1128 = vor.u32 %v1124, %v1127
        %v1129 = vrot.slane %v1128, 4
        %v1131 = vshll.u32 %v1113, 16
        %v1133 = vrot.slane %v1131, 5
        %v1134 = vsel %vm748, %v1129, %v1133
        %v1136 = vshrl.u32 %v1106, 16
        %v1138 = vrot.slane %v1136, 4
        %v1139 = vshll.u32 %v1106, 16
        %v1141 = vrot.slane %v1139, 5
        %v1142 = vor.u32 %v1138, %v1141
        %v1143 = vrot.slane %v1142, 4
        %v1145 = vshll.u32 %v1114, 16
        %v1147 = vrot.slane %v1145, 5
        %v1148 = vsel %vm748, %v1143, %v1147
        %v1150 = vshrl.u32 %v1107, 16
        %v1152 = vrot.slane %v1150, 4
        %v1153 = vshll.u32 %v1107, 16
        %v1155 = vrot.slane %v1153, 5
        %v1156 = vor.u32 %v1152, %v1155
        %v1157 = vrot.slane %v1156, 4
        %v1159 = vshll.u32 %v1115, 16
        %v1161 = vrot.slane %v1159, 5
        %v1162 = vsel %vm748, %v1157, %v1161
        %v1164 = vshrl.u32 %v1108, 16
        %v1166 = vrot.slane %v1164, 4
        %v1167 = vshll.u32 %v1108, 16
        %v1169 = vrot.slane %v1167, 5
        %v1170 = vor.u32 %v1166, %v1169
        %v1171 = vrot.slane %v1170, 4
        %v1173 = vshll.u32 %v1116, 16
        %v1175 = vrot.slane %v1173, 5
        %v1176 = vsel %vm748, %v1171, %v1175
        %v1178 = vshrl.u32 %v1109, 16
        %v1180 = vrot.slane %v1178, 4
        %v1181 = vshll.u32 %v1109, 16
        %v1183 = vrot.slane %v1181, 5
        %v1184 = vor.u32 %v1180, %v1183
        %v1185 = vrot.slane %v1184, 4
        %v1187 = vshll.u32 %v1117, 16
        %v1189 = vrot.slane %v1187, 5
        %v1190 = vsel %vm748, %v1185, %v1189
        %v1192 = vshrl.u32 %v1110, 16
        %v1194 = vrot.slane %v1192, 4
        %v1195 = vshll.u32 %v1110, 16
        %v1197 = vrot.slane %v1195, 5
        %v1198 = vor.u32 %v1194, %v1197
        %v1199 = vrot.slane %v1198, 4
        %v1201 = vshll.u32 %v1118, 16
        %v1203 = vrot.slane %v1201, 5
        %v1204 = vsel %vm748, %v1199, %v1203
        %v1206 = vshrl.u32 %v1111, 16
        %v1208 = vrot.slane %v1206, 4
        %v1209 = vshll.u32 %v1111, 16
        %v1211 = vrot.slane %v1209, 5
        %v1212 = vor.u32 %v1208, %v1211
        %v1213 = vrot.slane %v1212, 4
        %v1215 = vshll.u32 %v1119, 16
        %v1217 = vrot.slane %v1215, 5
        %v1218 = vsel %vm748, %v1213, %v1217
        %v1220 = vshrl.u32 %v1112, 16
        %v1222 = vrot.slane %v1220, 4
        %v1223 = vshll.u32 %v1112, 16
        %v1225 = vrot.slane %v1223, 5
        %v1226 = vor.u32 %v1222, %v1225
        %v1227 = vrot.slane %v1226, 4
        %v1229 = vshll.u32 %v1120, 16
        %v1231 = vrot.slane %v1229, 5
        %v1232 = vsel %vm748, %v1227, %v1231
        %v1233 = vld [vmem:[%s1104] sm:$0xe]
        %v1234 = vld [vmem:[%s1104 + $0x8] sm:$0xe]
        %v1235 = vld [vmem:[%s1104 + $0x10] sm:$0xe]
        %v1236 = vld [vmem:[%s1104 + $0x18] sm:$0xe]
        %v1237 = vld [vmem:[%s1104 + $0x20] sm:$0xe]
        %v1238 = vld [vmem:[%s1104 + $0x28] sm:$0xe]
        %v1239 = vld [vmem:[%s1104 + $0x30] sm:$0xe]
        %v1240 = vld [vmem:[%s1104 + $0x38] sm:$0xe]
        %v1257 = vrot.slane %v1233, 5
        %v1258 = vrot.slane %v1257, 4
        %v1259 = vrot.slane %v1113, 5
        %v1260 = vsel %vm887, %v1258, %v1259
        %v1261 = vrot.slane %v1234, 5
        %v1262 = vrot.slane %v1261, 4
        %v1263 = vrot.slane %v1114, 5
        %v1264 = vsel %vm887, %v1262, %v1263
        %v1265 = vrot.slane %v1235, 5
        %v1266 = vrot.slane %v1265, 4
        %v1267 = vrot.slane %v1115, 5
        %v1268 = vsel %vm887, %v1266, %v1267
        %v1269 = vrot.slane %v1236, 5
        %v1270 = vrot.slane %v1269, 4
        %v1271 = vrot.slane %v1116, 5
        %v1272 = vsel %vm887, %v1270, %v1271
        %v1273 = vrot.slane %v1237, 5
        %v1274 = vrot.slane %v1273, 4
        %v1275 = vrot.slane %v1117, 5
        %v1276 = vsel %vm887, %v1274, %v1275
        %v1277 = vrot.slane %v1238, 5
        %v1278 = vrot.slane %v1277, 4
        %v1279 = vrot.slane %v1118, 5
        %v1280 = vsel %vm887, %v1278, %v1279
        %v1281 = vrot.slane %v1239, 5
        %v1282 = vrot.slane %v1281, 4
        %v1283 = vrot.slane %v1119, 5
        %v1284 = vsel %vm887, %v1282, %v1283
        %v1285 = vrot.slane %v1240, 5
        %v1286 = vrot.slane %v1285, 4
        %v1287 = vrot.slane %v1120, 5
        %v1288 = vsel %vm887, %v1286, %v1287
        %v1297 = vunpack.c.l.b16 %v730
        %v1298 = vunpack.c.l.b16 %v731
        %v1299 = vunpack.c.l.b16 %v732
        %v1300 = vunpack.c.l.b16 %v733
        %v1301 = vunpack.c.l.b16 %v734
        %v1302 = vunpack.c.l.b16 %v735
        %v1303 = vunpack.c.l.b16 %v736
        %v1304 = vunpack.c.l.b16 %v737
        %v1305 = vpack.c.b16 %v1298, %v1297
        %v1306 = vpack.c.b16 %v1300, %v1299
        %v1307 = vpack.c.b16 %v1302, %v1301
        %v1308 = vpack.c.b16 %v1304, %v1303
        %v1309 = vunpack.c.l.b16 %v762
        %v1310 = vunpack.c.l.b16 %v776
        %v1311 = vunpack.c.l.b16 %v790
        %v1312 = vunpack.c.l.b16 %v804
        %v1313 = vunpack.c.l.b16 %v818
        %v1314 = vunpack.c.l.b16 %v832
        %v1315 = vunpack.c.l.b16 %v846
        %v1316 = vunpack.c.l.b16 %v860
        %v1317 = vpack.c.b16 %v1310, %v1309
        %v1318 = vpack.c.b16 %v1312, %v1311
        %v1319 = vpack.c.b16 %v1314, %v1313
        %v1320 = vpack.c.b16 %v1316, %v1315
        %1321 = vrot.lane.b32.xlu0 %v1317, 4
        %v1322 = vpop.permute.xlu0 %1321
        %1323 = vrot.lane.b32.xlu0 %v1318, 4
        %v1324 = vpop.permute.xlu0 %1323
        %1325 = vrot.lane.b32.xlu0 %v1319, 4
        %v1326 = vpop.permute.xlu0 %1325
        %1327 = vrot.lane.b32.xlu0 %v1320, 4
        %v1328 = vpop.permute.xlu0 %1327
        %v1329 = vunpack.c.l.b16 %v891
        %v1330 = vunpack.c.l.b16 %v895
        %v1331 = vunpack.c.l.b16 %v899
        %v1332 = vunpack.c.l.b16 %v903
        %v1333 = vunpack.c.l.b16 %v907
        %v1334 = vunpack.c.l.b16 %v911
        %v1335 = vunpack.c.l.b16 %v915
        %v1336 = vunpack.c.l.b16 %v919
        %v1337 = vpack.c.b16 %v1330, %v1329
        %v1338 = vpack.c.b16 %v1332, %v1331
        %v1339 = vpack.c.b16 %v1334, %v1333
        %v1340 = vpack.c.b16 %v1336, %v1335
        %1341 = vrot.lane.b32.xlu0 %v1337, 8
        %v1342 = vpop.permute.xlu0 %1341
        %1343 = vrot.lane.b32.xlu0 %v1338, 8
        %v1344 = vpop.permute.xlu0 %1343
        %1345 = vrot.lane.b32.xlu0 %v1339, 8
        %v1346 = vpop.permute.xlu0 %1345
        %1347 = vrot.lane.b32.xlu0 %v1340, 8
        %v1348 = vpop.permute.xlu0 %1347
        %v1357 = vunpack.c.l.b16 %v920
        %v1358 = vunpack.c.l.b16 %v921
        %v1359 = vunpack.c.l.b16 %v922
        %v1360 = vunpack.c.l.b16 %v923
        %v1361 = vunpack.c.l.b16 %v924
        %v1362 = vunpack.c.l.b16 %v925
        %v1363 = vunpack.c.l.b16 %v926
        %v1364 = vunpack.c.l.b16 %v927
        %v1365 = vpack.c.b16 %v1358, %v1357
        %v1366 = vpack.c.b16 %v1360, %v1359
        %v1367 = vpack.c.b16 %v1362, %v1361
        %v1368 = vpack.c.b16 %v1364, %v1363
        %1369 = vrot.lane.b32.xlu0 %v1365, 12
        %v1370 = vpop.permute.xlu0 %1369
        %1371 = vrot.lane.b32.xlu0 %v1366, 12
        %v1372 = vpop.permute.xlu0 %1371
        %1373 = vrot.lane.b32.xlu0 %v1367, 12
        %v1374 = vpop.permute.xlu0 %1373
        %1375 = vrot.lane.b32.xlu0 %v1368, 12
        %v1376 = vpop.permute.xlu0 %1375
        %v1377 = vunpack.c.l.b16 %v949
        %v1378 = vunpack.c.l.b16 %v963
        %v1379 = vunpack.c.l.b16 %v977
        %v1380 = vunpack.c.l.b16 %v991
        %v1381 = vunpack.c.l.b16 %v1005
        %v1382 = vunpack.c.l.b16 %v1019
        %v1383 = vunpack.c.l.b16 %v1033
        %v1384 = vunpack.c.l.b16 %v1047
        %v1385 = vpack.c.b16 %v1378, %v1377
        %v1386 = vpack.c.b16 %v1380, %v1379
        %v1387 = vpack.c.b16 %v1382, %v1381
        %v1388 = vpack.c.b16 %v1384, %v1383
        %1389 = vrot.lane.b32.xlu0 %v1385, 16
        %v1390 = vpop.permute.xlu0 %1389
        %1391 = vrot.lane.b32.xlu0 %v1386, 16
        %v1392 = vpop.permute.xlu0 %1391
        %1393 = vrot.lane.b32.xlu0 %v1387, 16
        %v1394 = vpop.permute.xlu0 %1393
        %1395 = vrot.lane.b32.xlu0 %v1388, 16
        %v1396 = vpop.permute.xlu0 %1395
        %v1397 = vunpack.c.l.b16 %v1075
        %v1398 = vunpack.c.l.b16 %v1079
        %v1399 = vunpack.c.l.b16 %v1083
        %v1400 = vunpack.c.l.b16 %v1087
        %v1401 = vunpack.c.l.b16 %v1091
        %v1402 = vunpack.c.l.b16 %v1095
        %v1403 = vunpack.c.l.b16 %v1099
        %v1404 = vunpack.c.l.b16 %v1103
        %v1405 = vpack.c.b16 %v1398, %v1397
        %v1406 = vpack.c.b16 %v1400, %v1399
        %v1407 = vpack.c.b16 %v1402, %v1401
        %v1408 = vpack.c.b16 %v1404, %v1403
        %1409 = vrot.lane.b32.xlu0 %v1405, 20
        %v1410 = vpop.permute.xlu0 %1409
        %1411 = vrot.lane.b32.xlu0 %v1406, 20
        %v1412 = vpop.permute.xlu0 %1411
        %1413 = vrot.lane.b32.xlu0 %v1407, 20
        %v1414 = vpop.permute.xlu0 %1413
        %1415 = vrot.lane.b32.xlu0 %v1408, 20
        %v1416 = vpop.permute.xlu0 %1415
        %v1425 = vunpack.c.l.b16 %v1105
        %v1426 = vunpack.c.l.b16 %v1106
        %v1427 = vunpack.c.l.b16 %v1107
        %v1428 = vunpack.c.l.b16 %v1108
        %v1429 = vunpack.c.l.b16 %v1109
        %v1430 = vunpack.c.l.b16 %v1110
        %v1431 = vunpack.c.l.b16 %v1111
        %v1432 = vunpack.c.l.b16 %v1112
        %v1433 = vpack.c.b16 %v1426, %v1425
        %v1434 = vpack.c.b16 %v1428, %v1427
        %v1435 = vpack.c.b16 %v1430, %v1429
        %v1436 = vpack.c.b16 %v1432, %v1431
        %1437 = vrot.lane.b32.xlu0 %v1433, 24
        %v1438 = vpop.permute.xlu0 %1437
        %1439 = vrot.lane.b32.xlu0 %v1434, 24
        %v1440 = vpop.permute.xlu0 %1439
        %1441 = vrot.lane.b32.xlu0 %v1435, 24
        %v1442 = vpop.permute.xlu0 %1441
        %1443 = vrot.lane.b32.xlu0 %v1436, 24
        %v1444 = vpop.permute.xlu0 %1443
        %v1445 = vunpack.c.l.b16 %v1134
        %v1446 = vunpack.c.l.b16 %v1148
        %v1447 = vunpack.c.l.b16 %v1162
        %v1448 = vunpack.c.l.b16 %v1176
        %v1449 = vunpack.c.l.b16 %v1190
        %v1450 = vunpack.c.l.b16 %v1204
        %v1451 = vunpack.c.l.b16 %v1218
        %v1452 = vunpack.c.l.b16 %v1232
        %v1453 = vpack.c.b16 %v1446, %v1445
        %v1454 = vpack.c.b16 %v1448, %v1447
        %v1455 = vpack.c.b16 %v1450, %v1449
        %v1456 = vpack.c.b16 %v1452, %v1451
        %1457 = vrot.lane.b32.xlu0 %v1453, 28
        %v1458 = vpop.permute.xlu0 %1457
        %1459 = vrot.lane.b32.xlu0 %v1454, 28
        %v1460 = vpop.permute.xlu0 %1459
        %1461 = vrot.lane.b32.xlu0 %v1455, 28
        %v1462 = vpop.permute.xlu0 %1461
        %1463 = vrot.lane.b32.xlu0 %v1456, 28
        %v1464 = vpop.permute.xlu0 %1463
        %v1465 = vunpack.c.l.b16 %v1260
        %v1466 = vunpack.c.l.b16 %v1264
        %v1467 = vunpack.c.l.b16 %v1268
        %v1468 = vunpack.c.l.b16 %v1272
        %v1469 = vunpack.c.l.b16 %v1276
        %v1470 = vunpack.c.l.b16 %v1280
        %v1471 = vunpack.c.l.b16 %v1284
        %v1472 = vunpack.c.l.b16 %v1288
        %v1473 = vpack.c.b16 %v1466, %v1465
        %v1474 = vpack.c.b16 %v1468, %v1467
        %v1475 = vpack.c.b16 %v1470, %v1469
        %v1476 = vpack.c.b16 %v1472, %v1471
        %1477 = vrot.lane.b32.xlu0 %v1473, 32
        %v1478 = vpop.permute.xlu0 %1477
        %1479 = vrot.lane.b32.xlu0 %v1474, 32
        %v1480 = vpop.permute.xlu0 %1479
        %1481 = vrot.lane.b32.xlu0 %v1475, 32
        %v1482 = vpop.permute.xlu0 %1481
        %1483 = vrot.lane.b32.xlu0 %v1476, 32
        %v1484 = vpop.permute.xlu0 %1483
        %vm1485 = vcmask 31744
        %v1488 = vsel %vm1485, %v1305, %v1322
        %v1491 = vsel %vm1485, %v1306, %v1324
        %v1494 = vsel %vm1485, %v1307, %v1326
        %v1497 = vsel %vm1485, %v1308, %v1328
        %vm1498 = vcmask 64512
        %v1500 = vsel %vm1498, %v1488, %v1342
        %v1502 = vsel %vm1498, %v1491, %v1344
        %v1504 = vsel %vm1498, %v1494, %v1346
        %v1506 = vsel %vm1498, %v1497, %v1348
        %vm1507 = vcmask 97280
        %v1509 = vsel %vm1507, %v1500, %v1370
        %v1511 = vsel %vm1507, %v1502, %v1372
        %v1513 = vsel %vm1507, %v1504, %v1374
        %v1515 = vsel %vm1507, %v1506, %v1376
        %vm1516 = vcmask 130048
        %v1518 = vsel %vm1516, %v1509, %v1390
        %v1520 = vsel %vm1516, %v1511, %v1392
        %v1522 = vsel %vm1516, %v1513, %v1394
        %v1524 = vsel %vm1516, %v1515, %v1396
        %vm1525 = vcmask 162816
        %v1527 = vsel %vm1525, %v1518, %v1410
        %v1529 = vsel %vm1525, %v1520, %v1412
        %v1531 = vsel %vm1525, %v1522, %v1414
        %v1533 = vsel %vm1525, %v1524, %v1416
        %vm1534 = vcmask 195584
        %v1536 = vsel %vm1534, %v1527, %v1438
        %v1538 = vsel %vm1534, %v1529, %v1440
        %v1540 = vsel %vm1534, %v1531, %v1442
        %v1542 = vsel %vm1534, %v1533, %v1444
        %vm1543 = vcmask 228352
        %v1545 = vsel %vm1543, %v1536, %v1458
        %v1547 = vsel %vm1543, %v1538, %v1460
        %v1549 = vsel %vm1543, %v1540, %v1462
        %v1551 = vsel %vm1543, %v1542, %v1464
        %vm1552 = vcmask 261120
        %v1554 = vsel %vm1552, %v1545, %v1478
        %v1556 = vsel %vm1552, %v1547, %v1480
        %v1558 = vsel %vm1552, %v1549, %v1482
        %v1560 = vsel %vm1552, %v1551, %v1484
        %v1561 = vld [vmem:[%s1] sm:$0xf]
        %v1562 = vld [vmem:[%s1 + $0x4] sm:$0xf]
        %v1563 = vld [vmem:[%s1 + $0x8] sm:$0xf]
        %v1564 = vld [vmem:[%s1 + $0xc] sm:$0xf]
        %v1565 = vld [vmem:[%s1 + $0x10] sm:$0x3]
        %v1566 = vld [vmem:[#allocation5] sm:$0x1]
        %v1568 = vperm.slane %v1566, 0
        %v1575 = vunpack.c.l.b16 %v1561
        %v1576 = vunpack.c.l.b16 %v1562
        %v1577 = vunpack.c.l.b16 %v1563
        %v1578 = vunpack.c.l.b16 %v1564
        %v1579 = vunpack.c.l.b16 %v1565
        %v1580 = vpack.c.b16 %v1576, %v1575
        %v1581 = vpack.c.b16 %v1578, %v1577
        %v1582 = vpack.c.b16 %v1579, %v1579
        %vm1585 = vcmask 293888
        %v1586 = vsel %vm1585, %v1554, 0
        %v1588 = vsel %vm1585, %v1556, 0
        %v1590 = vsel %vm1585, %v1558, 0
        %v1592 = vsel %vm1585, %v1560, 0
        %vm1594 = vcmask 1041408
        %v1596 = vsel %vm1594, %v1582, 0
        %1598 = vmatpush.bf16.msra.mxu0 0
        %1599 = vmatpush.bf16.msra.mxu0 0
        %1600 = vmatpush.bf16.msra.mxu0 0
        %1601 = vmatpush.bf16.msra.mxu0 0
        %1602 = vmatpush.bf16.msra.mxu0 0
        %1603 = vmatpush.bf16.msra.mxu0 %v1596
        %1604 = vmatpush.bf16.msra.mxu0 %v1581
        %1605 = vmatpush.bf16.msra.mxu0 %v1580
        %1606 = vmatmul.bf16.gmra.mxu0 %v1586
        %v1607 = vpop.f32.mrf.mxu0
        %v1608 = vadd.f32 %v1568, %v1607
        %v1609 = vpop.f32.mrf.mxu0
        %v1610 = vadd.f32 %v1568, %v1609
        %1611 = vmatmul.bf16.gmra.mxu0 %v1588
        %v1612 = vpop.f32.mrf.mxu0
        %v1613 = vadd.f32 %v1568, %v1612
        %v1614 = vpop.f32.mrf.mxu0
        %v1615 = vadd.f32 %v1568, %v1614
        %1616 = vmatmul.bf16.gmra.mxu0 %v1590
        %v1617 = vpop.f32.mrf.mxu0
        %v1618 = vadd.f32 %v1568, %v1617
        %v1619 = vpop.f32.mrf.mxu0
        %v1620 = vadd.f32 %v1568, %v1619
        %1621 = vmatmul.bf16.gmra.mxu0 %v1592
        %v1622 = vpop.f32.mrf.mxu0
        %v1623 = vadd.f32 %v1568, %v1622
        %v1624 = vpop.f32.mrf.mxu0
        %v1625 = vadd.f32 %v1568, %v1624
        %1626 = vdwg.mxu0
        %v1627 = vpack.c.bf16 %v1608, %v1608
        %v1628 = vpack.c.bf16 %v1610, %v1610
        %v1629 = vpack.c.bf16 %v1613, %v1613
        %v1630 = vpack.c.bf16 %v1615, %v1615
        %v1631 = vpack.c.bf16 %v1618, %v1618
        %v1632 = vpack.c.bf16 %v1620, %v1620
        %v1633 = vpack.c.bf16 %v1623, %v1623
        %v1634 = vpack.c.bf16 %v1625, %v1625
        %v1636 = vshrl.u32 %v1627, 16
        %v1638 = vrot.slane %v1636, 7
        %v1639 = vshll.u32 %v1627, 16
        %v1641 = vor.u32 %v1638, %v1639
        %v1642 = vrot.slane %v1638, 4
        %v1644 = vshrl.u32 %v1628, 16
        %v1646 = vrot.slane %v1644, 7
        %v1647 = vshll.u32 %v1628, 16
        %v1649 = vor.u32 %v1646, %v1647
        %v1650 = vrot.slane %v1646, 4
        %v1652 = vshrl.u32 %v1629, 16
        %v1654 = vrot.slane %v1652, 7
        %v1655 = vshll.u32 %v1629, 16
        %v1657 = vor.u32 %v1654, %v1655
        %v1658 = vrot.slane %v1654, 4
        %v1660 = vshrl.u32 %v1630, 16
        %v1662 = vrot.slane %v1660, 7
        %v1663 = vshll.u32 %v1630, 16
        %v1665 = vor.u32 %v1662, %v1663
        %v1666 = vrot.slane %v1662, 4
        %v1668 = vshrl.u32 %v1631, 16
        %v1670 = vrot.slane %v1668, 7
        %v1671 = vshll.u32 %v1631, 16
        %v1673 = vor.u32 %v1670, %v1671
        %v1674 = vrot.slane %v1670, 4
        %v1676 = vshrl.u32 %v1632, 16
        %v1678 = vrot.slane %v1676, 7
        %v1679 = vshll.u32 %v1632, 16
        %v1681 = vor.u32 %v1678, %v1679
        %v1682 = vrot.slane %v1678, 4
        %v1684 = vshrl.u32 %v1633, 16
        %v1686 = vrot.slane %v1684, 7
        %v1687 = vshll.u32 %v1633, 16
        %v1689 = vor.u32 %v1686, %v1687
        %v1690 = vrot.slane %v1686, 4
        %v1692 = vshrl.u32 %v1634, 16
        %v1694 = vrot.slane %v1692, 7
        %v1695 = vshll.u32 %v1634, 16
        %v1697 = vor.u32 %v1694, %v1695
        %v1698 = vrot.slane %v1694, 4
        %s1715 = scalar_lea.vmem [#allocation3], 8
        %vm1716 = vcmask 257024
        %vm1717 = vmand %vm1716, %vm573
        %v1718 = vld [vmem:[%s1715] sm:$0xf]
        %v1719 = vsel %vm1717, %v1641, %v1718
        %1720 = vst [vmem:[%s1715] sm:$0xf] %v1719
        %vm1721 = vcmask 253952
        %vm1722 = vmand %vm1721, %vm579
        %v1723 = vld [vmem:[%s1715 + $0x4] sm:$0x1]
        %v1724 = vsel %vm1722, %v1642, %v1723
        %1725 = vst [vmem:[%s1715 + $0x4] sm:$0x1] %v1724
        %v1726 = vld [vmem:[%s1715 + $0x8] sm:$0xf]
        %v1727 = vsel %vm1717, %v1649, %v1726
        %1728 = vst [vmem:[%s1715 + $0x8] sm:$0xf] %v1727
        %v1729 = vld [vmem:[%s1715 + $0xc] sm:$0x1]
        %v1730 = vsel %vm1722, %v1650, %v1729
        %1731 = vst [vmem:[%s1715 + $0xc] sm:$0x1] %v1730
        %v1732 = vld [vmem:[%s1715 + $0x10] sm:$0xf]
        %v1733 = vsel %vm1717, %v1657, %v1732
        %1734 = vst [vmem:[%s1715 + $0x10] sm:$0xf] %v1733
        %v1735 = vld [vmem:[%s1715 + $0x14] sm:$0x1]
        %v1736 = vsel %vm1722, %v1658, %v1735
        %1737 = vst [vmem:[%s1715 + $0x14] sm:$0x1] %v1736
        %v1738 = vld [vmem:[%s1715 + $0x18] sm:$0xf]
        %v1739 = vsel %vm1717, %v1665, %v1738
        %1740 = vst [vmem:[%s1715 + $0x18] sm:$0xf] %v1739
        %v1741 = vld [vmem:[%s1715 + $0x1c] sm:$0x1]
        %v1742 = vsel %vm1722, %v1666, %v1741
        %1743 = vst [vmem:[%s1715 + $0x1c] sm:$0x1] %v1742
        %v1744 = vld [vmem:[%s1715 + $0x20] sm:$0xf]
        %v1745 = vsel %vm1717, %v1673, %v1744
        %1746 = vst [vmem:[%s1715 + $0x20] sm:$0xf] %v1745
        %v1747 = vld [vmem:[%s1715 + $0x24] sm:$0x1]
        %v1748 = vsel %vm1722, %v1674, %v1747
        %1749 = vst [vmem:[%s1715 + $0x24] sm:$0x1] %v1748
        %v1750 = vld [vmem:[%s1715 + $0x28] sm:$0xf]
        %v1751 = vsel %vm1717, %v1681, %v1750
        %1752 = vst [vmem:[%s1715 + $0x28] sm:$0xf] %v1751
        %v1753 = vld [vmem:[%s1715 + $0x2c] sm:$0x1]
        %v1754 = vsel %vm1722, %v1682, %v1753
        %1755 = vst [vmem:[%s1715 + $0x2c] sm:$0x1] %v1754
        %v1756 = vld [vmem:[%s1715 + $0x30] sm:$0xf]
        %v1757 = vsel %vm1717, %v1689, %v1756
        %1758 = vst [vmem:[%s1715 + $0x30] sm:$0xf] %v1757
        %v1759 = vld [vmem:[%s1715 + $0x34] sm:$0x1]
        %v1760 = vsel %vm1722, %v1690, %v1759
        %1761 = vst [vmem:[%s1715 + $0x34] sm:$0x1] %v1760
        %v1762 = vld [vmem:[%s1715 + $0x38] sm:$0xf]
        %v1763 = vsel %vm1717, %v1697, %v1762
        %1764 = vst [vmem:[%s1715 + $0x38] sm:$0xf] %v1763
        %v1765 = vld [vmem:[%s1715 + $0x3c] sm:$0x1]
        %v1766 = vsel %vm1722, %v1698, %v1765
        %1767 = vst [vmem:[%s1715 + $0x3c] sm:$0x1] %v1766
        %v1768 = vld [vmem:[#allocation3] sm:$0xf]
        %v1769 = vld [vmem:[#allocation3 + $0x8] sm:$0xf]
        %v1770 = vld [vmem:[#allocation3 + $0x10] sm:$0xf]
        %v1771 = vld [vmem:[#allocation3 + $0x18] sm:$0xf]
        %v1772 = vld [vmem:[#allocation3 + $0x20] sm:$0xf]
        %v1773 = vld [vmem:[#allocation3 + $0x28] sm:$0xf]
        %v1774 = vld [vmem:[#allocation3 + $0x30] sm:$0xf]
        %v1775 = vld [vmem:[#allocation3 + $0x38] sm:$0xf]
        %v1776 = vld [vmem:[#allocation3 + $0x4] sm:$0x1]
        %v1777 = vld [vmem:[#allocation3 + $0xc] sm:$0x1]
        %v1778 = vld [vmem:[#allocation3 + $0x14] sm:$0x1]
        %v1779 = vld [vmem:[#allocation3 + $0x1c] sm:$0x1]
        %v1780 = vld [vmem:[#allocation3 + $0x24] sm:$0x1]
        %v1781 = vld [vmem:[#allocation3 + $0x2c] sm:$0x1]
        %v1782 = vld [vmem:[#allocation3 + $0x34] sm:$0x1]
        %v1783 = vld [vmem:[#allocation3 + $0x3c] sm:$0x1]
        %v1785 = vshrl.u32 %v1768, 16
        %v1787 = vrot.slane %v1785, 4
        %v1788 = vshll.u32 %v1768, 16
        %v1790 = vrot.slane %v1788, 5
        %v1791 = vor.u32 %v1787, %v1790
        %v1792 = vrot.slane %v1791, 4
        %v1794 = vshll.u32 %v1776, 16
        %v1796 = vrot.slane %v1794, 5
        %v1797 = vsel %vm748, %v1792, %v1796
        %v1799 = vshrl.u32 %v1769, 16
        %v1801 = vrot.slane %v1799, 4
        %v1802 = vshll.u32 %v1769, 16
        %v1804 = vrot.slane %v1802, 5
        %v1805 = vor.u32 %v1801, %v1804
        %v1806 = vrot.slane %v1805, 4
        %v1808 = vshll.u32 %v1777, 16
        %v1810 = vrot.slane %v1808, 5
        %v1811 = vsel %vm748, %v1806, %v1810
        %v1813 = vshrl.u32 %v1770, 16
        %v1815 = vrot.slane %v1813, 4
        %v1816 = vshll.u32 %v1770, 16
        %v1818 = vrot.slane %v1816, 5
        %v1819 = vor.u32 %v1815, %v1818
        %v1820 = vrot.slane %v1819, 4
        %v1822 = vshll.u32 %v1778, 16
        %v1824 = vrot.slane %v1822, 5
        %v1825 = vsel %vm748, %v1820, %v1824
        %v1827 = vshrl.u32 %v1771, 16
        %v1829 = vrot.slane %v1827, 4
        %v1830 = vshll.u32 %v1771, 16
        %v1832 = vrot.slane %v1830, 5
        %v1833 = vor.u32 %v1829, %v1832
        %v1834 = vrot.slane %v1833, 4
        %v1836 = vshll.u32 %v1779, 16
        %v1838 = vrot.slane %v1836, 5
        %v1839 = vsel %vm748, %v1834, %v1838
        %v1841 = vshrl.u32 %v1772, 16
        %v1843 = vrot.slane %v1841, 4
        %v1844 = vshll.u32 %v1772, 16
        %v1846 = vrot.slane %v1844, 5
        %v1847 = vor.u32 %v1843, %v1846
        %v1848 = vrot.slane %v1847, 4
        %v1850 = vshll.u32 %v1780, 16
        %v1852 = vrot.slane %v1850, 5
        %v1853 = vsel %vm748, %v1848, %v1852
        %v1855 = vshrl.u32 %v1773, 16
        %v1857 = vrot.slane %v1855, 4
        %v1858 = vshll.u32 %v1773, 16
        %v1860 = vrot.slane %v1858, 5
        %v1861 = vor.u32 %v1857, %v1860
        %v1862 = vrot.slane %v1861, 4
        %v1864 = vshll.u32 %v1781, 16
        %v1866 = vrot.slane %v1864, 5
        %v1867 = vsel %vm748, %v1862, %v1866
        %v1869 = vshrl.u32 %v1774, 16
        %v1871 = vrot.slane %v1869, 4
        %v1872 = vshll.u32 %v1774, 16
        %v1874 = vrot.slane %v1872, 5
        %v1875 = vor.u32 %v1871, %v1874
        %v1876 = vrot.slane %v1875, 4
        %v1878 = vshll.u32 %v1782, 16
        %v1880 = vrot.slane %v1878, 5
        %v1881 = vsel %vm748, %v1876, %v1880
        %v1883 = vshrl.u32 %v1775, 16
        %v1885 = vrot.slane %v1883, 4
        %v1886 = vshll.u32 %v1775, 16
        %v1888 = vrot.slane %v1886, 5
        %v1889 = vor.u32 %v1885, %v1888
        %v1890 = vrot.slane %v1889, 4
        %v1892 = vshll.u32 %v1783, 16
        %v1894 = vrot.slane %v1892, 5
        %v1895 = vsel %vm748, %v1890, %v1894
        %v1896 = vld [vmem:[#allocation3] sm:$0xe]
        %v1897 = vld [vmem:[#allocation3 + $0x8] sm:$0xe]
        %v1898 = vld [vmem:[#allocation3 + $0x10] sm:$0xe]
        %v1899 = vld [vmem:[#allocation3 + $0x18] sm:$0xe]
        %v1900 = vld [vmem:[#allocation3 + $0x20] sm:$0xe]
        %v1901 = vld [vmem:[#allocation3 + $0x28] sm:$0xe]
        %v1902 = vld [vmem:[#allocation3 + $0x30] sm:$0xe]
        %v1903 = vld [vmem:[#allocation3 + $0x38] sm:$0xe]
        %v1920 = vrot.slane %v1896, 5
        %v1921 = vrot.slane %v1920, 4
        %v1922 = vrot.slane %v1776, 5
        %v1923 = vsel %vm887, %v1921, %v1922
        %v1924 = vrot.slane %v1897, 5
        %v1925 = vrot.slane %v1924, 4
        %v1926 = vrot.slane %v1777, 5
        %v1927 = vsel %vm887, %v1925, %v1926
        %v1928 = vrot.slane %v1898, 5
        %v1929 = vrot.slane %v1928, 4
        %v1930 = vrot.slane %v1778, 5
        %v1931 = vsel %vm887, %v1929, %v1930
        %v1932 = vrot.slane %v1899, 5
        %v1933 = vrot.slane %v1932, 4
        %v1934 = vrot.slane %v1779, 5
        %v1935 = vsel %vm887, %v1933, %v1934
        %v1936 = vrot.slane %v1900, 5
        %v1937 = vrot.slane %v1936, 4
        %v1938 = vrot.slane %v1780, 5
        %v1939 = vsel %vm887, %v1937, %v1938
        %v1940 = vrot.slane %v1901, 5
        %v1941 = vrot.slane %v1940, 4
        %v1942 = vrot.slane %v1781, 5
        %v1943 = vsel %vm887, %v1941, %v1942
        %v1944 = vrot.slane %v1902, 5
        %v1945 = vrot.slane %v1944, 4
        %v1946 = vrot.slane %v1782, 5
        %v1947 = vsel %vm887, %v1945, %v1946
        %v1948 = vrot.slane %v1903, 5
        %v1949 = vrot.slane %v1948, 4
        %v1950 = vrot.slane %v1783, 5
        %v1951 = vsel %vm887, %v1949, %v1950
        %v1952 = vld [vmem:[%s1715] sm:$0xf]
        %v1953 = vld [vmem:[%s1715 + $0x8] sm:$0xf]
        %v1954 = vld [vmem:[%s1715 + $0x10] sm:$0xf]
        %v1955 = vld [vmem:[%s1715 + $0x18] sm:$0xf]
        %v1956 = vld [vmem:[%s1715 + $0x20] sm:$0xf]
        %v1957 = vld [vmem:[%s1715 + $0x28] sm:$0xf]
        %v1958 = vld [vmem:[%s1715 + $0x30] sm:$0xf]
        %v1959 = vld [vmem:[%s1715 + $0x38] sm:$0xf]
        %v1960 = vld [vmem:[%s1715 + $0x4] sm:$0x1]
        %v1961 = vld [vmem:[%s1715 + $0xc] sm:$0x1]
        %v1962 = vld [vmem:[%s1715 + $0x14] sm:$0x1]
        %v1963 = vld [vmem:[%s1715 + $0x1c] sm:$0x1]
        %v1964 = vld [vmem:[%s1715 + $0x24] sm:$0x1]
        %v1965 = vld [vmem:[%s1715 + $0x2c] sm:$0x1]
        %v1966 = vld [vmem:[%s1715 + $0x34] sm:$0x1]
        %v1967 = vld [vmem:[%s1715 + $0x3c] sm:$0x1]
        %v1969 = vshrl.u32 %v1952, 16
        %v1971 = vrot.slane %v1969, 4
        %v1972 = vshll.u32 %v1952, 16
        %v1974 = vrot.slane %v1972, 5
        %v1975 = vor.u32 %v1971, %v1974
        %v1976 = vrot.slane %v1975, 4
        %v1978 = vshll.u32 %v1960, 16
        %v1980 = vrot.slane %v1978, 5
        %v1981 = vsel %vm748, %v1976, %v1980
        %v1983 = vshrl.u32 %v1953, 16
        %v1985 = vrot.slane %v1983, 4
        %v1986 = vshll.u32 %v1953, 16
        %v1988 = vrot.slane %v1986, 5
        %v1989 = vor.u32 %v1985, %v1988
        %v1990 = vrot.slane %v1989, 4
        %v1992 = vshll.u32 %v1961, 16
        %v1994 = vrot.slane %v1992, 5
        %v1995 = vsel %vm748, %v1990, %v1994
        %v1997 = vshrl.u32 %v1954, 16
        %v1999 = vrot.slane %v1997, 4
        %v2000 = vshll.u32 %v1954, 16
        %v2002 = vrot.slane %v2000, 5
        %v2003 = vor.u32 %v1999, %v2002
        %v2004 = vrot.slane %v2003, 4
        %v2006 = vshll.u32 %v1962, 16
        %v2008 = vrot.slane %v2006, 5
        %v2009 = vsel %vm748, %v2004, %v2008
        %v2011 = vshrl.u32 %v1955, 16
        %v2013 = vrot.slane %v2011, 4
        %v2014 = vshll.u32 %v1955, 16
        %v2016 = vrot.slane %v2014, 5
        %v2017 = vor.u32 %v2013, %v2016
        %v2018 = vrot.slane %v2017, 4
        %v2020 = vshll.u32 %v1963, 16
        %v2022 = vrot.slane %v2020, 5
        %v2023 = vsel %vm748, %v2018, %v2022
        %v2025 = vshrl.u32 %v1956, 16
        %v2027 = vrot.slane %v2025, 4
        %v2028 = vshll.u32 %v1956, 16
        %v2030 = vrot.slane %v2028, 5
        %v2031 = vor.u32 %v2027, %v2030
        %v2032 = vrot.slane %v2031, 4
        %v2034 = vshll.u32 %v1964, 16
        %v2036 = vrot.slane %v2034, 5
        %v2037 = vsel %vm748, %v2032, %v2036
        %v2039 = vshrl.u32 %v1957, 16
        %v2041 = vrot.slane %v2039, 4
        %v2042 = vshll.u32 %v1957, 16
        %v2044 = vrot.slane %v2042, 5
        %v2045 = vor.u32 %v2041, %v2044
        %v2046 = vrot.slane %v2045, 4
        %v2048 = vshll.u32 %v1965, 16
        %v2050 = vrot.slane %v2048, 5
        %v2051 = vsel %vm748, %v2046, %v2050
        %v2053 = vshrl.u32 %v1958, 16
        %v2055 = vrot.slane %v2053, 4
        %v2056 = vshll.u32 %v1958, 16
        %v2058 = vrot.slane %v2056, 5
        %v2059 = vor.u32 %v2055, %v2058
        %v2060 = vrot.slane %v2059, 4
        %v2062 = vshll.u32 %v1966, 16
        %v2064 = vrot.slane %v2062, 5
        %v2065 = vsel %vm748, %v2060, %v2064
        %v2067 = vshrl.u32 %v1959, 16
        %v2069 = vrot.slane %v2067, 4
        %v2070 = vshll.u32 %v1959, 16
        %v2072 = vrot.slane %v2070, 5
        %v2073 = vor.u32 %v2069, %v2072
        %v2074 = vrot.slane %v2073, 4
        %v2076 = vshll.u32 %v1967, 16
        %v2078 = vrot.slane %v2076, 5
        %v2079 = vsel %vm748, %v2074, %v2078
        %v2088 = vld [vmem:[%s1715] sm:$0xe]
        %v2089 = vld [vmem:[%s1715 + $0x8] sm:$0xe]
        %v2090 = vld [vmem:[%s1715 + $0x10] sm:$0xe]
        %v2091 = vld [vmem:[%s1715 + $0x18] sm:$0xe]
        %v2092 = vld [vmem:[%s1715 + $0x20] sm:$0xe]
        %v2093 = vld [vmem:[%s1715 + $0x28] sm:$0xe]
        %v2094 = vld [vmem:[%s1715 + $0x30] sm:$0xe]
        %v2095 = vld [vmem:[%s1715 + $0x38] sm:$0xe]
        %v2112 = vrot.slane %v2088, 5
        %v2113 = vrot.slane %v2112, 4
        %v2114 = vrot.slane %v1960, 5
        %v2115 = vsel %vm887, %v2113, %v2114
        %v2116 = vrot.slane %v2089, 5
        %v2117 = vrot.slane %v2116, 4
        %v2118 = vrot.slane %v1961, 5
        %v2119 = vsel %vm887, %v2117, %v2118
        %v2120 = vrot.slane %v2090, 5
        %v2121 = vrot.slane %v2120, 4
        %v2122 = vrot.slane %v1962, 5
        %v2123 = vsel %vm887, %v2121, %v2122
        %v2124 = vrot.slane %v2091, 5
        %v2125 = vrot.slane %v2124, 4
        %v2126 = vrot.slane %v1963, 5
        %v2127 = vsel %vm887, %v2125, %v2126
        %v2128 = vrot.slane %v2092, 5
        %v2129 = vrot.slane %v2128, 4
        %v2130 = vrot.slane %v1964, 5
        %v2131 = vsel %vm887, %v2129, %v2130
        %v2132 = vrot.slane %v2093, 5
        %v2133 = vrot.slane %v2132, 4
        %v2134 = vrot.slane %v1965, 5
        %v2135 = vsel %vm887, %v2133, %v2134
        %v2136 = vrot.slane %v2094, 5
        %v2137 = vrot.slane %v2136, 4
        %v2138 = vrot.slane %v1966, 5
        %v2139 = vsel %vm887, %v2137, %v2138
        %v2140 = vrot.slane %v2095, 5
        %v2141 = vrot.slane %v2140, 4
        %v2142 = vrot.slane %v1967, 5
        %v2143 = vsel %vm887, %v2141, %v2142
        %s2144 = scalar_lea.vmem [#allocation3], 16
        %v2145 = vld [vmem:[%s2144] sm:$0xf]
        %v2146 = vld [vmem:[%s2144 + $0x8] sm:$0xf]
        %v2147 = vld [vmem:[%s2144 + $0x10] sm:$0xf]
        %v2148 = vld [vmem:[%s2144 + $0x18] sm:$0xf]
        %v2149 = vld [vmem:[%s2144 + $0x20] sm:$0xf]
        %v2150 = vld [vmem:[%s2144 + $0x28] sm:$0xf]
        %v2151 = vld [vmem:[%s2144 + $0x30] sm:$0xf]
        %v2152 = vld [vmem:[%s2144 + $0x38] sm:$0xf]
        %v2153 = vld [vmem:[%s2144 + $0x4] sm:$0x1]
        %v2154 = vld [vmem:[%s2144 + $0xc] sm:$0x1]
        %v2155 = vld [vmem:[%s2144 + $0x14] sm:$0x1]
        %v2156 = vld [vmem:[%s2144 + $0x1c] sm:$0x1]
        %v2157 = vld [vmem:[%s2144 + $0x24] sm:$0x1]
        %v2158 = vld [vmem:[%s2144 + $0x2c] sm:$0x1]
        %v2159 = vld [vmem:[%s2144 + $0x34] sm:$0x1]
        %v2160 = vld [vmem:[%s2144 + $0x3c] sm:$0x1]
        %v2162 = vshrl.u32 %v2145, 16
        %v2164 = vrot.slane %v2162, 4
        %v2165 = vshll.u32 %v2145, 16
        %v2167 = vrot.slane %v2165, 5
        %v2168 = vor.u32 %v2164, %v2167
        %v2169 = vrot.slane %v2168, 4
        %v2171 = vshll.u32 %v2153, 16
        %v2173 = vrot.slane %v2171, 5
        %v2174 = vsel %vm748, %v2169, %v2173
        %v2176 = vshrl.u32 %v2146, 16
        %v2178 = vrot.slane %v2176, 4
        %v2179 = vshll.u32 %v2146, 16
        %v2181 = vrot.slane %v2179, 5
        %v2182 = vor.u32 %v2178, %v2181
        %v2183 = vrot.slane %v2182, 4
        %v2185 = vshll.u32 %v2154, 16
        %v2187 = vrot.slane %v2185, 5
        %v2188 = vsel %vm748, %v2183, %v2187
        %v2190 = vshrl.u32 %v2147, 16
        %v2192 = vrot.slane %v2190, 4
        %v2193 = vshll.u32 %v2147, 16
        %v2195 = vrot.slane %v2193, 5
        %v2196 = vor.u32 %v2192, %v2195
        %v2197 = vrot.slane %v2196, 4
        %v2199 = vshll.u32 %v2155, 16
        %v2201 = vrot.slane %v2199, 5
        %v2202 = vsel %vm748, %v2197, %v2201
        %v2204 = vshrl.u32 %v2148, 16
        %v2206 = vrot.slane %v2204, 4
        %v2207 = vshll.u32 %v2148, 16
        %v2209 = vrot.slane %v2207, 5
        %v2210 = vor.u32 %v2206, %v2209
        %v2211 = vrot.slane %v2210, 4
        %v2213 = vshll.u32 %v2156, 16
        %v2215 = vrot.slane %v2213, 5
        %v2216 = vsel %vm748, %v2211, %v2215
        %v2218 = vshrl.u32 %v2149, 16
        %v2220 = vrot.slane %v2218, 4
        %v2221 = vshll.u32 %v2149, 16
        %v2223 = vrot.slane %v2221, 5
        %v2224 = vor.u32 %v2220, %v2223
        %v2225 = vrot.slane %v2224, 4
        %v2227 = vshll.u32 %v2157, 16
        %v2229 = vrot.slane %v2227, 5
        %v2230 = vsel %vm748, %v2225, %v2229
        %v2232 = vshrl.u32 %v2150, 16
        %v2234 = vrot.slane %v2232, 4
        %v2235 = vshll.u32 %v2150, 16
        %v2237 = vrot.slane %v2235, 5
        %v2238 = vor.u32 %v2234, %v2237
        %v2239 = vrot.slane %v2238, 4
        %v2241 = vshll.u32 %v2158, 16
        %v2243 = vrot.slane %v2241, 5
        %v2244 = vsel %vm748, %v2239, %v2243
        %v2246 = vshrl.u32 %v2151, 16
        %v2248 = vrot.slane %v2246, 4
        %v2249 = vshll.u32 %v2151, 16
        %v2251 = vrot.slane %v2249, 5
        %v2252 = vor.u32 %v2248, %v2251
        %v2253 = vrot.slane %v2252, 4
        %v2255 = vshll.u32 %v2159, 16
        %v2257 = vrot.slane %v2255, 5
        %v2258 = vsel %vm748, %v2253, %v2257
        %v2260 = vshrl.u32 %v2152, 16
        %v2262 = vrot.slane %v2260, 4
        %v2263 = vshll.u32 %v2152, 16
        %v2265 = vrot.slane %v2263, 5
        %v2266 = vor.u32 %v2262, %v2265
        %v2267 = vrot.slane %v2266, 4
        %v2269 = vshll.u32 %v2160, 16
        %v2271 = vrot.slane %v2269, 5
        %v2272 = vsel %vm748, %v2267, %v2271
        %v2273 = vld [vmem:[%s2144] sm:$0xe]
        %v2274 = vld [vmem:[%s2144 + $0x8] sm:$0xe]
        %v2275 = vld [vmem:[%s2144 + $0x10] sm:$0xe]
        %v2276 = vld [vmem:[%s2144 + $0x18] sm:$0xe]
        %v2277 = vld [vmem:[%s2144 + $0x20] sm:$0xe]
        %v2278 = vld [vmem:[%s2144 + $0x28] sm:$0xe]
        %v2279 = vld [vmem:[%s2144 + $0x30] sm:$0xe]
        %v2280 = vld [vmem:[%s2144 + $0x38] sm:$0xe]
        %v2297 = vrot.slane %v2273, 5
        %v2298 = vrot.slane %v2297, 4
        %v2299 = vrot.slane %v2153, 5
        %v2300 = vsel %vm887, %v2298, %v2299
        %v2301 = vrot.slane %v2274, 5
        %v2302 = vrot.slane %v2301, 4
        %v2303 = vrot.slane %v2154, 5
        %v2304 = vsel %vm887, %v2302, %v2303
        %v2305 = vrot.slane %v2275, 5
        %v2306 = vrot.slane %v2305, 4
        %v2307 = vrot.slane %v2155, 5
        %v2308 = vsel %vm887, %v2306, %v2307
        %v2309 = vrot.slane %v2276, 5
        %v2310 = vrot.slane %v2309, 4
        %v2311 = vrot.slane %v2156, 5
        %v2312 = vsel %vm887, %v2310, %v2311
        %v2313 = vrot.slane %v2277, 5
        %v2314 = vrot.slane %v2313, 4
        %v2315 = vrot.slane %v2157, 5
        %v2316 = vsel %vm887, %v2314, %v2315
        %v2317 = vrot.slane %v2278, 5
        %v2318 = vrot.slane %v2317, 4
        %v2319 = vrot.slane %v2158, 5
        %v2320 = vsel %vm887, %v2318, %v2319
        %v2321 = vrot.slane %v2279, 5
        %v2322 = vrot.slane %v2321, 4
        %v2323 = vrot.slane %v2159, 5
        %v2324 = vsel %vm887, %v2322, %v2323
        %v2325 = vrot.slane %v2280, 5
        %v2326 = vrot.slane %v2325, 4
        %v2327 = vrot.slane %v2160, 5
        %v2328 = vsel %vm887, %v2326, %v2327
        %v2337 = vunpack.c.l.b16 %v1768
        %v2338 = vunpack.c.l.b16 %v1769
        %v2339 = vunpack.c.l.b16 %v1770
        %v2340 = vunpack.c.l.b16 %v1771
        %v2341 = vunpack.c.l.b16 %v1772
        %v2342 = vunpack.c.l.b16 %v1773
        %v2343 = vunpack.c.l.b16 %v1774
        %v2344 = vunpack.c.l.b16 %v1775
        %v2345 = vpack.c.b16 %v2338, %v2337
        %v2346 = vpack.c.b16 %v2340, %v2339
        %v2347 = vpack.c.b16 %v2342, %v2341
        %v2348 = vpack.c.b16 %v2344, %v2343
        %v2349 = vunpack.c.l.b16 %v1797
        %v2350 = vunpack.c.l.b16 %v1811
        %v2351 = vunpack.c.l.b16 %v1825
        %v2352 = vunpack.c.l.b16 %v1839
        %v2353 = vunpack.c.l.b16 %v1853
        %v2354 = vunpack.c.l.b16 %v1867
        %v2355 = vunpack.c.l.b16 %v1881
        %v2356 = vunpack.c.l.b16 %v1895
        %v2357 = vpack.c.b16 %v2350, %v2349
        %v2358 = vpack.c.b16 %v2352, %v2351
        %v2359 = vpack.c.b16 %v2354, %v2353
        %v2360 = vpack.c.b16 %v2356, %v2355
        %2361 = vrot.lane.b32.xlu0 %v2357, 32
        %v2362 = vpop.permute.xlu0 %2361
        %2363 = vrot.lane.b32.xlu0 %v2358, 32
        %v2364 = vpop.permute.xlu0 %2363
        %2365 = vrot.lane.b32.xlu0 %v2359, 32
        %v2366 = vpop.permute.xlu0 %2365
        %2367 = vrot.lane.b32.xlu0 %v2360, 32
        %v2368 = vpop.permute.xlu0 %2367
        %v2369 = vunpack.c.l.b16 %v1923
        %v2370 = vunpack.c.l.b16 %v1927
        %v2371 = vunpack.c.l.b16 %v1931
        %v2372 = vunpack.c.l.b16 %v1935
        %v2373 = vunpack.c.l.b16 %v1939
        %v2374 = vunpack.c.l.b16 %v1943
        %v2375 = vunpack.c.l.b16 %v1947
        %v2376 = vunpack.c.l.b16 %v1951
        %v2377 = vpack.c.b16 %v2370, %v2369
        %v2378 = vpack.c.b16 %v2372, %v2371
        %v2379 = vpack.c.b16 %v2374, %v2373
        %v2380 = vpack.c.b16 %v2376, %v2375
        %2381 = vrot.lane.b32.xlu0 %v2377, 64
        %v2382 = vpop.permute.xlu0 %2381
        %2383 = vrot.lane.b32.xlu0 %v2378, 64
        %v2384 = vpop.permute.xlu0 %2383
        %2385 = vrot.lane.b32.xlu0 %v2379, 64
        %v2386 = vpop.permute.xlu0 %2385
        %2387 = vrot.lane.b32.xlu0 %v2380, 64
        %v2388 = vpop.permute.xlu0 %2387
        %v2397 = vunpack.c.l.b16 %v1952
        %v2398 = vunpack.c.l.b16 %v1953
        %v2399 = vunpack.c.l.b16 %v1954
        %v2400 = vunpack.c.l.b16 %v1955
        %v2401 = vunpack.c.l.b16 %v1956
        %v2402 = vunpack.c.l.b16 %v1957
        %v2403 = vunpack.c.l.b16 %v1958
        %v2404 = vunpack.c.l.b16 %v1959
        %v2405 = vpack.c.b16 %v2398, %v2397
        %v2406 = vpack.c.b16 %v2400, %v2399
        %v2407 = vpack.c.b16 %v2402, %v2401
        %v2408 = vpack.c.b16 %v2404, %v2403
        %2409 = vrot.lane.b32.xlu0 %v2405, 96
        %v2410 = vpop.permute.xlu0 %2409
        %2411 = vrot.lane.b32.xlu0 %v2406, 96
        %v2412 = vpop.permute.xlu0 %2411
        %2413 = vrot.lane.b32.xlu0 %v2407, 96
        %v2414 = vpop.permute.xlu0 %2413
        %2415 = vrot.lane.b32.xlu0 %v2408, 96
        %v2416 = vpop.permute.xlu0 %2415
        %v2417 = vunpack.c.l.b16 %v1981
        %v2418 = vunpack.c.l.b16 %v1995
        %v2419 = vunpack.c.l.b16 %v2009
        %v2420 = vunpack.c.l.b16 %v2023
        %v2421 = vunpack.c.l.b16 %v2037
        %v2422 = vunpack.c.l.b16 %v2051
        %v2423 = vunpack.c.l.b16 %v2065
        %v2424 = vunpack.c.l.b16 %v2079
        %v2425 = vpack.c.b16 %v2418, %v2417
        %v2426 = vpack.c.b16 %v2420, %v2419
        %v2427 = vpack.c.b16 %v2422, %v2421
        %v2428 = vpack.c.b16 %v2424, %v2423
        %v2429 = vunpack.c.l.b16 %v2115
        %v2430 = vunpack.c.l.b16 %v2119
        %v2431 = vunpack.c.l.b16 %v2123
        %v2432 = vunpack.c.l.b16 %v2127
        %v2433 = vunpack.c.l.b16 %v2131
        %v2434 = vunpack.c.l.b16 %v2135
        %v2435 = vunpack.c.l.b16 %v2139
        %v2436 = vunpack.c.l.b16 %v2143
        %v2437 = vpack.c.b16 %v2430, %v2429
        %v2438 = vpack.c.b16 %v2432, %v2431
        %v2439 = vpack.c.b16 %v2434, %v2433
        %v2440 = vpack.c.b16 %v2436, %v2435
        %2441 = vrot.lane.b32.xlu0 %v2437, 32
        %v2442 = vpop.permute.xlu0 %2441
        %2443 = vrot.lane.b32.xlu0 %v2438, 32
        %v2444 = vpop.permute.xlu0 %2443
        %2445 = vrot.lane.b32.xlu0 %v2439, 32
        %v2446 = vpop.permute.xlu0 %2445
        %2447 = vrot.lane.b32.xlu0 %v2440, 32
        %v2448 = vpop.permute.xlu0 %2447
        %v2457 = vunpack.c.l.b16 %v2145
        %v2458 = vunpack.c.l.b16 %v2146
        %v2459 = vunpack.c.l.b16 %v2147
        %v2460 = vunpack.c.l.b16 %v2148
        %v2461 = vunpack.c.l.b16 %v2149
        %v2462 = vunpack.c.l.b16 %v2150
        %v2463 = vunpack.c.l.b16 %v2151
        %v2464 = vunpack.c.l.b16 %v2152
        %v2465 = vpack.c.b16 %v2458, %v2457
        %v2466 = vpack.c.b16 %v2460, %v2459
        %v2467 = vpack.c.b16 %v2462, %v2461
        %v2468 = vpack.c.b16 %v2464, %v2463
        %2469 = vrot.lane.b32.xlu0 %v2465, 64
        %v2470 = vpop.permute.xlu0 %2469
        %2471 = vrot.lane.b32.xlu0 %v2466, 64
        %v2472 = vpop.permute.xlu0 %2471
        %2473 = vrot.lane.b32.xlu0 %v2467, 64
        %v2474 = vpop.permute.xlu0 %2473
        %2475 = vrot.lane.b32.xlu0 %v2468, 64
        %v2476 = vpop.permute.xlu0 %2475
        %v2477 = vunpack.c.l.b16 %v2174
        %v2478 = vunpack.c.l.b16 %v2188
        %v2479 = vunpack.c.l.b16 %v2202
        %v2480 = vunpack.c.l.b16 %v2216
        %v2481 = vunpack.c.l.b16 %v2230
        %v2482 = vunpack.c.l.b16 %v2244
        %v2483 = vunpack.c.l.b16 %v2258
        %v2484 = vunpack.c.l.b16 %v2272
        %v2485 = vpack.c.b16 %v2478, %v2477
        %v2486 = vpack.c.b16 %v2480, %v2479
        %v2487 = vpack.c.b16 %v2482, %v2481
        %v2488 = vpack.c.b16 %v2484, %v2483
        %2489 = vrot.lane.b32.xlu0 %v2485, 96
        %v2490 = vpop.permute.xlu0 %2489
        %2491 = vrot.lane.b32.xlu0 %v2486, 96
        %v2492 = vpop.permute.xlu0 %2491
        %2493 = vrot.lane.b32.xlu0 %v2487, 96
        %v2494 = vpop.permute.xlu0 %2493
        %2495 = vrot.lane.b32.xlu0 %v2488, 96
        %v2496 = vpop.permute.xlu0 %2495
        %v2497 = vunpack.c.l.b16 %v2300
        %v2498 = vunpack.c.l.b16 %v2304
        %v2499 = vunpack.c.l.b16 %v2308
        %v2500 = vunpack.c.l.b16 %v2312
        %v2501 = vunpack.c.l.b16 %v2316
        %v2502 = vunpack.c.l.b16 %v2320
        %v2503 = vunpack.c.l.b16 %v2324
        %v2504 = vunpack.c.l.b16 %v2328
        %v2505 = vpack.c.b16 %v2498, %v2497
        %v2506 = vpack.c.b16 %v2500, %v2499
        %v2507 = vpack.c.b16 %v2502, %v2501
        %v2508 = vpack.c.b16 %v2504, %v2503
        %v2511 = vsel %vm1552, %v2345, %v2362
        %v2514 = vsel %vm1552, %v2346, %v2364
        %v2517 = vsel %vm1552, %v2347, %v2366
        %v2520 = vsel %vm1552, %v2348, %v2368
        %vm2521 = vcmask 523264
        %v2523 = vsel %vm2521, %v2511, %v2382
        %v2525 = vsel %vm2521, %v2514, %v2384
        %v2527 = vsel %vm2521, %v2517, %v2386
        %v2529 = vsel %vm2521, %v2520, %v2388
        %vm2530 = vcmask 785408
        %v2532 = vsel %vm2530, %v2523, %v2410
        %v2535 = vsel %vm2530, %v2525, %v2412
        %v2538 = vsel %vm2530, %v2527, %v2414
        %v2541 = vsel %vm2530, %v2529, %v2416
        %v2545 = vsel %vm1552, %v2425, %v2442
        %v2548 = vsel %vm1552, %v2426, %v2444
        %v2551 = vsel %vm1552, %v2427, %v2446
        %v2554 = vsel %vm1552, %v2428, %v2448
        %v2556 = vsel %vm2521, %v2545, %v2470
        %v2558 = vsel %vm2521, %v2548, %v2472
        %v2560 = vsel %vm2521, %v2551, %v2474
        %v2562 = vsel %vm2521, %v2554, %v2476
        %v2564 = vsel %vm2530, %v2556, %v2490
        %v2567 = vsel %vm2530, %v2558, %v2492
        %v2570 = vsel %vm2530, %v2560, %v2494
        %v2573 = vsel %vm2530, %v2562, %v2496
        %v2575 = vld [vmem:[%s3] sm:$0xf]
        %v2576 = vld [vmem:[%s3 + $0x4] sm:$0xf]
        %v2577 = vld [vmem:[%s3 + $0x8] sm:$0xf]
        %v2578 = vld [vmem:[%s3 + $0xc] sm:$0xf]
        %v2579 = vld [vmem:[%s3 + $0x10] sm:$0xf]
        %v2580 = vld [vmem:[%s3 + $0x14] sm:$0xf]
        %v2581 = vld [vmem:[%s3 + $0x18] sm:$0xf]
        %v2582 = vld [vmem:[%s3 + $0x1c] sm:$0xf]
        %v2583 = vld [vmem:[%s3 + $0x20] sm:$0xf]
        %v2584 = vld [vmem:[%s3 + $0x24] sm:$0xf]
        %v2585 = vld [vmem:[%s3 + $0x28] sm:$0xf]
        %v2586 = vld [vmem:[%s3 + $0x2c] sm:$0xf]
        %v2587 = vld [vmem:[%s3 + $0x30] sm:$0xf]
        %v2588 = vld [vmem:[%s3 + $0x34] sm:$0xf]
        %v2589 = vld [vmem:[%s3 + $0x38] sm:$0xf]
        %v2590 = vld [vmem:[%s3 + $0x3c] sm:$0xf]
        %v2591 = vld [vmem:[%s3 + $0x40] sm:$0xf]
        %v2592 = vld [vmem:[%s3 + $0x44] sm:$0xf]
        %v2593 = vld [vmem:[%s3 + $0x48] sm:$0xf]
        %v2594 = vld [vmem:[%s3 + $0x4c] sm:$0xf]
        %v2595 = vld [vmem:[%s3 + $0x50] sm:$0xf]
        %v2596 = vld [vmem:[%s3 + $0x54] sm:$0xf]
        %v2597 = vld [vmem:[%s3 + $0x58] sm:$0xf]
        %v2598 = vld [vmem:[%s3 + $0x5c] sm:$0xf]
        %v2599 = vld [vmem:[%s3 + $0x60] sm:$0xf]
        %v2600 = vld [vmem:[%s3 + $0x64] sm:$0xf]
        %v2601 = vld [vmem:[%s3 + $0x68] sm:$0xf]
        %v2602 = vld [vmem:[%s3 + $0x6c] sm:$0xf]
        %v2603 = vld [vmem:[%s3 + $0x70] sm:$0xf]
        %v2604 = vld [vmem:[%s3 + $0x74] sm:$0xf]
        %v2605 = vld [vmem:[%s3 + $0x78] sm:$0xf]
        %v2606 = vld [vmem:[%s3 + $0x7c] sm:$0xf]
        %v2607 = vld [vmem:[%s3 + $0x80] sm:$0xf]
        %v2608 = vld [vmem:[%s3 + $0x84] sm:$0xf]
        %v2609 = vld [vmem:[%s3 + $0x88] sm:$0xf]
        %v2610 = vld [vmem:[%s3 + $0x8c] sm:$0xf]
        %v2647 = vunpack.c.l.b16 %v2575
        %v2648 = vunpack.c.l.b16 %v2576
        %v2649 = vunpack.c.l.b16 %v2577
        %v2650 = vunpack.c.l.b16 %v2578
        %v2651 = vunpack.c.l.b16 %v2579
        %v2652 = vunpack.c.l.b16 %v2580
        %v2653 = vunpack.c.l.b16 %v2581
        %v2654 = vunpack.c.l.b16 %v2582
        %v2655 = vunpack.c.l.b16 %v2583
        %v2656 = vunpack.c.l.b16 %v2584
        %v2657 = vunpack.c.l.b16 %v2585
        %v2658 = vunpack.c.l.b16 %v2586
        %v2659 = vunpack.c.l.b16 %v2587
        %v2660 = vunpack.c.l.b16 %v2588
        %v2661 = vunpack.c.l.b16 %v2589
        %v2662 = vunpack.c.l.b16 %v2590
        %v2663 = vunpack.c.l.b16 %v2591
        %v2664 = vunpack.c.l.b16 %v2592
        %v2665 = vunpack.c.l.b16 %v2593
        %v2666 = vunpack.c.l.b16 %v2594
        %v2667 = vunpack.c.l.b16 %v2595
        %v2668 = vunpack.c.l.b16 %v2596
        %v2669 = vunpack.c.l.b16 %v2597
        %v2670 = vunpack.c.l.b16 %v2598
        %v2671 = vunpack.c.l.b16 %v2599
        %v2672 = vunpack.c.l.b16 %v2600
        %v2673 = vunpack.c.l.b16 %v2601
        %v2674 = vunpack.c.l.b16 %v2602
        %v2675 = vunpack.c.l.b16 %v2603
        %v2676 = vunpack.c.l.b16 %v2604
        %v2677 = vunpack.c.l.b16 %v2605
        %v2678 = vunpack.c.l.b16 %v2606
        %v2679 = vunpack.c.l.b16 %v2607
        %v2680 = vunpack.c.l.b16 %v2608
        %v2681 = vunpack.c.l.b16 %v2609
        %v2682 = vunpack.c.l.b16 %v2610
        %v2683 = vpack.c.b16 %v2648, %v2647
        %v2684 = vpack.c.b16 %v2650, %v2649
        %v2685 = vpack.c.b16 %v2652, %v2651
        %v2686 = vpack.c.b16 %v2654, %v2653
        %v2687 = vpack.c.b16 %v2656, %v2655
        %v2688 = vpack.c.b16 %v2658, %v2657
        %v2689 = vpack.c.b16 %v2660, %v2659
        %v2690 = vpack.c.b16 %v2662, %v2661
        %v2691 = vpack.c.b16 %v2664, %v2663
        %v2692 = vpack.c.b16 %v2666, %v2665
        %v2693 = vpack.c.b16 %v2668, %v2667
        %v2694 = vpack.c.b16 %v2670, %v2669
        %v2695 = vpack.c.b16 %v2672, %v2671
        %v2696 = vpack.c.b16 %v2674, %v2673
        %v2697 = vpack.c.b16 %v2676, %v2675
        %v2698 = vpack.c.b16 %v2678, %v2677
        %v2699 = vpack.c.b16 %v2680, %v2679
        %v2700 = vpack.c.b16 %v2682, %v2681
        %v2720 = vsel %vm1552, %v2505, 0
        %v2723 = vsel %vm1552, %v2506, 0
        %v2726 = vsel %vm1552, %v2507, 0
        %v2729 = vsel %vm1552, %v2508, 0
        %2731 = vmatpush.bf16.msra.mxu0 %v2690
        %2732 = vmatpush.bf16.msra.mxu0 %v2689
        %2733 = vmatpush.bf16.msra.mxu0 %v2688
        %2734 = vmatpush.bf16.msra.mxu0 %v2687
        %2735 = vmatpush.bf16.msra.mxu0 %v2686
        %2736 = vmatpush.bf16.msra.mxu0 %v2685
        %2737 = vmatpush.bf16.msra.mxu0 %v2684
        %2738 = vmatpush.bf16.msra.mxu0 %v2683
        %2739 = vmatmul.bf16.gmra.mxu0 %v2532
        %v2740 = vpop.f32.mrf.mxu0
        %v2741 = vadd.f32 0.0, %v2740
        %v2742 = vpop.f32.mrf.mxu0
        %v2743 = vadd.f32 0.0, %v2742
        %2744 = vmatmul.bf16.gmra.mxu0 %v2535
        %v2745 = vpop.f32.mrf.mxu0
        %v2746 = vadd.f32 0.0, %v2745
        %v2747 = vpop.f32.mrf.mxu0
        %v2748 = vadd.f32 0.0, %v2747
        %2749 = vmatmul.bf16.gmra.mxu0 %v2538
        %v2750 = vpop.f32.mrf.mxu0
        %v2751 = vadd.f32 0.0, %v2750
        %v2752 = vpop.f32.mrf.mxu0
        %v2753 = vadd.f32 0.0, %v2752
        %2754 = vmatmul.bf16.gmra.mxu0 %v2541
        %v2755 = vpop.f32.mrf.mxu0
        %v2756 = vadd.f32 0.0, %v2755
        %v2757 = vpop.f32.mrf.mxu0
        %v2758 = vadd.f32 0.0, %v2757
        %2759 = vdwg.mxu0
        %2760 = vmatpush.bf16.msra.mxu0 %v2698
        %2761 = vmatpush.bf16.msra.mxu0 %v2697
        %2762 = vmatpush.bf16.msra.mxu0 %v2696
        %2763 = vmatpush.bf16.msra.mxu0 %v2695
        %2764 = vmatpush.bf16.msra.mxu0 %v2694
        %2765 = vmatpush.bf16.msra.mxu0 %v2693
        %2766 = vmatpush.bf16.msra.mxu0 %v2692
        %2767 = vmatpush.bf16.msra.mxu0 %v2691
        %2768 = vmatmul.bf16.gmra.mxu0 %v2564
        %v2769 = vpop.f32.mrf.mxu0
        %v2770 = vadd.f32 %v2741, %v2769
        %v2771 = vpop.f32.mrf.mxu0
        %v2772 = vadd.f32 %v2743, %v2771
        %2773 = vmatmul.bf16.gmra.mxu0 %v2567
        %v2774 = vpop.f32.mrf.mxu0
        %v2775 = vadd.f32 %v2746, %v2774
        %v2776 = vpop.f32.mrf.mxu0
        %v2777 = vadd.f32 %v2748, %v2776
        %2778 = vmatmul.bf16.gmra.mxu0 %v2570
        %v2779 = vpop.f32.mrf.mxu0
        %v2780 = vadd.f32 %v2751, %v2779
        %v2781 = vpop.f32.mrf.mxu0
        %v2782 = vadd.f32 %v2753, %v2781
        %2783 = vmatmul.bf16.gmra.mxu0 %v2573
        %v2784 = vpop.f32.mrf.mxu0
        %v2785 = vadd.f32 %v2756, %v2784
        %v2786 = vpop.f32.mrf.mxu0
        %v2787 = vadd.f32 %v2758, %v2786
        %2788 = vdwg.mxu0
        %2789 = vmatpush.bf16.msra.mxu0 0
        %2790 = vmatpush.bf16.msra.mxu0 0
        %2791 = vmatpush.bf16.msra.mxu0 0
        %2792 = vmatpush.bf16.msra.mxu0 0
        %2793 = vmatpush.bf16.msra.mxu0 0
        %2794 = vmatpush.bf16.msra.mxu0 0
        %2795 = vmatpush.bf16.msra.mxu0 %v2700
        %2796 = vmatpush.bf16.msra.mxu0 %v2699
        %2797 = vmatmul.bf16.gmra.mxu0 %v2720
        %v2798 = vpop.f32.mrf.mxu0
        %v2799 = vadd.f32 %v2770, %v2798
        %v2800 = vpop.f32.mrf.mxu0
        %v2801 = vadd.f32 %v2772, %v2800
        %2802 = vmatmul.bf16.gmra.mxu0 %v2723
        %v2803 = vpop.f32.mrf.mxu0
        %v2804 = vadd.f32 %v2775, %v2803
        %v2805 = vpop.f32.mrf.mxu0
        %v2806 = vadd.f32 %v2777, %v2805
        %2807 = vmatmul.bf16.gmra.mxu0 %v2726
        %v2808 = vpop.f32.mrf.mxu0
        %v2809 = vadd.f32 %v2780, %v2808
        %v2810 = vpop.f32.mrf.mxu0
        %v2811 = vadd.f32 %v2782, %v2810
        %2812 = vmatmul.bf16.gmra.mxu0 %v2729
        %v2813 = vpop.f32.mrf.mxu0
        %v2814 = vadd.f32 %v2785, %v2813
        %v2815 = vpop.f32.mrf.mxu0
        %v2816 = vadd.f32 %v2787, %v2815
        %2817 = vdwg.mxu0
        %v2818 = vmax.f32 %v2799, 0.0
        %v2819 = vmax.f32 %v2801, 0.0
        %v2820 = vmax.f32 %v2804, 0.0
        %v2821 = vmax.f32 %v2806, 0.0
        %v2822 = vmax.f32 %v2809, 0.0
        %v2823 = vmax.f32 %v2811, 0.0
        %v2824 = vmax.f32 %v2814, 0.0
        %v2825 = vmax.f32 %v2816, 0.0
        %v2826 = vpack.c.bf16 %v2819, %v2818
        %v2827 = vpack.c.bf16 %v2821, %v2820
        %v2828 = vpack.c.bf16 %v2823, %v2822
        %v2829 = vpack.c.bf16 %v2825, %v2824
        %v2830 = vld [vmem:[#allocation7] sm:$0xf]
        %v2832 = vsel %vm1498, %v2826, 0
        %v2835 = vsel %vm1498, %v2827, 0
        %v2838 = vsel %vm1498, %v2828, 0
        %v2841 = vsel %vm1498, %v2829, 0
        %vm2843 = vcmask 1043456
        %v2845 = vsel %vm2843, %v2830, 0
        %2847 = vmatpush.bf16.msra.mxu0 0
        %2848 = vmatpush.bf16.msra.mxu0 0
        %2849 = vmatpush.bf16.msra.mxu0 0
        %2850 = vmatpush.bf16.msra.mxu0 0
        %2851 = vmatpush.bf16.msra.mxu0 0
        %2852 = vmatpush.bf16.msra.mxu0 0
        %2853 = vmatpush.bf16.msra.mxu0 0
        %2854 = vmatpush.bf16.msra.mxu0 %v2845
        %2855 = vmatmul.bf16.gmra.mxu0 %v2832
        %v2856 = vpop.f32.mrf.mxu0
        %v2857 = vadd.f32 0.0, %v2856
        %v2858 = vpop.f32.mrf.mxu0
        %v2859 = vadd.f32 0.0, %v2858
        %2860 = vmatmul.bf16.gmra.mxu0 %v2835
        %v2861 = vpop.f32.mrf.mxu0
        %v2862 = vadd.f32 0.0, %v2861
        %v2863 = vpop.f32.mrf.mxu0
        %v2864 = vadd.f32 0.0, %v2863
        %2865 = vmatmul.bf16.gmra.mxu0 %v2838
        %v2866 = vpop.f32.mrf.mxu0
        %v2867 = vadd.f32 0.0, %v2866
        %v2868 = vpop.f32.mrf.mxu0
        %v2869 = vadd.f32 0.0, %v2868
        %2870 = vmatmul.bf16.gmra.mxu0 %v2841
        %v2871 = vpop.f32.mrf.mxu0
        %v2872 = vadd.f32 0.0, %v2871
        %v2873 = vpop.f32.mrf.mxu0
        %v2874 = vadd.f32 0.0, %v2873
        %2875 = vdwg.mxu0
        %v2876 = vunpack.c.l.bf16 %v1981
        %v2877 = vunpack.c.l.bf16 %v1995
        %v2878 = vunpack.c.l.bf16 %v2009
        %v2879 = vunpack.c.l.bf16 %v2023
        %v2880 = vunpack.c.l.bf16 %v2037
        %v2881 = vunpack.c.l.bf16 %v2051
        %v2882 = vunpack.c.l.bf16 %v2065
        %v2883 = vunpack.c.l.bf16 %v2079
        %v2884 = vadd.f32 %v2876, %v2857
        %v2885 = vadd.f32 %v2877, %v2859
        %v2886 = vadd.f32 %v2878, %v2862
        %v2887 = vadd.f32 %v2879, %v2864
        %v2888 = vadd.f32 %v2880, %v2867
        %v2889 = vadd.f32 %v2881, %v2869
        %v2890 = vadd.f32 %v2882, %v2872
        %v2891 = vadd.f32 %v2883, %v2874
        %v2892 = vpack.c.bf16 %v2884, %v2884
        %v2893 = vpack.c.bf16 %v2885, %v2885
        %v2894 = vpack.c.bf16 %v2886, %v2886
        %v2895 = vpack.c.bf16 %v2887, %v2887
        %v2896 = vpack.c.bf16 %v2888, %v2888
        %v2897 = vpack.c.bf16 %v2889, %v2889
        %v2898 = vpack.c.bf16 %v2890, %v2890
        %v2899 = vpack.c.bf16 %v2891, %v2891
        %v2901 = vshrl.u32 %v2892, 16
        %v2903 = vrot.slane %v2901, 7
        %v2904 = vshll.u32 %v2892, 16
        %v2906 = vor.u32 %v2903, %v2904
        %v2907 = vrot.slane %v2903, 4
        %v2909 = vshrl.u32 %v2893, 16
        %v2911 = vrot.slane %v2909, 7
        %v2912 = vshll.u32 %v2893, 16
        %v2914 = vor.u32 %v2911, %v2912
        %v2915 = vrot.slane %v2911, 4
        %v2917 = vshrl.u32 %v2894, 16
        %v2919 = vrot.slane %v2917, 7
        %v2920 = vshll.u32 %v2894, 16
        %v2922 = vor.u32 %v2919, %v2920
        %v2923 = vrot.slane %v2919, 4
        %v2925 = vshrl.u32 %v2895, 16
        %v2927 = vrot.slane %v2925, 7
        %v2928 = vshll.u32 %v2895, 16
        %v2930 = vor.u32 %v2927, %v2928
        %v2931 = vrot.slane %v2927, 4
        %v2933 = vshrl.u32 %v2896, 16
        %v2935 = vrot.slane %v2933, 7
        %v2936 = vshll.u32 %v2896, 16
        %v2938 = vor.u32 %v2935, %v2936
        %v2939 = vrot.slane %v2935, 4
        %v2941 = vshrl.u32 %v2897, 16
        %v2943 = vrot.slane %v2941, 7
        %v2944 = vshll.u32 %v2897, 16
        %v2946 = vor.u32 %v2943, %v2944
        %v2947 = vrot.slane %v2943, 4
        %v2949 = vshrl.u32 %v2898, 16
        %v2951 = vrot.slane %v2949, 7
        %v2952 = vshll.u32 %v2898, 16
        %v2954 = vor.u32 %v2951, %v2952
        %v2955 = vrot.slane %v2951, 4
        %v2957 = vshrl.u32 %v2899, 16
        %v2959 = vrot.slane %v2957, 7
        %v2960 = vshll.u32 %v2899, 16
        %v2962 = vor.u32 %v2959, %v2960
        %v2963 = vrot.slane %v2959, 4
        %v2980 = vsel %vm1717, %v2906, %v1952
        %2981 = vst [vmem:[%s1715] sm:$0xf] %v2980
        %v2982 = vld [vmem:[%s1715 + $0x4] sm:$0x1]
        %v2983 = vsel %vm1722, %v2907, %v2982
        %2984 = vst [vmem:[%s1715 + $0x4] sm:$0x1] %v2983
        %v2985 = vld [vmem:[%s1715 + $0x8] sm:$0xf]
        %v2986 = vsel %vm1717, %v2914, %v2985
        %2987 = vst [vmem:[%s1715 + $0x8] sm:$0xf] %v2986
        %v2988 = vld [vmem:[%s1715 + $0xc] sm:$0x1]
        %v2989 = vsel %vm1722, %v2915, %v2988
        %2990 = vst [vmem:[%s1715 + $0xc] sm:$0x1] %v2989
        %v2991 = vld [vmem:[%s1715 + $0x10] sm:$0xf]
        %v2992 = vsel %vm1717, %v2922, %v2991
        %2993 = vst [vmem:[%s1715 + $0x10] sm:$0xf] %v2992
        %v2994 = vld [vmem:[%s1715 + $0x14] sm:$0x1]
        %v2995 = vsel %vm1722, %v2923, %v2994
        %2996 = vst [vmem:[%s1715 + $0x14] sm:$0x1] %v2995
        %v2997 = vld [vmem:[%s1715 + $0x18] sm:$0xf]
        %v2998 = vsel %vm1717, %v2930, %v2997
        %2999 = vst [vmem:[%s1715 + $0x18] sm:$0xf] %v2998
        %v3000 = vld [vmem:[%s1715 + $0x1c] sm:$0x1]
        %v3001 = vsel %vm1722, %v2931, %v3000
        %3002 = vst [vmem:[%s1715 + $0x1c] sm:$0x1] %v3001
        %v3003 = vld [vmem:[%s1715 + $0x20] sm:$0xf]
        %v3004 = vsel %vm1717, %v2938, %v3003
        %3005 = vst [vmem:[%s1715 + $0x20] sm:$0xf] %v3004
        %v3006 = vld [vmem:[%s1715 + $0x24] sm:$0x1]
        %v3007 = vsel %vm1722, %v2939, %v3006
        %3008 = vst [vmem:[%s1715 + $0x24] sm:$0x1] %v3007
        %v3009 = vld [vmem:[%s1715 + $0x28] sm:$0xf]
        %v3010 = vsel %vm1717, %v2946, %v3009
        %3011 = vst [vmem:[%s1715 + $0x28] sm:$0xf] %v3010
        %v3012 = vld [vmem:[%s1715 + $0x2c] sm:$0x1]
        %v3013 = vsel %vm1722, %v2947, %v3012
        %3014 = vst [vmem:[%s1715 + $0x2c] sm:$0x1] %v3013
        %v3015 = vld [vmem:[%s1715 + $0x30] sm:$0xf]
        %v3016 = vsel %vm1717, %v2954, %v3015
        %3017 = vst [vmem:[%s1715 + $0x30] sm:$0xf] %v3016
        %v3018 = vld [vmem:[%s1715 + $0x34] sm:$0x1]
        %v3019 = vsel %vm1722, %v2955, %v3018
        %3020 = vst [vmem:[%s1715 + $0x34] sm:$0x1] %v3019
        %v3021 = vld [vmem:[%s1715 + $0x38] sm:$0xf]
        %v3022 = vsel %vm1717, %v2962, %v3021
        %3023 = vst [vmem:[%s1715 + $0x38] sm:$0xf] %v3022
        %v3024 = vld [vmem:[%s1715 + $0x3c] sm:$0x1]
        %v3025 = vsel %vm1722, %v2963, %v3024
        %3026 = vst [vmem:[%s1715 + $0x3c] sm:$0x1] %v3025
        %v3027 = vld [vmem:[#allocation3] sm:$0xf]
        %v3028 = vld [vmem:[#allocation3 + $0x8] sm:$0xf]
        %v3029 = vld [vmem:[#allocation3 + $0x10] sm:$0xf]
        %v3030 = vld [vmem:[#allocation3 + $0x18] sm:$0xf]
        %v3031 = vld [vmem:[#allocation3 + $0x20] sm:$0xf]
        %v3032 = vld [vmem:[#allocation3 + $0x28] sm:$0xf]
        %v3033 = vld [vmem:[#allocation3 + $0x30] sm:$0xf]
        %v3034 = vld [vmem:[#allocation3 + $0x38] sm:$0xf]
        %v3035 = vld [vmem:[#allocation3 + $0x4] sm:$0x1]
        %v3036 = vld [vmem:[#allocation3 + $0xc] sm:$0x1]
        %v3037 = vld [vmem:[#allocation3 + $0x14] sm:$0x1]
        %v3038 = vld [vmem:[#allocation3 + $0x1c] sm:$0x1]
        %v3039 = vld [vmem:[#allocation3 + $0x24] sm:$0x1]
        %v3040 = vld [vmem:[#allocation3 + $0x2c] sm:$0x1]
        %v3041 = vld [vmem:[#allocation3 + $0x34] sm:$0x1]
        %v3042 = vld [vmem:[#allocation3 + $0x3c] sm:$0x1]
        %v3044 = vshrl.u32 %v3027, 16
        %v3046 = vrot.slane %v3044, 4
        %v3047 = vshll.u32 %v3027, 16
        %v3049 = vrot.slane %v3047, 5
        %v3050 = vor.u32 %v3046, %v3049
        %v3051 = vrot.slane %v3050, 4
        %v3053 = vshll.u32 %v3035, 16
        %v3055 = vrot.slane %v3053, 5
        %v3056 = vsel %vm748, %v3051, %v3055
        %v3058 = vshrl.u32 %v3028, 16
        %v3060 = vrot.slane %v3058, 4
        %v3061 = vshll.u32 %v3028, 16
        %v3063 = vrot.slane %v3061, 5
        %v3064 = vor.u32 %v3060, %v3063
        %v3065 = vrot.slane %v3064, 4
        %v3067 = vshll.u32 %v3036, 16
        %v3069 = vrot.slane %v3067, 5
        %v3070 = vsel %vm748, %v3065, %v3069
        %v3072 = vshrl.u32 %v3029, 16
        %v3074 = vrot.slane %v3072, 4
        %v3075 = vshll.u32 %v3029, 16
        %v3077 = vrot.slane %v3075, 5
        %v3078 = vor.u32 %v3074, %v3077
        %v3079 = vrot.slane %v3078, 4
        %v3081 = vshll.u32 %v3037, 16
        %v3083 = vrot.slane %v3081, 5
        %v3084 = vsel %vm748, %v3079, %v3083
        %v3086 = vshrl.u32 %v3030, 16
        %v3088 = vrot.slane %v3086, 4
        %v3089 = vshll.u32 %v3030, 16
        %v3091 = vrot.slane %v3089, 5
        %v3092 = vor.u32 %v3088, %v3091
        %v3093 = vrot.slane %v3092, 4
        %v3095 = vshll.u32 %v3038, 16
        %v3097 = vrot.slane %v3095, 5
        %v3098 = vsel %vm748, %v3093, %v3097
        %v3100 = vshrl.u32 %v3031, 16
        %v3102 = vrot.slane %v3100, 4
        %v3103 = vshll.u32 %v3031, 16
        %v3105 = vrot.slane %v3103, 5
        %v3106 = vor.u32 %v3102, %v3105
        %v3107 = vrot.slane %v3106, 4
        %v3109 = vshll.u32 %v3039, 16
        %v3111 = vrot.slane %v3109, 5
        %v3112 = vsel %vm748, %v3107, %v3111
        %v3114 = vshrl.u32 %v3032, 16
        %v3116 = vrot.slane %v3114, 4
        %v3117 = vshll.u32 %v3032, 16
        %v3119 = vrot.slane %v3117, 5
        %v3120 = vor.u32 %v3116, %v3119
        %v3121 = vrot.slane %v3120, 4
        %v3123 = vshll.u32 %v3040, 16
        %v3125 = vrot.slane %v3123, 5
        %v3126 = vsel %vm748, %v3121, %v3125
        %v3128 = vshrl.u32 %v3033, 16
        %v3130 = vrot.slane %v3128, 4
        %v3131 = vshll.u32 %v3033, 16
        %v3133 = vrot.slane %v3131, 5
        %v3134 = vor.u32 %v3130, %v3133
        %v3135 = vrot.slane %v3134, 4
        %v3137 = vshll.u32 %v3041, 16
        %v3139 = vrot.slane %v3137, 5
        %v3140 = vsel %vm748, %v3135, %v3139
        %v3142 = vshrl.u32 %v3034, 16
        %v3144 = vrot.slane %v3142, 4
        %v3145 = vshll.u32 %v3034, 16
        %v3147 = vrot.slane %v3145, 5
        %v3148 = vor.u32 %v3144, %v3147
        %v3149 = vrot.slane %v3148, 4
        %v3151 = vshll.u32 %v3042, 16
        %v3153 = vrot.slane %v3151, 5
        %v3154 = vsel %vm748, %v3149, %v3153
        %v3155 = vld [vmem:[#allocation3] sm:$0xe]
        %v3156 = vld [vmem:[#allocation3 + $0x8] sm:$0xe]
        %v3157 = vld [vmem:[#allocation3 + $0x10] sm:$0xe]
        %v3158 = vld [vmem:[#allocation3 + $0x18] sm:$0xe]
        %v3159 = vld [vmem:[#allocation3 + $0x20] sm:$0xe]
        %v3160 = vld [vmem:[#allocation3 + $0x28] sm:$0xe]
        %v3161 = vld [vmem:[#allocation3 + $0x30] sm:$0xe]
        %v3162 = vld [vmem:[#allocation3 + $0x38] sm:$0xe]
        %v3179 = vrot.slane %v3155, 5
        %v3180 = vrot.slane %v3179, 4
        %v3181 = vrot.slane %v3035, 5
        %v3182 = vsel %vm887, %v3180, %v3181
        %v3183 = vrot.slane %v3156, 5
        %v3184 = vrot.slane %v3183, 4
        %v3185 = vrot.slane %v3036, 5
        %v3186 = vsel %vm887, %v3184, %v3185
        %v3187 = vrot.slane %v3157, 5
        %v3188 = vrot.slane %v3187, 4
        %v3189 = vrot.slane %v3037, 5
        %v3190 = vsel %vm887, %v3188, %v3189
        %v3191 = vrot.slane %v3158, 5
        %v3192 = vrot.slane %v3191, 4
        %v3193 = vrot.slane %v3038, 5
        %v3194 = vsel %vm887, %v3192, %v3193
        %v3195 = vrot.slane %v3159, 5
        %v3196 = vrot.slane %v3195, 4
        %v3197 = vrot.slane %v3039, 5
        %v3198 = vsel %vm887, %v3196, %v3197
        %v3199 = vrot.slane %v3160, 5
        %v3200 = vrot.slane %v3199, 4
        %v3201 = vrot.slane %v3040, 5
        %v3202 = vsel %vm887, %v3200, %v3201
        %v3203 = vrot.slane %v3161, 5
        %v3204 = vrot.slane %v3203, 4
        %v3205 = vrot.slane %v3041, 5
        %v3206 = vsel %vm887, %v3204, %v3205
        %v3207 = vrot.slane %v3162, 5
        %v3208 = vrot.slane %v3207, 4
        %v3209 = vrot.slane %v3042, 5
        %v3210 = vsel %vm887, %v3208, %v3209
        %v3211 = vld [vmem:[%s1715] sm:$0xf]
        %v3212 = vld [vmem:[%s1715 + $0x8] sm:$0xf]
        %v3213 = vld [vmem:[%s1715 + $0x10] sm:$0xf]
        %v3214 = vld [vmem:[%s1715 + $0x18] sm:$0xf]
        %v3215 = vld [vmem:[%s1715 + $0x20] sm:$0xf]
        %v3216 = vld [vmem:[%s1715 + $0x28] sm:$0xf]
        %v3217 = vld [vmem:[%s1715 + $0x30] sm:$0xf]
        %v3218 = vld [vmem:[%s1715 + $0x38] sm:$0xf]
        %v3219 = vld [vmem:[%s1715 + $0x4] sm:$0x1]
        %v3220 = vld [vmem:[%s1715 + $0xc] sm:$0x1]
        %v3221 = vld [vmem:[%s1715 + $0x14] sm:$0x1]
        %v3222 = vld [vmem:[%s1715 + $0x1c] sm:$0x1]
        %v3223 = vld [vmem:[%s1715 + $0x24] sm:$0x1]
        %v3224 = vld [vmem:[%s1715 + $0x2c] sm:$0x1]
        %v3225 = vld [vmem:[%s1715 + $0x34] sm:$0x1]
        %v3226 = vld [vmem:[%s1715 + $0x3c] sm:$0x1]
        %v3228 = vshrl.u32 %v3211, 16
        %v3230 = vrot.slane %v3228, 4
        %v3231 = vshll.u32 %v3211, 16
        %v3233 = vrot.slane %v3231, 5
        %v3234 = vor.u32 %v3230, %v3233
        %v3235 = vrot.slane %v3234, 4
        %v3237 = vshll.u32 %v3219, 16
        %v3239 = vrot.slane %v3237, 5
        %v3240 = vsel %vm748, %v3235, %v3239
        %v3242 = vshrl.u32 %v3212, 16
        %v3244 = vrot.slane %v3242, 4
        %v3245 = vshll.u32 %v3212, 16
        %v3247 = vrot.slane %v3245, 5
        %v3248 = vor.u32 %v3244, %v3247
        %v3249 = vrot.slane %v3248, 4
        %v3251 = vshll.u32 %v3220, 16
        %v3253 = vrot.slane %v3251, 5
        %v3254 = vsel %vm748, %v3249, %v3253
        %v3256 = vshrl.u32 %v3213, 16
        %v3258 = vrot.slane %v3256, 4
        %v3259 = vshll.u32 %v3213, 16
        %v3261 = vrot.slane %v3259, 5
        %v3262 = vor.u32 %v3258, %v3261
        %v3263 = vrot.slane %v3262, 4
        %v3265 = vshll.u32 %v3221, 16
        %v3267 = vrot.slane %v3265, 5
        %v3268 = vsel %vm748, %v3263, %v3267
        %v3270 = vshrl.u32 %v3214, 16
        %v3272 = vrot.slane %v3270, 4
        %v3273 = vshll.u32 %v3214, 16
        %v3275 = vrot.slane %v3273, 5
        %v3276 = vor.u32 %v3272, %v3275
        %v3277 = vrot.slane %v3276, 4
        %v3279 = vshll.u32 %v3222, 16
        %v3281 = vrot.slane %v3279, 5
        %v3282 = vsel %vm748, %v3277, %v3281
        %v3284 = vshrl.u32 %v3215, 16
        %v3286 = vrot.slane %v3284, 4
        %v3287 = vshll.u32 %v3215, 16
        %v3289 = vrot.slane %v3287, 5
        %v3290 = vor.u32 %v3286, %v3289
        %v3291 = vrot.slane %v3290, 4
        %v3293 = vshll.u32 %v3223, 16
        %v3295 = vrot.slane %v3293, 5
        %v3296 = vsel %vm748, %v3291, %v3295
        %v3298 = vshrl.u32 %v3216, 16
        %v3300 = vrot.slane %v3298, 4
        %v3301 = vshll.u32 %v3216, 16
        %v3303 = vrot.slane %v3301, 5
        %v3304 = vor.u32 %v3300, %v3303
        %v3305 = vrot.slane %v3304, 4
        %v3307 = vshll.u32 %v3224, 16
        %v3309 = vrot.slane %v3307, 5
        %v3310 = vsel %vm748, %v3305, %v3309
        %v3312 = vshrl.u32 %v3217, 16
        %v3314 = vrot.slane %v3312, 4
        %v3315 = vshll.u32 %v3217, 16
        %v3317 = vrot.slane %v3315, 5
        %v3318 = vor.u32 %v3314, %v3317
        %v3319 = vrot.slane %v3318, 4
        %v3321 = vshll.u32 %v3225, 16
        %v3323 = vrot.slane %v3321, 5
        %v3324 = vsel %vm748, %v3319, %v3323
        %v3326 = vshrl.u32 %v3218, 16
        %v3328 = vrot.slane %v3326, 4
        %v3329 = vshll.u32 %v3218, 16
        %v3331 = vrot.slane %v3329, 5
        %v3332 = vor.u32 %v3328, %v3331
        %v3333 = vrot.slane %v3332, 4
        %v3335 = vshll.u32 %v3226, 16
        %v3337 = vrot.slane %v3335, 5
        %v3338 = vsel %vm748, %v3333, %v3337
        %v3347 = vld [vmem:[%s1715] sm:$0xe]
        %v3348 = vld [vmem:[%s1715 + $0x8] sm:$0xe]
        %v3349 = vld [vmem:[%s1715 + $0x10] sm:$0xe]
        %v3350 = vld [vmem:[%s1715 + $0x18] sm:$0xe]
        %v3351 = vld [vmem:[%s1715 + $0x20] sm:$0xe]
        %v3352 = vld [vmem:[%s1715 + $0x28] sm:$0xe]
        %v3353 = vld [vmem:[%s1715 + $0x30] sm:$0xe]
        %v3354 = vld [vmem:[%s1715 + $0x38] sm:$0xe]
        %v3371 = vrot.slane %v3347, 5
        %v3372 = vrot.slane %v3371, 4
        %v3373 = vrot.slane %v3219, 5
        %v3374 = vsel %vm887, %v3372, %v3373
        %v3375 = vrot.slane %v3348, 5
        %v3376 = vrot.slane %v3375, 4
        %v3377 = vrot.slane %v3220, 5
        %v3378 = vsel %vm887, %v3376, %v3377
        %v3379 = vrot.slane %v3349, 5
        %v3380 = vrot.slane %v3379, 4
        %v3381 = vrot.slane %v3221, 5
        %v3382 = vsel %vm887, %v3380, %v3381
        %v3383 = vrot.slane %v3350, 5
        %v3384 = vrot.slane %v3383, 4
        %v3385 = vrot.slane %v3222, 5
        %v3386 = vsel %vm887, %v3384, %v3385
        %v3387 = vrot.slane %v3351, 5
        %v3388 = vrot.slane %v3387, 4
        %v3389 = vrot.slane %v3223, 5
        %v3390 = vsel %vm887, %v3388, %v3389
        %v3391 = vrot.slane %v3352, 5
        %v3392 = vrot.slane %v3391, 4
        %v3393 = vrot.slane %v3224, 5
        %v3394 = vsel %vm887, %v3392, %v3393
        %v3395 = vrot.slane %v3353, 5
        %v3396 = vrot.slane %v3395, 4
        %v3397 = vrot.slane %v3225, 5
        %v3398 = vsel %vm887, %v3396, %v3397
        %v3399 = vrot.slane %v3354, 5
        %v3400 = vrot.slane %v3399, 4
        %v3401 = vrot.slane %v3226, 5
        %v3402 = vsel %vm887, %v3400, %v3401
        %v3403 = vld [vmem:[%s2144] sm:$0xf]
        %v3404 = vld [vmem:[%s2144 + $0x8] sm:$0xf]
        %v3405 = vld [vmem:[%s2144 + $0x10] sm:$0xf]
        %v3406 = vld [vmem:[%s2144 + $0x18] sm:$0xf]
        %v3407 = vld [vmem:[%s2144 + $0x20] sm:$0xf]
        %v3408 = vld [vmem:[%s2144 + $0x28] sm:$0xf]
        %v3409 = vld [vmem:[%s2144 + $0x30] sm:$0xf]
        %v3410 = vld [vmem:[%s2144 + $0x38] sm:$0xf]
        %v3411 = vld [vmem:[%s2144 + $0x4] sm:$0x1]
        %v3412 = vld [vmem:[%s2144 + $0xc] sm:$0x1]
        %v3413 = vld [vmem:[%s2144 + $0x14] sm:$0x1]
        %v3414 = vld [vmem:[%s2144 + $0x1c] sm:$0x1]
        %v3415 = vld [vmem:[%s2144 + $0x24] sm:$0x1]
        %v3416 = vld [vmem:[%s2144 + $0x2c] sm:$0x1]
        %v3417 = vld [vmem:[%s2144 + $0x34] sm:$0x1]
        %v3418 = vld [vmem:[%s2144 + $0x3c] sm:$0x1]
        %v3420 = vshrl.u32 %v3403, 16
        %v3422 = vrot.slane %v3420, 4
        %v3423 = vshll.u32 %v3403, 16
        %v3425 = vrot.slane %v3423, 5
        %v3426 = vor.u32 %v3422, %v3425
        %v3427 = vrot.slane %v3426, 4
        %v3429 = vshll.u32 %v3411, 16
        %v3431 = vrot.slane %v3429, 5
        %v3432 = vsel %vm748, %v3427, %v3431
        %v3434 = vshrl.u32 %v3404, 16
        %v3436 = vrot.slane %v3434, 4
        %v3437 = vshll.u32 %v3404, 16
        %v3439 = vrot.slane %v3437, 5
        %v3440 = vor.u32 %v3436, %v3439
        %v3441 = vrot.slane %v3440, 4
        %v3443 = vshll.u32 %v3412, 16
        %v3445 = vrot.slane %v3443, 5
        %v3446 = vsel %vm748, %v3441, %v3445
        %v3448 = vshrl.u32 %v3405, 16
        %v3450 = vrot.slane %v3448, 4
        %v3451 = vshll.u32 %v3405, 16
        %v3453 = vrot.slane %v3451, 5
        %v3454 = vor.u32 %v3450, %v3453
        %v3455 = vrot.slane %v3454, 4
        %v3457 = vshll.u32 %v3413, 16
        %v3459 = vrot.slane %v3457, 5
        %v3460 = vsel %vm748, %v3455, %v3459
        %v3462 = vshrl.u32 %v3406, 16
        %v3464 = vrot.slane %v3462, 4
        %v3465 = vshll.u32 %v3406, 16
        %v3467 = vrot.slane %v3465, 5
        %v3468 = vor.u32 %v3464, %v3467
        %v3469 = vrot.slane %v3468, 4
        %v3471 = vshll.u32 %v3414, 16
        %v3473 = vrot.slane %v3471, 5
        %v3474 = vsel %vm748, %v3469, %v3473
        %v3476 = vshrl.u32 %v3407, 16
        %v3478 = vrot.slane %v3476, 4
        %v3479 = vshll.u32 %v3407, 16
        %v3481 = vrot.slane %v3479, 5
        %v3482 = vor.u32 %v3478, %v3481
        %v3483 = vrot.slane %v3482, 4
        %v3485 = vshll.u32 %v3415, 16
        %v3487 = vrot.slane %v3485, 5
        %v3488 = vsel %vm748, %v3483, %v3487
        %v3490 = vshrl.u32 %v3408, 16
        %v3492 = vrot.slane %v3490, 4
        %v3493 = vshll.u32 %v3408, 16
        %v3495 = vrot.slane %v3493, 5
        %v3496 = vor.u32 %v3492, %v3495
        %v3497 = vrot.slane %v3496, 4
        %v3499 = vshll.u32 %v3416, 16
        %v3501 = vrot.slane %v3499, 5
        %v3502 = vsel %vm748, %v3497, %v3501
        %v3504 = vshrl.u32 %v3409, 16
        %v3506 = vrot.slane %v3504, 4
        %v3507 = vshll.u32 %v3409, 16
        %v3509 = vrot.slane %v3507, 5
        %v3510 = vor.u32 %v3506, %v3509
        %v3511 = vrot.slane %v3510, 4
        %v3513 = vshll.u32 %v3417, 16
        %v3515 = vrot.slane %v3513, 5
        %v3516 = vsel %vm748, %v3511, %v3515
        %v3518 = vshrl.u32 %v3410, 16
        %v3520 = vrot.slane %v3518, 4
        %v3521 = vshll.u32 %v3410, 16
        %v3523 = vrot.slane %v3521, 5
        %v3524 = vor.u32 %v3520, %v3523
        %v3525 = vrot.slane %v3524, 4
        %v3527 = vshll.u32 %v3418, 16
        %v3529 = vrot.slane %v3527, 5
        %v3530 = vsel %vm748, %v3525, %v3529
        %v3531 = vld [vmem:[%s2144] sm:$0xe]
        %v3532 = vld [vmem:[%s2144 + $0x8] sm:$0xe]
        %v3533 = vld [vmem:[%s2144 + $0x10] sm:$0xe]
        %v3534 = vld [vmem:[%s2144 + $0x18] sm:$0xe]
        %v3535 = vld [vmem:[%s2144 + $0x20] sm:$0xe]
        %v3536 = vld [vmem:[%s2144 + $0x28] sm:$0xe]
        %v3537 = vld [vmem:[%s2144 + $0x30] sm:$0xe]
        %v3538 = vld [vmem:[%s2144 + $0x38] sm:$0xe]
        %v3555 = vrot.slane %v3531, 5
        %v3556 = vrot.slane %v3555, 4
        %v3557 = vrot.slane %v3411, 5
        %v3558 = vsel %vm887, %v3556, %v3557
        %v3559 = vrot.slane %v3532, 5
        %v3560 = vrot.slane %v3559, 4
        %v3561 = vrot.slane %v3412, 5
        %v3562 = vsel %vm887, %v3560, %v3561
        %v3563 = vrot.slane %v3533, 5
        %v3564 = vrot.slane %v3563, 4
        %v3565 = vrot.slane %v3413, 5
        %v3566 = vsel %vm887, %v3564, %v3565
        %v3567 = vrot.slane %v3534, 5
        %v3568 = vrot.slane %v3567, 4
        %v3569 = vrot.slane %v3414, 5
        %v3570 = vsel %vm887, %v3568, %v3569
        %v3571 = vrot.slane %v3535, 5
        %v3572 = vrot.slane %v3571, 4
        %v3573 = vrot.slane %v3415, 5
        %v3574 = vsel %vm887, %v3572, %v3573
        %v3575 = vrot.slane %v3536, 5
        %v3576 = vrot.slane %v3575, 4
        %v3577 = vrot.slane %v3416, 5
        %v3578 = vsel %vm887, %v3576, %v3577
        %v3579 = vrot.slane %v3537, 5
        %v3580 = vrot.slane %v3579, 4
        %v3581 = vrot.slane %v3417, 5
        %v3582 = vsel %vm887, %v3580, %v3581
        %v3583 = vrot.slane %v3538, 5
        %v3584 = vrot.slane %v3583, 4
        %v3585 = vrot.slane %v3418, 5
        %v3586 = vsel %vm887, %v3584, %v3585
        %v3595 = vunpack.c.l.b16 %v3027
        %v3596 = vunpack.c.l.b16 %v3028
        %v3597 = vunpack.c.l.b16 %v3029
        %v3598 = vunpack.c.l.b16 %v3030
        %v3599 = vunpack.c.l.b16 %v3031
        %v3600 = vunpack.c.l.b16 %v3032
        %v3601 = vunpack.c.l.b16 %v3033
        %v3602 = vunpack.c.l.b16 %v3034
        %v3603 = vpack.c.b16 %v3596, %v3595
        %v3604 = vpack.c.b16 %v3598, %v3597
        %v3605 = vpack.c.b16 %v3600, %v3599
        %v3606 = vpack.c.b16 %v3602, %v3601
        %v3607 = vunpack.c.l.b16 %v3056
        %v3608 = vunpack.c.l.b16 %v3070
        %v3609 = vunpack.c.l.b16 %v3084
        %v3610 = vunpack.c.l.b16 %v3098
        %v3611 = vunpack.c.l.b16 %v3112
        %v3612 = vunpack.c.l.b16 %v3126
        %v3613 = vunpack.c.l.b16 %v3140
        %v3614 = vunpack.c.l.b16 %v3154
        %v3615 = vpack.c.b16 %v3608, %v3607
        %v3616 = vpack.c.b16 %v3610, %v3609
        %v3617 = vpack.c.b16 %v3612, %v3611
        %v3618 = vpack.c.b16 %v3614, %v3613
        %3619 = vrot.lane.b32.xlu0 %v3615, 32
        %v3620 = vpop.permute.xlu0 %3619
        %3621 = vrot.lane.b32.xlu0 %v3616, 32
        %v3622 = vpop.permute.xlu0 %3621
        %3623 = vrot.lane.b32.xlu0 %v3617, 32
        %v3624 = vpop.permute.xlu0 %3623
        %3625 = vrot.lane.b32.xlu0 %v3618, 32
        %v3626 = vpop.permute.xlu0 %3625
        %v3627 = vunpack.c.l.b16 %v3182
        %v3628 = vunpack.c.l.b16 %v3186
        %v3629 = vunpack.c.l.b16 %v3190
        %v3630 = vunpack.c.l.b16 %v3194
        %v3631 = vunpack.c.l.b16 %v3198
        %v3632 = vunpack.c.l.b16 %v3202
        %v3633 = vunpack.c.l.b16 %v3206
        %v3634 = vunpack.c.l.b16 %v3210
        %v3635 = vpack.c.b16 %v3628, %v3627
        %v3636 = vpack.c.b16 %v3630, %v3629
        %v3637 = vpack.c.b16 %v3632, %v3631
        %v3638 = vpack.c.b16 %v3634, %v3633
        %3639 = vrot.lane.b32.xlu0 %v3635, 64
        %v3640 = vpop.permute.xlu0 %3639
        %3641 = vrot.lane.b32.xlu0 %v3636, 64
        %v3642 = vpop.permute.xlu0 %3641
        %3643 = vrot.lane.b32.xlu0 %v3637, 64
        %v3644 = vpop.permute.xlu0 %3643
        %3645 = vrot.lane.b32.xlu0 %v3638, 64
        %v3646 = vpop.permute.xlu0 %3645
        %v3655 = vunpack.c.l.b16 %v3211
        %v3656 = vunpack.c.l.b16 %v3212
        %v3657 = vunpack.c.l.b16 %v3213
        %v3658 = vunpack.c.l.b16 %v3214
        %v3659 = vunpack.c.l.b16 %v3215
        %v3660 = vunpack.c.l.b16 %v3216
        %v3661 = vunpack.c.l.b16 %v3217
        %v3662 = vunpack.c.l.b16 %v3218
        %v3663 = vpack.c.b16 %v3656, %v3655
        %v3664 = vpack.c.b16 %v3658, %v3657
        %v3665 = vpack.c.b16 %v3660, %v3659
        %v3666 = vpack.c.b16 %v3662, %v3661
        %3667 = vrot.lane.b32.xlu0 %v3663, 96
        %v3668 = vpop.permute.xlu0 %3667
        %3669 = vrot.lane.b32.xlu0 %v3664, 96
        %v3670 = vpop.permute.xlu0 %3669
        %3671 = vrot.lane.b32.xlu0 %v3665, 96
        %v3672 = vpop.permute.xlu0 %3671
        %3673 = vrot.lane.b32.xlu0 %v3666, 96
        %v3674 = vpop.permute.xlu0 %3673
        %v3675 = vunpack.c.l.b16 %v3240
        %v3676 = vunpack.c.l.b16 %v3254
        %v3677 = vunpack.c.l.b16 %v3268
        %v3678 = vunpack.c.l.b16 %v3282
        %v3679 = vunpack.c.l.b16 %v3296
        %v3680 = vunpack.c.l.b16 %v3310
        %v3681 = vunpack.c.l.b16 %v3324
        %v3682 = vunpack.c.l.b16 %v3338
        %v3683 = vpack.c.b16 %v3676, %v3675
        %v3684 = vpack.c.b16 %v3678, %v3677
        %v3685 = vpack.c.b16 %v3680, %v3679
        %v3686 = vpack.c.b16 %v3682, %v3681
        %v3687 = vunpack.c.l.b16 %v3374
        %v3688 = vunpack.c.l.b16 %v3378
        %v3689 = vunpack.c.l.b16 %v3382
        %v3690 = vunpack.c.l.b16 %v3386
        %v3691 = vunpack.c.l.b16 %v3390
        %v3692 = vunpack.c.l.b16 %v3394
        %v3693 = vunpack.c.l.b16 %v3398
        %v3694 = vunpack.c.l.b16 %v3402
        %v3695 = vpack.c.b16 %v3688, %v3687
        %v3696 = vpack.c.b16 %v3690, %v3689
        %v3697 = vpack.c.b16 %v3692, %v3691
        %v3698 = vpack.c.b16 %v3694, %v3693
        %3699 = vrot.lane.b32.xlu0 %v3695, 32
        %v3700 = vpop.permute.xlu0 %3699
        %3701 = vrot.lane.b32.xlu0 %v3696, 32
        %v3702 = vpop.permute.xlu0 %3701
        %3703 = vrot.lane.b32.xlu0 %v3697, 32
        %v3704 = vpop.permute.xlu0 %3703
        %3705 = vrot.lane.b32.xlu0 %v3698, 32
        %v3706 = vpop.permute.xlu0 %3705
        %v3715 = vunpack.c.l.b16 %v3403
        %v3716 = vunpack.c.l.b16 %v3404
        %v3717 = vunpack.c.l.b16 %v3405
        %v3718 = vunpack.c.l.b16 %v3406
        %v3719 = vunpack.c.l.b16 %v3407
        %v3720 = vunpack.c.l.b16 %v3408
        %v3721 = vunpack.c.l.b16 %v3409
        %v3722 = vunpack.c.l.b16 %v3410
        %v3723 = vpack.c.b16 %v3716, %v3715
        %v3724 = vpack.c.b16 %v3718, %v3717
        %v3725 = vpack.c.b16 %v3720, %v3719
        %v3726 = vpack.c.b16 %v3722, %v3721
        %3727 = vrot.lane.b32.xlu0 %v3723, 64
        %v3728 = vpop.permute.xlu0 %3727
        %3729 = vrot.lane.b32.xlu0 %v3724, 64
        %v3730 = vpop.permute.xlu0 %3729
        %3731 = vrot.lane.b32.xlu0 %v3725, 64
        %v3732 = vpop.permute.xlu0 %3731
        %3733 = vrot.lane.b32.xlu0 %v3726, 64
        %v3734 = vpop.permute.xlu0 %3733
        %v3735 = vunpack.c.l.b16 %v3432
        %v3736 = vunpack.c.l.b16 %v3446
        %v3737 = vunpack.c.l.b16 %v3460
        %v3738 = vunpack.c.l.b16 %v3474
        %v3739 = vunpack.c.l.b16 %v3488
        %v3740 = vunpack.c.l.b16 %v3502
        %v3741 = vunpack.c.l.b16 %v3516
        %v3742 = vunpack.c.l.b16 %v3530
        %v3743 = vpack.c.b16 %v3736, %v3735
        %v3744 = vpack.c.b16 %v3738, %v3737
        %v3745 = vpack.c.b16 %v3740, %v3739
        %v3746 = vpack.c.b16 %v3742, %v3741
        %3747 = vrot.lane.b32.xlu0 %v3743, 96
        %v3748 = vpop.permute.xlu0 %3747
        %3749 = vrot.lane.b32.xlu0 %v3744, 96
        %v3750 = vpop.permute.xlu0 %3749
        %3751 = vrot.lane.b32.xlu0 %v3745, 96
        %v3752 = vpop.permute.xlu0 %3751
        %3753 = vrot.lane.b32.xlu0 %v3746, 96
        %v3754 = vpop.permute.xlu0 %3753
        %v3755 = vunpack.c.l.b16 %v3558
        %v3756 = vunpack.c.l.b16 %v3562
        %v3757 = vunpack.c.l.b16 %v3566
        %v3758 = vunpack.c.l.b16 %v3570
        %v3759 = vunpack.c.l.b16 %v3574
        %v3760 = vunpack.c.l.b16 %v3578
        %v3761 = vunpack.c.l.b16 %v3582
        %v3762 = vunpack.c.l.b16 %v3586
        %v3763 = vpack.c.b16 %v3756, %v3755
        %v3764 = vpack.c.b16 %v3758, %v3757
        %v3765 = vpack.c.b16 %v3760, %v3759
        %v3766 = vpack.c.b16 %v3762, %v3761
        %v3769 = vsel %vm1552, %v3603, %v3620
        %v3772 = vsel %vm1552, %v3604, %v3622
        %v3775 = vsel %vm1552, %v3605, %v3624
        %v3778 = vsel %vm1552, %v3606, %v3626
        %v3780 = vsel %vm2521, %v3769, %v3640
        %v3782 = vsel %vm2521, %v3772, %v3642
        %v3784 = vsel %vm2521, %v3775, %v3644
        %v3786 = vsel %vm2521, %v3778, %v3646
        %v3788 = vsel %vm2530, %v3780, %v3668
        %v3791 = vsel %vm2530, %v3782, %v3670
        %v3794 = vsel %vm2530, %v3784, %v3672
        %v3797 = vsel %vm2530, %v3786, %v3674
        %v3801 = vsel %vm1552, %v3683, %v3700
        %v3804 = vsel %vm1552, %v3684, %v3702
        %v3807 = vsel %vm1552, %v3685, %v3704
        %v3810 = vsel %vm1552, %v3686, %v3706
        %v3812 = vsel %vm2521, %v3801, %v3728
        %v3814 = vsel %vm2521, %v3804, %v3730
        %v3816 = vsel %vm2521, %v3807, %v3732
        %v3818 = vsel %vm2521, %v3810, %v3734
        %v3820 = vsel %vm2530, %v3812, %v3748
        %v3823 = vsel %vm2530, %v3814, %v3750
        %v3826 = vsel %vm2530, %v3816, %v3752
        %v3829 = vsel %vm2530, %v3818, %v3754
        %v3831 = vld [vmem:[%s5] sm:$0xf]
        %v3832 = vld [vmem:[%s5 + $0x4] sm:$0xf]
        %v3833 = vld [vmem:[%s5 + $0x8] sm:$0xf]
        %v3834 = vld [vmem:[%s5 + $0xc] sm:$0xf]
        %v3835 = vld [vmem:[%s5 + $0x10] sm:$0xf]
        %v3836 = vld [vmem:[%s5 + $0x14] sm:$0xf]
        %v3837 = vld [vmem:[%s5 + $0x18] sm:$0xf]
        %v3838 = vld [vmem:[%s5 + $0x1c] sm:$0xf]
        %v3839 = vld [vmem:[%s5 + $0x20] sm:$0xf]
        %v3840 = vld [vmem:[%s5 + $0x24] sm:$0xf]
        %v3841 = vld [vmem:[%s5 + $0x28] sm:$0xf]
        %v3842 = vld [vmem:[%s5 + $0x2c] sm:$0xf]
        %v3843 = vld [vmem:[%s5 + $0x30] sm:$0xf]
        %v3844 = vld [vmem:[%s5 + $0x34] sm:$0xf]
        %v3845 = vld [vmem:[%s5 + $0x38] sm:$0xf]
        %v3846 = vld [vmem:[%s5 + $0x3c] sm:$0xf]
        %v3847 = vld [vmem:[%s5 + $0x40] sm:$0xf]
        %v3848 = vld [vmem:[%s5 + $0x44] sm:$0xf]
        %v3849 = vld [vmem:[%s5 + $0x48] sm:$0xf]
        %v3850 = vld [vmem:[%s5 + $0x4c] sm:$0xf]
        %v3851 = vld [vmem:[%s5 + $0x50] sm:$0xf]
        %v3852 = vld [vmem:[%s5 + $0x54] sm:$0xf]
        %v3853 = vld [vmem:[%s5 + $0x58] sm:$0xf]
        %v3854 = vld [vmem:[%s5 + $0x5c] sm:$0xf]
        %v3855 = vld [vmem:[%s5 + $0x60] sm:$0xf]
        %v3856 = vld [vmem:[%s5 + $0x64] sm:$0xf]
        %v3857 = vld [vmem:[%s5 + $0x68] sm:$0xf]
        %v3858 = vld [vmem:[%s5 + $0x6c] sm:$0xf]
        %v3859 = vld [vmem:[%s5 + $0x70] sm:$0xf]
        %v3860 = vld [vmem:[%s5 + $0x74] sm:$0xf]
        %v3861 = vld [vmem:[%s5 + $0x78] sm:$0xf]
        %v3862 = vld [vmem:[%s5 + $0x7c] sm:$0xf]
        %v3863 = vld [vmem:[%s5 + $0x80] sm:$0xf]
        %v3864 = vld [vmem:[%s5 + $0x84] sm:$0xf]
        %v3865 = vld [vmem:[%s5 + $0x88] sm:$0xf]
        %v3866 = vld [vmem:[%s5 + $0x8c] sm:$0xf]
        %v3903 = vunpack.c.l.b16 %v3831
        %v3904 = vunpack.c.l.b16 %v3832
        %v3905 = vunpack.c.l.b16 %v3833
        %v3906 = vunpack.c.l.b16 %v3834
        %v3907 = vunpack.c.l.b16 %v3835
        %v3908 = vunpack.c.l.b16 %v3836
        %v3909 = vunpack.c.l.b16 %v3837
        %v3910 = vunpack.c.l.b16 %v3838
        %v3911 = vunpack.c.l.b16 %v3839
        %v3912 = vunpack.c.l.b16 %v3840
        %v3913 = vunpack.c.l.b16 %v3841
        %v3914 = vunpack.c.l.b16 %v3842
        %v3915 = vunpack.c.l.b16 %v3843
        %v3916 = vunpack.c.l.b16 %v3844
        %v3917 = vunpack.c.l.b16 %v3845
        %v3918 = vunpack.c.l.b16 %v3846
        %v3919 = vunpack.c.l.b16 %v3847
        %v3920 = vunpack.c.l.b16 %v3848
        %v3921 = vunpack.c.l.b16 %v3849
        %v3922 = vunpack.c.l.b16 %v3850
        %v3923 = vunpack.c.l.b16 %v3851
        %v3924 = vunpack.c.l.b16 %v3852
        %v3925 = vunpack.c.l.b16 %v3853
        %v3926 = vunpack.c.l.b16 %v3854
        %v3927 = vunpack.c.l.b16 %v3855
        %v3928 = vunpack.c.l.b16 %v3856
        %v3929 = vunpack.c.l.b16 %v3857
        %v3930 = vunpack.c.l.b16 %v3858
        %v3931 = vunpack.c.l.b16 %v3859
        %v3932 = vunpack.c.l.b16 %v3860
        %v3933 = vunpack.c.l.b16 %v3861
        %v3934 = vunpack.c.l.b16 %v3862
        %v3935 = vunpack.c.l.b16 %v3863
        %v3936 = vunpack.c.l.b16 %v3864
        %v3937 = vunpack.c.l.b16 %v3865
        %v3938 = vunpack.c.l.b16 %v3866
        %v3939 = vpack.c.b16 %v3904, %v3903
        %v3940 = vpack.c.b16 %v3906, %v3905
        %v3941 = vpack.c.b16 %v3908, %v3907
        %v3942 = vpack.c.b16 %v3910, %v3909
        %v3943 = vpack.c.b16 %v3912, %v3911
        %v3944 = vpack.c.b16 %v3914, %v3913
        %v3945 = vpack.c.b16 %v3916, %v3915
        %v3946 = vpack.c.b16 %v3918, %v3917
        %v3947 = vpack.c.b16 %v3920, %v3919
        %v3948 = vpack.c.b16 %v3922, %v3921
        %v3949 = vpack.c.b16 %v3924, %v3923
        %v3950 = vpack.c.b16 %v3926, %v3925
        %v3951 = vpack.c.b16 %v3928, %v3927
        %v3952 = vpack.c.b16 %v3930, %v3929
        %v3953 = vpack.c.b16 %v3932, %v3931
        %v3954 = vpack.c.b16 %v3934, %v3933
        %v3955 = vpack.c.b16 %v3936, %v3935
        %v3956 = vpack.c.b16 %v3938, %v3937
        %v3976 = vsel %vm1552, %v3763, 0
        %v3979 = vsel %vm1552, %v3764, 0
        %v3982 = vsel %vm1552, %v3765, 0
        %v3985 = vsel %vm1552, %v3766, 0
        %3987 = vmatpush.bf16.msra.mxu0 %v3946
        %3988 = vmatpush.bf16.msra.mxu0 %v3945
        %3989 = vmatpush.bf16.msra.mxu0 %v3944
        %3990 = vmatpush.bf16.msra.mxu0 %v3943
        %3991 = vmatpush.bf16.msra.mxu0 %v3942
        %3992 = vmatpush.bf16.msra.mxu0 %v3941
        %3993 = vmatpush.bf16.msra.mxu0 %v3940
        %3994 = vmatpush.bf16.msra.mxu0 %v3939
        %3995 = vmatmul.bf16.gmra.mxu0 %v3788
        %v3996 = vpop.f32.mrf.mxu0
        %v3997 = vadd.f32 0.0, %v3996
        %v3998 = vpop.f32.mrf.mxu0
        %v3999 = vadd.f32 0.0, %v3998
        %4000 = vmatmul.bf16.gmra.mxu0 %v3791
        %v4001 = vpop.f32.mrf.mxu0
        %v4002 = vadd.f32 0.0, %v4001
        %v4003 = vpop.f32.mrf.mxu0
        %v4004 = vadd.f32 0.0, %v4003
        %4005 = vmatmul.bf16.gmra.mxu0 %v3794
        %v4006 = vpop.f32.mrf.mxu0
        %v4007 = vadd.f32 0.0, %v4006
        %v4008 = vpop.f32.mrf.mxu0
        %v4009 = vadd.f32 0.0, %v4008
        %4010 = vmatmul.bf16.gmra.mxu0 %v3797
        %v4011 = vpop.f32.mrf.mxu0
        %v4012 = vadd.f32 0.0, %v4011
        %v4013 = vpop.f32.mrf.mxu0
        %v4014 = vadd.f32 0.0, %v4013
        %4015 = vdwg.mxu0
        %4016 = vmatpush.bf16.msra.mxu0 %v3954
        %4017 = vmatpush.bf16.msra.mxu0 %v3953
        %4018 = vmatpush.bf16.msra.mxu0 %v3952
        %4019 = vmatpush.bf16.msra.mxu0 %v3951
        %4020 = vmatpush.bf16.msra.mxu0 %v3950
        %4021 = vmatpush.bf16.msra.mxu0 %v3949
        %4022 = vmatpush.bf16.msra.mxu0 %v3948
        %4023 = vmatpush.bf16.msra.mxu0 %v3947
        %4024 = vmatmul.bf16.gmra.mxu0 %v3820
        %v4025 = vpop.f32.mrf.mxu0
        %v4026 = vadd.f32 %v3997, %v4025
        %v4027 = vpop.f32.mrf.mxu0
        %v4028 = vadd.f32 %v3999, %v4027
        %4029 = vmatmul.bf16.gmra.mxu0 %v3823
        %v4030 = vpop.f32.mrf.mxu0
        %v4031 = vadd.f32 %v4002, %v4030
        %v4032 = vpop.f32.mrf.mxu0
        %v4033 = vadd.f32 %v4004, %v4032
        %4034 = vmatmul.bf16.gmra.mxu0 %v3826
        %v4035 = vpop.f32.mrf.mxu0
        %v4036 = vadd.f32 %v4007, %v4035
        %v4037 = vpop.f32.mrf.mxu0
        %v4038 = vadd.f32 %v4009, %v4037
        %4039 = vmatmul.bf16.gmra.mxu0 %v3829
        %v4040 = vpop.f32.mrf.mxu0
        %v4041 = vadd.f32 %v4012, %v4040
        %v4042 = vpop.f32.mrf.mxu0
        %v4043 = vadd.f32 %v4014, %v4042
        %4044 = vdwg.mxu0
        %4045 = vmatpush.bf16.msra.mxu0 0
        %4046 = vmatpush.bf16.msra.mxu0 0
        %4047 = vmatpush.bf16.msra.mxu0 0
        %4048 = vmatpush.bf16.msra.mxu0 0
        %4049 = vmatpush.bf16.msra.mxu0 0
        %4050 = vmatpush.bf16.msra.mxu0 0
        %4051 = vmatpush.bf16.msra.mxu0 %v3956
        %4052 = vmatpush.bf16.msra.mxu0 %v3955
        %4053 = vmatmul.bf16.gmra.mxu0 %v3976
        %v4054 = vpop.f32.mrf.mxu0
        %v4055 = vadd.f32 %v4026, %v4054
        %v4056 = vpop.f32.mrf.mxu0
        %v4057 = vadd.f32 %v4028, %v4056
        %4058 = vmatmul.bf16.gmra.mxu0 %v3979
        %v4059 = vpop.f32.mrf.mxu0
        %v4060 = vadd.f32 %v4031, %v4059
        %v4061 = vpop.f32.mrf.mxu0
        %v4062 = vadd.f32 %v4033, %v4061
        %4063 = vmatmul.bf16.gmra.mxu0 %v3982
        %v4064 = vpop.f32.mrf.mxu0
        %v4065 = vadd.f32 %v4036, %v4064
        %v4066 = vpop.f32.mrf.mxu0
        %v4067 = vadd.f32 %v4038, %v4066
        %4068 = vmatmul.bf16.gmra.mxu0 %v3985
        %v4069 = vpop.f32.mrf.mxu0
        %v4070 = vadd.f32 %v4041, %v4069
        %v4071 = vpop.f32.mrf.mxu0
        %v4072 = vadd.f32 %v4043, %v4071
        %4073 = vdwg.mxu0
        %v4074 = vmax.f32 %v4055, 0.0
        %v4075 = vmax.f32 %v4057, 0.0
        %v4076 = vmax.f32 %v4060, 0.0
        %v4077 = vmax.f32 %v4062, 0.0
        %v4078 = vmax.f32 %v4065, 0.0
        %v4079 = vmax.f32 %v4067, 0.0
        %v4080 = vmax.f32 %v4070, 0.0
        %v4081 = vmax.f32 %v4072, 0.0
        %v4082 = vpack.c.bf16 %v4075, %v4074
        %v4083 = vpack.c.bf16 %v4077, %v4076
        %v4084 = vpack.c.bf16 %v4079, %v4078
        %v4085 = vpack.c.bf16 %v4081, %v4080
        %v4086 = vld [vmem:[#allocation9] sm:$0xf]
        %v4088 = vsel %vm1498, %v4082, 0
        %v4091 = vsel %vm1498, %v4083, 0
        %v4094 = vsel %vm1498, %v4084, 0
        %v4097 = vsel %vm1498, %v4085, 0
        %v4100 = vsel %vm2843, %v4086, 0
        %4102 = vmatpush.bf16.msra.mxu0 0
        %4103 = vmatpush.bf16.msra.mxu0 0
        %4104 = vmatpush.bf16.msra.mxu0 0
        %4105 = vmatpush.bf16.msra.mxu0 0
        %4106 = vmatpush.bf16.msra.mxu0 0
        %4107 = vmatpush.bf16.msra.mxu0 0
        %4108 = vmatpush.bf16.msra.mxu0 0
        %4109 = vmatpush.bf16.msra.mxu0 %v4100
        %4110 = vmatmul.bf16.gmra.mxu0 %v4088
        %v4111 = vpop.f32.mrf.mxu0
        %v4112 = vadd.f32 0.0, %v4111
        %v4113 = vpop.f32.mrf.mxu0
        %v4114 = vadd.f32 0.0, %v4113
        %4115 = vmatmul.bf16.gmra.mxu0 %v4091
        %v4116 = vpop.f32.mrf.mxu0
        %v4117 = vadd.f32 0.0, %v4116
        %v4118 = vpop.f32.mrf.mxu0
        %v4119 = vadd.f32 0.0, %v4118
        %4120 = vmatmul.bf16.gmra.mxu0 %v4094
        %v4121 = vpop.f32.mrf.mxu0
        %v4122 = vadd.f32 0.0, %v4121
        %v4123 = vpop.f32.mrf.mxu0
        %v4124 = vadd.f32 0.0, %v4123
        %4125 = vmatmul.bf16.gmra.mxu0 %v4097
        %v4126 = vpop.f32.mrf.mxu0
        %v4127 = vadd.f32 0.0, %v4126
        %v4128 = vpop.f32.mrf.mxu0
        %v4129 = vadd.f32 0.0, %v4128
        %4130 = vdwg.mxu0
        %v4131 = vunpack.c.l.bf16 %v3240
        %v4132 = vunpack.c.l.bf16 %v3254
        %v4133 = vunpack.c.l.bf16 %v3268
        %v4134 = vunpack.c.l.bf16 %v3282
        %v4135 = vunpack.c.l.bf16 %v3296
        %v4136 = vunpack.c.l.bf16 %v3310
        %v4137 = vunpack.c.l.bf16 %v3324
        %v4138 = vunpack.c.l.bf16 %v3338
        %v4139 = vadd.f32 %v4131, %v4112
        %v4140 = vadd.f32 %v4132, %v4114
        %v4141 = vadd.f32 %v4133, %v4117
        %v4142 = vadd.f32 %v4134, %v4119
        %v4143 = vadd.f32 %v4135, %v4122
        %v4144 = vadd.f32 %v4136, %v4124
        %v4145 = vadd.f32 %v4137, %v4127
        %v4146 = vadd.f32 %v4138, %v4129
        %v4147 = vmax.f32 %v4139, 0.0
        %v4148 = vmax.f32 %v4140, 0.0
        %v4149 = vmax.f32 %v4141, 0.0
        %v4150 = vmax.f32 %v4142, 0.0
        %v4151 = vmax.f32 %v4143, 0.0
        %v4152 = vmax.f32 %v4144, 0.0
        %v4153 = vmax.f32 %v4145, 0.0
        %v4154 = vmax.f32 %v4146, 0.0
        %v4155 = vpack.c.bf16 %v4147, %v4147
        %v4156 = vpack.c.bf16 %v4148, %v4148
        %v4157 = vpack.c.bf16 %v4149, %v4149
        %v4158 = vpack.c.bf16 %v4150, %v4150
        %v4159 = vpack.c.bf16 %v4151, %v4151
        %v4160 = vpack.c.bf16 %v4152, %v4152
        %v4161 = vpack.c.bf16 %v4153, %v4153
        %v4162 = vpack.c.bf16 %v4154, %v4154
        %v4164 = vshrl.u32 %v4155, 16
        %v4166 = vrot.slane %v4164, 7
        %v4167 = vshll.u32 %v4155, 16
        %v4169 = vor.u32 %v4166, %v4167
        %v4170 = vrot.slane %v4166, 4
        %v4172 = vshrl.u32 %v4156, 16
        %v4174 = vrot.slane %v4172, 7
        %v4175 = vshll.u32 %v4156, 16
        %v4177 = vor.u32 %v4174, %v4175
        %v4178 = vrot.slane %v4174, 4
        %v4180 = vshrl.u32 %v4157, 16
        %v4182 = vrot.slane %v4180, 7
        %v4183 = vshll.u32 %v4157, 16
        %v4185 = vor.u32 %v4182, %v4183
        %v4186 = vrot.slane %v4182, 4
        %v4188 = vshrl.u32 %v4158, 16
        %v4190 = vrot.slane %v4188, 7
        %v4191 = vshll.u32 %v4158, 16
        %v4193 = vor.u32 %v4190, %v4191
        %v4194 = vrot.slane %v4190, 4
        %v4196 = vshrl.u32 %v4159, 16
        %v4198 = vrot.slane %v4196, 7
        %v4199 = vshll.u32 %v4159, 16
        %v4201 = vor.u32 %v4198, %v4199
        %v4202 = vrot.slane %v4198, 4
        %v4204 = vshrl.u32 %v4160, 16
        %v4206 = vrot.slane %v4204, 7
        %v4207 = vshll.u32 %v4160, 16
        %v4209 = vor.u32 %v4206, %v4207
        %v4210 = vrot.slane %v4206, 4
        %v4212 = vshrl.u32 %v4161, 16
        %v4214 = vrot.slane %v4212, 7
        %v4215 = vshll.u32 %v4161, 16
        %v4217 = vor.u32 %v4214, %v4215
        %v4218 = vrot.slane %v4214, 4
        %v4220 = vshrl.u32 %v4162, 16
        %v4222 = vrot.slane %v4220, 7
        %v4223 = vshll.u32 %v4162, 16
        %v4225 = vor.u32 %v4222, %v4223
        %v4226 = vrot.slane %v4222, 4
        %v4243 = vsel %vm1717, %v4169, %v3211
        %4244 = vst [vmem:[%s1715] sm:$0xf] %v4243
        %v4245 = vld [vmem:[%s1715 + $0x4] sm:$0x1]
        %v4246 = vsel %vm1722, %v4170, %v4245
        %4247 = vst [vmem:[%s1715 + $0x4] sm:$0x1] %v4246
        %v4248 = vld [vmem:[%s1715 + $0x8] sm:$0xf]
        %v4249 = vsel %vm1717, %v4177, %v4248
        %4250 = vst [vmem:[%s1715 + $0x8] sm:$0xf] %v4249
        %v4251 = vld [vmem:[%s1715 + $0xc] sm:$0x1]
        %v4252 = vsel %vm1722, %v4178, %v4251
        %4253 = vst [vmem:[%s1715 + $0xc] sm:$0x1] %v4252
        %v4254 = vld [vmem:[%s1715 + $0x10] sm:$0xf]
        %v4255 = vsel %vm1717, %v4185, %v4254
        %4256 = vst [vmem:[%s1715 + $0x10] sm:$0xf] %v4255
        %v4257 = vld [vmem:[%s1715 + $0x14] sm:$0x1]
        %v4258 = vsel %vm1722, %v4186, %v4257
        %4259 = vst [vmem:[%s1715 + $0x14] sm:$0x1] %v4258
        %v4260 = vld [vmem:[%s1715 + $0x18] sm:$0xf]
        %v4261 = vsel %vm1717, %v4193, %v4260
        %4262 = vst [vmem:[%s1715 + $0x18] sm:$0xf] %v4261
        %v4263 = vld [vmem:[%s1715 + $0x1c] sm:$0x1]
        %v4264 = vsel %vm1722, %v4194, %v4263
        %4265 = vst [vmem:[%s1715 + $0x1c] sm:$0x1] %v4264
        %v4266 = vld [vmem:[%s1715 + $0x20] sm:$0xf]
        %v4267 = vsel %vm1717, %v4201, %v4266
        %4268 = vst [vmem:[%s1715 + $0x20] sm:$0xf] %v4267
        %v4269 = vld [vmem:[%s1715 + $0x24] sm:$0x1]
        %v4270 = vsel %vm1722, %v4202, %v4269
        %4271 = vst [vmem:[%s1715 + $0x24] sm:$0x1] %v4270
        %v4272 = vld [vmem:[%s1715 + $0x28] sm:$0xf]
        %v4273 = vsel %vm1717, %v4209, %v4272
        %4274 = vst [vmem:[%s1715 + $0x28] sm:$0xf] %v4273
        %v4275 = vld [vmem:[%s1715 + $0x2c] sm:$0x1]
        %v4276 = vsel %vm1722, %v4210, %v4275
        %4277 = vst [vmem:[%s1715 + $0x2c] sm:$0x1] %v4276
        %v4278 = vld [vmem:[%s1715 + $0x30] sm:$0xf]
        %v4279 = vsel %vm1717, %v4217, %v4278
        %4280 = vst [vmem:[%s1715 + $0x30] sm:$0xf] %v4279
        %v4281 = vld [vmem:[%s1715 + $0x34] sm:$0x1]
        %v4282 = vsel %vm1722, %v4218, %v4281
        %4283 = vst [vmem:[%s1715 + $0x34] sm:$0x1] %v4282
        %v4284 = vld [vmem:[%s1715 + $0x38] sm:$0xf]
        %v4285 = vsel %vm1717, %v4225, %v4284
        %4286 = vst [vmem:[%s1715 + $0x38] sm:$0xf] %v4285
        %v4287 = vld [vmem:[%s1715 + $0x3c] sm:$0x1]
        %v4288 = vsel %vm1722, %v4226, %v4287
        %4289 = vst [vmem:[%s1715 + $0x3c] sm:$0x1] %v4288
        %v4290 = vld [vmem:[#allocation3] sm:$0xf]
        %v4291 = vld [vmem:[#allocation3 + $0x8] sm:$0xf]
        %v4292 = vld [vmem:[#allocation3 + $0x10] sm:$0xf]
        %v4293 = vld [vmem:[#allocation3 + $0x18] sm:$0xf]
        %v4294 = vld [vmem:[#allocation3 + $0x20] sm:$0xf]
        %v4295 = vld [vmem:[#allocation3 + $0x28] sm:$0xf]
        %v4296 = vld [vmem:[#allocation3 + $0x30] sm:$0xf]
        %v4297 = vld [vmem:[#allocation3 + $0x38] sm:$0xf]
        %v4298 = vld [vmem:[#allocation3 + $0x4] sm:$0x1]
        %v4299 = vld [vmem:[#allocation3 + $0xc] sm:$0x1]
        %v4300 = vld [vmem:[#allocation3 + $0x14] sm:$0x1]
        %v4301 = vld [vmem:[#allocation3 + $0x1c] sm:$0x1]
        %v4302 = vld [vmem:[#allocation3 + $0x24] sm:$0x1]
        %v4303 = vld [vmem:[#allocation3 + $0x2c] sm:$0x1]
        %v4304 = vld [vmem:[#allocation3 + $0x34] sm:$0x1]
        %v4305 = vld [vmem:[#allocation3 + $0x3c] sm:$0x1]
        %v4307 = vshrl.u32 %v4290, 16
        %v4309 = vrot.slane %v4307, 4
        %v4310 = vshll.u32 %v4290, 16
        %v4312 = vrot.slane %v4310, 5
        %v4313 = vor.u32 %v4309, %v4312
        %v4314 = vrot.slane %v4313, 4
        %v4316 = vshll.u32 %v4298, 16
        %v4318 = vrot.slane %v4316, 5
        %v4319 = vsel %vm748, %v4314, %v4318
        %v4321 = vshrl.u32 %v4291, 16
        %v4323 = vrot.slane %v4321, 4
        %v4324 = vshll.u32 %v4291, 16
        %v4326 = vrot.slane %v4324, 5
        %v4327 = vor.u32 %v4323, %v4326
        %v4328 = vrot.slane %v4327, 4
        %v4330 = vshll.u32 %v4299, 16
        %v4332 = vrot.slane %v4330, 5
        %v4333 = vsel %vm748, %v4328, %v4332
        %v4335 = vshrl.u32 %v4292, 16
        %v4337 = vrot.slane %v4335, 4
        %v4338 = vshll.u32 %v4292, 16
        %v4340 = vrot.slane %v4338, 5
        %v4341 = vor.u32 %v4337, %v4340
        %v4342 = vrot.slane %v4341, 4
        %v4344 = vshll.u32 %v4300, 16
        %v4346 = vrot.slane %v4344, 5
        %v4347 = vsel %vm748, %v4342, %v4346
        %v4349 = vshrl.u32 %v4293, 16
        %v4351 = vrot.slane %v4349, 4
        %v4352 = vshll.u32 %v4293, 16
        %v4354 = vrot.slane %v4352, 5
        %v4355 = vor.u32 %v4351, %v4354
        %v4356 = vrot.slane %v4355, 4
        %v4358 = vshll.u32 %v4301, 16
        %v4360 = vrot.slane %v4358, 5
        %v4361 = vsel %vm748, %v4356, %v4360
        %v4363 = vshrl.u32 %v4294, 16
        %v4365 = vrot.slane %v4363, 4
        %v4366 = vshll.u32 %v4294, 16
        %v4368 = vrot.slane %v4366, 5
        %v4369 = vor.u32 %v4365, %v4368
        %v4370 = vrot.slane %v4369, 4
        %v4372 = vshll.u32 %v4302, 16
        %v4374 = vrot.slane %v4372, 5
        %v4375 = vsel %vm748, %v4370, %v4374
        %v4377 = vshrl.u32 %v4295, 16
        %v4379 = vrot.slane %v4377, 4
        %v4380 = vshll.u32 %v4295, 16
        %v4382 = vrot.slane %v4380, 5
        %v4383 = vor.u32 %v4379, %v4382
        %v4384 = vrot.slane %v4383, 4
        %v4386 = vshll.u32 %v4303, 16
        %v4388 = vrot.slane %v4386, 5
        %v4389 = vsel %vm748, %v4384, %v4388
        %v4391 = vshrl.u32 %v4296, 16
        %v4393 = vrot.slane %v4391, 4
        %v4394 = vshll.u32 %v4296, 16
        %v4396 = vrot.slane %v4394, 5
        %v4397 = vor.u32 %v4393, %v4396
        %v4398 = vrot.slane %v4397, 4
        %v4400 = vshll.u32 %v4304, 16
        %v4402 = vrot.slane %v4400, 5
        %v4403 = vsel %vm748, %v4398, %v4402
        %v4405 = vshrl.u32 %v4297, 16
        %v4407 = vrot.slane %v4405, 4
        %v4408 = vshll.u32 %v4297, 16
        %v4410 = vrot.slane %v4408, 5
        %v4411 = vor.u32 %v4407, %v4410
        %v4412 = vrot.slane %v4411, 4
        %v4414 = vshll.u32 %v4305, 16
        %v4416 = vrot.slane %v4414, 5
        %v4417 = vsel %vm748, %v4412, %v4416
        %v4418 = vld [vmem:[#allocation3] sm:$0xe]
        %v4419 = vld [vmem:[#allocation3 + $0x8] sm:$0xe]
        %v4420 = vld [vmem:[#allocation3 + $0x10] sm:$0xe]
        %v4421 = vld [vmem:[#allocation3 + $0x18] sm:$0xe]
        %v4422 = vld [vmem:[#allocation3 + $0x20] sm:$0xe]
        %v4423 = vld [vmem:[#allocation3 + $0x28] sm:$0xe]
        %v4424 = vld [vmem:[#allocation3 + $0x30] sm:$0xe]
        %v4425 = vld [vmem:[#allocation3 + $0x38] sm:$0xe]
        %v4442 = vrot.slane %v4418, 5
        %v4443 = vrot.slane %v4442, 4
        %v4444 = vrot.slane %v4298, 5
        %v4445 = vsel %vm887, %v4443, %v4444
        %v4446 = vrot.slane %v4419, 5
        %v4447 = vrot.slane %v4446, 4
        %v4448 = vrot.slane %v4299, 5
        %v4449 = vsel %vm887, %v4447, %v4448
        %v4450 = vrot.slane %v4420, 5
        %v4451 = vrot.slane %v4450, 4
        %v4452 = vrot.slane %v4300, 5
        %v4453 = vsel %vm887, %v4451, %v4452
        %v4454 = vrot.slane %v4421, 5
        %v4455 = vrot.slane %v4454, 4
        %v4456 = vrot.slane %v4301, 5
        %v4457 = vsel %vm887, %v4455, %v4456
        %v4458 = vrot.slane %v4422, 5
        %v4459 = vrot.slane %v4458, 4
        %v4460 = vrot.slane %v4302, 5
        %v4461 = vsel %vm887, %v4459, %v4460
        %v4462 = vrot.slane %v4423, 5
        %v4463 = vrot.slane %v4462, 4
        %v4464 = vrot.slane %v4303, 5
        %v4465 = vsel %vm887, %v4463, %v4464
        %v4466 = vrot.slane %v4424, 5
        %v4467 = vrot.slane %v4466, 4
        %v4468 = vrot.slane %v4304, 5
        %v4469 = vsel %vm887, %v4467, %v4468
        %v4470 = vrot.slane %v4425, 5
        %v4471 = vrot.slane %v4470, 4
        %v4472 = vrot.slane %v4305, 5
        %v4473 = vsel %vm887, %v4471, %v4472
        %v4474 = vld [vmem:[%s1715] sm:$0xf]
        %v4475 = vld [vmem:[%s1715 + $0x8] sm:$0xf]
        %v4476 = vld [vmem:[%s1715 + $0x10] sm:$0xf]
        %v4477 = vld [vmem:[%s1715 + $0x18] sm:$0xf]
        %v4478 = vld [vmem:[%s1715 + $0x20] sm:$0xf]
        %v4479 = vld [vmem:[%s1715 + $0x28] sm:$0xf]
        %v4480 = vld [vmem:[%s1715 + $0x30] sm:$0xf]
        %v4481 = vld [vmem:[%s1715 + $0x38] sm:$0xf]
        %v4482 = vld [vmem:[%s1715 + $0x4] sm:$0x1]
        %v4483 = vld [vmem:[%s1715 + $0xc] sm:$0x1]
        %v4484 = vld [vmem:[%s1715 + $0x14] sm:$0x1]
        %v4485 = vld [vmem:[%s1715 + $0x1c] sm:$0x1]
        %v4486 = vld [vmem:[%s1715 + $0x24] sm:$0x1]
        %v4487 = vld [vmem:[%s1715 + $0x2c] sm:$0x1]
        %v4488 = vld [vmem:[%s1715 + $0x34] sm:$0x1]
        %v4489 = vld [vmem:[%s1715 + $0x3c] sm:$0x1]
        %v4491 = vshrl.u32 %v4474, 16
        %v4493 = vrot.slane %v4491, 4
        %v4494 = vshll.u32 %v4474, 16
        %v4496 = vrot.slane %v4494, 5
        %v4497 = vor.u32 %v4493, %v4496
        %v4498 = vrot.slane %v4497, 4
        %v4500 = vshll.u32 %v4482, 16
        %v4502 = vrot.slane %v4500, 5
        %v4503 = vsel %vm748, %v4498, %v4502
        %v4505 = vshrl.u32 %v4475, 16
        %v4507 = vrot.slane %v4505, 4
        %v4508 = vshll.u32 %v4475, 16
        %v4510 = vrot.slane %v4508, 5
        %v4511 = vor.u32 %v4507, %v4510
        %v4512 = vrot.slane %v4511, 4
        %v4514 = vshll.u32 %v4483, 16
        %v4516 = vrot.slane %v4514, 5
        %v4517 = vsel %vm748, %v4512, %v4516
        %v4519 = vshrl.u32 %v4476, 16
        %v4521 = vrot.slane %v4519, 4
        %v4522 = vshll.u32 %v4476, 16
        %v4524 = vrot.slane %v4522, 5
        %v4525 = vor.u32 %v4521, %v4524
        %v4526 = vrot.slane %v4525, 4
        %v4528 = vshll.u32 %v4484, 16
        %v4530 = vrot.slane %v4528, 5
        %v4531 = vsel %vm748, %v4526, %v4530
        %v4533 = vshrl.u32 %v4477, 16
        %v4535 = vrot.slane %v4533, 4
        %v4536 = vshll.u32 %v4477, 16
        %v4538 = vrot.slane %v4536, 5
        %v4539 = vor.u32 %v4535, %v4538
        %v4540 = vrot.slane %v4539, 4
        %v4542 = vshll.u32 %v4485, 16
        %v4544 = vrot.slane %v4542, 5
        %v4545 = vsel %vm748, %v4540, %v4544
        %v4547 = vshrl.u32 %v4478, 16
        %v4549 = vrot.slane %v4547, 4
        %v4550 = vshll.u32 %v4478, 16
        %v4552 = vrot.slane %v4550, 5
        %v4553 = vor.u32 %v4549, %v4552
        %v4554 = vrot.slane %v4553, 4
        %v4556 = vshll.u32 %v4486, 16
        %v4558 = vrot.slane %v4556, 5
        %v4559 = vsel %vm748, %v4554, %v4558
        %v4561 = vshrl.u32 %v4479, 16
        %v4563 = vrot.slane %v4561, 4
        %v4564 = vshll.u32 %v4479, 16
        %v4566 = vrot.slane %v4564, 5
        %v4567 = vor.u32 %v4563, %v4566
        %v4568 = vrot.slane %v4567, 4
        %v4570 = vshll.u32 %v4487, 16
        %v4572 = vrot.slane %v4570, 5
        %v4573 = vsel %vm748, %v4568, %v4572
        %v4575 = vshrl.u32 %v4480, 16
        %v4577 = vrot.slane %v4575, 4
        %v4578 = vshll.u32 %v4480, 16
        %v4580 = vrot.slane %v4578, 5
        %v4581 = vor.u32 %v4577, %v4580
        %v4582 = vrot.slane %v4581, 4
        %v4584 = vshll.u32 %v4488, 16
        %v4586 = vrot.slane %v4584, 5
        %v4587 = vsel %vm748, %v4582, %v4586
        %v4589 = vshrl.u32 %v4481, 16
        %v4591 = vrot.slane %v4589, 4
        %v4592 = vshll.u32 %v4481, 16
        %v4594 = vrot.slane %v4592, 5
        %v4595 = vor.u32 %v4591, %v4594
        %v4596 = vrot.slane %v4595, 4
        %v4598 = vshll.u32 %v4489, 16
        %v4600 = vrot.slane %v4598, 5
        %v4601 = vsel %vm748, %v4596, %v4600
        %v4602 = vld [vmem:[%s1715] sm:$0xe]
        %v4603 = vld [vmem:[%s1715 + $0x8] sm:$0xe]
        %v4604 = vld [vmem:[%s1715 + $0x10] sm:$0xe]
        %v4605 = vld [vmem:[%s1715 + $0x18] sm:$0xe]
        %v4606 = vld [vmem:[%s1715 + $0x20] sm:$0xe]
        %v4607 = vld [vmem:[%s1715 + $0x28] sm:$0xe]
        %v4608 = vld [vmem:[%s1715 + $0x30] sm:$0xe]
        %v4609 = vld [vmem:[%s1715 + $0x38] sm:$0xe]
        %v4626 = vrot.slane %v4602, 5
        %v4627 = vrot.slane %v4626, 4
        %v4628 = vrot.slane %v4482, 5
        %v4629 = vsel %vm887, %v4627, %v4628
        %v4630 = vrot.slane %v4603, 5
        %v4631 = vrot.slane %v4630, 4
        %v4632 = vrot.slane %v4483, 5
        %v4633 = vsel %vm887, %v4631, %v4632
        %v4634 = vrot.slane %v4604, 5
        %v4635 = vrot.slane %v4634, 4
        %v4636 = vrot.slane %v4484, 5
        %v4637 = vsel %vm887, %v4635, %v4636
        %v4638 = vrot.slane %v4605, 5
        %v4639 = vrot.slane %v4638, 4
        %v4640 = vrot.slane %v4485, 5
        %v4641 = vsel %vm887, %v4639, %v4640
        %v4642 = vrot.slane %v4606, 5
        %v4643 = vrot.slane %v4642, 4
        %v4644 = vrot.slane %v4486, 5
        %v4645 = vsel %vm887, %v4643, %v4644
        %v4646 = vrot.slane %v4607, 5
        %v4647 = vrot.slane %v4646, 4
        %v4648 = vrot.slane %v4487, 5
        %v4649 = vsel %vm887, %v4647, %v4648
        %v4650 = vrot.slane %v4608, 5
        %v4651 = vrot.slane %v4650, 4
        %v4652 = vrot.slane %v4488, 5
        %v4653 = vsel %vm887, %v4651, %v4652
        %v4654 = vrot.slane %v4609, 5
        %v4655 = vrot.slane %v4654, 4
        %v4656 = vrot.slane %v4489, 5
        %v4657 = vsel %vm887, %v4655, %v4656
        %v4658 = vld [vmem:[%s2144] sm:$0xf]
        %v4659 = vld [vmem:[%s2144 + $0x8] sm:$0xf]
        %v4660 = vld [vmem:[%s2144 + $0x10] sm:$0xf]
        %v4661 = vld [vmem:[%s2144 + $0x18] sm:$0xf]
        %v4662 = vld [vmem:[%s2144 + $0x20] sm:$0xf]
        %v4663 = vld [vmem:[%s2144 + $0x28] sm:$0xf]
        %v4664 = vld [vmem:[%s2144 + $0x30] sm:$0xf]
        %v4665 = vld [vmem:[%s2144 + $0x38] sm:$0xf]
        %v4666 = vld [vmem:[%s2144 + $0x4] sm:$0x1]
        %v4667 = vld [vmem:[%s2144 + $0xc] sm:$0x1]
        %v4668 = vld [vmem:[%s2144 + $0x14] sm:$0x1]
        %v4669 = vld [vmem:[%s2144 + $0x1c] sm:$0x1]
        %v4670 = vld [vmem:[%s2144 + $0x24] sm:$0x1]
        %v4671 = vld [vmem:[%s2144 + $0x2c] sm:$0x1]
        %v4672 = vld [vmem:[%s2144 + $0x34] sm:$0x1]
        %v4673 = vld [vmem:[%s2144 + $0x3c] sm:$0x1]
        %v4675 = vshrl.u32 %v4658, 16
        %v4677 = vrot.slane %v4675, 4
        %v4678 = vshll.u32 %v4658, 16
        %v4680 = vrot.slane %v4678, 5
        %v4681 = vor.u32 %v4677, %v4680
        %v4682 = vrot.slane %v4681, 4
        %v4684 = vshll.u32 %v4666, 16
        %v4686 = vrot.slane %v4684, 5
        %v4687 = vsel %vm748, %v4682, %v4686
        %v4689 = vshrl.u32 %v4659, 16
        %v4691 = vrot.slane %v4689, 4
        %v4692 = vshll.u32 %v4659, 16
        %v4694 = vrot.slane %v4692, 5
        %v4695 = vor.u32 %v4691, %v4694
        %v4696 = vrot.slane %v4695, 4
        %v4698 = vshll.u32 %v4667, 16
        %v4700 = vrot.slane %v4698, 5
        %v4701 = vsel %vm748, %v4696, %v4700
        %v4703 = vshrl.u32 %v4660, 16
        %v4705 = vrot.slane %v4703, 4
        %v4706 = vshll.u32 %v4660, 16
        %v4708 = vrot.slane %v4706, 5
        %v4709 = vor.u32 %v4705, %v4708
        %v4710 = vrot.slane %v4709, 4
        %v4712 = vshll.u32 %v4668, 16
        %v4714 = vrot.slane %v4712, 5
        %v4715 = vsel %vm748, %v4710, %v4714
        %v4717 = vshrl.u32 %v4661, 16
        %v4719 = vrot.slane %v4717, 4
        %v4720 = vshll.u32 %v4661, 16
        %v4722 = vrot.slane %v4720, 5
        %v4723 = vor.u32 %v4719, %v4722
        %v4724 = vrot.slane %v4723, 4
        %v4726 = vshll.u32 %v4669, 16
        %v4728 = vrot.slane %v4726, 5
        %v4729 = vsel %vm748, %v4724, %v4728
        %v4731 = vshrl.u32 %v4662, 16
        %v4733 = vrot.slane %v4731, 4
        %v4734 = vshll.u32 %v4662, 16
        %v4736 = vrot.slane %v4734, 5
        %v4737 = vor.u32 %v4733, %v4736
        %v4738 = vrot.slane %v4737, 4
        %v4740 = vshll.u32 %v4670, 16
        %v4742 = vrot.slane %v4740, 5
        %v4743 = vsel %vm748, %v4738, %v4742
        %v4745 = vshrl.u32 %v4663, 16
        %v4747 = vrot.slane %v4745, 4
        %v4748 = vshll.u32 %v4663, 16
        %v4750 = vrot.slane %v4748, 5
        %v4751 = vor.u32 %v4747, %v4750
        %v4752 = vrot.slane %v4751, 4
        %v4754 = vshll.u32 %v4671, 16
        %v4756 = vrot.slane %v4754, 5
        %v4757 = vsel %vm748, %v4752, %v4756
        %v4759 = vshrl.u32 %v4664, 16
        %v4761 = vrot.slane %v4759, 4
        %v4762 = vshll.u32 %v4664, 16
        %v4764 = vrot.slane %v4762, 5
        %v4765 = vor.u32 %v4761, %v4764
        %v4766 = vrot.slane %v4765, 4
        %v4768 = vshll.u32 %v4672, 16
        %v4770 = vrot.slane %v4768, 5
        %v4771 = vsel %vm748, %v4766, %v4770
        %v4773 = vshrl.u32 %v4665, 16
        %v4775 = vrot.slane %v4773, 4
        %v4776 = vshll.u32 %v4665, 16
        %v4778 = vrot.slane %v4776, 5
        %v4779 = vor.u32 %v4775, %v4778
        %v4780 = vrot.slane %v4779, 4
        %v4782 = vshll.u32 %v4673, 16
        %v4784 = vrot.slane %v4782, 5
        %v4785 = vsel %vm748, %v4780, %v4784
        %v4786 = vld [vmem:[%s2144] sm:$0xe]
        %v4787 = vld [vmem:[%s2144 + $0x8] sm:$0xe]
        %v4788 = vld [vmem:[%s2144 + $0x10] sm:$0xe]
        %v4789 = vld [vmem:[%s2144 + $0x18] sm:$0xe]
        %v4790 = vld [vmem:[%s2144 + $0x20] sm:$0xe]
        %v4791 = vld [vmem:[%s2144 + $0x28] sm:$0xe]
        %v4792 = vld [vmem:[%s2144 + $0x30] sm:$0xe]
        %v4793 = vld [vmem:[%s2144 + $0x38] sm:$0xe]
        %v4810 = vrot.slane %v4786, 5
        %v4811 = vrot.slane %v4810, 4
        %v4812 = vrot.slane %v4666, 5
        %v4813 = vsel %vm887, %v4811, %v4812
        %v4814 = vrot.slane %v4787, 5
        %v4815 = vrot.slane %v4814, 4
        %v4816 = vrot.slane %v4667, 5
        %v4817 = vsel %vm887, %v4815, %v4816
        %v4818 = vrot.slane %v4788, 5
        %v4819 = vrot.slane %v4818, 4
        %v4820 = vrot.slane %v4668, 5
        %v4821 = vsel %vm887, %v4819, %v4820
        %v4822 = vrot.slane %v4789, 5
        %v4823 = vrot.slane %v4822, 4
        %v4824 = vrot.slane %v4669, 5
        %v4825 = vsel %vm887, %v4823, %v4824
        %v4826 = vrot.slane %v4790, 5
        %v4827 = vrot.slane %v4826, 4
        %v4828 = vrot.slane %v4670, 5
        %v4829 = vsel %vm887, %v4827, %v4828
        %v4830 = vrot.slane %v4791, 5
        %v4831 = vrot.slane %v4830, 4
        %v4832 = vrot.slane %v4671, 5
        %v4833 = vsel %vm887, %v4831, %v4832
        %v4834 = vrot.slane %v4792, 5
        %v4835 = vrot.slane %v4834, 4
        %v4836 = vrot.slane %v4672, 5
        %v4837 = vsel %vm887, %v4835, %v4836
        %v4838 = vrot.slane %v4793, 5
        %v4839 = vrot.slane %v4838, 4
        %v4840 = vrot.slane %v4673, 5
        %v4841 = vsel %vm887, %v4839, %v4840
        %v4850 = vunpack.c.l.b16 %v4290
        %v4851 = vunpack.c.l.b16 %v4291
        %v4852 = vunpack.c.l.b16 %v4292
        %v4853 = vunpack.c.l.b16 %v4293
        %v4854 = vunpack.c.l.b16 %v4294
        %v4855 = vunpack.c.l.b16 %v4295
        %v4856 = vunpack.c.l.b16 %v4296
        %v4857 = vunpack.c.l.b16 %v4297
        %v4858 = vpack.c.b16 %v4851, %v4850
        %v4859 = vpack.c.b16 %v4853, %v4852
        %v4860 = vpack.c.b16 %v4855, %v4854
        %v4861 = vpack.c.b16 %v4857, %v4856
        %v4862 = vunpack.c.l.b16 %v4319
        %v4863 = vunpack.c.l.b16 %v4333
        %v4864 = vunpack.c.l.b16 %v4347
        %v4865 = vunpack.c.l.b16 %v4361
        %v4866 = vunpack.c.l.b16 %v4375
        %v4867 = vunpack.c.l.b16 %v4389
        %v4868 = vunpack.c.l.b16 %v4403
        %v4869 = vunpack.c.l.b16 %v4417
        %v4870 = vpack.c.b16 %v4863, %v4862
        %v4871 = vpack.c.b16 %v4865, %v4864
        %v4872 = vpack.c.b16 %v4867, %v4866
        %v4873 = vpack.c.b16 %v4869, %v4868
        %4874 = vrot.lane.b32.xlu0 %v4870, 32
        %v4875 = vpop.permute.xlu0 %4874
        %4876 = vrot.lane.b32.xlu0 %v4871, 32
        %v4877 = vpop.permute.xlu0 %4876
        %4878 = vrot.lane.b32.xlu0 %v4872, 32
        %v4879 = vpop.permute.xlu0 %4878
        %4880 = vrot.lane.b32.xlu0 %v4873, 32
        %v4881 = vpop.permute.xlu0 %4880
        %v4882 = vunpack.c.l.b16 %v4445
        %v4883 = vunpack.c.l.b16 %v4449
        %v4884 = vunpack.c.l.b16 %v4453
        %v4885 = vunpack.c.l.b16 %v4457
        %v4886 = vunpack.c.l.b16 %v4461
        %v4887 = vunpack.c.l.b16 %v4465
        %v4888 = vunpack.c.l.b16 %v4469
        %v4889 = vunpack.c.l.b16 %v4473
        %v4890 = vpack.c.b16 %v4883, %v4882
        %v4891 = vpack.c.b16 %v4885, %v4884
        %v4892 = vpack.c.b16 %v4887, %v4886
        %v4893 = vpack.c.b16 %v4889, %v4888
        %4894 = vrot.lane.b32.xlu0 %v4890, 64
        %v4895 = vpop.permute.xlu0 %4894
        %4896 = vrot.lane.b32.xlu0 %v4891, 64
        %v4897 = vpop.permute.xlu0 %4896
        %4898 = vrot.lane.b32.xlu0 %v4892, 64
        %v4899 = vpop.permute.xlu0 %4898
        %4900 = vrot.lane.b32.xlu0 %v4893, 64
        %v4901 = vpop.permute.xlu0 %4900
        %v4910 = vunpack.c.l.b16 %v4474
        %v4911 = vunpack.c.l.b16 %v4475
        %v4912 = vunpack.c.l.b16 %v4476
        %v4913 = vunpack.c.l.b16 %v4477
        %v4914 = vunpack.c.l.b16 %v4478
        %v4915 = vunpack.c.l.b16 %v4479
        %v4916 = vunpack.c.l.b16 %v4480
        %v4917 = vunpack.c.l.b16 %v4481
        %v4918 = vpack.c.b16 %v4911, %v4910
        %v4919 = vpack.c.b16 %v4913, %v4912
        %v4920 = vpack.c.b16 %v4915, %v4914
        %v4921 = vpack.c.b16 %v4917, %v4916
        %4922 = vrot.lane.b32.xlu0 %v4918, 96
        %v4923 = vpop.permute.xlu0 %4922
        %4924 = vrot.lane.b32.xlu0 %v4919, 96
        %v4925 = vpop.permute.xlu0 %4924
        %4926 = vrot.lane.b32.xlu0 %v4920, 96
        %v4927 = vpop.permute.xlu0 %4926
        %4928 = vrot.lane.b32.xlu0 %v4921, 96
        %v4929 = vpop.permute.xlu0 %4928
        %v4930 = vunpack.c.l.b16 %v4503
        %v4931 = vunpack.c.l.b16 %v4517
        %v4932 = vunpack.c.l.b16 %v4531
        %v4933 = vunpack.c.l.b16 %v4545
        %v4934 = vunpack.c.l.b16 %v4559
        %v4935 = vunpack.c.l.b16 %v4573
        %v4936 = vunpack.c.l.b16 %v4587
        %v4937 = vunpack.c.l.b16 %v4601
        %v4938 = vpack.c.b16 %v4931, %v4930
        %v4939 = vpack.c.b16 %v4933, %v4932
        %v4940 = vpack.c.b16 %v4935, %v4934
        %v4941 = vpack.c.b16 %v4937, %v4936
        %v4942 = vunpack.c.l.b16 %v4629
        %v4943 = vunpack.c.l.b16 %v4633
        %v4944 = vunpack.c.l.b16 %v4637
        %v4945 = vunpack.c.l.b16 %v4641
        %v4946 = vunpack.c.l.b16 %v4645
        %v4947 = vunpack.c.l.b16 %v4649
        %v4948 = vunpack.c.l.b16 %v4653
        %v4949 = vunpack.c.l.b16 %v4657
        %v4950 = vpack.c.b16 %v4943, %v4942
        %v4951 = vpack.c.b16 %v4945, %v4944
        %v4952 = vpack.c.b16 %v4947, %v4946
        %v4953 = vpack.c.b16 %v4949, %v4948
        %4954 = vrot.lane.b32.xlu0 %v4950, 32
        %v4955 = vpop.permute.xlu0 %4954
        %4956 = vrot.lane.b32.xlu0 %v4951, 32
        %v4957 = vpop.permute.xlu0 %4956
        %4958 = vrot.lane.b32.xlu0 %v4952, 32
        %v4959 = vpop.permute.xlu0 %4958
        %4960 = vrot.lane.b32.xlu0 %v4953, 32
        %v4961 = vpop.permute.xlu0 %4960
        %v4970 = vunpack.c.l.b16 %v4658
        %v4971 = vunpack.c.l.b16 %v4659
        %v4972 = vunpack.c.l.b16 %v4660
        %v4973 = vunpack.c.l.b16 %v4661
        %v4974 = vunpack.c.l.b16 %v4662
        %v4975 = vunpack.c.l.b16 %v4663
        %v4976 = vunpack.c.l.b16 %v4664
        %v4977 = vunpack.c.l.b16 %v4665
        %v4978 = vpack.c.b16 %v4971, %v4970
        %v4979 = vpack.c.b16 %v4973, %v4972
        %v4980 = vpack.c.b16 %v4975, %v4974
        %v4981 = vpack.c.b16 %v4977, %v4976
        %4982 = vrot.lane.b32.xlu0 %v4978, 64
        %v4983 = vpop.permute.xlu0 %4982
        %4984 = vrot.lane.b32.xlu0 %v4979, 64
        %v4985 = vpop.permute.xlu0 %4984
        %4986 = vrot.lane.b32.xlu0 %v4980, 64
        %v4987 = vpop.permute.xlu0 %4986
        %4988 = vrot.lane.b32.xlu0 %v4981, 64
        %v4989 = vpop.permute.xlu0 %4988
        %v4990 = vunpack.c.l.b16 %v4687
        %v4991 = vunpack.c.l.b16 %v4701
        %v4992 = vunpack.c.l.b16 %v4715
        %v4993 = vunpack.c.l.b16 %v4729
        %v4994 = vunpack.c.l.b16 %v4743
        %v4995 = vunpack.c.l.b16 %v4757
        %v4996 = vunpack.c.l.b16 %v4771
        %v4997 = vunpack.c.l.b16 %v4785
        %v4998 = vpack.c.b16 %v4991, %v4990
        %v4999 = vpack.c.b16 %v4993, %v4992
        %v5000 = vpack.c.b16 %v4995, %v4994
        %v5001 = vpack.c.b16 %v4997, %v4996
        %5002 = vrot.lane.b32.xlu0 %v4998, 96
        %v5003 = vpop.permute.xlu0 %5002
        %5004 = vrot.lane.b32.xlu0 %v4999, 96
        %v5005 = vpop.permute.xlu0 %5004
        %5006 = vrot.lane.b32.xlu0 %v5000, 96
        %v5007 = vpop.permute.xlu0 %5006
        %5008 = vrot.lane.b32.xlu0 %v5001, 96
        %v5009 = vpop.permute.xlu0 %5008
        %v5010 = vunpack.c.l.b16 %v4813
        %v5011 = vunpack.c.l.b16 %v4817
        %v5012 = vunpack.c.l.b16 %v4821
        %v5013 = vunpack.c.l.b16 %v4825
        %v5014 = vunpack.c.l.b16 %v4829
        %v5015 = vunpack.c.l.b16 %v4833
        %v5016 = vunpack.c.l.b16 %v4837
        %v5017 = vunpack.c.l.b16 %v4841
        %v5018 = vpack.c.b16 %v5011, %v5010
        %v5019 = vpack.c.b16 %v5013, %v5012
        %v5020 = vpack.c.b16 %v5015, %v5014
        %v5021 = vpack.c.b16 %v5017, %v5016
        %v5024 = vsel %vm1552, %v4858, %v4875
        %v5027 = vsel %vm1552, %v4859, %v4877
        %v5030 = vsel %vm1552, %v4860, %v4879
        %v5033 = vsel %vm1552, %v4861, %v4881
        %v5035 = vsel %vm2521, %v5024, %v4895
        %v5037 = vsel %vm2521, %v5027, %v4897
        %v5039 = vsel %vm2521, %v5030, %v4899
        %v5041 = vsel %vm2521, %v5033, %v4901
        %v5043 = vsel %vm2530, %v5035, %v4923
        %v5046 = vsel %vm2530, %v5037, %v4925
        %v5049 = vsel %vm2530, %v5039, %v4927
        %v5052 = vsel %vm2530, %v5041, %v4929
        %v5056 = vsel %vm1552, %v4938, %v4955
        %v5059 = vsel %vm1552, %v4939, %v4957
        %v5062 = vsel %vm1552, %v4940, %v4959
        %v5065 = vsel %vm1552, %v4941, %v4961
        %v5067 = vsel %vm2521, %v5056, %v4983
        %v5069 = vsel %vm2521, %v5059, %v4985
        %v5071 = vsel %vm2521, %v5062, %v4987
        %v5073 = vsel %vm2521, %v5065, %v4989
        %v5075 = vsel %vm2530, %v5067, %v5003
        %v5078 = vsel %vm2530, %v5069, %v5005
        %v5081 = vsel %vm2530, %v5071, %v5007
        %v5084 = vsel %vm2530, %v5073, %v5009
        %v5086 = vld [vmem:[%s7] sm:$0xf]
        %v5087 = vld [vmem:[%s7 + $0x4] sm:$0xf]
        %v5088 = vld [vmem:[%s7 + $0x8] sm:$0xf]
        %v5089 = vld [vmem:[%s7 + $0xc] sm:$0xf]
        %v5090 = vld [vmem:[%s7 + $0x10] sm:$0xf]
        %v5091 = vld [vmem:[%s7 + $0x14] sm:$0xf]
        %v5092 = vld [vmem:[%s7 + $0x18] sm:$0xf]
        %v5093 = vld [vmem:[%s7 + $0x1c] sm:$0xf]
        %v5094 = vld [vmem:[%s7 + $0x20] sm:$0xf]
        %v5095 = vld [vmem:[%s7 + $0x24] sm:$0xf]
        %v5096 = vld [vmem:[%s7 + $0x28] sm:$0xf]
        %v5097 = vld [vmem:[%s7 + $0x2c] sm:$0xf]
        %v5098 = vld [vmem:[%s7 + $0x30] sm:$0xf]
        %v5099 = vld [vmem:[%s7 + $0x34] sm:$0xf]
        %v5100 = vld [vmem:[%s7 + $0x38] sm:$0xf]
        %v5101 = vld [vmem:[%s7 + $0x3c] sm:$0xf]
        %v5102 = vld [vmem:[%s7 + $0x40] sm:$0xf]
        %v5103 = vld [vmem:[%s7 + $0x44] sm:$0xf]
        %v5104 = vld [vmem:[%s7 + $0x48] sm:$0xf]
        %v5105 = vld [vmem:[%s7 + $0x4c] sm:$0xf]
        %v5106 = vld [vmem:[%s7 + $0x50] sm:$0xf]
        %v5107 = vld [vmem:[%s7 + $0x54] sm:$0xf]
        %v5108 = vld [vmem:[%s7 + $0x58] sm:$0xf]
        %v5109 = vld [vmem:[%s7 + $0x5c] sm:$0xf]
        %v5110 = vld [vmem:[%s7 + $0x60] sm:$0xf]
        %v5111 = vld [vmem:[%s7 + $0x64] sm:$0xf]
        %v5112 = vld [vmem:[%s7 + $0x68] sm:$0xf]
        %v5113 = vld [vmem:[%s7 + $0x6c] sm:$0xf]
        %v5114 = vld [vmem:[%s7 + $0x70] sm:$0xf]
        %v5115 = vld [vmem:[%s7 + $0x74] sm:$0xf]
        %v5116 = vld [vmem:[%s7 + $0x78] sm:$0xf]
        %v5117 = vld [vmem:[%s7 + $0x7c] sm:$0xf]
        %v5118 = vld [vmem:[%s7 + $0x80] sm:$0xf]
        %v5119 = vld [vmem:[%s7 + $0x84] sm:$0xf]
        %v5120 = vld [vmem:[%s7 + $0x88] sm:$0xf]
        %v5121 = vld [vmem:[%s7 + $0x8c] sm:$0xf]
        %v5122 = vld [vmem:[#allocation10] sm:$0x1]
        %v5124 = vperm.slane %v5122, 0
        %v5162 = vunpack.c.l.b16 %v5086
        %v5163 = vunpack.c.l.b16 %v5087
        %v5164 = vunpack.c.l.b16 %v5088
        %v5165 = vunpack.c.l.b16 %v5089
        %v5166 = vunpack.c.l.b16 %v5090
        %v5167 = vunpack.c.l.b16 %v5091
        %v5168 = vunpack.c.l.b16 %v5092
        %v5169 = vunpack.c.l.b16 %v5093
        %v5170 = vunpack.c.l.b16 %v5094
        %v5171 = vunpack.c.l.b16 %v5095
        %v5172 = vunpack.c.l.b16 %v5096
        %v5173 = vunpack.c.l.b16 %v5097
        %v5174 = vunpack.c.l.b16 %v5098
        %v5175 = vunpack.c.l.b16 %v5099
        %v5176 = vunpack.c.l.b16 %v5100
        %v5177 = vunpack.c.l.b16 %v5101
        %v5178 = vunpack.c.l.b16 %v5102
        %v5179 = vunpack.c.l.b16 %v5103
        %v5180 = vunpack.c.l.b16 %v5104
        %v5181 = vunpack.c.l.b16 %v5105
        %v5182 = vunpack.c.l.b16 %v5106
        %v5183 = vunpack.c.l.b16 %v5107
        %v5184 = vunpack.c.l.b16 %v5108
        %v5185 = vunpack.c.l.b16 %v5109
        %v5186 = vunpack.c.l.b16 %v5110
        %v5187 = vunpack.c.l.b16 %v5111
        %v5188 = vunpack.c.l.b16 %v5112
        %v5189 = vunpack.c.l.b16 %v5113
        %v5190 = vunpack.c.l.b16 %v5114
        %v5191 = vunpack.c.l.b16 %v5115
        %v5192 = vunpack.c.l.b16 %v5116
        %v5193 = vunpack.c.l.b16 %v5117
        %v5194 = vunpack.c.l.b16 %v5118
        %v5195 = vunpack.c.l.b16 %v5119
        %v5196 = vunpack.c.l.b16 %v5120
        %v5197 = vunpack.c.l.b16 %v5121
        %v5198 = vpack.c.b16 %v5163, %v5162
        %v5199 = vpack.c.b16 %v5165, %v5164
        %v5200 = vpack.c.b16 %v5167, %v5166
        %v5201 = vpack.c.b16 %v5169, %v5168
        %v5202 = vpack.c.b16 %v5171, %v5170
        %v5203 = vpack.c.b16 %v5173, %v5172
        %v5204 = vpack.c.b16 %v5175, %v5174
        %v5205 = vpack.c.b16 %v5177, %v5176
        %v5206 = vpack.c.b16 %v5179, %v5178
        %v5207 = vpack.c.b16 %v5181, %v5180
        %v5208 = vpack.c.b16 %v5183, %v5182
        %v5209 = vpack.c.b16 %v5185, %v5184
        %v5210 = vpack.c.b16 %v5187, %v5186
        %v5211 = vpack.c.b16 %v5189, %v5188
        %v5212 = vpack.c.b16 %v5191, %v5190
        %v5213 = vpack.c.b16 %v5193, %v5192
        %v5214 = vpack.c.b16 %v5195, %v5194
        %v5215 = vpack.c.b16 %v5197, %v5196
        %v5235 = vsel %vm1552, %v5018, 0
        %v5238 = vsel %vm1552, %v5019, 0
        %v5241 = vsel %vm1552, %v5020, 0
        %v5244 = vsel %vm1552, %v5021, 0
        %5246 = vmatpush.bf16.msra.mxu0 %v5205
        %5247 = vmatpush.bf16.msra.mxu0 %v5204
        %5248 = vmatpush.bf16.msra.mxu0 %v5203
        %5249 = vmatpush.bf16.msra.mxu0 %v5202
        %5250 = vmatpush.bf16.msra.mxu0 %v5201
        %5251 = vmatpush.bf16.msra.mxu0 %v5200
        %5252 = vmatpush.bf16.msra.mxu0 %v5199
        %5253 = vmatpush.bf16.msra.mxu0 %v5198
        %5254 = vmatmul.bf16.gmra.mxu0 %v5043
        %v5255 = vpop.f32.mrf.mxu0
        %v5256 = vadd.f32 %v5124, %v5255
        %v5257 = vpop.f32.mrf.mxu0
        %v5258 = vadd.f32 %v5124, %v5257
        %5259 = vmatmul.bf16.gmra.mxu0 %v5046
        %v5260 = vpop.f32.mrf.mxu0
        %v5261 = vadd.f32 %v5124, %v5260
        %v5262 = vpop.f32.mrf.mxu0
        %v5263 = vadd.f32 %v5124, %v5262
        %5264 = vmatmul.bf16.gmra.mxu0 %v5049
        %v5265 = vpop.f32.mrf.mxu0
        %v5266 = vadd.f32 %v5124, %v5265
        %v5267 = vpop.f32.mrf.mxu0
        %v5268 = vadd.f32 %v5124, %v5267
        %5269 = vmatmul.bf16.gmra.mxu0 %v5052
        %v5270 = vpop.f32.mrf.mxu0
        %v5271 = vadd.f32 %v5124, %v5270
        %v5272 = vpop.f32.mrf.mxu0
        %v5273 = vadd.f32 %v5124, %v5272
        %5274 = vdwg.mxu0
        %5275 = vmatpush.bf16.msra.mxu0 %v5213
        %5276 = vmatpush.bf16.msra.mxu0 %v5212
        %5277 = vmatpush.bf16.msra.mxu0 %v5211
        %5278 = vmatpush.bf16.msra.mxu0 %v5210
        %5279 = vmatpush.bf16.msra.mxu0 %v5209
        %5280 = vmatpush.bf16.msra.mxu0 %v5208
        %5281 = vmatpush.bf16.msra.mxu0 %v5207
        %5282 = vmatpush.bf16.msra.mxu0 %v5206
        %5283 = vmatmul.bf16.gmra.mxu0 %v5075
        %v5284 = vpop.f32.mrf.mxu0
        %v5285 = vadd.f32 %v5256, %v5284
        %v5286 = vpop.f32.mrf.mxu0
        %v5287 = vadd.f32 %v5258, %v5286
        %5288 = vmatmul.bf16.gmra.mxu0 %v5078
        %v5289 = vpop.f32.mrf.mxu0
        %v5290 = vadd.f32 %v5261, %v5289
        %v5291 = vpop.f32.mrf.mxu0
        %v5292 = vadd.f32 %v5263, %v5291
        %5293 = vmatmul.bf16.gmra.mxu0 %v5081
        %v5294 = vpop.f32.mrf.mxu0
        %v5295 = vadd.f32 %v5266, %v5294
        %v5296 = vpop.f32.mrf.mxu0
        %v5297 = vadd.f32 %v5268, %v5296
        %5298 = vmatmul.bf16.gmra.mxu0 %v5084
        %v5299 = vpop.f32.mrf.mxu0
        %v5300 = vadd.f32 %v5271, %v5299
        %v5301 = vpop.f32.mrf.mxu0
        %v5302 = vadd.f32 %v5273, %v5301
        %5303 = vdwg.mxu0
        %5304 = vmatpush.bf16.msra.mxu0 0
        %5305 = vmatpush.bf16.msra.mxu0 0
        %5306 = vmatpush.bf16.msra.mxu0 0
        %5307 = vmatpush.bf16.msra.mxu0 0
        %5308 = vmatpush.bf16.msra.mxu0 0
        %5309 = vmatpush.bf16.msra.mxu0 0
        %5310 = vmatpush.bf16.msra.mxu0 %v5215
        %5311 = vmatpush.bf16.msra.mxu0 %v5214
        %5312 = vmatmul.bf16.gmra.mxu0 %v5235
        %v5313 = vpop.f32.mrf.mxu0
        %v5314 = vadd.f32 %v5285, %v5313
        %v5315 = vpop.f32.mrf.mxu0
        %v5316 = vadd.f32 %v5287, %v5315
        %5317 = vmatmul.bf16.gmra.mxu0 %v5238
        %v5318 = vpop.f32.mrf.mxu0
        %v5319 = vadd.f32 %v5290, %v5318
        %v5320 = vpop.f32.mrf.mxu0
        %v5321 = vadd.f32 %v5292, %v5320
        %5322 = vmatmul.bf16.gmra.mxu0 %v5241
        %v5323 = vpop.f32.mrf.mxu0
        %v5324 = vadd.f32 %v5295, %v5323
        %v5325 = vpop.f32.mrf.mxu0
        %v5326 = vadd.f32 %v5297, %v5325
        %5327 = vmatmul.bf16.gmra.mxu0 %v5244
        %v5328 = vpop.f32.mrf.mxu0
        %v5329 = vadd.f32 %v5300, %v5328
        %v5330 = vpop.f32.mrf.mxu0
        %v5331 = vadd.f32 %v5302, %v5330
        %5332 = vdwg.mxu0
        %v5333 = vmax.f32 %v5314, 0.0
        %v5334 = vmax.f32 %v5316, 0.0
        %v5335 = vmax.f32 %v5319, 0.0
        %v5336 = vmax.f32 %v5321, 0.0
        %v5337 = vmax.f32 %v5324, 0.0
        %v5338 = vmax.f32 %v5326, 0.0
        %v5339 = vmax.f32 %v5329, 0.0
        %v5340 = vmax.f32 %v5331, 0.0
        %v5341 = vpack.c.bf16 %v5333, %v5333
        %v5342 = vpack.c.bf16 %v5334, %v5334
        %v5343 = vpack.c.bf16 %v5335, %v5335
        %v5344 = vpack.c.bf16 %v5336, %v5336
        %v5345 = vpack.c.bf16 %v5337, %v5337
        %v5346 = vpack.c.bf16 %v5338, %v5338
        %v5347 = vpack.c.bf16 %v5339, %v5339
        %v5348 = vpack.c.bf16 %v5340, %v5340
        %v5350 = vshrl.u32 %v5341, 16
        %v5352 = vrot.slane %v5350, 7
        %v5353 = vshll.u32 %v5341, 16
        %v5355 = vor.u32 %v5352, %v5353
        %v5356 = vrot.slane %v5352, 4
        %v5358 = vshrl.u32 %v5342, 16
        %v5360 = vrot.slane %v5358, 7
        %v5361 = vshll.u32 %v5342, 16
        %v5363 = vor.u32 %v5360, %v5361
        %v5364 = vrot.slane %v5360, 4
        %v5366 = vshrl.u32 %v5343, 16
        %v5368 = vrot.slane %v5366, 7
        %v5369 = vshll.u32 %v5343, 16
        %v5371 = vor.u32 %v5368, %v5369
        %v5372 = vrot.slane %v5368, 4
        %v5374 = vshrl.u32 %v5344, 16
        %v5376 = vrot.slane %v5374, 7
        %v5377 = vshll.u32 %v5344, 16
        %v5379 = vor.u32 %v5376, %v5377
        %v5380 = vrot.slane %v5376, 4
        %v5382 = vshrl.u32 %v5345, 16
        %v5384 = vrot.slane %v5382, 7
        %v5385 = vshll.u32 %v5345, 16
        %v5387 = vor.u32 %v5384, %v5385
        %v5388 = vrot.slane %v5384, 4
        %v5390 = vshrl.u32 %v5346, 16
        %v5392 = vrot.slane %v5390, 7
        %v5393 = vshll.u32 %v5346, 16
        %v5395 = vor.u32 %v5392, %v5393
        %v5396 = vrot.slane %v5392, 4
        %v5398 = vshrl.u32 %v5347, 16
        %v5400 = vrot.slane %v5398, 7
        %v5401 = vshll.u32 %v5347, 16
        %v5403 = vor.u32 %v5400, %v5401
        %v5404 = vrot.slane %v5400, 4
        %v5406 = vshrl.u32 %v5348, 16
        %v5408 = vrot.slane %v5406, 7
        %v5409 = vshll.u32 %v5348, 16
        %v5411 = vor.u32 %v5408, %v5409
        %v5412 = vrot.slane %v5408, 4
        %s5429 = scalar_lea.vmem [#allocation4], 8
        %vm5430 = vcmask 125952
        %vm5431 = vmand %vm5430, %vm573
        %v5432 = vld [vmem:[%s5429] sm:$0xf]
        %v5433 = vsel %vm5431, %v5355, %v5432
        %5434 = vst [vmem:[%s5429] sm:$0xf] %v5433
        %vm5435 = vcmask 122880
        %vm5436 = vmand %vm5435, %vm579
        %v5437 = vld [vmem:[%s5429 + $0x4] sm:$0x1]
        %v5438 = vsel %vm5436, %v5356, %v5437
        %5439 = vst [vmem:[%s5429 + $0x4] sm:$0x1] %v5438
        %v5440 = vld [vmem:[%s5429 + $0x8] sm:$0xf]
        %v5441 = vsel %vm5431, %v5363, %v5440
        %5442 = vst [vmem:[%s5429 + $0x8] sm:$0xf] %v5441
        %v5443 = vld [vmem:[%s5429 + $0xc] sm:$0x1]
        %v5444 = vsel %vm5436, %v5364, %v5443
        %5445 = vst [vmem:[%s5429 + $0xc] sm:$0x1] %v5444
        %v5446 = vld [vmem:[%s5429 + $0x10] sm:$0xf]
        %v5447 = vsel %vm5431, %v5371, %v5446
        %5448 = vst [vmem:[%s5429 + $0x10] sm:$0xf] %v5447
        %v5449 = vld [vmem:[%s5429 + $0x14] sm:$0x1]
        %v5450 = vsel %vm5436, %v5372, %v5449
        %5451 = vst [vmem:[%s5429 + $0x14] sm:$0x1] %v5450
        %v5452 = vld [vmem:[%s5429 + $0x18] sm:$0xf]
        %v5453 = vsel %vm5431, %v5379, %v5452
        %5454 = vst [vmem:[%s5429 + $0x18] sm:$0xf] %v5453
        %v5455 = vld [vmem:[%s5429 + $0x1c] sm:$0x1]
        %v5456 = vsel %vm5436, %v5380, %v5455
        %5457 = vst [vmem:[%s5429 + $0x1c] sm:$0x1] %v5456
        %v5458 = vld [vmem:[%s5429 + $0x20] sm:$0xf]
        %v5459 = vsel %vm5431, %v5387, %v5458
        %5460 = vst [vmem:[%s5429 + $0x20] sm:$0xf] %v5459
        %v5461 = vld [vmem:[%s5429 + $0x24] sm:$0x1]
        %v5462 = vsel %vm5436, %v5388, %v5461
        %5463 = vst [vmem:[%s5429 + $0x24] sm:$0x1] %v5462
        %v5464 = vld [vmem:[%s5429 + $0x28] sm:$0xf]
        %v5465 = vsel %vm5431, %v5395, %v5464
        %5466 = vst [vmem:[%s5429 + $0x28] sm:$0xf] %v5465
        %v5467 = vld [vmem:[%s5429 + $0x2c] sm:$0x1]
        %v5468 = vsel %vm5436, %v5396, %v5467
        %5469 = vst [vmem:[%s5429 + $0x2c] sm:$0x1] %v5468
        %v5470 = vld [vmem:[%s5429 + $0x30] sm:$0xf]
        %v5471 = vsel %vm5431, %v5403, %v5470
        %5472 = vst [vmem:[%s5429 + $0x30] sm:$0xf] %v5471
        %v5473 = vld [vmem:[%s5429 + $0x34] sm:$0x1]
        %v5474 = vsel %vm5436, %v5404, %v5473
        %5475 = vst [vmem:[%s5429 + $0x34] sm:$0x1] %v5474
        %v5476 = vld [vmem:[%s5429 + $0x38] sm:$0xf]
        %v5477 = vsel %vm5431, %v5411, %v5476
        %5478 = vst [vmem:[%s5429 + $0x38] sm:$0xf] %v5477
        %v5479 = vld [vmem:[%s5429 + $0x3c] sm:$0x1]
        %v5480 = vsel %vm5436, %v5412, %v5479
        %5481 = vst [vmem:[%s5429 + $0x3c] sm:$0x1] %v5480
        %5482 = vrot.lane.b32.xlu0 %v5355, 112
        %v5483 = vpop.permute.xlu0 %5482
        %5484 = vrot.lane.b32.xlu0 %v5356, 112
        %v5485 = vpop.permute.xlu0 %5484
        %5486 = vrot.lane.b32.xlu0 %v5363, 112
        %v5487 = vpop.permute.xlu0 %5486
        %5488 = vrot.lane.b32.xlu0 %v5364, 112
        %v5489 = vpop.permute.xlu0 %5488
        %5490 = vrot.lane.b32.xlu0 %v5371, 112
        %v5491 = vpop.permute.xlu0 %5490
        %5492 = vrot.lane.b32.xlu0 %v5372, 112
        %v5493 = vpop.permute.xlu0 %5492
        %5494 = vrot.lane.b32.xlu0 %v5379, 112
        %v5495 = vpop.permute.xlu0 %5494
        %5496 = vrot.lane.b32.xlu0 %v5380, 112
        %v5497 = vpop.permute.xlu0 %5496
        %5498 = vrot.lane.b32.xlu0 %v5387, 112
        %v5499 = vpop.permute.xlu0 %5498
        %5500 = vrot.lane.b32.xlu0 %v5388, 112
        %v5501 = vpop.permute.xlu0 %5500
        %5502 = vrot.lane.b32.xlu0 %v5395, 112
        %v5503 = vpop.permute.xlu0 %5502
        %5504 = vrot.lane.b32.xlu0 %v5396, 112
        %v5505 = vpop.permute.xlu0 %5504
        %5506 = vrot.lane.b32.xlu0 %v5403, 112
        %v5507 = vpop.permute.xlu0 %5506
        %5508 = vrot.lane.b32.xlu0 %v5404, 112
        %v5509 = vpop.permute.xlu0 %5508
        %5510 = vrot.lane.b32.xlu0 %v5411, 112
        %v5511 = vpop.permute.xlu0 %5510
        %5512 = vrot.lane.b32.xlu0 %v5412, 112
        %v5513 = vpop.permute.xlu0 %5512
        %s5530 = scalar_lea.vmem [#allocation4], 88
        %v5531 = vld [vmem:[%s5530] sm:$0xf]
        %v5532 = vsel %vm5431, %v5483, %v5531
        %5533 = vst [vmem:[%s5530] sm:$0xf] %v5532
        %v5534 = vld [vmem:[%s5530 + $0x4] sm:$0x1]
        %v5535 = vsel %vm5436, %v5485, %v5534
        %5536 = vst [vmem:[%s5530 + $0x4] sm:$0x1] %v5535
        %v5537 = vld [vmem:[%s5530 + $0x8] sm:$0xf]
        %v5538 = vsel %vm5431, %v5487, %v5537
        %5539 = vst [vmem:[%s5530 + $0x8] sm:$0xf] %v5538
        %v5540 = vld [vmem:[%s5530 + $0xc] sm:$0x1]
        %v5541 = vsel %vm5436, %v5489, %v5540
        %5542 = vst [vmem:[%s5530 + $0xc] sm:$0x1] %v5541
        %v5543 = vld [vmem:[%s5530 + $0x10] sm:$0xf]
        %v5544 = vsel %vm5431, %v5491, %v5543
        %5545 = vst [vmem:[%s5530 + $0x10] sm:$0xf] %v5544
        %v5546 = vld [vmem:[%s5530 + $0x14] sm:$0x1]
        %v5547 = vsel %vm5436, %v5493, %v5546
        %5548 = vst [vmem:[%s5530 + $0x14] sm:$0x1] %v5547
        %v5549 = vld [vmem:[%s5530 + $0x18] sm:$0xf]
        %v5550 = vsel %vm5431, %v5495, %v5549
        %5551 = vst [vmem:[%s5530 + $0x18] sm:$0xf] %v5550
        %v5552 = vld [vmem:[%s5530 + $0x1c] sm:$0x1]
        %v5553 = vsel %vm5436, %v5497, %v5552
        %5554 = vst [vmem:[%s5530 + $0x1c] sm:$0x1] %v5553
        %v5555 = vld [vmem:[%s5530 + $0x20] sm:$0xf]
        %v5556 = vsel %vm5431, %v5499, %v5555
        %5557 = vst [vmem:[%s5530 + $0x20] sm:$0xf] %v5556
        %v5558 = vld [vmem:[%s5530 + $0x24] sm:$0x1]
        %v5559 = vsel %vm5436, %v5501, %v5558
        %5560 = vst [vmem:[%s5530 + $0x24] sm:$0x1] %v5559
        %v5561 = vld [vmem:[%s5530 + $0x28] sm:$0xf]
        %v5562 = vsel %vm5431, %v5503, %v5561
        %5563 = vst [vmem:[%s5530 + $0x28] sm:$0xf] %v5562
        %v5564 = vld [vmem:[%s5530 + $0x2c] sm:$0x1]
        %v5565 = vsel %vm5436, %v5505, %v5564
        %5566 = vst [vmem:[%s5530 + $0x2c] sm:$0x1] %v5565
        %v5567 = vld [vmem:[%s5530 + $0x30] sm:$0xf]
        %v5568 = vsel %vm5431, %v5507, %v5567
        %5569 = vst [vmem:[%s5530 + $0x30] sm:$0xf] %v5568
        %v5570 = vld [vmem:[%s5530 + $0x34] sm:$0x1]
        %v5571 = vsel %vm5436, %v5509, %v5570
        %5572 = vst [vmem:[%s5530 + $0x34] sm:$0x1] %v5571
        %v5573 = vld [vmem:[%s5530 + $0x38] sm:$0xf]
        %v5574 = vsel %vm5431, %v5511, %v5573
        %5575 = vst [vmem:[%s5530 + $0x38] sm:$0xf] %v5574
        %v5576 = vld [vmem:[%s5530 + $0x3c] sm:$0x1]
        %v5577 = vsel %vm5436, %v5513, %v5576
        %5578 = vst [vmem:[%s5530 + $0x3c] sm:$0x1] %v5577
        %5579 = vrot.lane.b32.xlu0 %v5355, 96
        %v5580 = vpop.permute.xlu0 %5579
        %5581 = vrot.lane.b32.xlu0 %v5356, 96
        %v5582 = vpop.permute.xlu0 %5581
        %5583 = vrot.lane.b32.xlu0 %v5363, 96
        %v5584 = vpop.permute.xlu0 %5583
        %5585 = vrot.lane.b32.xlu0 %v5364, 96
        %v5586 = vpop.permute.xlu0 %5585
        %5587 = vrot.lane.b32.xlu0 %v5371, 96
        %v5588 = vpop.permute.xlu0 %5587
        %5589 = vrot.lane.b32.xlu0 %v5372, 96
        %v5590 = vpop.permute.xlu0 %5589
        %5591 = vrot.lane.b32.xlu0 %v5379, 96
        %v5592 = vpop.permute.xlu0 %5591
        %5593 = vrot.lane.b32.xlu0 %v5380, 96
        %v5594 = vpop.permute.xlu0 %5593
        %5595 = vrot.lane.b32.xlu0 %v5387, 96
        %v5596 = vpop.permute.xlu0 %5595
        %5597 = vrot.lane.b32.xlu0 %v5388, 96
        %v5598 = vpop.permute.xlu0 %5597
        %5599 = vrot.lane.b32.xlu0 %v5395, 96
        %v5600 = vpop.permute.xlu0 %5599
        %5601 = vrot.lane.b32.xlu0 %v5396, 96
        %v5602 = vpop.permute.xlu0 %5601
        %5603 = vrot.lane.b32.xlu0 %v5403, 96
        %v5604 = vpop.permute.xlu0 %5603
        %5605 = vrot.lane.b32.xlu0 %v5404, 96
        %v5606 = vpop.permute.xlu0 %5605
        %5607 = vrot.lane.b32.xlu0 %v5411, 96
        %v5608 = vpop.permute.xlu0 %5607
        %5609 = vrot.lane.b32.xlu0 %v5412, 96
        %v5610 = vpop.permute.xlu0 %5609
        %s5627 = scalar_lea.vmem [#allocation4], 168
        %v5628 = vld [vmem:[%s5627] sm:$0xf]
        %v5629 = vsel %vm5431, %v5580, %v5628
        %5630 = vst [vmem:[%s5627] sm:$0xf] %v5629
        %v5631 = vld [vmem:[%s5627 + $0x4] sm:$0x1]
        %v5632 = vsel %vm5436, %v5582, %v5631
        %5633 = vst [vmem:[%s5627 + $0x4] sm:$0x1] %v5632
        %v5634 = vld [vmem:[%s5627 + $0x8] sm:$0xf]
        %v5635 = vsel %vm5431, %v5584, %v5634
        %5636 = vst [vmem:[%s5627 + $0x8] sm:$0xf] %v5635
        %v5637 = vld [vmem:[%s5627 + $0xc] sm:$0x1]
        %v5638 = vsel %vm5436, %v5586, %v5637
        %5639 = vst [vmem:[%s5627 + $0xc] sm:$0x1] %v5638
        %v5640 = vld [vmem:[%s5627 + $0x10] sm:$0xf]
        %v5641 = vsel %vm5431, %v5588, %v5640
        %5642 = vst [vmem:[%s5627 + $0x10] sm:$0xf] %v5641
        %v5643 = vld [vmem:[%s5627 + $0x14] sm:$0x1]
        %v5644 = vsel %vm5436, %v5590, %v5643
        %5645 = vst [vmem:[%s5627 + $0x14] sm:$0x1] %v5644
        %v5646 = vld [vmem:[%s5627 + $0x18] sm:$0xf]
        %v5647 = vsel %vm5431, %v5592, %v5646
        %5648 = vst [vmem:[%s5627 + $0x18] sm:$0xf] %v5647
        %v5649 = vld [vmem:[%s5627 + $0x1c] sm:$0x1]
        %v5650 = vsel %vm5436, %v5594, %v5649
        %5651 = vst [vmem:[%s5627 + $0x1c] sm:$0x1] %v5650
        %v5652 = vld [vmem:[%s5627 + $0x20] sm:$0xf]
        %v5653 = vsel %vm5431, %v5596, %v5652
        %5654 = vst [vmem:[%s5627 + $0x20] sm:$0xf] %v5653
        %v5655 = vld [vmem:[%s5627 + $0x24] sm:$0x1]
        %v5656 = vsel %vm5436, %v5598, %v5655
        %5657 = vst [vmem:[%s5627 + $0x24] sm:$0x1] %v5656
        %v5658 = vld [vmem:[%s5627 + $0x28] sm:$0xf]
        %v5659 = vsel %vm5431, %v5600, %v5658
        %5660 = vst [vmem:[%s5627 + $0x28] sm:$0xf] %v5659
        %v5661 = vld [vmem:[%s5627 + $0x2c] sm:$0x1]
        %v5662 = vsel %vm5436, %v5602, %v5661
        %5663 = vst [vmem:[%s5627 + $0x2c] sm:$0x1] %v5662
        %v5664 = vld [vmem:[%s5627 + $0x30] sm:$0xf]
        %v5665 = vsel %vm5431, %v5604, %v5664
        %5666 = vst [vmem:[%s5627 + $0x30] sm:$0xf] %v5665
        %v5667 = vld [vmem:[%s5627 + $0x34] sm:$0x1]
        %v5668 = vsel %vm5436, %v5606, %v5667
        %5669 = vst [vmem:[%s5627 + $0x34] sm:$0x1] %v5668
        %v5670 = vld [vmem:[%s5627 + $0x38] sm:$0xf]
        %v5671 = vsel %vm5431, %v5608, %v5670
        %5672 = vst [vmem:[%s5627 + $0x38] sm:$0xf] %v5671
        %v5673 = vld [vmem:[%s5627 + $0x3c] sm:$0x1]
        %v5674 = vsel %vm5436, %v5610, %v5673
        %5675 = vst [vmem:[%s5627 + $0x3c] sm:$0x1] %v5674
        %5676 = vrot.lane.b32.xlu0 %v5355, 80
        %v5677 = vpop.permute.xlu0 %5676
        %5678 = vrot.lane.b32.xlu0 %v5356, 80
        %v5679 = vpop.permute.xlu0 %5678
        %5680 = vrot.lane.b32.xlu0 %v5363, 80
        %v5681 = vpop.permute.xlu0 %5680
        %5682 = vrot.lane.b32.xlu0 %v5364, 80
        %v5683 = vpop.permute.xlu0 %5682
        %5684 = vrot.lane.b32.xlu0 %v5371, 80
        %v5685 = vpop.permute.xlu0 %5684
        %5686 = vrot.lane.b32.xlu0 %v5372, 80
        %v5687 = vpop.permute.xlu0 %5686
        %5688 = vrot.lane.b32.xlu0 %v5379, 80
        %v5689 = vpop.permute.xlu0 %5688
        %5690 = vrot.lane.b32.xlu0 %v5380, 80
        %v5691 = vpop.permute.xlu0 %5690
        %5692 = vrot.lane.b32.xlu0 %v5387, 80
        %v5693 = vpop.permute.xlu0 %5692
        %5694 = vrot.lane.b32.xlu0 %v5388, 80
        %v5695 = vpop.permute.xlu0 %5694
        %5696 = vrot.lane.b32.xlu0 %v5395, 80
        %v5697 = vpop.permute.xlu0 %5696
        %5698 = vrot.lane.b32.xlu0 %v5396, 80
        %v5699 = vpop.permute.xlu0 %5698
        %5700 = vrot.lane.b32.xlu0 %v5403, 80
        %v5701 = vpop.permute.xlu0 %5700
        %5702 = vrot.lane.b32.xlu0 %v5404, 80
        %v5703 = vpop.permute.xlu0 %5702
        %5704 = vrot.lane.b32.xlu0 %v5411, 80
        %v5705 = vpop.permute.xlu0 %5704
        %5706 = vrot.lane.b32.xlu0 %v5412, 80
        %v5707 = vpop.permute.xlu0 %5706
        %s5724 = scalar_lea.vmem [#allocation4], 248
        %v5725 = vld [vmem:[%s5724] sm:$0xf]
        %v5726 = vsel %vm5431, %v5677, %v5725
        %5727 = vst [vmem:[%s5724] sm:$0xf] %v5726
        %v5728 = vld [vmem:[%s5724 + $0x4] sm:$0x1]
        %v5729 = vsel %vm5436, %v5679, %v5728
        %5730 = vst [vmem:[%s5724 + $0x4] sm:$0x1] %v5729
        %v5731 = vld [vmem:[%s5724 + $0x8] sm:$0xf]
        %v5732 = vsel %vm5431, %v5681, %v5731
        %5733 = vst [vmem:[%s5724 + $0x8] sm:$0xf] %v5732
        %v5734 = vld [vmem:[%s5724 + $0xc] sm:$0x1]
        %v5735 = vsel %vm5436, %v5683, %v5734
        %5736 = vst [vmem:[%s5724 + $0xc] sm:$0x1] %v5735
        %v5737 = vld [vmem:[%s5724 + $0x10] sm:$0xf]
        %v5738 = vsel %vm5431, %v5685, %v5737
        %5739 = vst [vmem:[%s5724 + $0x10] sm:$0xf] %v5738
        %v5740 = vld [vmem:[%s5724 + $0x14] sm:$0x1]
        %v5741 = vsel %vm5436, %v5687, %v5740
        %5742 = vst [vmem:[%s5724 + $0x14] sm:$0x1] %v5741
        %v5743 = vld [vmem:[%s5724 + $0x18] sm:$0xf]
        %v5744 = vsel %vm5431, %v5689, %v5743
        %5745 = vst [vmem:[%s5724 + $0x18] sm:$0xf] %v5744
        %v5746 = vld [vmem:[%s5724 + $0x1c] sm:$0x1]
        %v5747 = vsel %vm5436, %v5691, %v5746
        %5748 = vst [vmem:[%s5724 + $0x1c] sm:$0x1] %v5747
        %v5749 = vld [vmem:[%s5724 + $0x20] sm:$0xf]
        %v5750 = vsel %vm5431, %v5693, %v5749
        %5751 = vst [vmem:[%s5724 + $0x20] sm:$0xf] %v5750
        %v5752 = vld [vmem:[%s5724 + $0x24] sm:$0x1]
        %v5753 = vsel %vm5436, %v5695, %v5752
        %5754 = vst [vmem:[%s5724 + $0x24] sm:$0x1] %v5753
        %v5755 = vld [vmem:[%s5724 + $0x28] sm:$0xf]
        %v5756 = vsel %vm5431, %v5697, %v5755
        %5757 = vst [vmem:[%s5724 + $0x28] sm:$0xf] %v5756
        %v5758 = vld [vmem:[%s5724 + $0x2c] sm:$0x1]
        %v5759 = vsel %vm5436, %v5699, %v5758
        %5760 = vst [vmem:[%s5724 + $0x2c] sm:$0x1] %v5759
        %v5761 = vld [vmem:[%s5724 + $0x30] sm:$0xf]
        %v5762 = vsel %vm5431, %v5701, %v5761
        %5763 = vst [vmem:[%s5724 + $0x30] sm:$0xf] %v5762
        %v5764 = vld [vmem:[%s5724 + $0x34] sm:$0x1]
        %v5765 = vsel %vm5436, %v5703, %v5764
        %5766 = vst [vmem:[%s5724 + $0x34] sm:$0x1] %v5765
        %v5767 = vld [vmem:[%s5724 + $0x38] sm:$0xf]
        %v5768 = vsel %vm5431, %v5705, %v5767
        %5769 = vst [vmem:[%s5724 + $0x38] sm:$0xf] %v5768
        %v5770 = vld [vmem:[%s5724 + $0x3c] sm:$0x1]
        %v5771 = vsel %vm5436, %v5707, %v5770
        %5772 = vst [vmem:[%s5724 + $0x3c] sm:$0x1] %v5771
        %s5773 = scalar_lea.vmem [#allocation4], 240
        %v5774 = vld [vmem:[%s5773] sm:$0xf]
        %v5775 = vld [vmem:[%s5773 + $0x8] sm:$0xf]
        %v5776 = vld [vmem:[%s5773 + $0x10] sm:$0xf]
        %v5777 = vld [vmem:[%s5773 + $0x18] sm:$0xf]
        %v5778 = vld [vmem:[%s5773 + $0x20] sm:$0xf]
        %v5779 = vld [vmem:[%s5773 + $0x28] sm:$0xf]
        %v5780 = vld [vmem:[%s5773 + $0x30] sm:$0xf]
        %v5781 = vld [vmem:[%s5773 + $0x38] sm:$0xf]
        %s5782 = scalar_lea.vmem [#allocation4], 160
        %v5783 = vld [vmem:[%s5782] sm:$0xf]
        %v5784 = vld [vmem:[%s5782 + $0x4] sm:$0x1]
        %v5785 = vld [vmem:[%s5782 + $0x8] sm:$0xf]
        %v5786 = vld [vmem:[%s5782 + $0xc] sm:$0x1]
        %v5787 = vld [vmem:[%s5782 + $0x10] sm:$0xf]
        %v5788 = vld [vmem:[%s5782 + $0x14] sm:$0x1]
        %v5789 = vld [vmem:[%s5782 + $0x18] sm:$0xf]
        %v5790 = vld [vmem:[%s5782 + $0x1c] sm:$0x1]
        %v5791 = vld [vmem:[%s5782 + $0x20] sm:$0xf]
        %v5792 = vld [vmem:[%s5782 + $0x24] sm:$0x1]
        %v5793 = vld [vmem:[%s5782 + $0x28] sm:$0xf]
        %v5794 = vld [vmem:[%s5782 + $0x2c] sm:$0x1]
        %v5795 = vld [vmem:[%s5782 + $0x30] sm:$0xf]
        %v5796 = vld [vmem:[%s5782 + $0x34] sm:$0x1]
        %v5797 = vld [vmem:[%s5782 + $0x38] sm:$0xf]
        %v5798 = vld [vmem:[%s5782 + $0x3c] sm:$0x1]
        %v5800 = vshrl.u32 %v5783, 16
        %v5802 = vrot.slane %v5800, 4
        %v5803 = vshll.u32 %v5783, 16
        %v5805 = vrot.slane %v5803, 5
        %v5806 = vor.u32 %v5802, %v5805
        %v5807 = vrot.slane %v5806, 4
        %v5809 = vshll.u32 %v5784, 16
        %v5811 = vrot.slane %v5809, 5
        %v5812 = vsel %vm748, %v5807, %v5811
        %v5814 = vshrl.u32 %v5785, 16
        %v5816 = vrot.slane %v5814, 4
        %v5817 = vshll.u32 %v5785, 16
        %v5819 = vrot.slane %v5817, 5
        %v5820 = vor.u32 %v5816, %v5819
        %v5821 = vrot.slane %v5820, 4
        %v5823 = vshll.u32 %v5786, 16
        %v5825 = vrot.slane %v5823, 5
        %v5826 = vsel %vm748, %v5821, %v5825
        %v5828 = vshrl.u32 %v5787, 16
        %v5830 = vrot.slane %v5828, 4
        %v5831 = vshll.u32 %v5787, 16
        %v5833 = vrot.slane %v5831, 5
        %v5834 = vor.u32 %v5830, %v5833
        %v5835 = vrot.slane %v5834, 4
        %v5837 = vshll.u32 %v5788, 16
        %v5839 = vrot.slane %v5837, 5
        %v5840 = vsel %vm748, %v5835, %v5839
        %v5842 = vshrl.u32 %v5789, 16
        %v5844 = vrot.slane %v5842, 4
        %v5845 = vshll.u32 %v5789, 16
        %v5847 = vrot.slane %v5845, 5
        %v5848 = vor.u32 %v5844, %v5847
        %v5849 = vrot.slane %v5848, 4
        %v5851 = vshll.u32 %v5790, 16
        %v5853 = vrot.slane %v5851, 5
        %v5854 = vsel %vm748, %v5849, %v5853
        %v5856 = vshrl.u32 %v5791, 16
        %v5858 = vrot.slane %v5856, 4
        %v5859 = vshll.u32 %v5791, 16
        %v5861 = vrot.slane %v5859, 5
        %v5862 = vor.u32 %v5858, %v5861
        %v5863 = vrot.slane %v5862, 4
        %v5865 = vshll.u32 %v5792, 16
        %v5867 = vrot.slane %v5865, 5
        %v5868 = vsel %vm748, %v5863, %v5867
        %v5870 = vshrl.u32 %v5793, 16
        %v5872 = vrot.slane %v5870, 4
        %v5873 = vshll.u32 %v5793, 16
        %v5875 = vrot.slane %v5873, 5
        %v5876 = vor.u32 %v5872, %v5875
        %v5877 = vrot.slane %v5876, 4
        %v5879 = vshll.u32 %v5794, 16
        %v5881 = vrot.slane %v5879, 5
        %v5882 = vsel %vm748, %v5877, %v5881
        %v5884 = vshrl.u32 %v5795, 16
        %v5886 = vrot.slane %v5884, 4
        %v5887 = vshll.u32 %v5795, 16
        %v5889 = vrot.slane %v5887, 5
        %v5890 = vor.u32 %v5886, %v5889
        %v5891 = vrot.slane %v5890, 4
        %v5893 = vshll.u32 %v5796, 16
        %v5895 = vrot.slane %v5893, 5
        %v5896 = vsel %vm748, %v5891, %v5895
        %v5898 = vshrl.u32 %v5797, 16
        %v5900 = vrot.slane %v5898, 4
        %v5901 = vshll.u32 %v5797, 16
        %v5903 = vrot.slane %v5901, 5
        %v5904 = vor.u32 %v5900, %v5903
        %v5905 = vrot.slane %v5904, 4
        %v5907 = vshll.u32 %v5798, 16
        %v5909 = vrot.slane %v5907, 5
        %v5910 = vsel %vm748, %v5905, %v5909
        %v5911 = vld [vmem:[%s5773 + $0x4] sm:$0x1]
        %v5912 = vld [vmem:[%s5773 + $0xc] sm:$0x1]
        %v5913 = vld [vmem:[%s5773 + $0x14] sm:$0x1]
        %v5914 = vld [vmem:[%s5773 + $0x1c] sm:$0x1]
        %v5915 = vld [vmem:[%s5773 + $0x24] sm:$0x1]
        %v5916 = vld [vmem:[%s5773 + $0x2c] sm:$0x1]
        %v5917 = vld [vmem:[%s5773 + $0x34] sm:$0x1]
        %v5918 = vld [vmem:[%s5773 + $0x3c] sm:$0x1]
        %v5920 = vshrl.u32 %v5774, 16
        %v5922 = vrot.slane %v5920, 4
        %v5923 = vshll.u32 %v5774, 16
        %v5925 = vrot.slane %v5923, 5
        %v5926 = vor.u32 %v5922, %v5925
        %v5927 = vrot.slane %v5926, 4
        %v5929 = vshll.u32 %v5911, 16
        %v5931 = vrot.slane %v5929, 5
        %v5932 = vsel %vm748, %v5927, %v5931
        %v5934 = vshrl.u32 %v5775, 16
        %v5936 = vrot.slane %v5934, 4
        %v5937 = vshll.u32 %v5775, 16
        %v5939 = vrot.slane %v5937, 5
        %v5940 = vor.u32 %v5936, %v5939
        %v5941 = vrot.slane %v5940, 4
        %v5943 = vshll.u32 %v5912, 16
        %v5945 = vrot.slane %v5943, 5
        %v5946 = vsel %vm748, %v5941, %v5945
        %v5948 = vshrl.u32 %v5776, 16
        %v5950 = vrot.slane %v5948, 4
        %v5951 = vshll.u32 %v5776, 16
        %v5953 = vrot.slane %v5951, 5
        %v5954 = vor.u32 %v5950, %v5953
        %v5955 = vrot.slane %v5954, 4
        %v5957 = vshll.u32 %v5913, 16
        %v5959 = vrot.slane %v5957, 5
        %v5960 = vsel %vm748, %v5955, %v5959
        %v5962 = vshrl.u32 %v5777, 16
        %v5964 = vrot.slane %v5962, 4
        %v5965 = vshll.u32 %v5777, 16
        %v5967 = vrot.slane %v5965, 5
        %v5968 = vor.u32 %v5964, %v5967
        %v5969 = vrot.slane %v5968, 4
        %v5971 = vshll.u32 %v5914, 16
        %v5973 = vrot.slane %v5971, 5
        %v5974 = vsel %vm748, %v5969, %v5973
        %v5976 = vshrl.u32 %v5778, 16
        %v5978 = vrot.slane %v5976, 4
        %v5979 = vshll.u32 %v5778, 16
        %v5981 = vrot.slane %v5979, 5
        %v5982 = vor.u32 %v5978, %v5981
        %v5983 = vrot.slane %v5982, 4
        %v5985 = vshll.u32 %v5915, 16
        %v5987 = vrot.slane %v5985, 5
        %v5988 = vsel %vm748, %v5983, %v5987
        %v5990 = vshrl.u32 %v5779, 16
        %v5992 = vrot.slane %v5990, 4
        %v5993 = vshll.u32 %v5779, 16
        %v5995 = vrot.slane %v5993, 5
        %v5996 = vor.u32 %v5992, %v5995
        %v5997 = vrot.slane %v5996, 4
        %v5999 = vshll.u32 %v5916, 16
        %v6001 = vrot.slane %v5999, 5
        %v6002 = vsel %vm748, %v5997, %v6001
        %v6004 = vshrl.u32 %v5780, 16
        %v6006 = vrot.slane %v6004, 4
        %v6007 = vshll.u32 %v5780, 16
        %v6009 = vrot.slane %v6007, 5
        %v6010 = vor.u32 %v6006, %v6009
        %v6011 = vrot.slane %v6010, 4
        %v6013 = vshll.u32 %v5917, 16
        %v6015 = vrot.slane %v6013, 5
        %v6016 = vsel %vm748, %v6011, %v6015
        %v6018 = vshrl.u32 %v5781, 16
        %v6020 = vrot.slane %v6018, 4
        %v6021 = vshll.u32 %v5781, 16
        %v6023 = vrot.slane %v6021, 5
        %v6024 = vor.u32 %v6020, %v6023
        %v6025 = vrot.slane %v6024, 4
        %v6027 = vshll.u32 %v5918, 16
        %v6029 = vrot.slane %v6027, 5
        %v6030 = vsel %vm748, %v6025, %v6029
        %v6031 = vld [vmem:[%s5530] sm:$0xf]
        %v6032 = vld [vmem:[%s5530 + $0x8] sm:$0xf]
        %v6033 = vld [vmem:[%s5530 + $0x10] sm:$0xf]
        %v6034 = vld [vmem:[%s5530 + $0x18] sm:$0xf]
        %v6035 = vld [vmem:[%s5530 + $0x20] sm:$0xf]
        %v6036 = vld [vmem:[%s5530 + $0x28] sm:$0xf]
        %v6037 = vld [vmem:[%s5530 + $0x30] sm:$0xf]
        %v6038 = vld [vmem:[%s5530 + $0x38] sm:$0xf]
        %v6039 = vld [vmem:[%s5429] sm:$0xf]
        %v6040 = vld [vmem:[%s5429 + $0x4] sm:$0x1]
        %v6041 = vld [vmem:[%s5429 + $0x8] sm:$0xf]
        %v6042 = vld [vmem:[%s5429 + $0xc] sm:$0x1]
        %v6043 = vld [vmem:[%s5429 + $0x10] sm:$0xf]
        %v6044 = vld [vmem:[%s5429 + $0x14] sm:$0x1]
        %v6045 = vld [vmem:[%s5429 + $0x18] sm:$0xf]
        %v6046 = vld [vmem:[%s5429 + $0x1c] sm:$0x1]
        %v6047 = vld [vmem:[%s5429 + $0x20] sm:$0xf]
        %v6048 = vld [vmem:[%s5429 + $0x24] sm:$0x1]
        %v6049 = vld [vmem:[%s5429 + $0x28] sm:$0xf]
        %v6050 = vld [vmem:[%s5429 + $0x2c] sm:$0x1]
        %v6051 = vld [vmem:[%s5429 + $0x30] sm:$0xf]
        %v6052 = vld [vmem:[%s5429 + $0x34] sm:$0x1]
        %v6053 = vld [vmem:[%s5429 + $0x38] sm:$0xf]
        %v6054 = vld [vmem:[%s5429 + $0x3c] sm:$0x1]
        %v6056 = vshrl.u32 %v6039, 16
        %v6058 = vrot.slane %v6056, 4
        %v6059 = vshll.u32 %v6039, 16
        %v6061 = vrot.slane %v6059, 5
        %v6062 = vor.u32 %v6058, %v6061
        %v6063 = vrot.slane %v6062, 4
        %v6065 = vshll.u32 %v6040, 16
        %v6067 = vrot.slane %v6065, 5
        %v6068 = vsel %vm748, %v6063, %v6067
        %v6070 = vshrl.u32 %v6041, 16
        %v6072 = vrot.slane %v6070, 4
        %v6073 = vshll.u32 %v6041, 16
        %v6075 = vrot.slane %v6073, 5
        %v6076 = vor.u32 %v6072, %v6075
        %v6077 = vrot.slane %v6076, 4
        %v6079 = vshll.u32 %v6042, 16
        %v6081 = vrot.slane %v6079, 5
        %v6082 = vsel %vm748, %v6077, %v6081
        %v6084 = vshrl.u32 %v6043, 16
        %v6086 = vrot.slane %v6084, 4
        %v6087 = vshll.u32 %v6043, 16
        %v6089 = vrot.slane %v6087, 5
        %v6090 = vor.u32 %v6086, %v6089
        %v6091 = vrot.slane %v6090, 4
        %v6093 = vshll.u32 %v6044, 16
        %v6095 = vrot.slane %v6093, 5
        %v6096 = vsel %vm748, %v6091, %v6095
        %v6098 = vshrl.u32 %v6045, 16
        %v6100 = vrot.slane %v6098, 4
        %v6101 = vshll.u32 %v6045, 16
        %v6103 = vrot.slane %v6101, 5
        %v6104 = vor.u32 %v6100, %v6103
        %v6105 = vrot.slane %v6104, 4
        %v6107 = vshll.u32 %v6046, 16
        %v6109 = vrot.slane %v6107, 5
        %v6110 = vsel %vm748, %v6105, %v6109
        %v6112 = vshrl.u32 %v6047, 16
        %v6114 = vrot.slane %v6112, 4
        %v6115 = vshll.u32 %v6047, 16
        %v6117 = vrot.slane %v6115, 5
        %v6118 = vor.u32 %v6114, %v6117
        %v6119 = vrot.slane %v6118, 4
        %v6121 = vshll.u32 %v6048, 16
        %v6123 = vrot.slane %v6121, 5
        %v6124 = vsel %vm748, %v6119, %v6123
        %v6126 = vshrl.u32 %v6049, 16
        %v6128 = vrot.slane %v6126, 4
        %v6129 = vshll.u32 %v6049, 16
        %v6131 = vrot.slane %v6129, 5
        %v6132 = vor.u32 %v6128, %v6131
        %v6133 = vrot.slane %v6132, 4
        %v6135 = vshll.u32 %v6050, 16
        %v6137 = vrot.slane %v6135, 5
        %v6138 = vsel %vm748, %v6133, %v6137
        %v6140 = vshrl.u32 %v6051, 16
        %v6142 = vrot.slane %v6140, 4
        %v6143 = vshll.u32 %v6051, 16
        %v6145 = vrot.slane %v6143, 5
        %v6146 = vor.u32 %v6142, %v6145
        %v6147 = vrot.slane %v6146, 4
        %v6149 = vshll.u32 %v6052, 16
        %v6151 = vrot.slane %v6149, 5
        %v6152 = vsel %vm748, %v6147, %v6151
        %v6154 = vshrl.u32 %v6053, 16
        %v6156 = vrot.slane %v6154, 4
        %v6157 = vshll.u32 %v6053, 16
        %v6159 = vrot.slane %v6157, 5
        %v6160 = vor.u32 %v6156, %v6159
        %v6161 = vrot.slane %v6160, 4
        %v6163 = vshll.u32 %v6054, 16
        %v6165 = vrot.slane %v6163, 5
        %v6166 = vsel %vm748, %v6161, %v6165
        %v6167 = vld [vmem:[%s5530 + $0x4] sm:$0x1]
        %v6168 = vld [vmem:[%s5530 + $0xc] sm:$0x1]
        %v6169 = vld [vmem:[%s5530 + $0x14] sm:$0x1]
        %v6170 = vld [vmem:[%s5530 + $0x1c] sm:$0x1]
        %v6171 = vld [vmem:[%s5530 + $0x24] sm:$0x1]
        %v6172 = vld [vmem:[%s5530 + $0x2c] sm:$0x1]
        %v6173 = vld [vmem:[%s5530 + $0x34] sm:$0x1]
        %v6174 = vld [vmem:[%s5530 + $0x3c] sm:$0x1]
        %v6176 = vshrl.u32 %v6031, 16
        %v6178 = vrot.slane %v6176, 4
        %v6179 = vshll.u32 %v6031, 16
        %v6181 = vrot.slane %v6179, 5
        %v6182 = vor.u32 %v6178, %v6181
        %v6183 = vrot.slane %v6182, 4
        %v6185 = vshll.u32 %v6167, 16
        %v6187 = vrot.slane %v6185, 5
        %v6188 = vsel %vm748, %v6183, %v6187
        %v6190 = vshrl.u32 %v6032, 16
        %v6192 = vrot.slane %v6190, 4
        %v6193 = vshll.u32 %v6032, 16
        %v6195 = vrot.slane %v6193, 5
        %v6196 = vor.u32 %v6192, %v6195
        %v6197 = vrot.slane %v6196, 4
        %v6199 = vshll.u32 %v6168, 16
        %v6201 = vrot.slane %v6199, 5
        %v6202 = vsel %vm748, %v6197, %v6201
        %v6204 = vshrl.u32 %v6033, 16
        %v6206 = vrot.slane %v6204, 4
        %v6207 = vshll.u32 %v6033, 16
        %v6209 = vrot.slane %v6207, 5
        %v6210 = vor.u32 %v6206, %v6209
        %v6211 = vrot.slane %v6210, 4
        %v6213 = vshll.u32 %v6169, 16
        %v6215 = vrot.slane %v6213, 5
        %v6216 = vsel %vm748, %v6211, %v6215
        %v6218 = vshrl.u32 %v6034, 16
        %v6220 = vrot.slane %v6218, 4
        %v6221 = vshll.u32 %v6034, 16
        %v6223 = vrot.slane %v6221, 5
        %v6224 = vor.u32 %v6220, %v6223
        %v6225 = vrot.slane %v6224, 4
        %v6227 = vshll.u32 %v6170, 16
        %v6229 = vrot.slane %v6227, 5
        %v6230 = vsel %vm748, %v6225, %v6229
        %v6232 = vshrl.u32 %v6035, 16
        %v6234 = vrot.slane %v6232, 4
        %v6235 = vshll.u32 %v6035, 16
        %v6237 = vrot.slane %v6235, 5
        %v6238 = vor.u32 %v6234, %v6237
        %v6239 = vrot.slane %v6238, 4
        %v6241 = vshll.u32 %v6171, 16
        %v6243 = vrot.slane %v6241, 5
        %v6244 = vsel %vm748, %v6239, %v6243
        %v6246 = vshrl.u32 %v6036, 16
        %v6248 = vrot.slane %v6246, 4
        %v6249 = vshll.u32 %v6036, 16
        %v6251 = vrot.slane %v6249, 5
        %v6252 = vor.u32 %v6248, %v6251
        %v6253 = vrot.slane %v6252, 4
        %v6255 = vshll.u32 %v6172, 16
        %v6257 = vrot.slane %v6255, 5
        %v6258 = vsel %vm748, %v6253, %v6257
        %v6260 = vshrl.u32 %v6037, 16
        %v6262 = vrot.slane %v6260, 4
        %v6263 = vshll.u32 %v6037, 16
        %v6265 = vrot.slane %v6263, 5
        %v6266 = vor.u32 %v6262, %v6265
        %v6267 = vrot.slane %v6266, 4
        %v6269 = vshll.u32 %v6173, 16
        %v6271 = vrot.slane %v6269, 5
        %v6272 = vsel %vm748, %v6267, %v6271
        %v6274 = vshrl.u32 %v6038, 16
        %v6276 = vrot.slane %v6274, 4
        %v6277 = vshll.u32 %v6038, 16
        %v6279 = vrot.slane %v6277, 5
        %v6280 = vor.u32 %v6276, %v6279
        %v6281 = vrot.slane %v6280, 4
        %v6283 = vshll.u32 %v6174, 16
        %v6285 = vrot.slane %v6283, 5
        %v6286 = vsel %vm748, %v6281, %v6285
        %v6287 = vld [vmem:[%s5724] sm:$0xf]
        %v6288 = vld [vmem:[%s5724 + $0x8] sm:$0xf]
        %v6289 = vld [vmem:[%s5724 + $0x10] sm:$0xf]
        %v6290 = vld [vmem:[%s5724 + $0x18] sm:$0xf]
        %v6291 = vld [vmem:[%s5724 + $0x20] sm:$0xf]
        %v6292 = vld [vmem:[%s5724 + $0x28] sm:$0xf]
        %v6293 = vld [vmem:[%s5724 + $0x30] sm:$0xf]
        %v6294 = vld [vmem:[%s5724 + $0x38] sm:$0xf]
        %v6295 = vld [vmem:[%s5627] sm:$0xf]
        %v6296 = vld [vmem:[%s5627 + $0x4] sm:$0x1]
        %v6297 = vld [vmem:[%s5627 + $0x8] sm:$0xf]
        %v6298 = vld [vmem:[%s5627 + $0xc] sm:$0x1]
        %v6299 = vld [vmem:[%s5627 + $0x10] sm:$0xf]
        %v6300 = vld [vmem:[%s5627 + $0x14] sm:$0x1]
        %v6301 = vld [vmem:[%s5627 + $0x18] sm:$0xf]
        %v6302 = vld [vmem:[%s5627 + $0x1c] sm:$0x1]
        %v6303 = vld [vmem:[%s5627 + $0x20] sm:$0xf]
        %v6304 = vld [vmem:[%s5627 + $0x24] sm:$0x1]
        %v6305 = vld [vmem:[%s5627 + $0x28] sm:$0xf]
        %v6306 = vld [vmem:[%s5627 + $0x2c] sm:$0x1]
        %v6307 = vld [vmem:[%s5627 + $0x30] sm:$0xf]
        %v6308 = vld [vmem:[%s5627 + $0x34] sm:$0x1]
        %v6309 = vld [vmem:[%s5627 + $0x38] sm:$0xf]
        %v6310 = vld [vmem:[%s5627 + $0x3c] sm:$0x1]
        %v6312 = vshrl.u32 %v6295, 16
        %v6314 = vrot.slane %v6312, 4
        %v6315 = vshll.u32 %v6295, 16
        %v6317 = vrot.slane %v6315, 5
        %v6318 = vor.u32 %v6314, %v6317
        %v6319 = vrot.slane %v6318, 4
        %v6321 = vshll.u32 %v6296, 16
        %v6323 = vrot.slane %v6321, 5
        %v6324 = vsel %vm748, %v6319, %v6323
        %v6326 = vshrl.u32 %v6297, 16
        %v6328 = vrot.slane %v6326, 4
        %v6329 = vshll.u32 %v6297, 16
        %v6331 = vrot.slane %v6329, 5
        %v6332 = vor.u32 %v6328, %v6331
        %v6333 = vrot.slane %v6332, 4
        %v6335 = vshll.u32 %v6298, 16
        %v6337 = vrot.slane %v6335, 5
        %v6338 = vsel %vm748, %v6333, %v6337
        %v6340 = vshrl.u32 %v6299, 16
        %v6342 = vrot.slane %v6340, 4
        %v6343 = vshll.u32 %v6299, 16
        %v6345 = vrot.slane %v6343, 5
        %v6346 = vor.u32 %v6342, %v6345
        %v6347 = vrot.slane %v6346, 4
        %v6349 = vshll.u32 %v6300, 16
        %v6351 = vrot.slane %v6349, 5
        %v6352 = vsel %vm748, %v6347, %v6351
        %v6354 = vshrl.u32 %v6301, 16
        %v6356 = vrot.slane %v6354, 4
        %v6357 = vshll.u32 %v6301, 16
        %v6359 = vrot.slane %v6357, 5
        %v6360 = vor.u32 %v6356, %v6359
        %v6361 = vrot.slane %v6360, 4
        %v6363 = vshll.u32 %v6302, 16
        %v6365 = vrot.slane %v6363, 5
        %v6366 = vsel %vm748, %v6361, %v6365
        %v6368 = vshrl.u32 %v6303, 16
        %v6370 = vrot.slane %v6368, 4
        %v6371 = vshll.u32 %v6303, 16
        %v6373 = vrot.slane %v6371, 5
        %v6374 = vor.u32 %v6370, %v6373
        %v6375 = vrot.slane %v6374, 4
        %v6377 = vshll.u32 %v6304, 16
        %v6379 = vrot.slane %v6377, 5
        %v6380 = vsel %vm748, %v6375, %v6379
        %v6382 = vshrl.u32 %v6305, 16
        %v6384 = vrot.slane %v6382, 4
        %v6385 = vshll.u32 %v6305, 16
        %v6387 = vrot.slane %v6385, 5
        %v6388 = vor.u32 %v6384, %v6387
        %v6389 = vrot.slane %v6388, 4
        %v6391 = vshll.u32 %v6306, 16
        %v6393 = vrot.slane %v6391, 5
        %v6394 = vsel %vm748, %v6389, %v6393
        %v6396 = vshrl.u32 %v6307, 16
        %v6398 = vrot.slane %v6396, 4
        %v6399 = vshll.u32 %v6307, 16
        %v6401 = vrot.slane %v6399, 5
        %v6402 = vor.u32 %v6398, %v6401
        %v6403 = vrot.slane %v6402, 4
        %v6405 = vshll.u32 %v6308, 16
        %v6407 = vrot.slane %v6405, 5
        %v6408 = vsel %vm748, %v6403, %v6407
        %v6410 = vshrl.u32 %v6309, 16
        %v6412 = vrot.slane %v6410, 4
        %v6413 = vshll.u32 %v6309, 16
        %v6415 = vrot.slane %v6413, 5
        %v6416 = vor.u32 %v6412, %v6415
        %v6417 = vrot.slane %v6416, 4
        %v6419 = vshll.u32 %v6310, 16
        %v6421 = vrot.slane %v6419, 5
        %v6422 = vsel %vm748, %v6417, %v6421
        %v6423 = vld [vmem:[%s5724 + $0x4] sm:$0x1]
        %v6424 = vld [vmem:[%s5724 + $0xc] sm:$0x1]
        %v6425 = vld [vmem:[%s5724 + $0x14] sm:$0x1]
        %v6426 = vld [vmem:[%s5724 + $0x1c] sm:$0x1]
        %v6427 = vld [vmem:[%s5724 + $0x24] sm:$0x1]
        %v6428 = vld [vmem:[%s5724 + $0x2c] sm:$0x1]
        %v6429 = vld [vmem:[%s5724 + $0x34] sm:$0x1]
        %v6430 = vld [vmem:[%s5724 + $0x3c] sm:$0x1]
        %v6432 = vshrl.u32 %v6287, 16
        %v6434 = vrot.slane %v6432, 4
        %v6435 = vshll.u32 %v6287, 16
        %v6437 = vrot.slane %v6435, 5
        %v6438 = vor.u32 %v6434, %v6437
        %v6439 = vrot.slane %v6438, 4
        %v6441 = vshll.u32 %v6423, 16
        %v6443 = vrot.slane %v6441, 5
        %v6444 = vsel %vm748, %v6439, %v6443
        %v6446 = vshrl.u32 %v6288, 16
        %v6448 = vrot.slane %v6446, 4
        %v6449 = vshll.u32 %v6288, 16
        %v6451 = vrot.slane %v6449, 5
        %v6452 = vor.u32 %v6448, %v6451
        %v6453 = vrot.slane %v6452, 4
        %v6455 = vshll.u32 %v6424, 16
        %v6457 = vrot.slane %v6455, 5
        %v6458 = vsel %vm748, %v6453, %v6457
        %v6460 = vshrl.u32 %v6289, 16
        %v6462 = vrot.slane %v6460, 4
        %v6463 = vshll.u32 %v6289, 16
        %v6465 = vrot.slane %v6463, 5
        %v6466 = vor.u32 %v6462, %v6465
        %v6467 = vrot.slane %v6466, 4
        %v6469 = vshll.u32 %v6425, 16
        %v6471 = vrot.slane %v6469, 5
        %v6472 = vsel %vm748, %v6467, %v6471
        %v6474 = vshrl.u32 %v6290, 16
        %v6476 = vrot.slane %v6474, 4
        %v6477 = vshll.u32 %v6290, 16
        %v6479 = vrot.slane %v6477, 5
        %v6480 = vor.u32 %v6476, %v6479
        %v6481 = vrot.slane %v6480, 4
        %v6483 = vshll.u32 %v6426, 16
        %v6485 = vrot.slane %v6483, 5
        %v6486 = vsel %vm748, %v6481, %v6485
        %v6488 = vshrl.u32 %v6291, 16
        %v6490 = vrot.slane %v6488, 4
        %v6491 = vshll.u32 %v6291, 16
        %v6493 = vrot.slane %v6491, 5
        %v6494 = vor.u32 %v6490, %v6493
        %v6495 = vrot.slane %v6494, 4
        %v6497 = vshll.u32 %v6427, 16
        %v6499 = vrot.slane %v6497, 5
        %v6500 = vsel %vm748, %v6495, %v6499
        %v6502 = vshrl.u32 %v6292, 16
        %v6504 = vrot.slane %v6502, 4
        %v6505 = vshll.u32 %v6292, 16
        %v6507 = vrot.slane %v6505, 5
        %v6508 = vor.u32 %v6504, %v6507
        %v6509 = vrot.slane %v6508, 4
        %v6511 = vshll.u32 %v6428, 16
        %v6513 = vrot.slane %v6511, 5
        %v6514 = vsel %vm748, %v6509, %v6513
        %v6516 = vshrl.u32 %v6293, 16
        %v6518 = vrot.slane %v6516, 4
        %v6519 = vshll.u32 %v6293, 16
        %v6521 = vrot.slane %v6519, 5
        %v6522 = vor.u32 %v6518, %v6521
        %v6523 = vrot.slane %v6522, 4
        %v6525 = vshll.u32 %v6429, 16
        %v6527 = vrot.slane %v6525, 5
        %v6528 = vsel %vm748, %v6523, %v6527
        %v6530 = vshrl.u32 %v6294, 16
        %v6532 = vrot.slane %v6530, 4
        %v6533 = vshll.u32 %v6294, 16
        %v6535 = vrot.slane %v6533, 5
        %v6536 = vor.u32 %v6532, %v6535
        %v6537 = vrot.slane %v6536, 4
        %v6539 = vshll.u32 %v6430, 16
        %v6541 = vrot.slane %v6539, 5
        %v6542 = vsel %vm748, %v6537, %v6541
        %v6551 = vunpack.c.l.b16 %v5774
        %v6552 = vunpack.c.l.b16 %v5775
        %v6553 = vunpack.c.l.b16 %v5776
        %v6554 = vunpack.c.l.b16 %v5777
        %v6555 = vunpack.c.l.b16 %v5778
        %v6556 = vunpack.c.l.b16 %v5779
        %v6557 = vunpack.c.l.b16 %v5780
        %v6558 = vunpack.c.l.b16 %v5781
        %v6559 = vpack.c.b16 %v6552, %v6551
        %v6560 = vpack.c.b16 %v6554, %v6553
        %v6561 = vpack.c.b16 %v6556, %v6555
        %v6562 = vpack.c.b16 %v6558, %v6557
        %v6563 = vunpack.c.l.b16 %v5812
        %v6564 = vunpack.c.l.b16 %v5826
        %v6565 = vunpack.c.l.b16 %v5840
        %v6566 = vunpack.c.l.b16 %v5854
        %v6567 = vunpack.c.l.b16 %v5868
        %v6568 = vunpack.c.l.b16 %v5882
        %v6569 = vunpack.c.l.b16 %v5896
        %v6570 = vunpack.c.l.b16 %v5910
        %v6571 = vpack.c.b16 %v6564, %v6563
        %v6572 = vpack.c.b16 %v6566, %v6565
        %v6573 = vpack.c.b16 %v6568, %v6567
        %v6574 = vpack.c.b16 %v6570, %v6569
        %6575 = vrot.lane.b32.xlu0 %v6571, 16
        %v6576 = vpop.permute.xlu0 %6575
        %6577 = vrot.lane.b32.xlu0 %v6572, 16
        %v6578 = vpop.permute.xlu0 %6577
        %6579 = vrot.lane.b32.xlu0 %v6573, 16
        %v6580 = vpop.permute.xlu0 %6579
        %6581 = vrot.lane.b32.xlu0 %v6574, 16
        %v6582 = vpop.permute.xlu0 %6581
        %v6583 = vunpack.c.l.b16 %v5932
        %v6584 = vunpack.c.l.b16 %v5946
        %v6585 = vunpack.c.l.b16 %v5960
        %v6586 = vunpack.c.l.b16 %v5974
        %v6587 = vunpack.c.l.b16 %v5988
        %v6588 = vunpack.c.l.b16 %v6002
        %v6589 = vunpack.c.l.b16 %v6016
        %v6590 = vunpack.c.l.b16 %v6030
        %v6591 = vpack.c.b16 %v6584, %v6583
        %v6592 = vpack.c.b16 %v6586, %v6585
        %v6593 = vpack.c.b16 %v6588, %v6587
        %v6594 = vpack.c.b16 %v6590, %v6589
        %6595 = vrot.lane.b32.xlu0 %v6591, 32
        %v6596 = vpop.permute.xlu0 %6595
        %6597 = vrot.lane.b32.xlu0 %v6592, 32
        %v6598 = vpop.permute.xlu0 %6597
        %6599 = vrot.lane.b32.xlu0 %v6593, 32
        %v6600 = vpop.permute.xlu0 %6599
        %6601 = vrot.lane.b32.xlu0 %v6594, 32
        %v6602 = vpop.permute.xlu0 %6601
        %v6611 = vunpack.c.l.b16 %v6031
        %v6612 = vunpack.c.l.b16 %v6032
        %v6613 = vunpack.c.l.b16 %v6033
        %v6614 = vunpack.c.l.b16 %v6034
        %v6615 = vunpack.c.l.b16 %v6035
        %v6616 = vunpack.c.l.b16 %v6036
        %v6617 = vunpack.c.l.b16 %v6037
        %v6618 = vunpack.c.l.b16 %v6038
        %v6619 = vpack.c.b16 %v6612, %v6611
        %v6620 = vpack.c.b16 %v6614, %v6613
        %v6621 = vpack.c.b16 %v6616, %v6615
        %v6622 = vpack.c.b16 %v6618, %v6617
        %6623 = vrot.lane.b32.xlu0 %v6619, 48
        %v6624 = vpop.permute.xlu0 %6623
        %6625 = vrot.lane.b32.xlu0 %v6620, 48
        %v6626 = vpop.permute.xlu0 %6625
        %6627 = vrot.lane.b32.xlu0 %v6621, 48
        %v6628 = vpop.permute.xlu0 %6627
        %6629 = vrot.lane.b32.xlu0 %v6622, 48
        %v6630 = vpop.permute.xlu0 %6629
        %v6631 = vunpack.c.l.b16 %v6068
        %v6632 = vunpack.c.l.b16 %v6082
        %v6633 = vunpack.c.l.b16 %v6096
        %v6634 = vunpack.c.l.b16 %v6110
        %v6635 = vunpack.c.l.b16 %v6124
        %v6636 = vunpack.c.l.b16 %v6138
        %v6637 = vunpack.c.l.b16 %v6152
        %v6638 = vunpack.c.l.b16 %v6166
        %v6639 = vpack.c.b16 %v6632, %v6631
        %v6640 = vpack.c.b16 %v6634, %v6633
        %v6641 = vpack.c.b16 %v6636, %v6635
        %v6642 = vpack.c.b16 %v6638, %v6637
        %6643 = vrot.lane.b32.xlu0 %v6639, 64
        %v6644 = vpop.permute.xlu0 %6643
        %6645 = vrot.lane.b32.xlu0 %v6640, 64
        %v6646 = vpop.permute.xlu0 %6645
        %6647 = vrot.lane.b32.xlu0 %v6641, 64
        %v6648 = vpop.permute.xlu0 %6647
        %6649 = vrot.lane.b32.xlu0 %v6642, 64
        %v6650 = vpop.permute.xlu0 %6649
        %v6651 = vunpack.c.l.b16 %v6188
        %v6652 = vunpack.c.l.b16 %v6202
        %v6653 = vunpack.c.l.b16 %v6216
        %v6654 = vunpack.c.l.b16 %v6230
        %v6655 = vunpack.c.l.b16 %v6244
        %v6656 = vunpack.c.l.b16 %v6258
        %v6657 = vunpack.c.l.b16 %v6272
        %v6658 = vunpack.c.l.b16 %v6286
        %v6659 = vpack.c.b16 %v6652, %v6651
        %v6660 = vpack.c.b16 %v6654, %v6653
        %v6661 = vpack.c.b16 %v6656, %v6655
        %v6662 = vpack.c.b16 %v6658, %v6657
        %6663 = vrot.lane.b32.xlu0 %v6659, 80
        %v6664 = vpop.permute.xlu0 %6663
        %6665 = vrot.lane.b32.xlu0 %v6660, 80
        %v6666 = vpop.permute.xlu0 %6665
        %6667 = vrot.lane.b32.xlu0 %v6661, 80
        %v6668 = vpop.permute.xlu0 %6667
        %6669 = vrot.lane.b32.xlu0 %v6662, 80
        %v6670 = vpop.permute.xlu0 %6669
        %v6679 = vunpack.c.l.b16 %v6287
        %v6680 = vunpack.c.l.b16 %v6288
        %v6681 = vunpack.c.l.b16 %v6289
        %v6682 = vunpack.c.l.b16 %v6290
        %v6683 = vunpack.c.l.b16 %v6291
        %v6684 = vunpack.c.l.b16 %v6292
        %v6685 = vunpack.c.l.b16 %v6293
        %v6686 = vunpack.c.l.b16 %v6294
        %v6687 = vpack.c.b16 %v6680, %v6679
        %v6688 = vpack.c.b16 %v6682, %v6681
        %v6689 = vpack.c.b16 %v6684, %v6683
        %v6690 = vpack.c.b16 %v6686, %v6685
        %6691 = vrot.lane.b32.xlu0 %v6687, 96
        %v6692 = vpop.permute.xlu0 %6691
        %6693 = vrot.lane.b32.xlu0 %v6688, 96
        %v6694 = vpop.permute.xlu0 %6693
        %6695 = vrot.lane.b32.xlu0 %v6689, 96
        %v6696 = vpop.permute.xlu0 %6695
        %6697 = vrot.lane.b32.xlu0 %v6690, 96
        %v6698 = vpop.permute.xlu0 %6697
        %v6699 = vunpack.c.l.b16 %v6324
        %v6700 = vunpack.c.l.b16 %v6338
        %v6701 = vunpack.c.l.b16 %v6352
        %v6702 = vunpack.c.l.b16 %v6366
        %v6703 = vunpack.c.l.b16 %v6380
        %v6704 = vunpack.c.l.b16 %v6394
        %v6705 = vunpack.c.l.b16 %v6408
        %v6706 = vunpack.c.l.b16 %v6422
        %v6707 = vpack.c.b16 %v6700, %v6699
        %v6708 = vpack.c.b16 %v6702, %v6701
        %v6709 = vpack.c.b16 %v6704, %v6703
        %v6710 = vpack.c.b16 %v6706, %v6705
        %6711 = vrot.lane.b32.xlu0 %v6707, 112
        %v6712 = vpop.permute.xlu0 %6711
        %6713 = vrot.lane.b32.xlu0 %v6708, 112
        %v6714 = vpop.permute.xlu0 %6713
        %6715 = vrot.lane.b32.xlu0 %v6709, 112
        %v6716 = vpop.permute.xlu0 %6715
        %6717 = vrot.lane.b32.xlu0 %v6710, 112
        %v6718 = vpop.permute.xlu0 %6717
        %v6719 = vunpack.c.l.b16 %v6444
        %v6720 = vunpack.c.l.b16 %v6458
        %v6721 = vunpack.c.l.b16 %v6472
        %v6722 = vunpack.c.l.b16 %v6486
        %v6723 = vunpack.c.l.b16 %v6500
        %v6724 = vunpack.c.l.b16 %v6514
        %v6725 = vunpack.c.l.b16 %v6528
        %v6726 = vunpack.c.l.b16 %v6542
        %v6727 = vpack.c.b16 %v6720, %v6719
        %v6728 = vpack.c.b16 %v6722, %v6721
        %v6729 = vpack.c.b16 %v6724, %v6723
        %v6730 = vpack.c.b16 %v6726, %v6725
        %v6733 = vsel %vm1516, %v6559, %v6576
        %v6736 = vsel %vm1516, %v6560, %v6578
        %v6739 = vsel %vm1516, %v6561, %v6580
        %v6742 = vsel %vm1516, %v6562, %v6582
        %v6744 = vsel %vm1552, %v6733, %v6596
        %v6746 = vsel %vm1552, %v6736, %v6598
        %v6748 = vsel %vm1552, %v6739, %v6600
        %v6750 = vsel %vm1552, %v6742, %v6602
        %vm6751 = vcmask 392192
        %v6753 = vsel %vm6751, %v6744, %v6624
        %v6755 = vsel %vm6751, %v6746, %v6626
        %v6757 = vsel %vm6751, %v6748, %v6628
        %v6759 = vsel %vm6751, %v6750, %v6630
        %v6761 = vsel %vm2521, %v6753, %v6644
        %v6763 = vsel %vm2521, %v6755, %v6646
        %v6765 = vsel %vm2521, %v6757, %v6648
        %v6767 = vsel %vm2521, %v6759, %v6650
        %vm6768 = vcmask 654336
        %v6770 = vsel %vm6768, %v6761, %v6664
        %v6772 = vsel %vm6768, %v6763, %v6666
        %v6774 = vsel %vm6768, %v6765, %v6668
        %v6776 = vsel %vm6768, %v6767, %v6670
        %v6778 = vsel %vm2530, %v6770, %v6692
        %v6780 = vsel %vm2530, %v6772, %v6694
        %v6782 = vsel %vm2530, %v6774, %v6696
        %v6784 = vsel %vm2530, %v6776, %v6698
        %vm6785 = vcmask 916480
        %v6787 = vsel %vm6785, %v6778, %v6712
        %v6790 = vsel %vm6785, %v6780, %v6714
        %v6793 = vsel %vm6785, %v6782, %v6716
        %v6796 = vsel %vm6785, %v6784, %v6718
        %v6798 = vld [vmem:[%s9] sm:$0xf]
        %v6799 = vld [vmem:[%s9 + $0x4] sm:$0xf]
        %v6800 = vld [vmem:[%s9 + $0x8] sm:$0xf]
        %v6801 = vld [vmem:[%s9 + $0xc] sm:$0xf]
        %v6802 = vld [vmem:[%s9 + $0x10] sm:$0xf]
        %v6803 = vld [vmem:[%s9 + $0x14] sm:$0xf]
        %v6804 = vld [vmem:[%s9 + $0x18] sm:$0xf]
        %v6805 = vld [vmem:[%s9 + $0x1c] sm:$0xf]
        %v6806 = vld [vmem:[%s9 + $0x20] sm:$0xf]
        %v6807 = vld [vmem:[%s9 + $0x24] sm:$0xf]
        %v6808 = vld [vmem:[%s9 + $0x28] sm:$0xf]
        %v6809 = vld [vmem:[%s9 + $0x2c] sm:$0xf]
        %v6810 = vld [vmem:[%s9 + $0x30] sm:$0xf]
        %v6811 = vld [vmem:[%s9 + $0x34] sm:$0xf]
        %v6812 = vld [vmem:[%s9 + $0x38] sm:$0xf]
        %v6813 = vld [vmem:[%s9 + $0x3c] sm:$0xf]
        %v6814 = vld [vmem:[%s9 + $0x40] sm:$0xf]
        %v6815 = vld [vmem:[%s9 + $0x44] sm:$0xf]
        %v6816 = vld [vmem:[#allocation12] sm:$0x1]
        %v6818 = vperm.slane %v6816, 0
        %v6838 = vunpack.c.l.b16 %v6798
        %v6839 = vunpack.c.l.b16 %v6799
        %v6840 = vunpack.c.l.b16 %v6800
        %v6841 = vunpack.c.l.b16 %v6801
        %v6842 = vunpack.c.l.b16 %v6802
        %v6843 = vunpack.c.l.b16 %v6803
        %v6844 = vunpack.c.l.b16 %v6804
        %v6845 = vunpack.c.l.b16 %v6805
        %v6846 = vunpack.c.l.b16 %v6806
        %v6847 = vunpack.c.l.b16 %v6807
        %v6848 = vunpack.c.l.b16 %v6808
        %v6849 = vunpack.c.l.b16 %v6809
        %v6850 = vunpack.c.l.b16 %v6810
        %v6851 = vunpack.c.l.b16 %v6811
        %v6852 = vunpack.c.l.b16 %v6812
        %v6853 = vunpack.c.l.b16 %v6813
        %v6854 = vunpack.c.l.b16 %v6814
        %v6855 = vunpack.c.l.b16 %v6815
        %v6856 = vpack.c.b16 %v6839, %v6838
        %v6857 = vpack.c.b16 %v6841, %v6840
        %v6858 = vpack.c.b16 %v6843, %v6842
        %v6859 = vpack.c.b16 %v6845, %v6844
        %v6860 = vpack.c.b16 %v6847, %v6846
        %v6861 = vpack.c.b16 %v6849, %v6848
        %v6862 = vpack.c.b16 %v6851, %v6850
        %v6863 = vpack.c.b16 %v6853, %v6852
        %v6864 = vpack.c.b16 %v6855, %v6854
        %v6875 = vsel %vm1516, %v6727, 0
        %v6878 = vsel %vm1516, %v6728, 0
        %v6881 = vsel %vm1516, %v6729, 0
        %v6884 = vsel %vm1516, %v6730, 0
        %6886 = vmatpush.bf16.msra.mxu0 %v6863
        %6887 = vmatpush.bf16.msra.mxu0 %v6862
        %6888 = vmatpush.bf16.msra.mxu0 %v6861
        %6889 = vmatpush.bf16.msra.mxu0 %v6860
        %6890 = vmatpush.bf16.msra.mxu0 %v6859
        %6891 = vmatpush.bf16.msra.mxu0 %v6858
        %6892 = vmatpush.bf16.msra.mxu0 %v6857
        %6893 = vmatpush.bf16.msra.mxu0 %v6856
        %6894 = vmatmul.bf16.gmra.mxu0 %v6787
        %v6895 = vpop.f32.mrf.mxu0
        %v6896 = vadd.f32 %v6818, %v6895
        %v6897 = vpop.f32.mrf.mxu0
        %v6898 = vadd.f32 %v6818, %v6897
        %6899 = vmatmul.bf16.gmra.mxu0 %v6790
        %v6900 = vpop.f32.mrf.mxu0
        %v6901 = vadd.f32 %v6818, %v6900
        %v6902 = vpop.f32.mrf.mxu0
        %v6903 = vadd.f32 %v6818, %v6902
        %6904 = vmatmul.bf16.gmra.mxu0 %v6793
        %v6905 = vpop.f32.mrf.mxu0
        %v6906 = vadd.f32 %v6818, %v6905
        %v6907 = vpop.f32.mrf.mxu0
        %v6908 = vadd.f32 %v6818, %v6907
        %6909 = vmatmul.bf16.gmra.mxu0 %v6796
        %v6910 = vpop.f32.mrf.mxu0
        %v6911 = vadd.f32 %v6818, %v6910
        %v6912 = vpop.f32.mrf.mxu0
        %v6913 = vadd.f32 %v6818, %v6912
        %6914 = vdwg.mxu0
        %6915 = vmatpush.bf16.msra.mxu0 0
        %6916 = vmatpush.bf16.msra.mxu0 0
        %6917 = vmatpush.bf16.msra.mxu0 0
        %6918 = vmatpush.bf16.msra.mxu0 0
        %6919 = vmatpush.bf16.msra.mxu0 0
        %6920 = vmatpush.bf16.msra.mxu0 0
        %6921 = vmatpush.bf16.msra.mxu0 0
        %6922 = vmatpush.bf16.msra.mxu0 %v6864
        %6923 = vmatmul.bf16.gmra.mxu0 %v6875
        %v6924 = vpop.f32.mrf.mxu0
        %v6925 = vadd.f32 %v6896, %v6924
        %v6926 = vpop.f32.mrf.mxu0
        %v6927 = vadd.f32 %v6898, %v6926
        %6928 = vmatmul.bf16.gmra.mxu0 %v6878
        %v6929 = vpop.f32.mrf.mxu0
        %v6930 = vadd.f32 %v6901, %v6929
        %v6931 = vpop.f32.mrf.mxu0
        %v6932 = vadd.f32 %v6903, %v6931
        %6933 = vmatmul.bf16.gmra.mxu0 %v6881
        %v6934 = vpop.f32.mrf.mxu0
        %v6935 = vadd.f32 %v6906, %v6934
        %v6936 = vpop.f32.mrf.mxu0
        %v6937 = vadd.f32 %v6908, %v6936
        %6938 = vmatmul.bf16.gmra.mxu0 %v6884
        %v6939 = vpop.f32.mrf.mxu0
        %v6940 = vadd.f32 %v6911, %v6939
        %v6941 = vpop.f32.mrf.mxu0
        %v6942 = vadd.f32 %v6913, %v6941
        %6943 = vdwg.mxu0
        %6944 = vst.msk [vmem:[%s459] sm:$0xff] %vm1507, %v6925
        %6945 = vst.msk [vmem:[%s459 + $0x8] sm:$0xff] %vm1507, %v6927
        %6946 = vst.msk [vmem:[%s459 + $0x10] sm:$0xff] %vm1507, %v6930
        %6947 = vst.msk [vmem:[%s459 + $0x18] sm:$0xff] %vm1507, %v6932
        %6948 = vst.msk [vmem:[%s459 + $0x20] sm:$0xff] %vm1507, %v6935
        %6949 = vst.msk [vmem:[%s459 + $0x28] sm:$0xff] %vm1507, %v6937
        %6950 = vst.msk [vmem:[%s459 + $0x30] sm:$0xff] %vm1507, %v6940
        %6951 = vst.msk [vmem:[%s459 + $0x38] sm:$0xff] %vm1507, %v6942
        %v6952 = vld [vmem:[%s5782] sm:$0xf]
        %v6953 = vld [vmem:[%s5782 + $0x4] sm:$0x1]
        %v6954 = vld [vmem:[%s5782 + $0x8] sm:$0xf]
        %v6955 = vld [vmem:[%s5782 + $0xc] sm:$0x1]
        %v6956 = vld [vmem:[%s5782 + $0x10] sm:$0xf]
        %v6957 = vld [vmem:[%s5782 + $0x14] sm:$0x1]
        %v6958 = vld [vmem:[%s5782 + $0x18] sm:$0xf]
        %v6959 = vld [vmem:[%s5782 + $0x1c] sm:$0x1]
        %v6960 = vld [vmem:[%s5782 + $0x20] sm:$0xf]
        %v6961 = vld [vmem:[%s5782 + $0x24] sm:$0x1]
        %v6962 = vld [vmem:[%s5782 + $0x28] sm:$0xf]
        %v6963 = vld [vmem:[%s5782 + $0x2c] sm:$0x1]
        %v6964 = vld [vmem:[%s5782 + $0x30] sm:$0xf]
        %v6965 = vld [vmem:[%s5782 + $0x34] sm:$0x1]
        %v6966 = vld [vmem:[%s5782 + $0x38] sm:$0xf]
        %v6967 = vld [vmem:[%s5782 + $0x3c] sm:$0x1]
        %v6969 = vshrl.u32 %v6952, 16
        %v6971 = vrot.slane %v6969, 4
        %v6972 = vshll.u32 %v6952, 16
        %v6974 = vrot.slane %v6972, 5
        %v6975 = vor.u32 %v6971, %v6974
        %v6976 = vrot.slane %v6975, 4
        %v6978 = vshll.u32 %v6953, 16
        %v6980 = vrot.slane %v6978, 5
        %v6981 = vsel %vm748, %v6976, %v6980
        %v6983 = vshrl.u32 %v6954, 16
        %v6985 = vrot.slane %v6983, 4
        %v6986 = vshll.u32 %v6954, 16
        %v6988 = vrot.slane %v6986, 5
        %v6989 = vor.u32 %v6985, %v6988
        %v6990 = vrot.slane %v6989, 4
        %v6992 = vshll.u32 %v6955, 16
        %v6994 = vrot.slane %v6992, 5
        %v6995 = vsel %vm748, %v6990, %v6994
        %v6997 = vshrl.u32 %v6956, 16
        %v6999 = vrot.slane %v6997, 4
        %v7000 = vshll.u32 %v6956, 16
        %v7002 = vrot.slane %v7000, 5
        %v7003 = vor.u32 %v6999, %v7002
        %v7004 = vrot.slane %v7003, 4
        %v7006 = vshll.u32 %v6957, 16
        %v7008 = vrot.slane %v7006, 5
        %v7009 = vsel %vm748, %v7004, %v7008
        %v7011 = vshrl.u32 %v6958, 16
        %v7013 = vrot.slane %v7011, 4
        %v7014 = vshll.u32 %v6958, 16
        %v7016 = vrot.slane %v7014, 5
        %v7017 = vor.u32 %v7013, %v7016
        %v7018 = vrot.slane %v7017, 4
        %v7020 = vshll.u32 %v6959, 16
        %v7022 = vrot.slane %v7020, 5
        %v7023 = vsel %vm748, %v7018, %v7022
        %v7025 = vshrl.u32 %v6960, 16
        %v7027 = vrot.slane %v7025, 4
        %v7028 = vshll.u32 %v6960, 16
        %v7030 = vrot.slane %v7028, 5
        %v7031 = vor.u32 %v7027, %v7030
        %v7032 = vrot.slane %v7031, 4
        %v7034 = vshll.u32 %v6961, 16
        %v7036 = vrot.slane %v7034, 5
        %v7037 = vsel %vm748, %v7032, %v7036
        %v7039 = vshrl.u32 %v6962, 16
        %v7041 = vrot.slane %v7039, 4
        %v7042 = vshll.u32 %v6962, 16
        %v7044 = vrot.slane %v7042, 5
        %v7045 = vor.u32 %v7041, %v7044
        %v7046 = vrot.slane %v7045, 4
        %v7048 = vshll.u32 %v6963, 16
        %v7050 = vrot.slane %v7048, 5
        %v7051 = vsel %vm748, %v7046, %v7050
        %v7053 = vshrl.u32 %v6964, 16
        %v7055 = vrot.slane %v7053, 4
        %v7056 = vshll.u32 %v6964, 16
        %v7058 = vrot.slane %v7056, 5
        %v7059 = vor.u32 %v7055, %v7058
        %v7060 = vrot.slane %v7059, 4
        %v7062 = vshll.u32 %v6965, 16
        %v7064 = vrot.slane %v7062, 5
        %v7065 = vsel %vm748, %v7060, %v7064
        %v7067 = vshrl.u32 %v6966, 16
        %v7069 = vrot.slane %v7067, 4
        %v7070 = vshll.u32 %v6966, 16
        %v7072 = vrot.slane %v7070, 5
        %v7073 = vor.u32 %v7069, %v7072
        %v7074 = vrot.slane %v7073, 4
        %v7076 = vshll.u32 %v6967, 16
        %v7078 = vrot.slane %v7076, 5
        %v7079 = vsel %vm748, %v7074, %v7078
        %v7080 = vld [vmem:[%s5773] sm:$0xf]
        %v7081 = vld [vmem:[%s5773 + $0x4] sm:$0x1]
        %v7082 = vld [vmem:[%s5773 + $0x8] sm:$0xf]
        %v7083 = vld [vmem:[%s5773 + $0xc] sm:$0x1]
        %v7084 = vld [vmem:[%s5773 + $0x10] sm:$0xf]
        %v7085 = vld [vmem:[%s5773 + $0x14] sm:$0x1]
        %v7086 = vld [vmem:[%s5773 + $0x18] sm:$0xf]
        %v7087 = vld [vmem:[%s5773 + $0x1c] sm:$0x1]
        %v7088 = vld [vmem:[%s5773 + $0x20] sm:$0xf]
        %v7089 = vld [vmem:[%s5773 + $0x24] sm:$0x1]
        %v7090 = vld [vmem:[%s5773 + $0x28] sm:$0xf]
        %v7091 = vld [vmem:[%s5773 + $0x2c] sm:$0x1]
        %v7092 = vld [vmem:[%s5773 + $0x30] sm:$0xf]
        %v7093 = vld [vmem:[%s5773 + $0x34] sm:$0x1]
        %v7094 = vld [vmem:[%s5773 + $0x38] sm:$0xf]
        %v7095 = vld [vmem:[%s5773 + $0x3c] sm:$0x1]
        %v7097 = vshrl.u32 %v7080, 16
        %v7099 = vrot.slane %v7097, 4
        %v7100 = vshll.u32 %v7080, 16
        %v7102 = vrot.slane %v7100, 5
        %v7103 = vor.u32 %v7099, %v7102
        %v7104 = vrot.slane %v7103, 4
        %v7106 = vshll.u32 %v7081, 16
        %v7108 = vrot.slane %v7106, 5
        %v7109 = vsel %vm748, %v7104, %v7108
        %v7111 = vshrl.u32 %v7082, 16
        %v7113 = vrot.slane %v7111, 4
        %v7114 = vshll.u32 %v7082, 16
        %v7116 = vrot.slane %v7114, 5
        %v7117 = vor.u32 %v7113, %v7116
        %v7118 = vrot.slane %v7117, 4
        %v7120 = vshll.u32 %v7083, 16
        %v7122 = vrot.slane %v7120, 5
        %v7123 = vsel %vm748, %v7118, %v7122
        %v7125 = vshrl.u32 %v7084, 16
        %v7127 = vrot.slane %v7125, 4
        %v7128 = vshll.u32 %v7084, 16
        %v7130 = vrot.slane %v7128, 5
        %v7131 = vor.u32 %v7127, %v7130
        %v7132 = vrot.slane %v7131, 4
        %v7134 = vshll.u32 %v7085, 16
        %v7136 = vrot.slane %v7134, 5
        %v7137 = vsel %vm748, %v7132, %v7136
        %v7139 = vshrl.u32 %v7086, 16
        %v7141 = vrot.slane %v7139, 4
        %v7142 = vshll.u32 %v7086, 16
        %v7144 = vrot.slane %v7142, 5
        %v7145 = vor.u32 %v7141, %v7144
        %v7146 = vrot.slane %v7145, 4
        %v7148 = vshll.u32 %v7087, 16
        %v7150 = vrot.slane %v7148, 5
        %v7151 = vsel %vm748, %v7146, %v7150
        %v7153 = vshrl.u32 %v7088, 16
        %v7155 = vrot.slane %v7153, 4
        %v7156 = vshll.u32 %v7088, 16
        %v7158 = vrot.slane %v7156, 5
        %v7159 = vor.u32 %v7155, %v7158
        %v7160 = vrot.slane %v7159, 4
        %v7162 = vshll.u32 %v7089, 16
        %v7164 = vrot.slane %v7162, 5
        %v7165 = vsel %vm748, %v7160, %v7164
        %v7167 = vshrl.u32 %v7090, 16
        %v7169 = vrot.slane %v7167, 4
        %v7170 = vshll.u32 %v7090, 16
        %v7172 = vrot.slane %v7170, 5
        %v7173 = vor.u32 %v7169, %v7172
        %v7174 = vrot.slane %v7173, 4
        %v7176 = vshll.u32 %v7091, 16
        %v7178 = vrot.slane %v7176, 5
        %v7179 = vsel %vm748, %v7174, %v7178
        %v7181 = vshrl.u32 %v7092, 16
        %v7183 = vrot.slane %v7181, 4
        %v7184 = vshll.u32 %v7092, 16
        %v7186 = vrot.slane %v7184, 5
        %v7187 = vor.u32 %v7183, %v7186
        %v7188 = vrot.slane %v7187, 4
        %v7190 = vshll.u32 %v7093, 16
        %v7192 = vrot.slane %v7190, 5
        %v7193 = vsel %vm748, %v7188, %v7192
        %v7195 = vshrl.u32 %v7094, 16
        %v7197 = vrot.slane %v7195, 4
        %v7198 = vshll.u32 %v7094, 16
        %v7200 = vrot.slane %v7198, 5
        %v7201 = vor.u32 %v7197, %v7200
        %v7202 = vrot.slane %v7201, 4
        %v7204 = vshll.u32 %v7095, 16
        %v7206 = vrot.slane %v7204, 5
        %v7207 = vsel %vm748, %v7202, %v7206
        %v7208 = vld [vmem:[%s5782] sm:$0xe]
        %v7209 = vld [vmem:[%s5782 + $0x8] sm:$0xe]
        %v7210 = vld [vmem:[%s5782 + $0x10] sm:$0xe]
        %v7211 = vld [vmem:[%s5782 + $0x18] sm:$0xe]
        %v7212 = vld [vmem:[%s5782 + $0x20] sm:$0xe]
        %v7213 = vld [vmem:[%s5782 + $0x28] sm:$0xe]
        %v7214 = vld [vmem:[%s5782 + $0x30] sm:$0xe]
        %v7215 = vld [vmem:[%s5782 + $0x38] sm:$0xe]
        %v7232 = vrot.slane %v7208, 5
        %v7233 = vrot.slane %v7232, 4
        %v7234 = vrot.slane %v6953, 5
        %v7235 = vsel %vm887, %v7233, %v7234
        %v7236 = vrot.slane %v7209, 5
        %v7237 = vrot.slane %v7236, 4
        %v7238 = vrot.slane %v6955, 5
        %v7239 = vsel %vm887, %v7237, %v7238
        %v7240 = vrot.slane %v7210, 5
        %v7241 = vrot.slane %v7240, 4
        %v7242 = vrot.slane %v6957, 5
        %v7243 = vsel %vm887, %v7241, %v7242
        %v7244 = vrot.slane %v7211, 5
        %v7245 = vrot.slane %v7244, 4
        %v7246 = vrot.slane %v6959, 5
        %v7247 = vsel %vm887, %v7245, %v7246
        %v7248 = vrot.slane %v7212, 5
        %v7249 = vrot.slane %v7248, 4
        %v7250 = vrot.slane %v6961, 5
        %v7251 = vsel %vm887, %v7249, %v7250
        %v7252 = vrot.slane %v7213, 5
        %v7253 = vrot.slane %v7252, 4
        %v7254 = vrot.slane %v6963, 5
        %v7255 = vsel %vm887, %v7253, %v7254
        %v7256 = vrot.slane %v7214, 5
        %v7257 = vrot.slane %v7256, 4
        %v7258 = vrot.slane %v6965, 5
        %v7259 = vsel %vm887, %v7257, %v7258
        %v7260 = vrot.slane %v7215, 5
        %v7261 = vrot.slane %v7260, 4
        %v7262 = vrot.slane %v6967, 5
        %v7263 = vsel %vm887, %v7261, %v7262
        %v7264 = vld [vmem:[%s5429] sm:$0xf]
        %v7265 = vld [vmem:[%s5429 + $0x4] sm:$0x1]
        %v7266 = vld [vmem:[%s5429 + $0x8] sm:$0xf]
        %v7267 = vld [vmem:[%s5429 + $0xc] sm:$0x1]
        %v7268 = vld [vmem:[%s5429 + $0x10] sm:$0xf]
        %v7269 = vld [vmem:[%s5429 + $0x14] sm:$0x1]
        %v7270 = vld [vmem:[%s5429 + $0x18] sm:$0xf]
        %v7271 = vld [vmem:[%s5429 + $0x1c] sm:$0x1]
        %v7272 = vld [vmem:[%s5429 + $0x20] sm:$0xf]
        %v7273 = vld [vmem:[%s5429 + $0x24] sm:$0x1]
        %v7274 = vld [vmem:[%s5429 + $0x28] sm:$0xf]
        %v7275 = vld [vmem:[%s5429 + $0x2c] sm:$0x1]
        %v7276 = vld [vmem:[%s5429 + $0x30] sm:$0xf]
        %v7277 = vld [vmem:[%s5429 + $0x34] sm:$0x1]
        %v7278 = vld [vmem:[%s5429 + $0x38] sm:$0xf]
        %v7279 = vld [vmem:[%s5429 + $0x3c] sm:$0x1]
        %v7281 = vshrl.u32 %v7264, 16
        %v7283 = vrot.slane %v7281, 4
        %v7284 = vshll.u32 %v7264, 16
        %v7286 = vrot.slane %v7284, 5
        %v7287 = vor.u32 %v7283, %v7286
        %v7288 = vrot.slane %v7287, 4
        %v7290 = vshll.u32 %v7265, 16
        %v7292 = vrot.slane %v7290, 5
        %v7293 = vsel %vm748, %v7288, %v7292
        %v7295 = vshrl.u32 %v7266, 16
        %v7297 = vrot.slane %v7295, 4
        %v7298 = vshll.u32 %v7266, 16
        %v7300 = vrot.slane %v7298, 5
        %v7301 = vor.u32 %v7297, %v7300
        %v7302 = vrot.slane %v7301, 4
        %v7304 = vshll.u32 %v7267, 16
        %v7306 = vrot.slane %v7304, 5
        %v7307 = vsel %vm748, %v7302, %v7306
        %v7309 = vshrl.u32 %v7268, 16
        %v7311 = vrot.slane %v7309, 4
        %v7312 = vshll.u32 %v7268, 16
        %v7314 = vrot.slane %v7312, 5
        %v7315 = vor.u32 %v7311, %v7314
        %v7316 = vrot.slane %v7315, 4
        %v7318 = vshll.u32 %v7269, 16
        %v7320 = vrot.slane %v7318, 5
        %v7321 = vsel %vm748, %v7316, %v7320
        %v7323 = vshrl.u32 %v7270, 16
        %v7325 = vrot.slane %v7323, 4
        %v7326 = vshll.u32 %v7270, 16
        %v7328 = vrot.slane %v7326, 5
        %v7329 = vor.u32 %v7325, %v7328
        %v7330 = vrot.slane %v7329, 4
        %v7332 = vshll.u32 %v7271, 16
        %v7334 = vrot.slane %v7332, 5
        %v7335 = vsel %vm748, %v7330, %v7334
        %v7337 = vshrl.u32 %v7272, 16
        %v7339 = vrot.slane %v7337, 4
        %v7340 = vshll.u32 %v7272, 16
        %v7342 = vrot.slane %v7340, 5
        %v7343 = vor.u32 %v7339, %v7342
        %v7344 = vrot.slane %v7343, 4
        %v7346 = vshll.u32 %v7273, 16
        %v7348 = vrot.slane %v7346, 5
        %v7349 = vsel %vm748, %v7344, %v7348
        %v7351 = vshrl.u32 %v7274, 16
        %v7353 = vrot.slane %v7351, 4
        %v7354 = vshll.u32 %v7274, 16
        %v7356 = vrot.slane %v7354, 5
        %v7357 = vor.u32 %v7353, %v7356
        %v7358 = vrot.slane %v7357, 4
        %v7360 = vshll.u32 %v7275, 16
        %v7362 = vrot.slane %v7360, 5
        %v7363 = vsel %vm748, %v7358, %v7362
        %v7365 = vshrl.u32 %v7276, 16
        %v7367 = vrot.slane %v7365, 4
        %v7368 = vshll.u32 %v7276, 16
        %v7370 = vrot.slane %v7368, 5
        %v7371 = vor.u32 %v7367, %v7370
        %v7372 = vrot.slane %v7371, 4
        %v7374 = vshll.u32 %v7277, 16
        %v7376 = vrot.slane %v7374, 5
        %v7377 = vsel %vm748, %v7372, %v7376
        %v7379 = vshrl.u32 %v7278, 16
        %v7381 = vrot.slane %v7379, 4
        %v7382 = vshll.u32 %v7278, 16
        %v7384 = vrot.slane %v7382, 5
        %v7385 = vor.u32 %v7381, %v7384
        %v7386 = vrot.slane %v7385, 4
        %v7388 = vshll.u32 %v7279, 16
        %v7390 = vrot.slane %v7388, 5
        %v7391 = vsel %vm748, %v7386, %v7390
        %v7392 = vld [vmem:[%s5530] sm:$0xf]
        %v7393 = vld [vmem:[%s5530 + $0x4] sm:$0x1]
        %v7394 = vld [vmem:[%s5530 + $0x8] sm:$0xf]
        %v7395 = vld [vmem:[%s5530 + $0xc] sm:$0x1]
        %v7396 = vld [vmem:[%s5530 + $0x10] sm:$0xf]
        %v7397 = vld [vmem:[%s5530 + $0x14] sm:$0x1]
        %v7398 = vld [vmem:[%s5530 + $0x18] sm:$0xf]
        %v7399 = vld [vmem:[%s5530 + $0x1c] sm:$0x1]
        %v7400 = vld [vmem:[%s5530 + $0x20] sm:$0xf]
        %v7401 = vld [vmem:[%s5530 + $0x24] sm:$0x1]
        %v7402 = vld [vmem:[%s5530 + $0x28] sm:$0xf]
        %v7403 = vld [vmem:[%s5530 + $0x2c] sm:$0x1]
        %v7404 = vld [vmem:[%s5530 + $0x30] sm:$0xf]
        %v7405 = vld [vmem:[%s5530 + $0x34] sm:$0x1]
        %v7406 = vld [vmem:[%s5530 + $0x38] sm:$0xf]
        %v7407 = vld [vmem:[%s5530 + $0x3c] sm:$0x1]
        %v7409 = vshrl.u32 %v7392, 16
        %v7411 = vrot.slane %v7409, 4
        %v7412 = vshll.u32 %v7392, 16
        %v7414 = vrot.slane %v7412, 5
        %v7415 = vor.u32 %v7411, %v7414
        %v7416 = vrot.slane %v7415, 4
        %v7418 = vshll.u32 %v7393, 16
        %v7420 = vrot.slane %v7418, 5
        %v7421 = vsel %vm748, %v7416, %v7420
        %v7423 = vshrl.u32 %v7394, 16
        %v7425 = vrot.slane %v7423, 4
        %v7426 = vshll.u32 %v7394, 16
        %v7428 = vrot.slane %v7426, 5
        %v7429 = vor.u32 %v7425, %v7428
        %v7430 = vrot.slane %v7429, 4
        %v7432 = vshll.u32 %v7395, 16
        %v7434 = vrot.slane %v7432, 5
        %v7435 = vsel %vm748, %v7430, %v7434
        %v7437 = vshrl.u32 %v7396, 16
        %v7439 = vrot.slane %v7437, 4
        %v7440 = vshll.u32 %v7396, 16
        %v7442 = vrot.slane %v7440, 5
        %v7443 = vor.u32 %v7439, %v7442
        %v7444 = vrot.slane %v7443, 4
        %v7446 = vshll.u32 %v7397, 16
        %v7448 = vrot.slane %v7446, 5
        %v7449 = vsel %vm748, %v7444, %v7448
        %v7451 = vshrl.u32 %v7398, 16
        %v7453 = vrot.slane %v7451, 4
        %v7454 = vshll.u32 %v7398, 16
        %v7456 = vrot.slane %v7454, 5
        %v7457 = vor.u32 %v7453, %v7456
        %v7458 = vrot.slane %v7457, 4
        %v7460 = vshll.u32 %v7399, 16
        %v7462 = vrot.slane %v7460, 5
        %v7463 = vsel %vm748, %v7458, %v7462
        %v7465 = vshrl.u32 %v7400, 16
        %v7467 = vrot.slane %v7465, 4
        %v7468 = vshll.u32 %v7400, 16
        %v7470 = vrot.slane %v7468, 5
        %v7471 = vor.u32 %v7467, %v7470
        %v7472 = vrot.slane %v7471, 4
        %v7474 = vshll.u32 %v7401, 16
        %v7476 = vrot.slane %v7474, 5
        %v7477 = vsel %vm748, %v7472, %v7476
        %v7479 = vshrl.u32 %v7402, 16
        %v7481 = vrot.slane %v7479, 4
        %v7482 = vshll.u32 %v7402, 16
        %v7484 = vrot.slane %v7482, 5
        %v7485 = vor.u32 %v7481, %v7484
        %v7486 = vrot.slane %v7485, 4
        %v7488 = vshll.u32 %v7403, 16
        %v7490 = vrot.slane %v7488, 5
        %v7491 = vsel %vm748, %v7486, %v7490
        %v7493 = vshrl.u32 %v7404, 16
        %v7495 = vrot.slane %v7493, 4
        %v7496 = vshll.u32 %v7404, 16
        %v7498 = vrot.slane %v7496, 5
        %v7499 = vor.u32 %v7495, %v7498
        %v7500 = vrot.slane %v7499, 4
        %v7502 = vshll.u32 %v7405, 16
        %v7504 = vrot.slane %v7502, 5
        %v7505 = vsel %vm748, %v7500, %v7504
        %v7507 = vshrl.u32 %v7406, 16
        %v7509 = vrot.slane %v7507, 4
        %v7510 = vshll.u32 %v7406, 16
        %v7512 = vrot.slane %v7510, 5
        %v7513 = vor.u32 %v7509, %v7512
        %v7514 = vrot.slane %v7513, 4
        %v7516 = vshll.u32 %v7407, 16
        %v7518 = vrot.slane %v7516, 5
        %v7519 = vsel %vm748, %v7514, %v7518
        %v7520 = vld [vmem:[%s5429] sm:$0xe]
        %v7521 = vld [vmem:[%s5429 + $0x8] sm:$0xe]
        %v7522 = vld [vmem:[%s5429 + $0x10] sm:$0xe]
        %v7523 = vld [vmem:[%s5429 + $0x18] sm:$0xe]
        %v7524 = vld [vmem:[%s5429 + $0x20] sm:$0xe]
        %v7525 = vld [vmem:[%s5429 + $0x28] sm:$0xe]
        %v7526 = vld [vmem:[%s5429 + $0x30] sm:$0xe]
        %v7527 = vld [vmem:[%s5429 + $0x38] sm:$0xe]
        %v7544 = vrot.slane %v7520, 5
        %v7545 = vrot.slane %v7544, 4
        %v7546 = vrot.slane %v7265, 5
        %v7547 = vsel %vm887, %v7545, %v7546
        %v7548 = vrot.slane %v7521, 5
        %v7549 = vrot.slane %v7548, 4
        %v7550 = vrot.slane %v7267, 5
        %v7551 = vsel %vm887, %v7549, %v7550
        %v7552 = vrot.slane %v7522, 5
        %v7553 = vrot.slane %v7552, 4
        %v7554 = vrot.slane %v7269, 5
        %v7555 = vsel %vm887, %v7553, %v7554
        %v7556 = vrot.slane %v7523, 5
        %v7557 = vrot.slane %v7556, 4
        %v7558 = vrot.slane %v7271, 5
        %v7559 = vsel %vm887, %v7557, %v7558
        %v7560 = vrot.slane %v7524, 5
        %v7561 = vrot.slane %v7560, 4
        %v7562 = vrot.slane %v7273, 5
        %v7563 = vsel %vm887, %v7561, %v7562
        %v7564 = vrot.slane %v7525, 5
        %v7565 = vrot.slane %v7564, 4
        %v7566 = vrot.slane %v7275, 5
        %v7567 = vsel %vm887, %v7565, %v7566
        %v7568 = vrot.slane %v7526, 5
        %v7569 = vrot.slane %v7568, 4
        %v7570 = vrot.slane %v7277, 5
        %v7571 = vsel %vm887, %v7569, %v7570
        %v7572 = vrot.slane %v7527, 5
        %v7573 = vrot.slane %v7572, 4
        %v7574 = vrot.slane %v7279, 5
        %v7575 = vsel %vm887, %v7573, %v7574
        %v7576 = vld [vmem:[%s5627] sm:$0xf]
        %v7577 = vld [vmem:[%s5627 + $0x4] sm:$0x1]
        %v7578 = vld [vmem:[%s5627 + $0x8] sm:$0xf]
        %v7579 = vld [vmem:[%s5627 + $0xc] sm:$0x1]
        %v7580 = vld [vmem:[%s5627 + $0x10] sm:$0xf]
        %v7581 = vld [vmem:[%s5627 + $0x14] sm:$0x1]
        %v7582 = vld [vmem:[%s5627 + $0x18] sm:$0xf]
        %v7583 = vld [vmem:[%s5627 + $0x1c] sm:$0x1]
        %v7584 = vld [vmem:[%s5627 + $0x20] sm:$0xf]
        %v7585 = vld [vmem:[%s5627 + $0x24] sm:$0x1]
        %v7586 = vld [vmem:[%s5627 + $0x28] sm:$0xf]
        %v7587 = vld [vmem:[%s5627 + $0x2c] sm:$0x1]
        %v7588 = vld [vmem:[%s5627 + $0x30] sm:$0xf]
        %v7589 = vld [vmem:[%s5627 + $0x34] sm:$0x1]
        %v7590 = vld [vmem:[%s5627 + $0x38] sm:$0xf]
        %v7591 = vld [vmem:[%s5627 + $0x3c] sm:$0x1]
        %v7593 = vshrl.u32 %v7576, 16
        %v7595 = vrot.slane %v7593, 4
        %v7596 = vshll.u32 %v7576, 16
        %v7598 = vrot.slane %v7596, 5
        %v7599 = vor.u32 %v7595, %v7598
        %v7600 = vrot.slane %v7599, 4
        %v7602 = vshll.u32 %v7577, 16
        %v7604 = vrot.slane %v7602, 5
        %v7605 = vsel %vm748, %v7600, %v7604
        %v7607 = vshrl.u32 %v7578, 16
        %v7609 = vrot.slane %v7607, 4
        %v7610 = vshll.u32 %v7578, 16
        %v7612 = vrot.slane %v7610, 5
        %v7613 = vor.u32 %v7609, %v7612
        %v7614 = vrot.slane %v7613, 4
        %v7616 = vshll.u32 %v7579, 16
        %v7618 = vrot.slane %v7616, 5
        %v7619 = vsel %vm748, %v7614, %v7618
        %v7621 = vshrl.u32 %v7580, 16
        %v7623 = vrot.slane %v7621, 4
        %v7624 = vshll.u32 %v7580, 16
        %v7626 = vrot.slane %v7624, 5
        %v7627 = vor.u32 %v7623, %v7626
        %v7628 = vrot.slane %v7627, 4
        %v7630 = vshll.u32 %v7581, 16
        %v7632 = vrot.slane %v7630, 5
        %v7633 = vsel %vm748, %v7628, %v7632
        %v7635 = vshrl.u32 %v7582, 16
        %v7637 = vrot.slane %v7635, 4
        %v7638 = vshll.u32 %v7582, 16
        %v7640 = vrot.slane %v7638, 5
        %v7641 = vor.u32 %v7637, %v7640
        %v7642 = vrot.slane %v7641, 4
        %v7644 = vshll.u32 %v7583, 16
        %v7646 = vrot.slane %v7644, 5
        %v7647 = vsel %vm748, %v7642, %v7646
        %v7649 = vshrl.u32 %v7584, 16
        %v7651 = vrot.slane %v7649, 4
        %v7652 = vshll.u32 %v7584, 16
        %v7654 = vrot.slane %v7652, 5
        %v7655 = vor.u32 %v7651, %v7654
        %v7656 = vrot.slane %v7655, 4
        %v7658 = vshll.u32 %v7585, 16
        %v7660 = vrot.slane %v7658, 5
        %v7661 = vsel %vm748, %v7656, %v7660
        %v7663 = vshrl.u32 %v7586, 16
        %v7665 = vrot.slane %v7663, 4
        %v7666 = vshll.u32 %v7586, 16
        %v7668 = vrot.slane %v7666, 5
        %v7669 = vor.u32 %v7665, %v7668
        %v7670 = vrot.slane %v7669, 4
        %v7672 = vshll.u32 %v7587, 16
        %v7674 = vrot.slane %v7672, 5
        %v7675 = vsel %vm748, %v7670, %v7674
        %v7677 = vshrl.u32 %v7588, 16
        %v7679 = vrot.slane %v7677, 4
        %v7680 = vshll.u32 %v7588, 16
        %v7682 = vrot.slane %v7680, 5
        %v7683 = vor.u32 %v7679, %v7682
        %v7684 = vrot.slane %v7683, 4
        %v7686 = vshll.u32 %v7589, 16
        %v7688 = vrot.slane %v7686, 5
        %v7689 = vsel %vm748, %v7684, %v7688
        %v7691 = vshrl.u32 %v7590, 16
        %v7693 = vrot.slane %v7691, 4
        %v7694 = vshll.u32 %v7590, 16
        %v7696 = vrot.slane %v7694, 5
        %v7697 = vor.u32 %v7693, %v7696
        %v7698 = vrot.slane %v7697, 4
        %v7700 = vshll.u32 %v7591, 16
        %v7702 = vrot.slane %v7700, 5
        %v7703 = vsel %vm748, %v7698, %v7702
        %v7704 = vld [vmem:[%s5724] sm:$0xf]
        %v7705 = vld [vmem:[%s5724 + $0x4] sm:$0x1]
        %v7706 = vld [vmem:[%s5724 + $0x8] sm:$0xf]
        %v7707 = vld [vmem:[%s5724 + $0xc] sm:$0x1]
        %v7708 = vld [vmem:[%s5724 + $0x10] sm:$0xf]
        %v7709 = vld [vmem:[%s5724 + $0x14] sm:$0x1]
        %v7710 = vld [vmem:[%s5724 + $0x18] sm:$0xf]
        %v7711 = vld [vmem:[%s5724 + $0x1c] sm:$0x1]
        %v7712 = vld [vmem:[%s5724 + $0x20] sm:$0xf]
        %v7713 = vld [vmem:[%s5724 + $0x24] sm:$0x1]
        %v7714 = vld [vmem:[%s5724 + $0x28] sm:$0xf]
        %v7715 = vld [vmem:[%s5724 + $0x2c] sm:$0x1]
        %v7716 = vld [vmem:[%s5724 + $0x30] sm:$0xf]
        %v7717 = vld [vmem:[%s5724 + $0x34] sm:$0x1]
        %v7718 = vld [vmem:[%s5724 + $0x38] sm:$0xf]
        %v7719 = vld [vmem:[%s5724 + $0x3c] sm:$0x1]
        %v7721 = vshrl.u32 %v7704, 16
        %v7723 = vrot.slane %v7721, 4
        %v7724 = vshll.u32 %v7704, 16
        %v7726 = vrot.slane %v7724, 5
        %v7727 = vor.u32 %v7723, %v7726
        %v7728 = vrot.slane %v7727, 4
        %v7730 = vshll.u32 %v7705, 16
        %v7732 = vrot.slane %v7730, 5
        %v7733 = vsel %vm748, %v7728, %v7732
        %v7735 = vshrl.u32 %v7706, 16
        %v7737 = vrot.slane %v7735, 4
        %v7738 = vshll.u32 %v7706, 16
        %v7740 = vrot.slane %v7738, 5
        %v7741 = vor.u32 %v7737, %v7740
        %v7742 = vrot.slane %v7741, 4
        %v7744 = vshll.u32 %v7707, 16
        %v7746 = vrot.slane %v7744, 5
        %v7747 = vsel %vm748, %v7742, %v7746
        %v7749 = vshrl.u32 %v7708, 16
        %v7751 = vrot.slane %v7749, 4
        %v7752 = vshll.u32 %v7708, 16
        %v7754 = vrot.slane %v7752, 5
        %v7755 = vor.u32 %v7751, %v7754
        %v7756 = vrot.slane %v7755, 4
        %v7758 = vshll.u32 %v7709, 16
        %v7760 = vrot.slane %v7758, 5
        %v7761 = vsel %vm748, %v7756, %v7760
        %v7763 = vshrl.u32 %v7710, 16
        %v7765 = vrot.slane %v7763, 4
        %v7766 = vshll.u32 %v7710, 16
        %v7768 = vrot.slane %v7766, 5
        %v7769 = vor.u32 %v7765, %v7768
        %v7770 = vrot.slane %v7769, 4
        %v7772 = vshll.u32 %v7711, 16
        %v7774 = vrot.slane %v7772, 5
        %v7775 = vsel %vm748, %v7770, %v7774
        %v7777 = vshrl.u32 %v7712, 16
        %v7779 = vrot.slane %v7777, 4
        %v7780 = vshll.u32 %v7712, 16
        %v7782 = vrot.slane %v7780, 5
        %v7783 = vor.u32 %v7779, %v7782
        %v7784 = vrot.slane %v7783, 4
        %v7786 = vshll.u32 %v7713, 16
        %v7788 = vrot.slane %v7786, 5
        %v7789 = vsel %vm748, %v7784, %v7788
        %v7791 = vshrl.u32 %v7714, 16
        %v7793 = vrot.slane %v7791, 4
        %v7794 = vshll.u32 %v7714, 16
        %v7796 = vrot.slane %v7794, 5
        %v7797 = vor.u32 %v7793, %v7796
        %v7798 = vrot.slane %v7797, 4
        %v7800 = vshll.u32 %v7715, 16
        %v7802 = vrot.slane %v7800, 5
        %v7803 = vsel %vm748, %v7798, %v7802
        %v7805 = vshrl.u32 %v7716, 16
        %v7807 = vrot.slane %v7805, 4
        %v7808 = vshll.u32 %v7716, 16
        %v7810 = vrot.slane %v7808, 5
        %v7811 = vor.u32 %v7807, %v7810
        %v7812 = vrot.slane %v7811, 4
        %v7814 = vshll.u32 %v7717, 16
        %v7816 = vrot.slane %v7814, 5
        %v7817 = vsel %vm748, %v7812, %v7816
        %v7819 = vshrl.u32 %v7718, 16
        %v7821 = vrot.slane %v7819, 4
        %v7822 = vshll.u32 %v7718, 16
        %v7824 = vrot.slane %v7822, 5
        %v7825 = vor.u32 %v7821, %v7824
        %v7826 = vrot.slane %v7825, 4
        %v7828 = vshll.u32 %v7719, 16
        %v7830 = vrot.slane %v7828, 5
        %v7831 = vsel %vm748, %v7826, %v7830
        %v7832 = vld [vmem:[%s5627] sm:$0xe]
        %v7833 = vld [vmem:[%s5627 + $0x8] sm:$0xe]
        %v7834 = vld [vmem:[%s5627 + $0x10] sm:$0xe]
        %v7835 = vld [vmem:[%s5627 + $0x18] sm:$0xe]
        %v7836 = vld [vmem:[%s5627 + $0x20] sm:$0xe]
        %v7837 = vld [vmem:[%s5627 + $0x28] sm:$0xe]
        %v7838 = vld [vmem:[%s5627 + $0x30] sm:$0xe]
        %v7839 = vld [vmem:[%s5627 + $0x38] sm:$0xe]
        %v7856 = vrot.slane %v7832, 5
        %v7857 = vrot.slane %v7856, 4
        %v7858 = vrot.slane %v7577, 5
        %v7859 = vsel %vm887, %v7857, %v7858
        %v7860 = vrot.slane %v7833, 5
        %v7861 = vrot.slane %v7860, 4
        %v7862 = vrot.slane %v7579, 5
        %v7863 = vsel %vm887, %v7861, %v7862
        %v7864 = vrot.slane %v7834, 5
        %v7865 = vrot.slane %v7864, 4
        %v7866 = vrot.slane %v7581, 5
        %v7867 = vsel %vm887, %v7865, %v7866
        %v7868 = vrot.slane %v7835, 5
        %v7869 = vrot.slane %v7868, 4
        %v7870 = vrot.slane %v7583, 5
        %v7871 = vsel %vm887, %v7869, %v7870
        %v7872 = vrot.slane %v7836, 5
        %v7873 = vrot.slane %v7872, 4
        %v7874 = vrot.slane %v7585, 5
        %v7875 = vsel %vm887, %v7873, %v7874
        %v7876 = vrot.slane %v7837, 5
        %v7877 = vrot.slane %v7876, 4
        %v7878 = vrot.slane %v7587, 5
        %v7879 = vsel %vm887, %v7877, %v7878
        %v7880 = vrot.slane %v7838, 5
        %v7881 = vrot.slane %v7880, 4
        %v7882 = vrot.slane %v7589, 5
        %v7883 = vsel %vm887, %v7881, %v7882
        %v7884 = vrot.slane %v7839, 5
        %v7885 = vrot.slane %v7884, 4
        %v7886 = vrot.slane %v7591, 5
        %v7887 = vsel %vm887, %v7885, %v7886
        %v7888 = vunpack.c.l.b16 %v6981
        %v7889 = vunpack.c.l.b16 %v6995
        %v7890 = vunpack.c.l.b16 %v7009
        %v7891 = vunpack.c.l.b16 %v7023
        %v7892 = vunpack.c.l.b16 %v7037
        %v7893 = vunpack.c.l.b16 %v7051
        %v7894 = vunpack.c.l.b16 %v7065
        %v7895 = vunpack.c.l.b16 %v7079
        %v7896 = vpack.c.b16 %v7889, %v7888
        %v7897 = vpack.c.b16 %v7891, %v7890
        %v7898 = vpack.c.b16 %v7893, %v7892
        %v7899 = vpack.c.b16 %v7895, %v7894
        %v7900 = vunpack.c.l.b16 %v7109
        %v7901 = vunpack.c.l.b16 %v7123
        %v7902 = vunpack.c.l.b16 %v7137
        %v7903 = vunpack.c.l.b16 %v7151
        %v7904 = vunpack.c.l.b16 %v7165
        %v7905 = vunpack.c.l.b16 %v7179
        %v7906 = vunpack.c.l.b16 %v7193
        %v7907 = vunpack.c.l.b16 %v7207
        %v7908 = vpack.c.b16 %v7901, %v7900
        %v7909 = vpack.c.b16 %v7903, %v7902
        %v7910 = vpack.c.b16 %v7905, %v7904
        %v7911 = vpack.c.b16 %v7907, %v7906
        %7912 = vrot.lane.b32.xlu0 %v7908, 16
        %v7913 = vpop.permute.xlu0 %7912
        %7914 = vrot.lane.b32.xlu0 %v7909, 16
        %v7915 = vpop.permute.xlu0 %7914
        %7916 = vrot.lane.b32.xlu0 %v7910, 16
        %v7917 = vpop.permute.xlu0 %7916
        %7918 = vrot.lane.b32.xlu0 %v7911, 16
        %v7919 = vpop.permute.xlu0 %7918
        %v7920 = vunpack.c.l.b16 %v7235
        %v7921 = vunpack.c.l.b16 %v7239
        %v7922 = vunpack.c.l.b16 %v7243
        %v7923 = vunpack.c.l.b16 %v7247
        %v7924 = vunpack.c.l.b16 %v7251
        %v7925 = vunpack.c.l.b16 %v7255
        %v7926 = vunpack.c.l.b16 %v7259
        %v7927 = vunpack.c.l.b16 %v7263
        %v7928 = vpack.c.b16 %v7921, %v7920
        %v7929 = vpack.c.b16 %v7923, %v7922
        %v7930 = vpack.c.b16 %v7925, %v7924
        %v7931 = vpack.c.b16 %v7927, %v7926
        %7932 = vrot.lane.b32.xlu0 %v7928, 32
        %v7933 = vpop.permute.xlu0 %7932
        %7934 = vrot.lane.b32.xlu0 %v7929, 32
        %v7935 = vpop.permute.xlu0 %7934
        %7936 = vrot.lane.b32.xlu0 %v7930, 32
        %v7937 = vpop.permute.xlu0 %7936
        %7938 = vrot.lane.b32.xlu0 %v7931, 32
        %v7939 = vpop.permute.xlu0 %7938
        %v7940 = vunpack.c.l.b16 %v7293
        %v7941 = vunpack.c.l.b16 %v7307
        %v7942 = vunpack.c.l.b16 %v7321
        %v7943 = vunpack.c.l.b16 %v7335
        %v7944 = vunpack.c.l.b16 %v7349
        %v7945 = vunpack.c.l.b16 %v7363
        %v7946 = vunpack.c.l.b16 %v7377
        %v7947 = vunpack.c.l.b16 %v7391
        %v7948 = vpack.c.b16 %v7941, %v7940
        %v7949 = vpack.c.b16 %v7943, %v7942
        %v7950 = vpack.c.b16 %v7945, %v7944
        %v7951 = vpack.c.b16 %v7947, %v7946
        %7952 = vrot.lane.b32.xlu0 %v7948, 48
        %v7953 = vpop.permute.xlu0 %7952
        %7954 = vrot.lane.b32.xlu0 %v7949, 48
        %v7955 = vpop.permute.xlu0 %7954
        %7956 = vrot.lane.b32.xlu0 %v7950, 48
        %v7957 = vpop.permute.xlu0 %7956
        %7958 = vrot.lane.b32.xlu0 %v7951, 48
        %v7959 = vpop.permute.xlu0 %7958
        %v7960 = vunpack.c.l.b16 %v7421
        %v7961 = vunpack.c.l.b16 %v7435
        %v7962 = vunpack.c.l.b16 %v7449
        %v7963 = vunpack.c.l.b16 %v7463
        %v7964 = vunpack.c.l.b16 %v7477
        %v7965 = vunpack.c.l.b16 %v7491
        %v7966 = vunpack.c.l.b16 %v7505
        %v7967 = vunpack.c.l.b16 %v7519
        %v7968 = vpack.c.b16 %v7961, %v7960
        %v7969 = vpack.c.b16 %v7963, %v7962
        %v7970 = vpack.c.b16 %v7965, %v7964
        %v7971 = vpack.c.b16 %v7967, %v7966
        %7972 = vrot.lane.b32.xlu0 %v7968, 64
        %v7973 = vpop.permute.xlu0 %7972
        %7974 = vrot.lane.b32.xlu0 %v7969, 64
        %v7975 = vpop.permute.xlu0 %7974
        %7976 = vrot.lane.b32.xlu0 %v7970, 64
        %v7977 = vpop.permute.xlu0 %7976
        %7978 = vrot.lane.b32.xlu0 %v7971, 64
        %v7979 = vpop.permute.xlu0 %7978
        %v7980 = vunpack.c.l.b16 %v7547
        %v7981 = vunpack.c.l.b16 %v7551
        %v7982 = vunpack.c.l.b16 %v7555
        %v7983 = vunpack.c.l.b16 %v7559
        %v7984 = vunpack.c.l.b16 %v7563
        %v7985 = vunpack.c.l.b16 %v7567
        %v7986 = vunpack.c.l.b16 %v7571
        %v7987 = vunpack.c.l.b16 %v7575
        %v7988 = vpack.c.b16 %v7981, %v7980
        %v7989 = vpack.c.b16 %v7983, %v7982
        %v7990 = vpack.c.b16 %v7985, %v7984
        %v7991 = vpack.c.b16 %v7987, %v7986
        %7992 = vrot.lane.b32.xlu0 %v7988, 80
        %v7993 = vpop.permute.xlu0 %7992
        %7994 = vrot.lane.b32.xlu0 %v7989, 80
        %v7995 = vpop.permute.xlu0 %7994
        %7996 = vrot.lane.b32.xlu0 %v7990, 80
        %v7997 = vpop.permute.xlu0 %7996
        %7998 = vrot.lane.b32.xlu0 %v7991, 80
        %v7999 = vpop.permute.xlu0 %7998
        %v8000 = vunpack.c.l.b16 %v7605
        %v8001 = vunpack.c.l.b16 %v7619
        %v8002 = vunpack.c.l.b16 %v7633
        %v8003 = vunpack.c.l.b16 %v7647
        %v8004 = vunpack.c.l.b16 %v7661
        %v8005 = vunpack.c.l.b16 %v7675
        %v8006 = vunpack.c.l.b16 %v7689
        %v8007 = vunpack.c.l.b16 %v7703
        %v8008 = vpack.c.b16 %v8001, %v8000
        %v8009 = vpack.c.b16 %v8003, %v8002
        %v8010 = vpack.c.b16 %v8005, %v8004
        %v8011 = vpack.c.b16 %v8007, %v8006
        %8012 = vrot.lane.b32.xlu0 %v8008, 96
        %v8013 = vpop.permute.xlu0 %8012
        %8014 = vrot.lane.b32.xlu0 %v8009, 96
        %v8015 = vpop.permute.xlu0 %8014
        %8016 = vrot.lane.b32.xlu0 %v8010, 96
        %v8017 = vpop.permute.xlu0 %8016
        %8018 = vrot.lane.b32.xlu0 %v8011, 96
        %v8019 = vpop.permute.xlu0 %8018
        %v8020 = vunpack.c.l.b16 %v7733
        %v8021 = vunpack.c.l.b16 %v7747
        %v8022 = vunpack.c.l.b16 %v7761
        %v8023 = vunpack.c.l.b16 %v7775
        %v8024 = vunpack.c.l.b16 %v7789
        %v8025 = vunpack.c.l.b16 %v7803
        %v8026 = vunpack.c.l.b16 %v7817
        %v8027 = vunpack.c.l.b16 %v7831
        %v8028 = vpack.c.b16 %v8021, %v8020
        %v8029 = vpack.c.b16 %v8023, %v8022
        %v8030 = vpack.c.b16 %v8025, %v8024
        %v8031 = vpack.c.b16 %v8027, %v8026
        %8032 = vrot.lane.b32.xlu0 %v8028, 112
        %v8033 = vpop.permute.xlu0 %8032
        %8034 = vrot.lane.b32.xlu0 %v8029, 112
        %v8035 = vpop.permute.xlu0 %8034
        %8036 = vrot.lane.b32.xlu0 %v8030, 112
        %v8037 = vpop.permute.xlu0 %8036
        %8038 = vrot.lane.b32.xlu0 %v8031, 112
        %v8039 = vpop.permute.xlu0 %8038
        %v8040 = vunpack.c.l.b16 %v7859
        %v8041 = vunpack.c.l.b16 %v7863
        %v8042 = vunpack.c.l.b16 %v7867
        %v8043 = vunpack.c.l.b16 %v7871
        %v8044 = vunpack.c.l.b16 %v7875
        %v8045 = vunpack.c.l.b16 %v7879
        %v8046 = vunpack.c.l.b16 %v7883
        %v8047 = vunpack.c.l.b16 %v7887
        %v8048 = vpack.c.b16 %v8041, %v8040
        %v8049 = vpack.c.b16 %v8043, %v8042
        %v8050 = vpack.c.b16 %v8045, %v8044
        %v8051 = vpack.c.b16 %v8047, %v8046
        %v8054 = vsel %vm1516, %v7896, %v7913
        %v8057 = vsel %vm1516, %v7897, %v7915
        %v8060 = vsel %vm1516, %v7898, %v7917
        %v8063 = vsel %vm1516, %v7899, %v7919
        %v8065 = vsel %vm1552, %v8054, %v7933
        %v8067 = vsel %vm1552, %v8057, %v7935
        %v8069 = vsel %vm1552, %v8060, %v7937
        %v8071 = vsel %vm1552, %v8063, %v7939
        %v8073 = vsel %vm6751, %v8065, %v7953
        %v8075 = vsel %vm6751, %v8067, %v7955
        %v8077 = vsel %vm6751, %v8069, %v7957
        %v8079 = vsel %vm6751, %v8071, %v7959
        %v8081 = vsel %vm2521, %v8073, %v7973
        %v8083 = vsel %vm2521, %v8075, %v7975
        %v8085 = vsel %vm2521, %v8077, %v7977
        %v8087 = vsel %vm2521, %v8079, %v7979
        %v8089 = vsel %vm6768, %v8081, %v7993
        %v8091 = vsel %vm6768, %v8083, %v7995
        %v8093 = vsel %vm6768, %v8085, %v7997
        %v8095 = vsel %vm6768, %v8087, %v7999
        %v8097 = vsel %vm2530, %v8089, %v8013
        %v8099 = vsel %vm2530, %v8091, %v8015
        %v8101 = vsel %vm2530, %v8093, %v8017
        %v8103 = vsel %vm2530, %v8095, %v8019
        %v8105 = vsel %vm6785, %v8097, %v8033
        %v8108 = vsel %vm6785, %v8099, %v8035
        %v8111 = vsel %vm6785, %v8101, %v8037
        %v8114 = vsel %vm6785, %v8103, %v8039
        %v8116 = vld [vmem:[%s9] sm:$0xf]
        %v8117 = vld [vmem:[%s9 + $0x4] sm:$0xf]
        %v8118 = vld [vmem:[%s9 + $0x8] sm:$0xf]
        %v8119 = vld [vmem:[%s9 + $0xc] sm:$0xf]
        %v8120 = vld [vmem:[%s9 + $0x10] sm:$0xf]
        %v8121 = vld [vmem:[%s9 + $0x14] sm:$0xf]
        %v8122 = vld [vmem:[%s9 + $0x18] sm:$0xf]
        %v8123 = vld [vmem:[%s9 + $0x1c] sm:$0xf]
        %v8124 = vld [vmem:[%s9 + $0x20] sm:$0xf]
        %v8125 = vld [vmem:[%s9 + $0x24] sm:$0xf]
        %v8126 = vld [vmem:[%s9 + $0x28] sm:$0xf]
        %v8127 = vld [vmem:[%s9 + $0x2c] sm:$0xf]
        %v8128 = vld [vmem:[%s9 + $0x30] sm:$0xf]
        %v8129 = vld [vmem:[%s9 + $0x34] sm:$0xf]
        %v8130 = vld [vmem:[%s9 + $0x38] sm:$0xf]
        %v8131 = vld [vmem:[%s9 + $0x3c] sm:$0xf]
        %v8132 = vld [vmem:[%s9 + $0x40] sm:$0xf]
        %v8133 = vld [vmem:[%s9 + $0x44] sm:$0xf]
        %v8134 = vld [vmem:[#allocation12] sm:$0x1]
        %v8136 = vperm.slane %v8134, 0
        %v8156 = vunpack.c.l.b16 %v8116
        %v8157 = vunpack.c.l.b16 %v8117
        %v8158 = vunpack.c.l.b16 %v8118
        %v8159 = vunpack.c.l.b16 %v8119
        %v8160 = vunpack.c.l.b16 %v8120
        %v8161 = vunpack.c.l.b16 %v8121
        %v8162 = vunpack.c.l.b16 %v8122
        %v8163 = vunpack.c.l.b16 %v8123
        %v8164 = vunpack.c.l.b16 %v8124
        %v8165 = vunpack.c.l.b16 %v8125
        %v8166 = vunpack.c.l.b16 %v8126
        %v8167 = vunpack.c.l.b16 %v8127
        %v8168 = vunpack.c.l.b16 %v8128
        %v8169 = vunpack.c.l.b16 %v8129
        %v8170 = vunpack.c.l.b16 %v8130
        %v8171 = vunpack.c.l.b16 %v8131
        %v8172 = vunpack.c.l.b16 %v8132
        %v8173 = vunpack.c.l.b16 %v8133
        %v8174 = vpack.c.b16 %v8157, %v8156
        %v8175 = vpack.c.b16 %v8159, %v8158
        %v8176 = vpack.c.b16 %v8161, %v8160
        %v8177 = vpack.c.b16 %v8163, %v8162
        %v8178 = vpack.c.b16 %v8165, %v8164
        %v8179 = vpack.c.b16 %v8167, %v8166
        %v8180 = vpack.c.b16 %v8169, %v8168
        %v8181 = vpack.c.b16 %v8171, %v8170
        %v8182 = vpack.c.b16 %v8173, %v8172
        %v8193 = vsel %vm1516, %v8048, 0
        %v8196 = vsel %vm1516, %v8049, 0
        %v8199 = vsel %vm1516, %v8050, 0
        %v8202 = vsel %vm1516, %v8051, 0
        %8204 = vmatpush.bf16.msra.mxu0 %v8181
        %8205 = vmatpush.bf16.msra.mxu0 %v8180
        %8206 = vmatpush.bf16.msra.mxu0 %v8179
        %8207 = vmatpush.bf16.msra.mxu0 %v8178
        %8208 = vmatpush.bf16.msra.mxu0 %v8177
        %8209 = vmatpush.bf16.msra.mxu0 %v8176
        %8210 = vmatpush.bf16.msra.mxu0 %v8175
        %8211 = vmatpush.bf16.msra.mxu0 %v8174
        %8212 = vmatmul.bf16.gmra.mxu0 %v8105
        %v8213 = vpop.f32.mrf.mxu0
        %v8214 = vadd.f32 %v8136, %v8213
        %v8215 = vpop.f32.mrf.mxu0
        %v8216 = vadd.f32 %v8136, %v8215
        %8217 = vmatmul.bf16.gmra.mxu0 %v8108
        %v8218 = vpop.f32.mrf.mxu0
        %v8219 = vadd.f32 %v8136, %v8218
        %v8220 = vpop.f32.mrf.mxu0
        %v8221 = vadd.f32 %v8136, %v8220
        %8222 = vmatmul.bf16.gmra.mxu0 %v8111
        %v8223 = vpop.f32.mrf.mxu0
        %v8224 = vadd.f32 %v8136, %v8223
        %v8225 = vpop.f32.mrf.mxu0
        %v8226 = vadd.f32 %v8136, %v8225
        %8227 = vmatmul.bf16.gmra.mxu0 %v8114
        %v8228 = vpop.f32.mrf.mxu0
        %v8229 = vadd.f32 %v8136, %v8228
        %v8230 = vpop.f32.mrf.mxu0
        %v8231 = vadd.f32 %v8136, %v8230
        %8232 = vdwg.mxu0
        %8233 = vmatpush.bf16.msra.mxu0 0
        %8234 = vmatpush.bf16.msra.mxu0 0
        %8235 = vmatpush.bf16.msra.mxu0 0
        %8236 = vmatpush.bf16.msra.mxu0 0
        %8237 = vmatpush.bf16.msra.mxu0 0
        %8238 = vmatpush.bf16.msra.mxu0 0
        %8239 = vmatpush.bf16.msra.mxu0 0
        %8240 = vmatpush.bf16.msra.mxu0 %v8182
        %8241 = vmatmul.bf16.gmra.mxu0 %v8193
        %v8242 = vpop.f32.mrf.mxu0
        %v8243 = vadd.f32 %v8214, %v8242
        %v8244 = vpop.f32.mrf.mxu0
        %v8245 = vadd.f32 %v8216, %v8244
        %8246 = vmatmul.bf16.gmra.mxu0 %v8196
        %v8247 = vpop.f32.mrf.mxu0
        %v8248 = vadd.f32 %v8219, %v8247
        %v8249 = vpop.f32.mrf.mxu0
        %v8250 = vadd.f32 %v8221, %v8249
        %8251 = vmatmul.bf16.gmra.mxu0 %v8199
        %v8252 = vpop.f32.mrf.mxu0
        %v8253 = vadd.f32 %v8224, %v8252
        %v8254 = vpop.f32.mrf.mxu0
        %v8255 = vadd.f32 %v8226, %v8254
        %8256 = vmatmul.bf16.gmra.mxu0 %v8202
        %v8257 = vpop.f32.mrf.mxu0
        %v8258 = vadd.f32 %v8229, %v8257
        %v8259 = vpop.f32.mrf.mxu0
        %v8260 = vadd.f32 %v8231, %v8259
        %8261 = vdwg.mxu0
        %s8262 = scalar_lea.vmem %s459, 64
        %8263 = vst.msk [vmem:[%s8262] sm:$0xff] %vm1507, %v8243
        %8264 = vst.msk [vmem:[%s8262 + $0x8] sm:$0xff] %vm1507, %v8245
        %8265 = vst.msk [vmem:[%s8262 + $0x10] sm:$0xff] %vm1507, %v8248
        %8266 = vst.msk [vmem:[%s8262 + $0x18] sm:$0xff] %vm1507, %v8250
        %8267 = vst.msk [vmem:[%s8262 + $0x20] sm:$0xff] %vm1507, %v8253
        %8268 = vst.msk [vmem:[%s8262 + $0x28] sm:$0xff] %vm1507, %v8255
        %8269 = vst.msk [vmem:[%s8262 + $0x30] sm:$0xff] %vm1507, %v8258
        %8270 = vst.msk [vmem:[%s8262 + $0x38] sm:$0xff] %vm1507, %v8260
        %v8271 = vld [vmem:[%s5530] sm:$0xf]
        %v8272 = vld [vmem:[%s5530 + $0x8] sm:$0xf]
        %v8273 = vld [vmem:[%s5530 + $0x10] sm:$0xf]
        %v8274 = vld [vmem:[%s5530 + $0x18] sm:$0xf]
        %v8275 = vld [vmem:[%s5530 + $0x20] sm:$0xf]
        %v8276 = vld [vmem:[%s5530 + $0x28] sm:$0xf]
        %v8277 = vld [vmem:[%s5530 + $0x30] sm:$0xf]
        %v8278 = vld [vmem:[%s5530 + $0x38] sm:$0xf]
        %v8279 = vld [vmem:[%s5429] sm:$0xf]
        %v8280 = vld [vmem:[%s5429 + $0x4] sm:$0x1]
        %v8281 = vld [vmem:[%s5429 + $0x8] sm:$0xf]
        %v8282 = vld [vmem:[%s5429 + $0xc] sm:$0x1]
        %v8283 = vld [vmem:[%s5429 + $0x10] sm:$0xf]
        %v8284 = vld [vmem:[%s5429 + $0x14] sm:$0x1]
        %v8285 = vld [vmem:[%s5429 + $0x18] sm:$0xf]
        %v8286 = vld [vmem:[%s5429 + $0x1c] sm:$0x1]
        %v8287 = vld [vmem:[%s5429 + $0x20] sm:$0xf]
        %v8288 = vld [vmem:[%s5429 + $0x24] sm:$0x1]
        %v8289 = vld [vmem:[%s5429 + $0x28] sm:$0xf]
        %v8290 = vld [vmem:[%s5429 + $0x2c] sm:$0x1]
        %v8291 = vld [vmem:[%s5429 + $0x30] sm:$0xf]
        %v8292 = vld [vmem:[%s5429 + $0x34] sm:$0x1]
        %v8293 = vld [vmem:[%s5429 + $0x38] sm:$0xf]
        %v8294 = vld [vmem:[%s5429 + $0x3c] sm:$0x1]
        %v8296 = vshrl.u32 %v8279, 16
        %v8298 = vrot.slane %v8296, 4
        %v8299 = vshll.u32 %v8279, 16
        %v8301 = vrot.slane %v8299, 5
        %v8302 = vor.u32 %v8298, %v8301
        %v8303 = vrot.slane %v8302, 4
        %v8305 = vshll.u32 %v8280, 16
        %v8307 = vrot.slane %v8305, 5
        %v8308 = vsel %vm748, %v8303, %v8307
        %v8310 = vshrl.u32 %v8281, 16
        %v8312 = vrot.slane %v8310, 4
        %v8313 = vshll.u32 %v8281, 16
        %v8315 = vrot.slane %v8313, 5
        %v8316 = vor.u32 %v8312, %v8315
        %v8317 = vrot.slane %v8316, 4
        %v8319 = vshll.u32 %v8282, 16
        %v8321 = vrot.slane %v8319, 5
        %v8322 = vsel %vm748, %v8317, %v8321
        %v8324 = vshrl.u32 %v8283, 16
        %v8326 = vrot.slane %v8324, 4
        %v8327 = vshll.u32 %v8283, 16
        %v8329 = vrot.slane %v8327, 5
        %v8330 = vor.u32 %v8326, %v8329
        %v8331 = vrot.slane %v8330, 4
        %v8333 = vshll.u32 %v8284, 16
        %v8335 = vrot.slane %v8333, 5
        %v8336 = vsel %vm748, %v8331, %v8335
        %v8338 = vshrl.u32 %v8285, 16
        %v8340 = vrot.slane %v8338, 4
        %v8341 = vshll.u32 %v8285, 16
        %v8343 = vrot.slane %v8341, 5
        %v8344 = vor.u32 %v8340, %v8343
        %v8345 = vrot.slane %v8344, 4
        %v8347 = vshll.u32 %v8286, 16
        %v8349 = vrot.slane %v8347, 5
        %v8350 = vsel %vm748, %v8345, %v8349
        %v8352 = vshrl.u32 %v8287, 16
        %v8354 = vrot.slane %v8352, 4
        %v8355 = vshll.u32 %v8287, 16
        %v8357 = vrot.slane %v8355, 5
        %v8358 = vor.u32 %v8354, %v8357
        %v8359 = vrot.slane %v8358, 4
        %v8361 = vshll.u32 %v8288, 16
        %v8363 = vrot.slane %v8361, 5
        %v8364 = vsel %vm748, %v8359, %v8363
        %v8366 = vshrl.u32 %v8289, 16
        %v8368 = vrot.slane %v8366, 4
        %v8369 = vshll.u32 %v8289, 16
        %v8371 = vrot.slane %v8369, 5
        %v8372 = vor.u32 %v8368, %v8371
        %v8373 = vrot.slane %v8372, 4
        %v8375 = vshll.u32 %v8290, 16
        %v8377 = vrot.slane %v8375, 5
        %v8378 = vsel %vm748, %v8373, %v8377
        %v8380 = vshrl.u32 %v8291, 16
        %v8382 = vrot.slane %v8380, 4
        %v8383 = vshll.u32 %v8291, 16
        %v8385 = vrot.slane %v8383, 5
        %v8386 = vor.u32 %v8382, %v8385
        %v8387 = vrot.slane %v8386, 4
        %v8389 = vshll.u32 %v8292, 16
        %v8391 = vrot.slane %v8389, 5
        %v8392 = vsel %vm748, %v8387, %v8391
        %v8394 = vshrl.u32 %v8293, 16
        %v8396 = vrot.slane %v8394, 4
        %v8397 = vshll.u32 %v8293, 16
        %v8399 = vrot.slane %v8397, 5
        %v8400 = vor.u32 %v8396, %v8399
        %v8401 = vrot.slane %v8400, 4
        %v8403 = vshll.u32 %v8294, 16
        %v8405 = vrot.slane %v8403, 5
        %v8406 = vsel %vm748, %v8401, %v8405
        %v8407 = vld [vmem:[%s5530 + $0x4] sm:$0x1]
        %v8408 = vld [vmem:[%s5530 + $0xc] sm:$0x1]
        %v8409 = vld [vmem:[%s5530 + $0x14] sm:$0x1]
        %v8410 = vld [vmem:[%s5530 + $0x1c] sm:$0x1]
        %v8411 = vld [vmem:[%s5530 + $0x24] sm:$0x1]
        %v8412 = vld [vmem:[%s5530 + $0x2c] sm:$0x1]
        %v8413 = vld [vmem:[%s5530 + $0x34] sm:$0x1]
        %v8414 = vld [vmem:[%s5530 + $0x3c] sm:$0x1]
        %v8416 = vshrl.u32 %v8271, 16
        %v8418 = vrot.slane %v8416, 4
        %v8419 = vshll.u32 %v8271, 16
        %v8421 = vrot.slane %v8419, 5
        %v8422 = vor.u32 %v8418, %v8421
        %v8423 = vrot.slane %v8422, 4
        %v8425 = vshll.u32 %v8407, 16
        %v8427 = vrot.slane %v8425, 5
        %v8428 = vsel %vm748, %v8423, %v8427
        %v8430 = vshrl.u32 %v8272, 16
        %v8432 = vrot.slane %v8430, 4
        %v8433 = vshll.u32 %v8272, 16
        %v8435 = vrot.slane %v8433, 5
        %v8436 = vor.u32 %v8432, %v8435
        %v8437 = vrot.slane %v8436, 4
        %v8439 = vshll.u32 %v8408, 16
        %v8441 = vrot.slane %v8439, 5
        %v8442 = vsel %vm748, %v8437, %v8441
        %v8444 = vshrl.u32 %v8273, 16
        %v8446 = vrot.slane %v8444, 4
        %v8447 = vshll.u32 %v8273, 16
        %v8449 = vrot.slane %v8447, 5
        %v8450 = vor.u32 %v8446, %v8449
        %v8451 = vrot.slane %v8450, 4
        %v8453 = vshll.u32 %v8409, 16
        %v8455 = vrot.slane %v8453, 5
        %v8456 = vsel %vm748, %v8451, %v8455
        %v8458 = vshrl.u32 %v8274, 16
        %v8460 = vrot.slane %v8458, 4
        %v8461 = vshll.u32 %v8274, 16
        %v8463 = vrot.slane %v8461, 5
        %v8464 = vor.u32 %v8460, %v8463
        %v8465 = vrot.slane %v8464, 4
        %v8467 = vshll.u32 %v8410, 16
        %v8469 = vrot.slane %v8467, 5
        %v8470 = vsel %vm748, %v8465, %v8469
        %v8472 = vshrl.u32 %v8275, 16
        %v8474 = vrot.slane %v8472, 4
        %v8475 = vshll.u32 %v8275, 16
        %v8477 = vrot.slane %v8475, 5
        %v8478 = vor.u32 %v8474, %v8477
        %v8479 = vrot.slane %v8478, 4
        %v8481 = vshll.u32 %v8411, 16
        %v8483 = vrot.slane %v8481, 5
        %v8484 = vsel %vm748, %v8479, %v8483
        %v8486 = vshrl.u32 %v8276, 16
        %v8488 = vrot.slane %v8486, 4
        %v8489 = vshll.u32 %v8276, 16
        %v8491 = vrot.slane %v8489, 5
        %v8492 = vor.u32 %v8488, %v8491
        %v8493 = vrot.slane %v8492, 4
        %v8495 = vshll.u32 %v8412, 16
        %v8497 = vrot.slane %v8495, 5
        %v8498 = vsel %vm748, %v8493, %v8497
        %v8500 = vshrl.u32 %v8277, 16
        %v8502 = vrot.slane %v8500, 4
        %v8503 = vshll.u32 %v8277, 16
        %v8505 = vrot.slane %v8503, 5
        %v8506 = vor.u32 %v8502, %v8505
        %v8507 = vrot.slane %v8506, 4
        %v8509 = vshll.u32 %v8413, 16
        %v8511 = vrot.slane %v8509, 5
        %v8512 = vsel %vm748, %v8507, %v8511
        %v8514 = vshrl.u32 %v8278, 16
        %v8516 = vrot.slane %v8514, 4
        %v8517 = vshll.u32 %v8278, 16
        %v8519 = vrot.slane %v8517, 5
        %v8520 = vor.u32 %v8516, %v8519
        %v8521 = vrot.slane %v8520, 4
        %v8523 = vshll.u32 %v8414, 16
        %v8525 = vrot.slane %v8523, 5
        %v8526 = vsel %vm748, %v8521, %v8525
        %v8527 = vld [vmem:[%s5724] sm:$0xf]
        %v8528 = vld [vmem:[%s5724 + $0x8] sm:$0xf]
        %v8529 = vld [vmem:[%s5724 + $0x10] sm:$0xf]
        %v8530 = vld [vmem:[%s5724 + $0x18] sm:$0xf]
        %v8531 = vld [vmem:[%s5724 + $0x20] sm:$0xf]
        %v8532 = vld [vmem:[%s5724 + $0x28] sm:$0xf]
        %v8533 = vld [vmem:[%s5724 + $0x30] sm:$0xf]
        %v8534 = vld [vmem:[%s5724 + $0x38] sm:$0xf]
        %v8535 = vld [vmem:[%s5627] sm:$0xf]
        %v8536 = vld [vmem:[%s5627 + $0x4] sm:$0x1]
        %v8537 = vld [vmem:[%s5627 + $0x8] sm:$0xf]
        %v8538 = vld [vmem:[%s5627 + $0xc] sm:$0x1]
        %v8539 = vld [vmem:[%s5627 + $0x10] sm:$0xf]
        %v8540 = vld [vmem:[%s5627 + $0x14] sm:$0x1]
        %v8541 = vld [vmem:[%s5627 + $0x18] sm:$0xf]
        %v8542 = vld [vmem:[%s5627 + $0x1c] sm:$0x1]
        %v8543 = vld [vmem:[%s5627 + $0x20] sm:$0xf]
        %v8544 = vld [vmem:[%s5627 + $0x24] sm:$0x1]
        %v8545 = vld [vmem:[%s5627 + $0x28] sm:$0xf]
        %v8546 = vld [vmem:[%s5627 + $0x2c] sm:$0x1]
        %v8547 = vld [vmem:[%s5627 + $0x30] sm:$0xf]
        %v8548 = vld [vmem:[%s5627 + $0x34] sm:$0x1]
        %v8549 = vld [vmem:[%s5627 + $0x38] sm:$0xf]
        %v8550 = vld [vmem:[%s5627 + $0x3c] sm:$0x1]
        %v8552 = vshrl.u32 %v8535, 16
        %v8554 = vrot.slane %v8552, 4
        %v8555 = vshll.u32 %v8535, 16
        %v8557 = vrot.slane %v8555, 5
        %v8558 = vor.u32 %v8554, %v8557
        %v8559 = vrot.slane %v8558, 4
        %v8561 = vshll.u32 %v8536, 16
        %v8563 = vrot.slane %v8561, 5
        %v8564 = vsel %vm748, %v8559, %v8563
        %v8566 = vshrl.u32 %v8537, 16
        %v8568 = vrot.slane %v8566, 4
        %v8569 = vshll.u32 %v8537, 16
        %v8571 = vrot.slane %v8569, 5
        %v8572 = vor.u32 %v8568, %v8571
        %v8573 = vrot.slane %v8572, 4
        %v8575 = vshll.u32 %v8538, 16
        %v8577 = vrot.slane %v8575, 5
        %v8578 = vsel %vm748, %v8573, %v8577
        %v8580 = vshrl.u32 %v8539, 16
        %v8582 = vrot.slane %v8580, 4
        %v8583 = vshll.u32 %v8539, 16
        %v8585 = vrot.slane %v8583, 5
        %v8586 = vor.u32 %v8582, %v8585
        %v8587 = vrot.slane %v8586, 4
        %v8589 = vshll.u32 %v8540, 16
        %v8591 = vrot.slane %v8589, 5
        %v8592 = vsel %vm748, %v8587, %v8591
        %v8594 = vshrl.u32 %v8541, 16
        %v8596 = vrot.slane %v8594, 4
        %v8597 = vshll.u32 %v8541, 16
        %v8599 = vrot.slane %v8597, 5
        %v8600 = vor.u32 %v8596, %v8599
        %v8601 = vrot.slane %v8600, 4
        %v8603 = vshll.u32 %v8542, 16
        %v8605 = vrot.slane %v8603, 5
        %v8606 = vsel %vm748, %v8601, %v8605
        %v8608 = vshrl.u32 %v8543, 16
        %v8610 = vrot.slane %v8608, 4
        %v8611 = vshll.u32 %v8543, 16
        %v8613 = vrot.slane %v8611, 5
        %v8614 = vor.u32 %v8610, %v8613
        %v8615 = vrot.slane %v8614, 4
        %v8617 = vshll.u32 %v8544, 16
        %v8619 = vrot.slane %v8617, 5
        %v8620 = vsel %vm748, %v8615, %v8619
        %v8622 = vshrl.u32 %v8545, 16
        %v8624 = vrot.slane %v8622, 4
        %v8625 = vshll.u32 %v8545, 16
        %v8627 = vrot.slane %v8625, 5
        %v8628 = vor.u32 %v8624, %v8627
        %v8629 = vrot.slane %v8628, 4
        %v8631 = vshll.u32 %v8546, 16
        %v8633 = vrot.slane %v8631, 5
        %v8634 = vsel %vm748, %v8629, %v8633
        %v8636 = vshrl.u32 %v8547, 16
        %v8638 = vrot.slane %v8636, 4
        %v8639 = vshll.u32 %v8547, 16
        %v8641 = vrot.slane %v8639, 5
        %v8642 = vor.u32 %v8638, %v8641
        %v8643 = vrot.slane %v8642, 4
        %v8645 = vshll.u32 %v8548, 16
        %v8647 = vrot.slane %v8645, 5
        %v8648 = vsel %vm748, %v8643, %v8647
        %v8650 = vshrl.u32 %v8549, 16
        %v8652 = vrot.slane %v8650, 4
        %v8653 = vshll.u32 %v8549, 16
        %v8655 = vrot.slane %v8653, 5
        %v8656 = vor.u32 %v8652, %v8655
        %v8657 = vrot.slane %v8656, 4
        %v8659 = vshll.u32 %v8550, 16
        %v8661 = vrot.slane %v8659, 5
        %v8662 = vsel %vm748, %v8657, %v8661
        %v8663 = vld [vmem:[%s5724 + $0x4] sm:$0x1]
        %v8664 = vld [vmem:[%s5724 + $0xc] sm:$0x1]
        %v8665 = vld [vmem:[%s5724 + $0x14] sm:$0x1]
        %v8666 = vld [vmem:[%s5724 + $0x1c] sm:$0x1]
        %v8667 = vld [vmem:[%s5724 + $0x24] sm:$0x1]
        %v8668 = vld [vmem:[%s5724 + $0x2c] sm:$0x1]
        %v8669 = vld [vmem:[%s5724 + $0x34] sm:$0x1]
        %v8670 = vld [vmem:[%s5724 + $0x3c] sm:$0x1]
        %v8672 = vshrl.u32 %v8527, 16
        %v8674 = vrot.slane %v8672, 4
        %v8675 = vshll.u32 %v8527, 16
        %v8677 = vrot.slane %v8675, 5
        %v8678 = vor.u32 %v8674, %v8677
        %v8679 = vrot.slane %v8678, 4
        %v8681 = vshll.u32 %v8663, 16
        %v8683 = vrot.slane %v8681, 5
        %v8684 = vsel %vm748, %v8679, %v8683
        %v8686 = vshrl.u32 %v8528, 16
        %v8688 = vrot.slane %v8686, 4
        %v8689 = vshll.u32 %v8528, 16
        %v8691 = vrot.slane %v8689, 5
        %v8692 = vor.u32 %v8688, %v8691
        %v8693 = vrot.slane %v8692, 4
        %v8695 = vshll.u32 %v8664, 16
        %v8697 = vrot.slane %v8695, 5
        %v8698 = vsel %vm748, %v8693, %v8697
        %v8700 = vshrl.u32 %v8529, 16
        %v8702 = vrot.slane %v8700, 4
        %v8703 = vshll.u32 %v8529, 16
        %v8705 = vrot.slane %v8703, 5
        %v8706 = vor.u32 %v8702, %v8705
        %v8707 = vrot.slane %v8706, 4
        %v8709 = vshll.u32 %v8665, 16
        %v8711 = vrot.slane %v8709, 5
        %v8712 = vsel %vm748, %v8707, %v8711
        %v8714 = vshrl.u32 %v8530, 16
        %v8716 = vrot.slane %v8714, 4
        %v8717 = vshll.u32 %v8530, 16
        %v8719 = vrot.slane %v8717, 5
        %v8720 = vor.u32 %v8716, %v8719
        %v8721 = vrot.slane %v8720, 4
        %v8723 = vshll.u32 %v8666, 16
        %v8725 = vrot.slane %v8723, 5
        %v8726 = vsel %vm748, %v8721, %v8725
        %v8728 = vshrl.u32 %v8531, 16
        %v8730 = vrot.slane %v8728, 4
        %v8731 = vshll.u32 %v8531, 16
        %v8733 = vrot.slane %v8731, 5
        %v8734 = vor.u32 %v8730, %v8733
        %v8735 = vrot.slane %v8734, 4
        %v8737 = vshll.u32 %v8667, 16
        %v8739 = vrot.slane %v8737, 5
        %v8740 = vsel %vm748, %v8735, %v8739
        %v8742 = vshrl.u32 %v8532, 16
        %v8744 = vrot.slane %v8742, 4
        %v8745 = vshll.u32 %v8532, 16
        %v8747 = vrot.slane %v8745, 5
        %v8748 = vor.u32 %v8744, %v8747
        %v8749 = vrot.slane %v8748, 4
        %v8751 = vshll.u32 %v8668, 16
        %v8753 = vrot.slane %v8751, 5
        %v8754 = vsel %vm748, %v8749, %v8753
        %v8756 = vshrl.u32 %v8533, 16
        %v8758 = vrot.slane %v8756, 4
        %v8759 = vshll.u32 %v8533, 16
        %v8761 = vrot.slane %v8759, 5
        %v8762 = vor.u32 %v8758, %v8761
        %v8763 = vrot.slane %v8762, 4
        %v8765 = vshll.u32 %v8669, 16
        %v8767 = vrot.slane %v8765, 5
        %v8768 = vsel %vm748, %v8763, %v8767
        %v8770 = vshrl.u32 %v8534, 16
        %v8772 = vrot.slane %v8770, 4
        %v8773 = vshll.u32 %v8534, 16
        %v8775 = vrot.slane %v8773, 5
        %v8776 = vor.u32 %v8772, %v8775
        %v8777 = vrot.slane %v8776, 4
        %v8779 = vshll.u32 %v8670, 16
        %v8781 = vrot.slane %v8779, 5
        %v8782 = vsel %vm748, %v8777, %v8781
        %s8783 = scalar_lea.vmem [#allocation4], 96
        %v8784 = vld [vmem:[%s8783] sm:$0xf]
        %v8785 = vld [vmem:[%s8783 + $0x8] sm:$0xf]
        %v8786 = vld [vmem:[%s8783 + $0x10] sm:$0xf]
        %v8787 = vld [vmem:[%s8783 + $0x18] sm:$0xf]
        %v8788 = vld [vmem:[%s8783 + $0x20] sm:$0xf]
        %v8789 = vld [vmem:[%s8783 + $0x28] sm:$0xf]
        %v8790 = vld [vmem:[%s8783 + $0x30] sm:$0xf]
        %v8791 = vld [vmem:[%s8783 + $0x38] sm:$0xf]
        %s8792 = scalar_lea.vmem [#allocation4], 16
        %v8793 = vld [vmem:[%s8792] sm:$0xf]
        %v8794 = vld [vmem:[%s8792 + $0x4] sm:$0x1]
        %v8795 = vld [vmem:[%s8792 + $0x8] sm:$0xf]
        %v8796 = vld [vmem:[%s8792 + $0xc] sm:$0x1]
        %v8797 = vld [vmem:[%s8792 + $0x10] sm:$0xf]
        %v8798 = vld [vmem:[%s8792 + $0x14] sm:$0x1]
        %v8799 = vld [vmem:[%s8792 + $0x18] sm:$0xf]
        %v8800 = vld [vmem:[%s8792 + $0x1c] sm:$0x1]
        %v8801 = vld [vmem:[%s8792 + $0x20] sm:$0xf]
        %v8802 = vld [vmem:[%s8792 + $0x24] sm:$0x1]
        %v8803 = vld [vmem:[%s8792 + $0x28] sm:$0xf]
        %v8804 = vld [vmem:[%s8792 + $0x2c] sm:$0x1]
        %v8805 = vld [vmem:[%s8792 + $0x30] sm:$0xf]
        %v8806 = vld [vmem:[%s8792 + $0x34] sm:$0x1]
        %v8807 = vld [vmem:[%s8792 + $0x38] sm:$0xf]
        %v8808 = vld [vmem:[%s8792 + $0x3c] sm:$0x1]
        %v8810 = vshrl.u32 %v8793, 16
        %v8812 = vrot.slane %v8810, 4
        %v8813 = vshll.u32 %v8793, 16
        %v8815 = vrot.slane %v8813, 5
        %v8816 = vor.u32 %v8812, %v8815
        %v8817 = vrot.slane %v8816, 4
        %v8819 = vshll.u32 %v8794, 16
        %v8821 = vrot.slane %v8819, 5
        %v8822 = vsel %vm748, %v8817, %v8821
        %v8824 = vshrl.u32 %v8795, 16
        %v8826 = vrot.slane %v8824, 4
        %v8827 = vshll.u32 %v8795, 16
        %v8829 = vrot.slane %v8827, 5
        %v8830 = vor.u32 %v8826, %v8829
        %v8831 = vrot.slane %v8830, 4
        %v8833 = vshll.u32 %v8796, 16
        %v8835 = vrot.slane %v8833, 5
        %v8836 = vsel %vm748, %v8831, %v8835
        %v8838 = vshrl.u32 %v8797, 16
        %v8840 = vrot.slane %v8838, 4
        %v8841 = vshll.u32 %v8797, 16
        %v8843 = vrot.slane %v8841, 5
        %v8844 = vor.u32 %v8840, %v8843
        %v8845 = vrot.slane %v8844, 4
        %v8847 = vshll.u32 %v8798, 16
        %v8849 = vrot.slane %v8847, 5
        %v8850 = vsel %vm748, %v8845, %v8849
        %v8852 = vshrl.u32 %v8799, 16
        %v8854 = vrot.slane %v8852, 4
        %v8855 = vshll.u32 %v8799, 16
        %v8857 = vrot.slane %v8855, 5
        %v8858 = vor.u32 %v8854, %v8857
        %v8859 = vrot.slane %v8858, 4
        %v8861 = vshll.u32 %v8800, 16
        %v8863 = vrot.slane %v8861, 5
        %v8864 = vsel %vm748, %v8859, %v8863
        %v8866 = vshrl.u32 %v8801, 16
        %v8868 = vrot.slane %v8866, 4
        %v8869 = vshll.u32 %v8801, 16
        %v8871 = vrot.slane %v8869, 5
        %v8872 = vor.u32 %v8868, %v8871
        %v8873 = vrot.slane %v8872, 4
        %v8875 = vshll.u32 %v8802, 16
        %v8877 = vrot.slane %v8875, 5
        %v8878 = vsel %vm748, %v8873, %v8877
        %v8880 = vshrl.u32 %v8803, 16
        %v8882 = vrot.slane %v8880, 4
        %v8883 = vshll.u32 %v8803, 16
        %v8885 = vrot.slane %v8883, 5
        %v8886 = vor.u32 %v8882, %v8885
        %v8887 = vrot.slane %v8886, 4
        %v8889 = vshll.u32 %v8804, 16
        %v8891 = vrot.slane %v8889, 5
        %v8892 = vsel %vm748, %v8887, %v8891
        %v8894 = vshrl.u32 %v8805, 16
        %v8896 = vrot.slane %v8894, 4
        %v8897 = vshll.u32 %v8805, 16
        %v8899 = vrot.slane %v8897, 5
        %v8900 = vor.u32 %v8896, %v8899
        %v8901 = vrot.slane %v8900, 4
        %v8903 = vshll.u32 %v8806, 16
        %v8905 = vrot.slane %v8903, 5
        %v8906 = vsel %vm748, %v8901, %v8905
        %v8908 = vshrl.u32 %v8807, 16
        %v8910 = vrot.slane %v8908, 4
        %v8911 = vshll.u32 %v8807, 16
        %v8913 = vrot.slane %v8911, 5
        %v8914 = vor.u32 %v8910, %v8913
        %v8915 = vrot.slane %v8914, 4
        %v8917 = vshll.u32 %v8808, 16
        %v8919 = vrot.slane %v8917, 5
        %v8920 = vsel %vm748, %v8915, %v8919
        %v8921 = vld [vmem:[%s8783 + $0x4] sm:$0x1]
        %v8922 = vld [vmem:[%s8783 + $0xc] sm:$0x1]
        %v8923 = vld [vmem:[%s8783 + $0x14] sm:$0x1]
        %v8924 = vld [vmem:[%s8783 + $0x1c] sm:$0x1]
        %v8925 = vld [vmem:[%s8783 + $0x24] sm:$0x1]
        %v8926 = vld [vmem:[%s8783 + $0x2c] sm:$0x1]
        %v8927 = vld [vmem:[%s8783 + $0x34] sm:$0x1]
        %v8928 = vld [vmem:[%s8783 + $0x3c] sm:$0x1]
        %v8930 = vshrl.u32 %v8784, 16
        %v8932 = vrot.slane %v8930, 4
        %v8933 = vshll.u32 %v8784, 16
        %v8935 = vrot.slane %v8933, 5
        %v8936 = vor.u32 %v8932, %v8935
        %v8937 = vrot.slane %v8936, 4
        %v8939 = vshll.u32 %v8921, 16
        %v8941 = vrot.slane %v8939, 5
        %v8942 = vsel %vm748, %v8937, %v8941
        %v8944 = vshrl.u32 %v8785, 16
        %v8946 = vrot.slane %v8944, 4
        %v8947 = vshll.u32 %v8785, 16
        %v8949 = vrot.slane %v8947, 5
        %v8950 = vor.u32 %v8946, %v8949
        %v8951 = vrot.slane %v8950, 4
        %v8953 = vshll.u32 %v8922, 16
        %v8955 = vrot.slane %v8953, 5
        %v8956 = vsel %vm748, %v8951, %v8955
        %v8958 = vshrl.u32 %v8786, 16
        %v8960 = vrot.slane %v8958, 4
        %v8961 = vshll.u32 %v8786, 16
        %v8963 = vrot.slane %v8961, 5
        %v8964 = vor.u32 %v8960, %v8963
        %v8965 = vrot.slane %v8964, 4
        %v8967 = vshll.u32 %v8923, 16
        %v8969 = vrot.slane %v8967, 5
        %v8970 = vsel %vm748, %v8965, %v8969
        %v8972 = vshrl.u32 %v8787, 16
        %v8974 = vrot.slane %v8972, 4
        %v8975 = vshll.u32 %v8787, 16
        %v8977 = vrot.slane %v8975, 5
        %v8978 = vor.u32 %v8974, %v8977
        %v8979 = vrot.slane %v8978, 4
        %v8981 = vshll.u32 %v8924, 16
        %v8983 = vrot.slane %v8981, 5
        %v8984 = vsel %vm748, %v8979, %v8983
        %v8986 = vshrl.u32 %v8788, 16
        %v8988 = vrot.slane %v8986, 4
        %v8989 = vshll.u32 %v8788, 16
        %v8991 = vrot.slane %v8989, 5
        %v8992 = vor.u32 %v8988, %v8991
        %v8993 = vrot.slane %v8992, 4
        %v8995 = vshll.u32 %v8925, 16
        %v8997 = vrot.slane %v8995, 5
        %v8998 = vsel %vm748, %v8993, %v8997
        %v9000 = vshrl.u32 %v8789, 16
        %v9002 = vrot.slane %v9000, 4
        %v9003 = vshll.u32 %v8789, 16
        %v9005 = vrot.slane %v9003, 5
        %v9006 = vor.u32 %v9002, %v9005
        %v9007 = vrot.slane %v9006, 4
        %v9009 = vshll.u32 %v8926, 16
        %v9011 = vrot.slane %v9009, 5
        %v9012 = vsel %vm748, %v9007, %v9011
        %v9014 = vshrl.u32 %v8790, 16
        %v9016 = vrot.slane %v9014, 4
        %v9017 = vshll.u32 %v8790, 16
        %v9019 = vrot.slane %v9017, 5
        %v9020 = vor.u32 %v9016, %v9019
        %v9021 = vrot.slane %v9020, 4
        %v9023 = vshll.u32 %v8927, 16
        %v9025 = vrot.slane %v9023, 5
        %v9026 = vsel %vm748, %v9021, %v9025
        %v9028 = vshrl.u32 %v8791, 16
        %v9030 = vrot.slane %v9028, 4
        %v9031 = vshll.u32 %v8791, 16
        %v9033 = vrot.slane %v9031, 5
        %v9034 = vor.u32 %v9030, %v9033
        %v9035 = vrot.slane %v9034, 4
        %v9037 = vshll.u32 %v8928, 16
        %v9039 = vrot.slane %v9037, 5
        %v9040 = vsel %vm748, %v9035, %v9039
        %v9049 = vunpack.c.l.b16 %v8271
        %v9050 = vunpack.c.l.b16 %v8272
        %v9051 = vunpack.c.l.b16 %v8273
        %v9052 = vunpack.c.l.b16 %v8274
        %v9053 = vunpack.c.l.b16 %v8275
        %v9054 = vunpack.c.l.b16 %v8276
        %v9055 = vunpack.c.l.b16 %v8277
        %v9056 = vunpack.c.l.b16 %v8278
        %v9057 = vpack.c.b16 %v9050, %v9049
        %v9058 = vpack.c.b16 %v9052, %v9051
        %v9059 = vpack.c.b16 %v9054, %v9053
        %v9060 = vpack.c.b16 %v9056, %v9055
        %v9061 = vunpack.c.l.b16 %v8308
        %v9062 = vunpack.c.l.b16 %v8322
        %v9063 = vunpack.c.l.b16 %v8336
        %v9064 = vunpack.c.l.b16 %v8350
        %v9065 = vunpack.c.l.b16 %v8364
        %v9066 = vunpack.c.l.b16 %v8378
        %v9067 = vunpack.c.l.b16 %v8392
        %v9068 = vunpack.c.l.b16 %v8406
        %v9069 = vpack.c.b16 %v9062, %v9061
        %v9070 = vpack.c.b16 %v9064, %v9063
        %v9071 = vpack.c.b16 %v9066, %v9065
        %v9072 = vpack.c.b16 %v9068, %v9067
        %9073 = vrot.lane.b32.xlu0 %v9069, 16
        %v9074 = vpop.permute.xlu0 %9073
        %9075 = vrot.lane.b32.xlu0 %v9070, 16
        %v9076 = vpop.permute.xlu0 %9075
        %9077 = vrot.lane.b32.xlu0 %v9071, 16
        %v9078 = vpop.permute.xlu0 %9077
        %9079 = vrot.lane.b32.xlu0 %v9072, 16
        %v9080 = vpop.permute.xlu0 %9079
        %v9081 = vunpack.c.l.b16 %v8428
        %v9082 = vunpack.c.l.b16 %v8442
        %v9083 = vunpack.c.l.b16 %v8456
        %v9084 = vunpack.c.l.b16 %v8470
        %v9085 = vunpack.c.l.b16 %v8484
        %v9086 = vunpack.c.l.b16 %v8498
        %v9087 = vunpack.c.l.b16 %v8512
        %v9088 = vunpack.c.l.b16 %v8526
        %v9089 = vpack.c.b16 %v9082, %v9081
        %v9090 = vpack.c.b16 %v9084, %v9083
        %v9091 = vpack.c.b16 %v9086, %v9085
        %v9092 = vpack.c.b16 %v9088, %v9087
        %9093 = vrot.lane.b32.xlu0 %v9089, 32
        %v9094 = vpop.permute.xlu0 %9093
        %9095 = vrot.lane.b32.xlu0 %v9090, 32
        %v9096 = vpop.permute.xlu0 %9095
        %9097 = vrot.lane.b32.xlu0 %v9091, 32
        %v9098 = vpop.permute.xlu0 %9097
        %9099 = vrot.lane.b32.xlu0 %v9092, 32
        %v9100 = vpop.permute.xlu0 %9099
        %v9109 = vunpack.c.l.b16 %v8527
        %v9110 = vunpack.c.l.b16 %v8528
        %v9111 = vunpack.c.l.b16 %v8529
        %v9112 = vunpack.c.l.b16 %v8530
        %v9113 = vunpack.c.l.b16 %v8531
        %v9114 = vunpack.c.l.b16 %v8532
        %v9115 = vunpack.c.l.b16 %v8533
        %v9116 = vunpack.c.l.b16 %v8534
        %v9117 = vpack.c.b16 %v9110, %v9109
        %v9118 = vpack.c.b16 %v9112, %v9111
        %v9119 = vpack.c.b16 %v9114, %v9113
        %v9120 = vpack.c.b16 %v9116, %v9115
        %9121 = vrot.lane.b32.xlu0 %v9117, 48
        %v9122 = vpop.permute.xlu0 %9121
        %9123 = vrot.lane.b32.xlu0 %v9118, 48
        %v9124 = vpop.permute.xlu0 %9123
        %9125 = vrot.lane.b32.xlu0 %v9119, 48
        %v9126 = vpop.permute.xlu0 %9125
        %9127 = vrot.lane.b32.xlu0 %v9120, 48
        %v9128 = vpop.permute.xlu0 %9127
        %v9129 = vunpack.c.l.b16 %v8564
        %v9130 = vunpack.c.l.b16 %v8578
        %v9131 = vunpack.c.l.b16 %v8592
        %v9132 = vunpack.c.l.b16 %v8606
        %v9133 = vunpack.c.l.b16 %v8620
        %v9134 = vunpack.c.l.b16 %v8634
        %v9135 = vunpack.c.l.b16 %v8648
        %v9136 = vunpack.c.l.b16 %v8662
        %v9137 = vpack.c.b16 %v9130, %v9129
        %v9138 = vpack.c.b16 %v9132, %v9131
        %v9139 = vpack.c.b16 %v9134, %v9133
        %v9140 = vpack.c.b16 %v9136, %v9135
        %9141 = vrot.lane.b32.xlu0 %v9137, 64
        %v9142 = vpop.permute.xlu0 %9141
        %9143 = vrot.lane.b32.xlu0 %v9138, 64
        %v9144 = vpop.permute.xlu0 %9143
        %9145 = vrot.lane.b32.xlu0 %v9139, 64
        %v9146 = vpop.permute.xlu0 %9145
        %9147 = vrot.lane.b32.xlu0 %v9140, 64
        %v9148 = vpop.permute.xlu0 %9147
        %v9149 = vunpack.c.l.b16 %v8684
        %v9150 = vunpack.c.l.b16 %v8698
        %v9151 = vunpack.c.l.b16 %v8712
        %v9152 = vunpack.c.l.b16 %v8726
        %v9153 = vunpack.c.l.b16 %v8740
        %v9154 = vunpack.c.l.b16 %v8754
        %v9155 = vunpack.c.l.b16 %v8768
        %v9156 = vunpack.c.l.b16 %v8782
        %v9157 = vpack.c.b16 %v9150, %v9149
        %v9158 = vpack.c.b16 %v9152, %v9151
        %v9159 = vpack.c.b16 %v9154, %v9153
        %v9160 = vpack.c.b16 %v9156, %v9155
        %9161 = vrot.lane.b32.xlu0 %v9157, 80
        %v9162 = vpop.permute.xlu0 %9161
        %9163 = vrot.lane.b32.xlu0 %v9158, 80
        %v9164 = vpop.permute.xlu0 %9163
        %9165 = vrot.lane.b32.xlu0 %v9159, 80
        %v9166 = vpop.permute.xlu0 %9165
        %9167 = vrot.lane.b32.xlu0 %v9160, 80
        %v9168 = vpop.permute.xlu0 %9167
        %v9177 = vunpack.c.l.b16 %v8784
        %v9178 = vunpack.c.l.b16 %v8785
        %v9179 = vunpack.c.l.b16 %v8786
        %v9180 = vunpack.c.l.b16 %v8787
        %v9181 = vunpack.c.l.b16 %v8788
        %v9182 = vunpack.c.l.b16 %v8789
        %v9183 = vunpack.c.l.b16 %v8790
        %v9184 = vunpack.c.l.b16 %v8791
        %v9185 = vpack.c.b16 %v9178, %v9177
        %v9186 = vpack.c.b16 %v9180, %v9179
        %v9187 = vpack.c.b16 %v9182, %v9181
        %v9188 = vpack.c.b16 %v9184, %v9183
        %9189 = vrot.lane.b32.xlu0 %v9185, 96
        %v9190 = vpop.permute.xlu0 %9189
        %9191 = vrot.lane.b32.xlu0 %v9186, 96
        %v9192 = vpop.permute.xlu0 %9191
        %9193 = vrot.lane.b32.xlu0 %v9187, 96
        %v9194 = vpop.permute.xlu0 %9193
        %9195 = vrot.lane.b32.xlu0 %v9188, 96
        %v9196 = vpop.permute.xlu0 %9195
        %v9197 = vunpack.c.l.b16 %v8822
        %v9198 = vunpack.c.l.b16 %v8836
        %v9199 = vunpack.c.l.b16 %v8850
        %v9200 = vunpack.c.l.b16 %v8864
        %v9201 = vunpack.c.l.b16 %v8878
        %v9202 = vunpack.c.l.b16 %v8892
        %v9203 = vunpack.c.l.b16 %v8906
        %v9204 = vunpack.c.l.b16 %v8920
        %v9205 = vpack.c.b16 %v9198, %v9197
        %v9206 = vpack.c.b16 %v9200, %v9199
        %v9207 = vpack.c.b16 %v9202, %v9201
        %v9208 = vpack.c.b16 %v9204, %v9203
        %9209 = vrot.lane.b32.xlu0 %v9205, 112
        %v9210 = vpop.permute.xlu0 %9209
        %9211 = vrot.lane.b32.xlu0 %v9206, 112
        %v9212 = vpop.permute.xlu0 %9211
        %9213 = vrot.lane.b32.xlu0 %v9207, 112
        %v9214 = vpop.permute.xlu0 %9213
        %9215 = vrot.lane.b32.xlu0 %v9208, 112
        %v9216 = vpop.permute.xlu0 %9215
        %v9217 = vunpack.c.l.b16 %v8942
        %v9218 = vunpack.c.l.b16 %v8956
        %v9219 = vunpack.c.l.b16 %v8970
        %v9220 = vunpack.c.l.b16 %v8984
        %v9221 = vunpack.c.l.b16 %v8998
        %v9222 = vunpack.c.l.b16 %v9012
        %v9223 = vunpack.c.l.b16 %v9026
        %v9224 = vunpack.c.l.b16 %v9040
        %v9225 = vpack.c.b16 %v9218, %v9217
        %v9226 = vpack.c.b16 %v9220, %v9219
        %v9227 = vpack.c.b16 %v9222, %v9221
        %v9228 = vpack.c.b16 %v9224, %v9223
        %v9231 = vsel %vm1516, %v9057, %v9074
        %v9234 = vsel %vm1516, %v9058, %v9076
        %v9237 = vsel %vm1516, %v9059, %v9078
        %v9240 = vsel %vm1516, %v9060, %v9080
        %v9242 = vsel %vm1552, %v9231, %v9094
        %v9244 = vsel %vm1552, %v9234, %v9096
        %v9246 = vsel %vm1552, %v9237, %v9098
        %v9248 = vsel %vm1552, %v9240, %v9100
        %v9250 = vsel %vm6751, %v9242, %v9122
        %v9252 = vsel %vm6751, %v9244, %v9124
        %v9254 = vsel %vm6751, %v9246, %v9126
        %v9256 = vsel %vm6751, %v9248, %v9128
        %v9258 = vsel %vm2521, %v9250, %v9142
        %v9260 = vsel %vm2521, %v9252, %v9144
        %v9262 = vsel %vm2521, %v9254, %v9146
        %v9264 = vsel %vm2521, %v9256, %v9148
        %v9266 = vsel %vm6768, %v9258, %v9162
        %v9268 = vsel %vm6768, %v9260, %v9164
        %v9270 = vsel %vm6768, %v9262, %v9166
        %v9272 = vsel %vm6768, %v9264, %v9168
        %v9274 = vsel %vm2530, %v9266, %v9190
        %v9276 = vsel %vm2530, %v9268, %v9192
        %v9278 = vsel %vm2530, %v9270, %v9194
        %v9280 = vsel %vm2530, %v9272, %v9196
        %v9282 = vsel %vm6785, %v9274, %v9210
        %v9285 = vsel %vm6785, %v9276, %v9212
        %v9288 = vsel %vm6785, %v9278, %v9214
        %v9291 = vsel %vm6785, %v9280, %v9216
        %v9293 = vld [vmem:[%s9] sm:$0xf]
        %v9294 = vld [vmem:[%s9 + $0x4] sm:$0xf]
        %v9295 = vld [vmem:[%s9 + $0x8] sm:$0xf]
        %v9296 = vld [vmem:[%s9 + $0xc] sm:$0xf]
        %v9297 = vld [vmem:[%s9 + $0x10] sm:$0xf]
        %v9298 = vld [vmem:[%s9 + $0x14] sm:$0xf]
        %v9299 = vld [vmem:[%s9 + $0x18] sm:$0xf]
        %v9300 = vld [vmem:[%s9 + $0x1c] sm:$0xf]
        %v9301 = vld [vmem:[%s9 + $0x20] sm:$0xf]
        %v9302 = vld [vmem:[%s9 + $0x24] sm:$0xf]
        %v9303 = vld [vmem:[%s9 + $0x28] sm:$0xf]
        %v9304 = vld [vmem:[%s9 + $0x2c] sm:$0xf]
        %v9305 = vld [vmem:[%s9 + $0x30] sm:$0xf]
        %v9306 = vld [vmem:[%s9 + $0x34] sm:$0xf]
        %v9307 = vld [vmem:[%s9 + $0x38] sm:$0xf]
        %v9308 = vld [vmem:[%s9 + $0x3c] sm:$0xf]
        %v9309 = vld [vmem:[%s9 + $0x40] sm:$0xf]
        %v9310 = vld [vmem:[%s9 + $0x44] sm:$0xf]
        %v9311 = vld [vmem:[#allocation12] sm:$0x1]
        %v9313 = vperm.slane %v9311, 0
        %v9333 = vunpack.c.l.b16 %v9293
        %v9334 = vunpack.c.l.b16 %v9294
        %v9335 = vunpack.c.l.b16 %v9295
        %v9336 = vunpack.c.l.b16 %v9296
        %v9337 = vunpack.c.l.b16 %v9297
        %v9338 = vunpack.c.l.b16 %v9298
        %v9339 = vunpack.c.l.b16 %v9299
        %v9340 = vunpack.c.l.b16 %v9300
        %v9341 = vunpack.c.l.b16 %v9301
        %v9342 = vunpack.c.l.b16 %v9302
        %v9343 = vunpack.c.l.b16 %v9303
        %v9344 = vunpack.c.l.b16 %v9304
        %v9345 = vunpack.c.l.b16 %v9305
        %v9346 = vunpack.c.l.b16 %v9306
        %v9347 = vunpack.c.l.b16 %v9307
        %v9348 = vunpack.c.l.b16 %v9308
        %v9349 = vunpack.c.l.b16 %v9309
        %v9350 = vunpack.c.l.b16 %v9310
        %v9351 = vpack.c.b16 %v9334, %v9333
        %v9352 = vpack.c.b16 %v9336, %v9335
        %v9353 = vpack.c.b16 %v9338, %v9337
        %v9354 = vpack.c.b16 %v9340, %v9339
        %v9355 = vpack.c.b16 %v9342, %v9341
        %v9356 = vpack.c.b16 %v9344, %v9343
        %v9357 = vpack.c.b16 %v9346, %v9345
        %v9358 = vpack.c.b16 %v9348, %v9347
        %v9359 = vpack.c.b16 %v9350, %v9349
        %v9370 = vsel %vm1516, %v9225, 0
        %v9373 = vsel %vm1516, %v9226, 0
        %v9376 = vsel %vm1516, %v9227, 0
        %v9379 = vsel %vm1516, %v9228, 0
        %9381 = vmatpush.bf16.msra.mxu0 %v9358
        %9382 = vmatpush.bf16.msra.mxu0 %v9357
        %9383 = vmatpush.bf16.msra.mxu0 %v9356
        %9384 = vmatpush.bf16.msra.mxu0 %v9355
        %9385 = vmatpush.bf16.msra.mxu0 %v9354
        %9386 = vmatpush.bf16.msra.mxu0 %v9353
        %9387 = vmatpush.bf16.msra.mxu0 %v9352
        %9388 = vmatpush.bf16.msra.mxu0 %v9351
        %9389 = vmatmul.bf16.gmra.mxu0 %v9282
        %v9390 = vpop.f32.mrf.mxu0
        %v9391 = vadd.f32 %v9313, %v9390
        %v9392 = vpop.f32.mrf.mxu0
        %v9393 = vadd.f32 %v9313, %v9392
        %9394 = vmatmul.bf16.gmra.mxu0 %v9285
        %v9395 = vpop.f32.mrf.mxu0
        %v9396 = vadd.f32 %v9313, %v9395
        %v9397 = vpop.f32.mrf.mxu0
        %v9398 = vadd.f32 %v9313, %v9397
        %9399 = vmatmul.bf16.gmra.mxu0 %v9288
        %v9400 = vpop.f32.mrf.mxu0
        %v9401 = vadd.f32 %v9313, %v9400
        %v9402 = vpop.f32.mrf.mxu0
        %v9403 = vadd.f32 %v9313, %v9402
        %9404 = vmatmul.bf16.gmra.mxu0 %v9291
        %v9405 = vpop.f32.mrf.mxu0
        %v9406 = vadd.f32 %v9313, %v9405
        %v9407 = vpop.f32.mrf.mxu0
        %v9408 = vadd.f32 %v9313, %v9407
        %9409 = vdwg.mxu0
        %9410 = vmatpush.bf16.msra.mxu0 0
        %9411 = vmatpush.bf16.msra.mxu0 0
        %9412 = vmatpush.bf16.msra.mxu0 0
        %9413 = vmatpush.bf16.msra.mxu0 0
        %9414 = vmatpush.bf16.msra.mxu0 0
        %9415 = vmatpush.bf16.msra.mxu0 0
        %9416 = vmatpush.bf16.msra.mxu0 0
        %9417 = vmatpush.bf16.msra.mxu0 %v9359
        %9418 = vmatmul.bf16.gmra.mxu0 %v9370
        %v9419 = vpop.f32.mrf.mxu0
        %v9420 = vadd.f32 %v9391, %v9419
        %v9421 = vpop.f32.mrf.mxu0
        %v9422 = vadd.f32 %v9393, %v9421
        %9423 = vmatmul.bf16.gmra.mxu0 %v9373
        %v9424 = vpop.f32.mrf.mxu0
        %v9425 = vadd.f32 %v9396, %v9424
        %v9426 = vpop.f32.mrf.mxu0
        %v9427 = vadd.f32 %v9398, %v9426
        %9428 = vmatmul.bf16.gmra.mxu0 %v9376
        %v9429 = vpop.f32.mrf.mxu0
        %v9430 = vadd.f32 %v9401, %v9429
        %v9431 = vpop.f32.mrf.mxu0
        %v9432 = vadd.f32 %v9403, %v9431
        %9433 = vmatmul.bf16.gmra.mxu0 %v9379
        %v9434 = vpop.f32.mrf.mxu0
        %v9435 = vadd.f32 %v9406, %v9434
        %v9436 = vpop.f32.mrf.mxu0
        %v9437 = vadd.f32 %v9408, %v9436
        %9438 = vdwg.mxu0
        %s9439 = scalar_lea.vmem %s459, 128
        %9440 = vst.msk [vmem:[%s9439] sm:$0xff] %vm1507, %v9420
        %9441 = vst.msk [vmem:[%s9439 + $0x8] sm:$0xff] %vm1507, %v9422
        %9442 = vst.msk [vmem:[%s9439 + $0x10] sm:$0xff] %vm1507, %v9425
        %9443 = vst.msk [vmem:[%s9439 + $0x18] sm:$0xff] %vm1507, %v9427
        %9444 = vst.msk [vmem:[%s9439 + $0x20] sm:$0xff] %vm1507, %v9430
        %9445 = vst.msk [vmem:[%s9439 + $0x28] sm:$0xff] %vm1507, %v9432
        %9446 = vst.msk [vmem:[%s9439 + $0x30] sm:$0xff] %vm1507, %v9435
        %9447 = vst.msk [vmem:[%s9439 + $0x38] sm:$0xff] %vm1507, %v9437
        %v9448 = vld [vmem:[%s5429] sm:$0xf]
        %v9449 = vld [vmem:[%s5429 + $0x4] sm:$0x1]
        %v9450 = vld [vmem:[%s5429 + $0x8] sm:$0xf]
        %v9451 = vld [vmem:[%s5429 + $0xc] sm:$0x1]
        %v9452 = vld [vmem:[%s5429 + $0x10] sm:$0xf]
        %v9453 = vld [vmem:[%s5429 + $0x14] sm:$0x1]
        %v9454 = vld [vmem:[%s5429 + $0x18] sm:$0xf]
        %v9455 = vld [vmem:[%s5429 + $0x1c] sm:$0x1]
        %v9456 = vld [vmem:[%s5429 + $0x20] sm:$0xf]
        %v9457 = vld [vmem:[%s5429 + $0x24] sm:$0x1]
        %v9458 = vld [vmem:[%s5429 + $0x28] sm:$0xf]
        %v9459 = vld [vmem:[%s5429 + $0x2c] sm:$0x1]
        %v9460 = vld [vmem:[%s5429 + $0x30] sm:$0xf]
        %v9461 = vld [vmem:[%s5429 + $0x34] sm:$0x1]
        %v9462 = vld [vmem:[%s5429 + $0x38] sm:$0xf]
        %v9463 = vld [vmem:[%s5429 + $0x3c] sm:$0x1]
        %v9465 = vshrl.u32 %v9448, 16
        %v9467 = vrot.slane %v9465, 4
        %v9468 = vshll.u32 %v9448, 16
        %v9470 = vrot.slane %v9468, 5
        %v9471 = vor.u32 %v9467, %v9470
        %v9472 = vrot.slane %v9471, 4
        %v9474 = vshll.u32 %v9449, 16
        %v9476 = vrot.slane %v9474, 5
        %v9477 = vsel %vm748, %v9472, %v9476
        %v9479 = vshrl.u32 %v9450, 16
        %v9481 = vrot.slane %v9479, 4
        %v9482 = vshll.u32 %v9450, 16
        %v9484 = vrot.slane %v9482, 5
        %v9485 = vor.u32 %v9481, %v9484
        %v9486 = vrot.slane %v9485, 4
        %v9488 = vshll.u32 %v9451, 16
        %v9490 = vrot.slane %v9488, 5
        %v9491 = vsel %vm748, %v9486, %v9490
        %v9493 = vshrl.u32 %v9452, 16
        %v9495 = vrot.slane %v9493, 4
        %v9496 = vshll.u32 %v9452, 16
        %v9498 = vrot.slane %v9496, 5
        %v9499 = vor.u32 %v9495, %v9498
        %v9500 = vrot.slane %v9499, 4
        %v9502 = vshll.u32 %v9453, 16
        %v9504 = vrot.slane %v9502, 5
        %v9505 = vsel %vm748, %v9500, %v9504
        %v9507 = vshrl.u32 %v9454, 16
        %v9509 = vrot.slane %v9507, 4
        %v9510 = vshll.u32 %v9454, 16
        %v9512 = vrot.slane %v9510, 5
        %v9513 = vor.u32 %v9509, %v9512
        %v9514 = vrot.slane %v9513, 4
        %v9516 = vshll.u32 %v9455, 16
        %v9518 = vrot.slane %v9516, 5
        %v9519 = vsel %vm748, %v9514, %v9518
        %v9521 = vshrl.u32 %v9456, 16
        %v9523 = vrot.slane %v9521, 4
        %v9524 = vshll.u32 %v9456, 16
        %v9526 = vrot.slane %v9524, 5
        %v9527 = vor.u32 %v9523, %v9526
        %v9528 = vrot.slane %v9527, 4
        %v9530 = vshll.u32 %v9457, 16
        %v9532 = vrot.slane %v9530, 5
        %v9533 = vsel %vm748, %v9528, %v9532
        %v9535 = vshrl.u32 %v9458, 16
        %v9537 = vrot.slane %v9535, 4
        %v9538 = vshll.u32 %v9458, 16
        %v9540 = vrot.slane %v9538, 5
        %v9541 = vor.u32 %v9537, %v9540
        %v9542 = vrot.slane %v9541, 4
        %v9544 = vshll.u32 %v9459, 16
        %v9546 = vrot.slane %v9544, 5
        %v9547 = vsel %vm748, %v9542, %v9546
        %v9549 = vshrl.u32 %v9460, 16
        %v9551 = vrot.slane %v9549, 4
        %v9552 = vshll.u32 %v9460, 16
        %v9554 = vrot.slane %v9552, 5
        %v9555 = vor.u32 %v9551, %v9554
        %v9556 = vrot.slane %v9555, 4
        %v9558 = vshll.u32 %v9461, 16
        %v9560 = vrot.slane %v9558, 5
        %v9561 = vsel %vm748, %v9556, %v9560
        %v9563 = vshrl.u32 %v9462, 16
        %v9565 = vrot.slane %v9563, 4
        %v9566 = vshll.u32 %v9462, 16
        %v9568 = vrot.slane %v9566, 5
        %v9569 = vor.u32 %v9565, %v9568
        %v9570 = vrot.slane %v9569, 4
        %v9572 = vshll.u32 %v9463, 16
        %v9574 = vrot.slane %v9572, 5
        %v9575 = vsel %vm748, %v9570, %v9574
        %v9576 = vld [vmem:[%s5530] sm:$0xf]
        %v9577 = vld [vmem:[%s5530 + $0x4] sm:$0x1]
        %v9578 = vld [vmem:[%s5530 + $0x8] sm:$0xf]
        %v9579 = vld [vmem:[%s5530 + $0xc] sm:$0x1]
        %v9580 = vld [vmem:[%s5530 + $0x10] sm:$0xf]
        %v9581 = vld [vmem:[%s5530 + $0x14] sm:$0x1]
        %v9582 = vld [vmem:[%s5530 + $0x18] sm:$0xf]
        %v9583 = vld [vmem:[%s5530 + $0x1c] sm:$0x1]
        %v9584 = vld [vmem:[%s5530 + $0x20] sm:$0xf]
        %v9585 = vld [vmem:[%s5530 + $0x24] sm:$0x1]
        %v9586 = vld [vmem:[%s5530 + $0x28] sm:$0xf]
        %v9587 = vld [vmem:[%s5530 + $0x2c] sm:$0x1]
        %v9588 = vld [vmem:[%s5530 + $0x30] sm:$0xf]
        %v9589 = vld [vmem:[%s5530 + $0x34] sm:$0x1]
        %v9590 = vld [vmem:[%s5530 + $0x38] sm:$0xf]
        %v9591 = vld [vmem:[%s5530 + $0x3c] sm:$0x1]
        %v9593 = vshrl.u32 %v9576, 16
        %v9595 = vrot.slane %v9593, 4
        %v9596 = vshll.u32 %v9576, 16
        %v9598 = vrot.slane %v9596, 5
        %v9599 = vor.u32 %v9595, %v9598
        %v9600 = vrot.slane %v9599, 4
        %v9602 = vshll.u32 %v9577, 16
        %v9604 = vrot.slane %v9602, 5
        %v9605 = vsel %vm748, %v9600, %v9604
        %v9607 = vshrl.u32 %v9578, 16
        %v9609 = vrot.slane %v9607, 4
        %v9610 = vshll.u32 %v9578, 16
        %v9612 = vrot.slane %v9610, 5
        %v9613 = vor.u32 %v9609, %v9612
        %v9614 = vrot.slane %v9613, 4
        %v9616 = vshll.u32 %v9579, 16
        %v9618 = vrot.slane %v9616, 5
        %v9619 = vsel %vm748, %v9614, %v9618
        %v9621 = vshrl.u32 %v9580, 16
        %v9623 = vrot.slane %v9621, 4
        %v9624 = vshll.u32 %v9580, 16
        %v9626 = vrot.slane %v9624, 5
        %v9627 = vor.u32 %v9623, %v9626
        %v9628 = vrot.slane %v9627, 4
        %v9630 = vshll.u32 %v9581, 16
        %v9632 = vrot.slane %v9630, 5
        %v9633 = vsel %vm748, %v9628, %v9632
        %v9635 = vshrl.u32 %v9582, 16
        %v9637 = vrot.slane %v9635, 4
        %v9638 = vshll.u32 %v9582, 16
        %v9640 = vrot.slane %v9638, 5
        %v9641 = vor.u32 %v9637, %v9640
        %v9642 = vrot.slane %v9641, 4
        %v9644 = vshll.u32 %v9583, 16
        %v9646 = vrot.slane %v9644, 5
        %v9647 = vsel %vm748, %v9642, %v9646
        %v9649 = vshrl.u32 %v9584, 16
        %v9651 = vrot.slane %v9649, 4
        %v9652 = vshll.u32 %v9584, 16
        %v9654 = vrot.slane %v9652, 5
        %v9655 = vor.u32 %v9651, %v9654
        %v9656 = vrot.slane %v9655, 4
        %v9658 = vshll.u32 %v9585, 16
        %v9660 = vrot.slane %v9658, 5
        %v9661 = vsel %vm748, %v9656, %v9660
        %v9663 = vshrl.u32 %v9586, 16
        %v9665 = vrot.slane %v9663, 4
        %v9666 = vshll.u32 %v9586, 16
        %v9668 = vrot.slane %v9666, 5
        %v9669 = vor.u32 %v9665, %v9668
        %v9670 = vrot.slane %v9669, 4
        %v9672 = vshll.u32 %v9587, 16
        %v9674 = vrot.slane %v9672, 5
        %v9675 = vsel %vm748, %v9670, %v9674
        %v9677 = vshrl.u32 %v9588, 16
        %v9679 = vrot.slane %v9677, 4
        %v9680 = vshll.u32 %v9588, 16
        %v9682 = vrot.slane %v9680, 5
        %v9683 = vor.u32 %v9679, %v9682
        %v9684 = vrot.slane %v9683, 4
        %v9686 = vshll.u32 %v9589, 16
        %v9688 = vrot.slane %v9686, 5
        %v9689 = vsel %vm748, %v9684, %v9688
        %v9691 = vshrl.u32 %v9590, 16
        %v9693 = vrot.slane %v9691, 4
        %v9694 = vshll.u32 %v9590, 16
        %v9696 = vrot.slane %v9694, 5
        %v9697 = vor.u32 %v9693, %v9696
        %v9698 = vrot.slane %v9697, 4
        %v9700 = vshll.u32 %v9591, 16
        %v9702 = vrot.slane %v9700, 5
        %v9703 = vsel %vm748, %v9698, %v9702
        %v9704 = vld [vmem:[%s5429] sm:$0xe]
        %v9705 = vld [vmem:[%s5429 + $0x8] sm:$0xe]
        %v9706 = vld [vmem:[%s5429 + $0x10] sm:$0xe]
        %v9707 = vld [vmem:[%s5429 + $0x18] sm:$0xe]
        %v9708 = vld [vmem:[%s5429 + $0x20] sm:$0xe]
        %v9709 = vld [vmem:[%s5429 + $0x28] sm:$0xe]
        %v9710 = vld [vmem:[%s5429 + $0x30] sm:$0xe]
        %v9711 = vld [vmem:[%s5429 + $0x38] sm:$0xe]
        %v9728 = vrot.slane %v9704, 5
        %v9729 = vrot.slane %v9728, 4
        %v9730 = vrot.slane %v9449, 5
        %v9731 = vsel %vm887, %v9729, %v9730
        %v9732 = vrot.slane %v9705, 5
        %v9733 = vrot.slane %v9732, 4
        %v9734 = vrot.slane %v9451, 5
        %v9735 = vsel %vm887, %v9733, %v9734
        %v9736 = vrot.slane %v9706, 5
        %v9737 = vrot.slane %v9736, 4
        %v9738 = vrot.slane %v9453, 5
        %v9739 = vsel %vm887, %v9737, %v9738
        %v9740 = vrot.slane %v9707, 5
        %v9741 = vrot.slane %v9740, 4
        %v9742 = vrot.slane %v9455, 5
        %v9743 = vsel %vm887, %v9741, %v9742
        %v9744 = vrot.slane %v9708, 5
        %v9745 = vrot.slane %v9744, 4
        %v9746 = vrot.slane %v9457, 5
        %v9747 = vsel %vm887, %v9745, %v9746
        %v9748 = vrot.slane %v9709, 5
        %v9749 = vrot.slane %v9748, 4
        %v9750 = vrot.slane %v9459, 5
        %v9751 = vsel %vm887, %v9749, %v9750
        %v9752 = vrot.slane %v9710, 5
        %v9753 = vrot.slane %v9752, 4
        %v9754 = vrot.slane %v9461, 5
        %v9755 = vsel %vm887, %v9753, %v9754
        %v9756 = vrot.slane %v9711, 5
        %v9757 = vrot.slane %v9756, 4
        %v9758 = vrot.slane %v9463, 5
        %v9759 = vsel %vm887, %v9757, %v9758
        %v9760 = vld [vmem:[%s5627] sm:$0xf]
        %v9761 = vld [vmem:[%s5627 + $0x4] sm:$0x1]
        %v9762 = vld [vmem:[%s5627 + $0x8] sm:$0xf]
        %v9763 = vld [vmem:[%s5627 + $0xc] sm:$0x1]
        %v9764 = vld [vmem:[%s5627 + $0x10] sm:$0xf]
        %v9765 = vld [vmem:[%s5627 + $0x14] sm:$0x1]
        %v9766 = vld [vmem:[%s5627 + $0x18] sm:$0xf]
        %v9767 = vld [vmem:[%s5627 + $0x1c] sm:$0x1]
        %v9768 = vld [vmem:[%s5627 + $0x20] sm:$0xf]
        %v9769 = vld [vmem:[%s5627 + $0x24] sm:$0x1]
        %v9770 = vld [vmem:[%s5627 + $0x28] sm:$0xf]
        %v9771 = vld [vmem:[%s5627 + $0x2c] sm:$0x1]
        %v9772 = vld [vmem:[%s5627 + $0x30] sm:$0xf]
        %v9773 = vld [vmem:[%s5627 + $0x34] sm:$0x1]
        %v9774 = vld [vmem:[%s5627 + $0x38] sm:$0xf]
        %v9775 = vld [vmem:[%s5627 + $0x3c] sm:$0x1]
        %v9777 = vshrl.u32 %v9760, 16
        %v9779 = vrot.slane %v9777, 4
        %v9780 = vshll.u32 %v9760, 16
        %v9782 = vrot.slane %v9780, 5
        %v9783 = vor.u32 %v9779, %v9782
        %v9784 = vrot.slane %v9783, 4
        %v9786 = vshll.u32 %v9761, 16
        %v9788 = vrot.slane %v9786, 5
        %v9789 = vsel %vm748, %v9784, %v9788
        %v9791 = vshrl.u32 %v9762, 16
        %v9793 = vrot.slane %v9791, 4
        %v9794 = vshll.u32 %v9762, 16
        %v9796 = vrot.slane %v9794, 5
        %v9797 = vor.u32 %v9793, %v9796
        %v9798 = vrot.slane %v9797, 4
        %v9800 = vshll.u32 %v9763, 16
        %v9802 = vrot.slane %v9800, 5
        %v9803 = vsel %vm748, %v9798, %v9802
        %v9805 = vshrl.u32 %v9764, 16
        %v9807 = vrot.slane %v9805, 4
        %v9808 = vshll.u32 %v9764, 16
        %v9810 = vrot.slane %v9808, 5
        %v9811 = vor.u32 %v9807, %v9810
        %v9812 = vrot.slane %v9811, 4
        %v9814 = vshll.u32 %v9765, 16
        %v9816 = vrot.slane %v9814, 5
        %v9817 = vsel %vm748, %v9812, %v9816
        %v9819 = vshrl.u32 %v9766, 16
        %v9821 = vrot.slane %v9819, 4
        %v9822 = vshll.u32 %v9766, 16
        %v9824 = vrot.slane %v9822, 5
        %v9825 = vor.u32 %v9821, %v9824
        %v9826 = vrot.slane %v9825, 4
        %v9828 = vshll.u32 %v9767, 16
        %v9830 = vrot.slane %v9828, 5
        %v9831 = vsel %vm748, %v9826, %v9830
        %v9833 = vshrl.u32 %v9768, 16
        %v9835 = vrot.slane %v9833, 4
        %v9836 = vshll.u32 %v9768, 16
        %v9838 = vrot.slane %v9836, 5
        %v9839 = vor.u32 %v9835, %v9838
        %v9840 = vrot.slane %v9839, 4
        %v9842 = vshll.u32 %v9769, 16
        %v9844 = vrot.slane %v9842, 5
        %v9845 = vsel %vm748, %v9840, %v9844
        %v9847 = vshrl.u32 %v9770, 16
        %v9849 = vrot.slane %v9847, 4
        %v9850 = vshll.u32 %v9770, 16
        %v9852 = vrot.slane %v9850, 5
        %v9853 = vor.u32 %v9849, %v9852
        %v9854 = vrot.slane %v9853, 4
        %v9856 = vshll.u32 %v9771, 16
        %v9858 = vrot.slane %v9856, 5
        %v9859 = vsel %vm748, %v9854, %v9858
        %v9861 = vshrl.u32 %v9772, 16
        %v9863 = vrot.slane %v9861, 4
        %v9864 = vshll.u32 %v9772, 16
        %v9866 = vrot.slane %v9864, 5
        %v9867 = vor.u32 %v9863, %v9866
        %v9868 = vrot.slane %v9867, 4
        %v9870 = vshll.u32 %v9773, 16
        %v9872 = vrot.slane %v9870, 5
        %v9873 = vsel %vm748, %v9868, %v9872
        %v9875 = vshrl.u32 %v9774, 16
        %v9877 = vrot.slane %v9875, 4
        %v9878 = vshll.u32 %v9774, 16
        %v9880 = vrot.slane %v9878, 5
        %v9881 = vor.u32 %v9877, %v9880
        %v9882 = vrot.slane %v9881, 4
        %v9884 = vshll.u32 %v9775, 16
        %v9886 = vrot.slane %v9884, 5
        %v9887 = vsel %vm748, %v9882, %v9886
        %v9888 = vld [vmem:[%s5724] sm:$0xf]
        %v9889 = vld [vmem:[%s5724 + $0x4] sm:$0x1]
        %v9890 = vld [vmem:[%s5724 + $0x8] sm:$0xf]
        %v9891 = vld [vmem:[%s5724 + $0xc] sm:$0x1]
        %v9892 = vld [vmem:[%s5724 + $0x10] sm:$0xf]
        %v9893 = vld [vmem:[%s5724 + $0x14] sm:$0x1]
        %v9894 = vld [vmem:[%s5724 + $0x18] sm:$0xf]
        %v9895 = vld [vmem:[%s5724 + $0x1c] sm:$0x1]
        %v9896 = vld [vmem:[%s5724 + $0x20] sm:$0xf]
        %v9897 = vld [vmem:[%s5724 + $0x24] sm:$0x1]
        %v9898 = vld [vmem:[%s5724 + $0x28] sm:$0xf]
        %v9899 = vld [vmem:[%s5724 + $0x2c] sm:$0x1]
        %v9900 = vld [vmem:[%s5724 + $0x30] sm:$0xf]
        %v9901 = vld [vmem:[%s5724 + $0x34] sm:$0x1]
        %v9902 = vld [vmem:[%s5724 + $0x38] sm:$0xf]
        %v9903 = vld [vmem:[%s5724 + $0x3c] sm:$0x1]
        %v9905 = vshrl.u32 %v9888, 16
        %v9907 = vrot.slane %v9905, 4
        %v9908 = vshll.u32 %v9888, 16
        %v9910 = vrot.slane %v9908, 5
        %v9911 = vor.u32 %v9907, %v9910
        %v9912 = vrot.slane %v9911, 4
        %v9914 = vshll.u32 %v9889, 16
        %v9916 = vrot.slane %v9914, 5
        %v9917 = vsel %vm748, %v9912, %v9916
        %v9919 = vshrl.u32 %v9890, 16
        %v9921 = vrot.slane %v9919, 4
        %v9922 = vshll.u32 %v9890, 16
        %v9924 = vrot.slane %v9922, 5
        %v9925 = vor.u32 %v9921, %v9924
        %v9926 = vrot.slane %v9925, 4
        %v9928 = vshll.u32 %v9891, 16
        %v9930 = vrot.slane %v9928, 5
        %v9931 = vsel %vm748, %v9926, %v9930
        %v9933 = vshrl.u32 %v9892, 16
        %v9935 = vrot.slane %v9933, 4
        %v9936 = vshll.u32 %v9892, 16
        %v9938 = vrot.slane %v9936, 5
        %v9939 = vor.u32 %v9935, %v9938
        %v9940 = vrot.slane %v9939, 4
        %v9942 = vshll.u32 %v9893, 16
        %v9944 = vrot.slane %v9942, 5
        %v9945 = vsel %vm748, %v9940, %v9944
        %v9947 = vshrl.u32 %v9894, 16
        %v9949 = vrot.slane %v9947, 4
        %v9950 = vshll.u32 %v9894, 16
        %v9952 = vrot.slane %v9950, 5
        %v9953 = vor.u32 %v9949, %v9952
        %v9954 = vrot.slane %v9953, 4
        %v9956 = vshll.u32 %v9895, 16
        %v9958 = vrot.slane %v9956, 5
        %v9959 = vsel %vm748, %v9954, %v9958
        %v9961 = vshrl.u32 %v9896, 16
        %v9963 = vrot.slane %v9961, 4
        %v9964 = vshll.u32 %v9896, 16
        %v9966 = vrot.slane %v9964, 5
        %v9967 = vor.u32 %v9963, %v9966
        %v9968 = vrot.slane %v9967, 4
        %v9970 = vshll.u32 %v9897, 16
        %v9972 = vrot.slane %v9970, 5
        %v9973 = vsel %vm748, %v9968, %v9972
        %v9975 = vshrl.u32 %v9898, 16
        %v9977 = vrot.slane %v9975, 4
        %v9978 = vshll.u32 %v9898, 16
        %v9980 = vrot.slane %v9978, 5
        %v9981 = vor.u32 %v9977, %v9980
        %v9982 = vrot.slane %v9981, 4
        %v9984 = vshll.u32 %v9899, 16
        %v9986 = vrot.slane %v9984, 5
        %v9987 = vsel %vm748, %v9982, %v9986
        %v9989 = vshrl.u32 %v9900, 16
        %v9991 = vrot.slane %v9989, 4
        %v9992 = vshll.u32 %v9900, 16
        %v9994 = vrot.slane %v9992, 5
        %v9995 = vor.u32 %v9991, %v9994
        %v9996 = vrot.slane %v9995, 4
        %v9998 = vshll.u32 %v9901, 16
        %v10000 = vrot.slane %v9998, 5
        %v10001 = vsel %vm748, %v9996, %v10000
        %v10003 = vshrl.u32 %v9902, 16
        %v10005 = vrot.slane %v10003, 4
        %v10006 = vshll.u32 %v9902, 16
        %v10008 = vrot.slane %v10006, 5
        %v10009 = vor.u32 %v10005, %v10008
        %v10010 = vrot.slane %v10009, 4
        %v10012 = vshll.u32 %v9903, 16
        %v10014 = vrot.slane %v10012, 5
        %v10015 = vsel %vm748, %v10010, %v10014
        %v10016 = vld [vmem:[%s5627] sm:$0xe]
        %v10017 = vld [vmem:[%s5627 + $0x8] sm:$0xe]
        %v10018 = vld [vmem:[%s5627 + $0x10] sm:$0xe]
        %v10019 = vld [vmem:[%s5627 + $0x18] sm:$0xe]
        %v10020 = vld [vmem:[%s5627 + $0x20] sm:$0xe]
        %v10021 = vld [vmem:[%s5627 + $0x28] sm:$0xe]
        %v10022 = vld [vmem:[%s5627 + $0x30] sm:$0xe]
        %v10023 = vld [vmem:[%s5627 + $0x38] sm:$0xe]
        %v10040 = vrot.slane %v10016, 5
        %v10041 = vrot.slane %v10040, 4
        %v10042 = vrot.slane %v9761, 5
        %v10043 = vsel %vm887, %v10041, %v10042
        %v10044 = vrot.slane %v10017, 5
        %v10045 = vrot.slane %v10044, 4
        %v10046 = vrot.slane %v9763, 5
        %v10047 = vsel %vm887, %v10045, %v10046
        %v10048 = vrot.slane %v10018, 5
        %v10049 = vrot.slane %v10048, 4
        %v10050 = vrot.slane %v9765, 5
        %v10051 = vsel %vm887, %v10049, %v10050
        %v10052 = vrot.slane %v10019, 5
        %v10053 = vrot.slane %v10052, 4
        %v10054 = vrot.slane %v9767, 5
        %v10055 = vsel %vm887, %v10053, %v10054
        %v10056 = vrot.slane %v10020, 5
        %v10057 = vrot.slane %v10056, 4
        %v10058 = vrot.slane %v9769, 5
        %v10059 = vsel %vm887, %v10057, %v10058
        %v10060 = vrot.slane %v10021, 5
        %v10061 = vrot.slane %v10060, 4
        %v10062 = vrot.slane %v9771, 5
        %v10063 = vsel %vm887, %v10061, %v10062
        %v10064 = vrot.slane %v10022, 5
        %v10065 = vrot.slane %v10064, 4
        %v10066 = vrot.slane %v9773, 5
        %v10067 = vsel %vm887, %v10065, %v10066
        %v10068 = vrot.slane %v10023, 5
        %v10069 = vrot.slane %v10068, 4
        %v10070 = vrot.slane %v9775, 5
        %v10071 = vsel %vm887, %v10069, %v10070
        %v10072 = vld [vmem:[%s8792] sm:$0xf]
        %v10073 = vld [vmem:[%s8792 + $0x4] sm:$0x1]
        %v10074 = vld [vmem:[%s8792 + $0x8] sm:$0xf]
        %v10075 = vld [vmem:[%s8792 + $0xc] sm:$0x1]
        %v10076 = vld [vmem:[%s8792 + $0x10] sm:$0xf]
        %v10077 = vld [vmem:[%s8792 + $0x14] sm:$0x1]
        %v10078 = vld [vmem:[%s8792 + $0x18] sm:$0xf]
        %v10079 = vld [vmem:[%s8792 + $0x1c] sm:$0x1]
        %v10080 = vld [vmem:[%s8792 + $0x20] sm:$0xf]
        %v10081 = vld [vmem:[%s8792 + $0x24] sm:$0x1]
        %v10082 = vld [vmem:[%s8792 + $0x28] sm:$0xf]
        %v10083 = vld [vmem:[%s8792 + $0x2c] sm:$0x1]
        %v10084 = vld [vmem:[%s8792 + $0x30] sm:$0xf]
        %v10085 = vld [vmem:[%s8792 + $0x34] sm:$0x1]
        %v10086 = vld [vmem:[%s8792 + $0x38] sm:$0xf]
        %v10087 = vld [vmem:[%s8792 + $0x3c] sm:$0x1]
        %v10089 = vshrl.u32 %v10072, 16
        %v10091 = vrot.slane %v10089, 4
        %v10092 = vshll.u32 %v10072, 16
        %v10094 = vrot.slane %v10092, 5
        %v10095 = vor.u32 %v10091, %v10094
        %v10096 = vrot.slane %v10095, 4
        %v10098 = vshll.u32 %v10073, 16
        %v10100 = vrot.slane %v10098, 5
        %v10101 = vsel %vm748, %v10096, %v10100
        %v10103 = vshrl.u32 %v10074, 16
        %v10105 = vrot.slane %v10103, 4
        %v10106 = vshll.u32 %v10074, 16
        %v10108 = vrot.slane %v10106, 5
        %v10109 = vor.u32 %v10105, %v10108
        %v10110 = vrot.slane %v10109, 4
        %v10112 = vshll.u32 %v10075, 16
        %v10114 = vrot.slane %v10112, 5
        %v10115 = vsel %vm748, %v10110, %v10114
        %v10117 = vshrl.u32 %v10076, 16
        %v10119 = vrot.slane %v10117, 4
        %v10120 = vshll.u32 %v10076, 16
        %v10122 = vrot.slane %v10120, 5
        %v10123 = vor.u32 %v10119, %v10122
        %v10124 = vrot.slane %v10123, 4
        %v10126 = vshll.u32 %v10077, 16
        %v10128 = vrot.slane %v10126, 5
        %v10129 = vsel %vm748, %v10124, %v10128
        %v10131 = vshrl.u32 %v10078, 16
        %v10133 = vrot.slane %v10131, 4
        %v10134 = vshll.u32 %v10078, 16
        %v10136 = vrot.slane %v10134, 5
        %v10137 = vor.u32 %v10133, %v10136
        %v10138 = vrot.slane %v10137, 4
        %v10140 = vshll.u32 %v10079, 16
        %v10142 = vrot.slane %v10140, 5
        %v10143 = vsel %vm748, %v10138, %v10142
        %v10145 = vshrl.u32 %v10080, 16
        %v10147 = vrot.slane %v10145, 4
        %v10148 = vshll.u32 %v10080, 16
        %v10150 = vrot.slane %v10148, 5
        %v10151 = vor.u32 %v10147, %v10150
        %v10152 = vrot.slane %v10151, 4
        %v10154 = vshll.u32 %v10081, 16
        %v10156 = vrot.slane %v10154, 5
        %v10157 = vsel %vm748, %v10152, %v10156
        %v10159 = vshrl.u32 %v10082, 16
        %v10161 = vrot.slane %v10159, 4
        %v10162 = vshll.u32 %v10082, 16
        %v10164 = vrot.slane %v10162, 5
        %v10165 = vor.u32 %v10161, %v10164
        %v10166 = vrot.slane %v10165, 4
        %v10168 = vshll.u32 %v10083, 16
        %v10170 = vrot.slane %v10168, 5
        %v10171 = vsel %vm748, %v10166, %v10170
        %v10173 = vshrl.u32 %v10084, 16
        %v10175 = vrot.slane %v10173, 4
        %v10176 = vshll.u32 %v10084, 16
        %v10178 = vrot.slane %v10176, 5
        %v10179 = vor.u32 %v10175, %v10178
        %v10180 = vrot.slane %v10179, 4
        %v10182 = vshll.u32 %v10085, 16
        %v10184 = vrot.slane %v10182, 5
        %v10185 = vsel %vm748, %v10180, %v10184
        %v10187 = vshrl.u32 %v10086, 16
        %v10189 = vrot.slane %v10187, 4
        %v10190 = vshll.u32 %v10086, 16
        %v10192 = vrot.slane %v10190, 5
        %v10193 = vor.u32 %v10189, %v10192
        %v10194 = vrot.slane %v10193, 4
        %v10196 = vshll.u32 %v10087, 16
        %v10198 = vrot.slane %v10196, 5
        %v10199 = vsel %vm748, %v10194, %v10198
        %v10200 = vld [vmem:[%s8783] sm:$0xf]
        %v10201 = vld [vmem:[%s8783 + $0x4] sm:$0x1]
        %v10202 = vld [vmem:[%s8783 + $0x8] sm:$0xf]
        %v10203 = vld [vmem:[%s8783 + $0xc] sm:$0x1]
        %v10204 = vld [vmem:[%s8783 + $0x10] sm:$0xf]
        %v10205 = vld [vmem:[%s8783 + $0x14] sm:$0x1]
        %v10206 = vld [vmem:[%s8783 + $0x18] sm:$0xf]
        %v10207 = vld [vmem:[%s8783 + $0x1c] sm:$0x1]
        %v10208 = vld [vmem:[%s8783 + $0x20] sm:$0xf]
        %v10209 = vld [vmem:[%s8783 + $0x24] sm:$0x1]
        %v10210 = vld [vmem:[%s8783 + $0x28] sm:$0xf]
        %v10211 = vld [vmem:[%s8783 + $0x2c] sm:$0x1]
        %v10212 = vld [vmem:[%s8783 + $0x30] sm:$0xf]
        %v10213 = vld [vmem:[%s8783 + $0x34] sm:$0x1]
        %v10214 = vld [vmem:[%s8783 + $0x38] sm:$0xf]
        %v10215 = vld [vmem:[%s8783 + $0x3c] sm:$0x1]
        %v10217 = vshrl.u32 %v10200, 16
        %v10219 = vrot.slane %v10217, 4
        %v10220 = vshll.u32 %v10200, 16
        %v10222 = vrot.slane %v10220, 5
        %v10223 = vor.u32 %v10219, %v10222
        %v10224 = vrot.slane %v10223, 4
        %v10226 = vshll.u32 %v10201, 16
        %v10228 = vrot.slane %v10226, 5
        %v10229 = vsel %vm748, %v10224, %v10228
        %v10231 = vshrl.u32 %v10202, 16
        %v10233 = vrot.slane %v10231, 4
        %v10234 = vshll.u32 %v10202, 16
        %v10236 = vrot.slane %v10234, 5
        %v10237 = vor.u32 %v10233, %v10236
        %v10238 = vrot.slane %v10237, 4
        %v10240 = vshll.u32 %v10203, 16
        %v10242 = vrot.slane %v10240, 5
        %v10243 = vsel %vm748, %v10238, %v10242
        %v10245 = vshrl.u32 %v10204, 16
        %v10247 = vrot.slane %v10245, 4
        %v10248 = vshll.u32 %v10204, 16
        %v10250 = vrot.slane %v10248, 5
        %v10251 = vor.u32 %v10247, %v10250
        %v10252 = vrot.slane %v10251, 4
        %v10254 = vshll.u32 %v10205, 16
        %v10256 = vrot.slane %v10254, 5
        %v10257 = vsel %vm748, %v10252, %v10256
        %v10259 = vshrl.u32 %v10206, 16
        %v10261 = vrot.slane %v10259, 4
        %v10262 = vshll.u32 %v10206, 16
        %v10264 = vrot.slane %v10262, 5
        %v10265 = vor.u32 %v10261, %v10264
        %v10266 = vrot.slane %v10265, 4
        %v10268 = vshll.u32 %v10207, 16
        %v10270 = vrot.slane %v10268, 5
        %v10271 = vsel %vm748, %v10266, %v10270
        %v10273 = vshrl.u32 %v10208, 16
        %v10275 = vrot.slane %v10273, 4
        %v10276 = vshll.u32 %v10208, 16
        %v10278 = vrot.slane %v10276, 5
        %v10279 = vor.u32 %v10275, %v10278
        %v10280 = vrot.slane %v10279, 4
        %v10282 = vshll.u32 %v10209, 16
        %v10284 = vrot.slane %v10282, 5
        %v10285 = vsel %vm748, %v10280, %v10284
        %v10287 = vshrl.u32 %v10210, 16
        %v10289 = vrot.slane %v10287, 4
        %v10290 = vshll.u32 %v10210, 16
        %v10292 = vrot.slane %v10290, 5
        %v10293 = vor.u32 %v10289, %v10292
        %v10294 = vrot.slane %v10293, 4
        %v10296 = vshll.u32 %v10211, 16
        %v10298 = vrot.slane %v10296, 5
        %v10299 = vsel %vm748, %v10294, %v10298
        %v10301 = vshrl.u32 %v10212, 16
        %v10303 = vrot.slane %v10301, 4
        %v10304 = vshll.u32 %v10212, 16
        %v10306 = vrot.slane %v10304, 5
        %v10307 = vor.u32 %v10303, %v10306
        %v10308 = vrot.slane %v10307, 4
        %v10310 = vshll.u32 %v10213, 16
        %v10312 = vrot.slane %v10310, 5
        %v10313 = vsel %vm748, %v10308, %v10312
        %v10315 = vshrl.u32 %v10214, 16
        %v10317 = vrot.slane %v10315, 4
        %v10318 = vshll.u32 %v10214, 16
        %v10320 = vrot.slane %v10318, 5
        %v10321 = vor.u32 %v10317, %v10320
        %v10322 = vrot.slane %v10321, 4
        %v10324 = vshll.u32 %v10215, 16
        %v10326 = vrot.slane %v10324, 5
        %v10327 = vsel %vm748, %v10322, %v10326
        %v10328 = vld [vmem:[%s8792] sm:$0xe]
        %v10329 = vld [vmem:[%s8792 + $0x8] sm:$0xe]
        %v10330 = vld [vmem:[%s8792 + $0x10] sm:$0xe]
        %v10331 = vld [vmem:[%s8792 + $0x18] sm:$0xe]
        %v10332 = vld [vmem:[%s8792 + $0x20] sm:$0xe]
        %v10333 = vld [vmem:[%s8792 + $0x28] sm:$0xe]
        %v10334 = vld [vmem:[%s8792 + $0x30] sm:$0xe]
        %v10335 = vld [vmem:[%s8792 + $0x38] sm:$0xe]
        %v10352 = vrot.slane %v10328, 5
        %v10353 = vrot.slane %v10352, 4
        %v10354 = vrot.slane %v10073, 5
        %v10355 = vsel %vm887, %v10353, %v10354
        %v10356 = vrot.slane %v10329, 5
        %v10357 = vrot.slane %v10356, 4
        %v10358 = vrot.slane %v10075, 5
        %v10359 = vsel %vm887, %v10357, %v10358
        %v10360 = vrot.slane %v10330, 5
        %v10361 = vrot.slane %v10360, 4
        %v10362 = vrot.slane %v10077, 5
        %v10363 = vsel %vm887, %v10361, %v10362
        %v10364 = vrot.slane %v10331, 5
        %v10365 = vrot.slane %v10364, 4
        %v10366 = vrot.slane %v10079, 5
        %v10367 = vsel %vm887, %v10365, %v10366
        %v10368 = vrot.slane %v10332, 5
        %v10369 = vrot.slane %v10368, 4
        %v10370 = vrot.slane %v10081, 5
        %v10371 = vsel %vm887, %v10369, %v10370
        %v10372 = vrot.slane %v10333, 5
        %v10373 = vrot.slane %v10372, 4
        %v10374 = vrot.slane %v10083, 5
        %v10375 = vsel %vm887, %v10373, %v10374
        %v10376 = vrot.slane %v10334, 5
        %v10377 = vrot.slane %v10376, 4
        %v10378 = vrot.slane %v10085, 5
        %v10379 = vsel %vm887, %v10377, %v10378
        %v10380 = vrot.slane %v10335, 5
        %v10381 = vrot.slane %v10380, 4
        %v10382 = vrot.slane %v10087, 5
        %v10383 = vsel %vm887, %v10381, %v10382
        %v10384 = vunpack.c.l.b16 %v9477
        %v10385 = vunpack.c.l.b16 %v9491
        %v10386 = vunpack.c.l.b16 %v9505
        %v10387 = vunpack.c.l.b16 %v9519
        %v10388 = vunpack.c.l.b16 %v9533
        %v10389 = vunpack.c.l.b16 %v9547
        %v10390 = vunpack.c.l.b16 %v9561
        %v10391 = vunpack.c.l.b16 %v9575
        %v10392 = vpack.c.b16 %v10385, %v10384
        %v10393 = vpack.c.b16 %v10387, %v10386
        %v10394 = vpack.c.b16 %v10389, %v10388
        %v10395 = vpack.c.b16 %v10391, %v10390
        %v10396 = vunpack.c.l.b16 %v9605
        %v10397 = vunpack.c.l.b16 %v9619
        %v10398 = vunpack.c.l.b16 %v9633
        %v10399 = vunpack.c.l.b16 %v9647
        %v10400 = vunpack.c.l.b16 %v9661
        %v10401 = vunpack.c.l.b16 %v9675
        %v10402 = vunpack.c.l.b16 %v9689
        %v10403 = vunpack.c.l.b16 %v9703
        %v10404 = vpack.c.b16 %v10397, %v10396
        %v10405 = vpack.c.b16 %v10399, %v10398
        %v10406 = vpack.c.b16 %v10401, %v10400
        %v10407 = vpack.c.b16 %v10403, %v10402
        %10408 = vrot.lane.b32.xlu0 %v10404, 16
        %v10409 = vpop.permute.xlu0 %10408
        %10410 = vrot.lane.b32.xlu0 %v10405, 16
        %v10411 = vpop.permute.xlu0 %10410
        %10412 = vrot.lane.b32.xlu0 %v10406, 16
        %v10413 = vpop.permute.xlu0 %10412
        %10414 = vrot.lane.b32.xlu0 %v10407, 16
        %v10415 = vpop.permute.xlu0 %10414
        %v10416 = vunpack.c.l.b16 %v9731
        %v10417 = vunpack.c.l.b16 %v9735
        %v10418 = vunpack.c.l.b16 %v9739
        %v10419 = vunpack.c.l.b16 %v9743
        %v10420 = vunpack.c.l.b16 %v9747
        %v10421 = vunpack.c.l.b16 %v9751
        %v10422 = vunpack.c.l.b16 %v9755
        %v10423 = vunpack.c.l.b16 %v9759
        %v10424 = vpack.c.b16 %v10417, %v10416
        %v10425 = vpack.c.b16 %v10419, %v10418
        %v10426 = vpack.c.b16 %v10421, %v10420
        %v10427 = vpack.c.b16 %v10423, %v10422
        %10428 = vrot.lane.b32.xlu0 %v10424, 32
        %v10429 = vpop.permute.xlu0 %10428
        %10430 = vrot.lane.b32.xlu0 %v10425, 32
        %v10431 = vpop.permute.xlu0 %10430
        %10432 = vrot.lane.b32.xlu0 %v10426, 32
        %v10433 = vpop.permute.xlu0 %10432
        %10434 = vrot.lane.b32.xlu0 %v10427, 32
        %v10435 = vpop.permute.xlu0 %10434
        %v10436 = vunpack.c.l.b16 %v9789
        %v10437 = vunpack.c.l.b16 %v9803
        %v10438 = vunpack.c.l.b16 %v9817
        %v10439 = vunpack.c.l.b16 %v9831
        %v10440 = vunpack.c.l.b16 %v9845
        %v10441 = vunpack.c.l.b16 %v9859
        %v10442 = vunpack.c.l.b16 %v9873
        %v10443 = vunpack.c.l.b16 %v9887
        %v10444 = vpack.c.b16 %v10437, %v10436
        %v10445 = vpack.c.b16 %v10439, %v10438
        %v10446 = vpack.c.b16 %v10441, %v10440
        %v10447 = vpack.c.b16 %v10443, %v10442
        %10448 = vrot.lane.b32.xlu0 %v10444, 48
        %v10449 = vpop.permute.xlu0 %10448
        %10450 = vrot.lane.b32.xlu0 %v10445, 48
        %v10451 = vpop.permute.xlu0 %10450
        %10452 = vrot.lane.b32.xlu0 %v10446, 48
        %v10453 = vpop.permute.xlu0 %10452
        %10454 = vrot.lane.b32.xlu0 %v10447, 48
        %v10455 = vpop.permute.xlu0 %10454
        %v10456 = vunpack.c.l.b16 %v9917
        %v10457 = vunpack.c.l.b16 %v9931
        %v10458 = vunpack.c.l.b16 %v9945
        %v10459 = vunpack.c.l.b16 %v9959
        %v10460 = vunpack.c.l.b16 %v9973
        %v10461 = vunpack.c.l.b16 %v9987
        %v10462 = vunpack.c.l.b16 %v10001
        %v10463 = vunpack.c.l.b16 %v10015
        %v10464 = vpack.c.b16 %v10457, %v10456
        %v10465 = vpack.c.b16 %v10459, %v10458
        %v10466 = vpack.c.b16 %v10461, %v10460
        %v10467 = vpack.c.b16 %v10463, %v10462
        %10468 = vrot.lane.b32.xlu0 %v10464, 64
        %v10469 = vpop.permute.xlu0 %10468
        %10470 = vrot.lane.b32.xlu0 %v10465, 64
        %v10471 = vpop.permute.xlu0 %10470
        %10472 = vrot.lane.b32.xlu0 %v10466, 64
        %v10473 = vpop.permute.xlu0 %10472
        %10474 = vrot.lane.b32.xlu0 %v10467, 64
        %v10475 = vpop.permute.xlu0 %10474
        %v10476 = vunpack.c.l.b16 %v10043
        %v10477 = vunpack.c.l.b16 %v10047
        %v10478 = vunpack.c.l.b16 %v10051
        %v10479 = vunpack.c.l.b16 %v10055
        %v10480 = vunpack.c.l.b16 %v10059
        %v10481 = vunpack.c.l.b16 %v10063
        %v10482 = vunpack.c.l.b16 %v10067
        %v10483 = vunpack.c.l.b16 %v10071
        %v10484 = vpack.c.b16 %v10477, %v10476
        %v10485 = vpack.c.b16 %v10479, %v10478
        %v10486 = vpack.c.b16 %v10481, %v10480
        %v10487 = vpack.c.b16 %v10483, %v10482
        %10488 = vrot.lane.b32.xlu0 %v10484, 80
        %v10489 = vpop.permute.xlu0 %10488
        %10490 = vrot.lane.b32.xlu0 %v10485, 80
        %v10491 = vpop.permute.xlu0 %10490
        %10492 = vrot.lane.b32.xlu0 %v10486, 80
        %v10493 = vpop.permute.xlu0 %10492
        %10494 = vrot.lane.b32.xlu0 %v10487, 80
        %v10495 = vpop.permute.xlu0 %10494
        %v10496 = vunpack.c.l.b16 %v10101
        %v10497 = vunpack.c.l.b16 %v10115
        %v10498 = vunpack.c.l.b16 %v10129
        %v10499 = vunpack.c.l.b16 %v10143
        %v10500 = vunpack.c.l.b16 %v10157
        %v10501 = vunpack.c.l.b16 %v10171
        %v10502 = vunpack.c.l.b16 %v10185
        %v10503 = vunpack.c.l.b16 %v10199
        %v10504 = vpack.c.b16 %v10497, %v10496
        %v10505 = vpack.c.b16 %v10499, %v10498
        %v10506 = vpack.c.b16 %v10501, %v10500
        %v10507 = vpack.c.b16 %v10503, %v10502
        %10508 = vrot.lane.b32.xlu0 %v10504, 96
        %v10509 = vpop.permute.xlu0 %10508
        %10510 = vrot.lane.b32.xlu0 %v10505, 96
        %v10511 = vpop.permute.xlu0 %10510
        %10512 = vrot.lane.b32.xlu0 %v10506, 96
        %v10513 = vpop.permute.xlu0 %10512
        %10514 = vrot.lane.b32.xlu0 %v10507, 96
        %v10515 = vpop.permute.xlu0 %10514
        %v10516 = vunpack.c.l.b16 %v10229
        %v10517 = vunpack.c.l.b16 %v10243
        %v10518 = vunpack.c.l.b16 %v10257
        %v10519 = vunpack.c.l.b16 %v10271
        %v10520 = vunpack.c.l.b16 %v10285
        %v10521 = vunpack.c.l.b16 %v10299
        %v10522 = vunpack.c.l.b16 %v10313
        %v10523 = vunpack.c.l.b16 %v10327
        %v10524 = vpack.c.b16 %v10517, %v10516
        %v10525 = vpack.c.b16 %v10519, %v10518
        %v10526 = vpack.c.b16 %v10521, %v10520
        %v10527 = vpack.c.b16 %v10523, %v10522
        %10528 = vrot.lane.b32.xlu0 %v10524, 112
        %v10529 = vpop.permute.xlu0 %10528
        %10530 = vrot.lane.b32.xlu0 %v10525, 112
        %v10531 = vpop.permute.xlu0 %10530
        %10532 = vrot.lane.b32.xlu0 %v10526, 112
        %v10533 = vpop.permute.xlu0 %10532
        %10534 = vrot.lane.b32.xlu0 %v10527, 112
        %v10535 = vpop.permute.xlu0 %10534
        %v10536 = vunpack.c.l.b16 %v10355
        %v10537 = vunpack.c.l.b16 %v10359
        %v10538 = vunpack.c.l.b16 %v10363
        %v10539 = vunpack.c.l.b16 %v10367
        %v10540 = vunpack.c.l.b16 %v10371
        %v10541 = vunpack.c.l.b16 %v10375
        %v10542 = vunpack.c.l.b16 %v10379
        %v10543 = vunpack.c.l.b16 %v10383
        %v10544 = vpack.c.b16 %v10537, %v10536
        %v10545 = vpack.c.b16 %v10539, %v10538
        %v10546 = vpack.c.b16 %v10541, %v10540
        %v10547 = vpack.c.b16 %v10543, %v10542
        %v10550 = vsel %vm1516, %v10392, %v10409
        %v10553 = vsel %vm1516, %v10393, %v10411
        %v10556 = vsel %vm1516, %v10394, %v10413
        %v10559 = vsel %vm1516, %v10395, %v10415
        %v10561 = vsel %vm1552, %v10550, %v10429
        %v10563 = vsel %vm1552, %v10553, %v10431
        %v10565 = vsel %vm1552, %v10556, %v10433
        %v10567 = vsel %vm1552, %v10559, %v10435
        %v10569 = vsel %vm6751, %v10561, %v10449
        %v10571 = vsel %vm6751, %v10563, %v10451
        %v10573 = vsel %vm6751, %v10565, %v10453
        %v10575 = vsel %vm6751, %v10567, %v10455
        %v10577 = vsel %vm2521, %v10569, %v10469
        %v10579 = vsel %vm2521, %v10571, %v10471
        %v10581 = vsel %vm2521, %v10573, %v10473
        %v10583 = vsel %vm2521, %v10575, %v10475
        %v10585 = vsel %vm6768, %v10577, %v10489
        %v10587 = vsel %vm6768, %v10579, %v10491
        %v10589 = vsel %vm6768, %v10581, %v10493
        %v10591 = vsel %vm6768, %v10583, %v10495
        %v10593 = vsel %vm2530, %v10585, %v10509
        %v10595 = vsel %vm2530, %v10587, %v10511
        %v10597 = vsel %vm2530, %v10589, %v10513
        %v10599 = vsel %vm2530, %v10591, %v10515
        %v10601 = vsel %vm6785, %v10593, %v10529
        %v10604 = vsel %vm6785, %v10595, %v10531
        %v10607 = vsel %vm6785, %v10597, %v10533
        %v10610 = vsel %vm6785, %v10599, %v10535
        %v10612 = vld [vmem:[%s9] sm:$0xf]
        %v10613 = vld [vmem:[%s9 + $0x4] sm:$0xf]
        %v10614 = vld [vmem:[%s9 + $0x8] sm:$0xf]
        %v10615 = vld [vmem:[%s9 + $0xc] sm:$0xf]
        %v10616 = vld [vmem:[%s9 + $0x10] sm:$0xf]
        %v10617 = vld [vmem:[%s9 + $0x14] sm:$0xf]
        %v10618 = vld [vmem:[%s9 + $0x18] sm:$0xf]
        %v10619 = vld [vmem:[%s9 + $0x1c] sm:$0xf]
        %v10620 = vld [vmem:[%s9 + $0x20] sm:$0xf]
        %v10621 = vld [vmem:[%s9 + $0x24] sm:$0xf]
        %v10622 = vld [vmem:[%s9 + $0x28] sm:$0xf]
        %v10623 = vld [vmem:[%s9 + $0x2c] sm:$0xf]
        %v10624 = vld [vmem:[%s9 + $0x30] sm:$0xf]
        %v10625 = vld [vmem:[%s9 + $0x34] sm:$0xf]
        %v10626 = vld [vmem:[%s9 + $0x38] sm:$0xf]
        %v10627 = vld [vmem:[%s9 + $0x3c] sm:$0xf]
        %v10628 = vld [vmem:[%s9 + $0x40] sm:$0xf]
        %v10629 = vld [vmem:[%s9 + $0x44] sm:$0xf]
        %v10630 = vld [vmem:[#allocation12] sm:$0x1]
        %v10632 = vperm.slane %v10630, 0
        %v10652 = vunpack.c.l.b16 %v10612
        %v10653 = vunpack.c.l.b16 %v10613
        %v10654 = vunpack.c.l.b16 %v10614
        %v10655 = vunpack.c.l.b16 %v10615
        %v10656 = vunpack.c.l.b16 %v10616
        %v10657 = vunpack.c.l.b16 %v10617
        %v10658 = vunpack.c.l.b16 %v10618
        %v10659 = vunpack.c.l.b16 %v10619
        %v10660 = vunpack.c.l.b16 %v10620
        %v10661 = vunpack.c.l.b16 %v10621
        %v10662 = vunpack.c.l.b16 %v10622
        %v10663 = vunpack.c.l.b16 %v10623
        %v10664 = vunpack.c.l.b16 %v10624
        %v10665 = vunpack.c.l.b16 %v10625
        %v10666 = vunpack.c.l.b16 %v10626
        %v10667 = vunpack.c.l.b16 %v10627
        %v10668 = vunpack.c.l.b16 %v10628
        %v10669 = vunpack.c.l.b16 %v10629
        %v10670 = vpack.c.b16 %v10653, %v10652
        %v10671 = vpack.c.b16 %v10655, %v10654
        %v10672 = vpack.c.b16 %v10657, %v10656
        %v10673 = vpack.c.b16 %v10659, %v10658
        %v10674 = vpack.c.b16 %v10661, %v10660
        %v10675 = vpack.c.b16 %v10663, %v10662
        %v10676 = vpack.c.b16 %v10665, %v10664
        %v10677 = vpack.c.b16 %v10667, %v10666
        %v10678 = vpack.c.b16 %v10669, %v10668
        %v10689 = vsel %vm1516, %v10544, 0
        %v10692 = vsel %vm1516, %v10545, 0
        %v10695 = vsel %vm1516, %v10546, 0
        %v10698 = vsel %vm1516, %v10547, 0
        %10700 = vmatpush.bf16.msra.mxu0 %v10677
        %10701 = vmatpush.bf16.msra.mxu0 %v10676
        %10702 = vmatpush.bf16.msra.mxu0 %v10675
        %10703 = vmatpush.bf16.msra.mxu0 %v10674
        %10704 = vmatpush.bf16.msra.mxu0 %v10673
        %10705 = vmatpush.bf16.msra.mxu0 %v10672
        %10706 = vmatpush.bf16.msra.mxu0 %v10671
        %10707 = vmatpush.bf16.msra.mxu0 %v10670
        %10708 = vmatmul.bf16.gmra.mxu0 %v10601
        %v10709 = vpop.f32.mrf.mxu0
        %v10710 = vadd.f32 %v10632, %v10709
        %v10711 = vpop.f32.mrf.mxu0
        %v10712 = vadd.f32 %v10632, %v10711
        %10713 = vmatmul.bf16.gmra.mxu0 %v10604
        %v10714 = vpop.f32.mrf.mxu0
        %v10715 = vadd.f32 %v10632, %v10714
        %v10716 = vpop.f32.mrf.mxu0
        %v10717 = vadd.f32 %v10632, %v10716
        %10718 = vmatmul.bf16.gmra.mxu0 %v10607
        %v10719 = vpop.f32.mrf.mxu0
        %v10720 = vadd.f32 %v10632, %v10719
        %v10721 = vpop.f32.mrf.mxu0
        %v10722 = vadd.f32 %v10632, %v10721
        %10723 = vmatmul.bf16.gmra.mxu0 %v10610
        %v10724 = vpop.f32.mrf.mxu0
        %v10725 = vadd.f32 %v10632, %v10724
        %v10726 = vpop.f32.mrf.mxu0
        %v10727 = vadd.f32 %v10632, %v10726
        %10728 = vdwg.mxu0
        %10729 = vmatpush.bf16.msra.mxu0 0
        %10730 = vmatpush.bf16.msra.mxu0 0
        %10731 = vmatpush.bf16.msra.mxu0 0
        %10732 = vmatpush.bf16.msra.mxu0 0
        %10733 = vmatpush.bf16.msra.mxu0 0
        %10734 = vmatpush.bf16.msra.mxu0 0
        %10735 = vmatpush.bf16.msra.mxu0 0
        %10736 = vmatpush.bf16.msra.mxu0 %v10678
        %10737 = vmatmul.bf16.gmra.mxu0 %v10689
        %v10738 = vpop.f32.mrf.mxu0
        %v10739 = vadd.f32 %v10710, %v10738
        %v10740 = vpop.f32.mrf.mxu0
        %v10741 = vadd.f32 %v10712, %v10740
        %10742 = vmatmul.bf16.gmra.mxu0 %v10692
        %v10743 = vpop.f32.mrf.mxu0
        %v10744 = vadd.f32 %v10715, %v10743
        %v10745 = vpop.f32.mrf.mxu0
        %v10746 = vadd.f32 %v10717, %v10745
        %10747 = vmatmul.bf16.gmra.mxu0 %v10695
        %v10748 = vpop.f32.mrf.mxu0
        %v10749 = vadd.f32 %v10720, %v10748
        %v10750 = vpop.f32.mrf.mxu0
        %v10751 = vadd.f32 %v10722, %v10750
        %10752 = vmatmul.bf16.gmra.mxu0 %v10698
        %v10753 = vpop.f32.mrf.mxu0
        %v10754 = vadd.f32 %v10725, %v10753
        %v10755 = vpop.f32.mrf.mxu0
        %v10756 = vadd.f32 %v10727, %v10755
        %10757 = vdwg.mxu0
        %s10758 = scalar_lea.vmem %s459, 192
        %10759 = vst.msk [vmem:[%s10758] sm:$0xff] %vm1507, %v10739
        %10760 = vst.msk [vmem:[%s10758 + $0x8] sm:$0xff] %vm1507, %v10741
        %10761 = vst.msk [vmem:[%s10758 + $0x10] sm:$0xff] %vm1507, %v10744
        %10762 = vst.msk [vmem:[%s10758 + $0x18] sm:$0xff] %vm1507, %v10746
        %10763 = vst.msk [vmem:[%s10758 + $0x20] sm:$0xff] %vm1507, %v10749
        %10764 = vst.msk [vmem:[%s10758 + $0x28] sm:$0xff] %vm1507, %v10751
        %10765 = vst.msk [vmem:[%s10758 + $0x30] sm:$0xff] %vm1507, %v10754
        %10766 = vst.msk [vmem:[%s10758 + $0x38] sm:$0xff] %vm1507, %v10756
        %p10767 = scmp.lt.s32.totalorder %s25, 1
        %s10768 = scalar_select %p10767, %s25, 1
        %s10769 = smul.addr %s10768, 32
        %s10770 = smul.addr %s10769, 8
        %s10771 = scalar_lea.vmem %s11, %s10770
        // Predicated region
        $region85: #{decoder_forward.1} parent=63 // pred_check
          %p10772 = pneg %p279
        $region86: #{decoder_forward.1} parent=63 // pred_check_branch
          %10774 = sbr.rel (%p10772) target = $region88
        $region87: #{decoder_forward.1} parent=63 // pred_region
          _
        $region88: #{decoder_forward.1} parent=63 // pred_fallthru
          _
      $region64: #{decoder_forward.1} parent=5 // pred_fallthru
        _
      %p10775 = scmp.le.s32.totalorder 2, %s20
      // Predicated region
      $region89: #{decoder_forward.1} parent=5 // pred_check
        %p10776 = pneg %p10775
      $region90: #{decoder_forward.1} parent=5 // pred_check_branch
        %10778 = sbr.rel (%p10776) target = $region92
      $region91: #{decoder_forward.1} parent=5 // pred_region
        %s10779 = ssub.s32 %s20, 2
        // Predicated region
        $region93: #{decoder_forward.1} parent=91 // pred_check
          %p10780 = pneg %p285
        $region94: #{decoder_forward.1} parent=91 // pred_check_branch
          %10782 = sbr.rel (%p10780) target = $region96
        $region95: #{decoder_forward.1} parent=91 // pred_region
          %p10783 = scmp.lt.s32.totalorder %s26, 1
          %s10784 = scalar_select %p10783, %s26, 1
          %s10785 = smul.addr %s10784, 32
          %s10786 = smul.addr %s10785, 8
          %s10787 = scalar_lea.vmem %s11, %s10786
        $region96: #{decoder_forward.1} parent=91 // pred_fallthru
          _
      $region92: #{decoder_forward.1} parent=5 // pred_fallthru
        _
    $region6: #{decoder_forward.1} parent=1 // loop_footer
      %s24 = sadd.s32 1, %s20
    $region7: #{decoder_forward.1} parent=1 // loop_footer_branch
      %19 = sbr.rel target = $region3
    $region8: #{decoder_forward.1} parent=1 // loop_exit
      _
    %10788 = vsyncpa [#allocation6], 1
    %s10789 = scalar_lea.sflag [#allocation6], 1
    %10790 = vsyncpa %s10789, 1
    %10791 = vsyncpa [#allocation8], 1
    %10792 = vsyncpa [#allocation11], 1

</llo_original>
